<compile_context>
chip_gen: v6e
topology: v6e:2x2x1
jax: 0.10.0
libtpu: 0.0.40
codegen_flags: <defaults>
</compile_context>

<pallas_src>
import math
from functools import partial

import jax
import jax.numpy as jnp
from jax.experimental import pallas as pl
from jax.experimental.pallas import tpu as pltpu

LANE = 128      # pad all channel (lane) dims to a multiple of this
SUBLANE = 8     # pad the row (M) dim to a multiple of this
BN_EPS = 1e-5


def _round_up(x, m):
    return ((x + m - 1) // m) * m


def _default_vmem_limit():
    # v7x only has 64 MiB VMEM per TensorCore (v5e/v6e: 128 MiB); derive a portable
    # scoped-VMEM request instead of hard-coding 100 MiB.
    try:
        cap = int(pltpu.get_tpu_info().vmem_capacity_bytes)
    except Exception:
        cap = 64 * 1024 * 1024
    return max(32 * 1024 * 1024, min(cap - 16 * 1024 * 1024, 96 * 1024 * 1024))


_VMEM_LIMIT = _default_vmem_limit()


# ------------------------------ Pallas kernel --------------------------------

def _conv_matmul_kernel(relu, has_res, p_ref, w_ref, b_ref, *rest):
    """grid = (M tiles [parallel], kh*kw taps [arbitrary, reduction])."""
    if has_res:
        r_ref, o_ref, acc_ref = rest
    else:
        o_ref, acc_ref = rest
        r_ref = None
    t = pl.program_id(1)

    @pl.when(t == 0)
    def _init():
        acc_ref[...] = jnp.zeros_like(acc_ref)

    # bf16 x bf16 on the MXU, f32 accumulate.
    acc_ref[...] += jnp.dot(p_ref[...], w_ref[...],
                            preferred_element_type=jnp.float32)

    @pl.when(t == pl.num_programs(1) - 1)
    def _finalize():
        y = acc_ref[...] + b_ref[...]            # keep epilogue in f32 (v5e-safe)
        if has_res:
            y = y + r_ref[...].astype(jnp.float32)
        if relu:
            y = jnp.maximum(y, 0.0)
        o_ref[...] = y.astype(o_ref.dtype)       # downcast only at the store


def fused_tap_matmul(pstack, wstack, bias, *, relu, residual=None,
                     out_dtype=jnp.bfloat16):
    """out = ReLU?( sum_t pstack[t] @ wstack[t] + bias [+ residual] )  -> (M, Cp)

    pstack:   (T, M, Cin)  bf16   im2col taps (T = kh*kw)
    wstack:   (T, Cin, Cp) bf16   BN-folded weights, Cp lane-dense (mult of 128)
    bias:     (1, Cp)      f32
    residual: (M, Cp) bf16 or None (added before the ReLU)
    """
    T, M, Cin = pstack.shape
    Tw, Cw, Cp = wstack.shape
    assert T == Tw and Cin == Cw and Cp % LANE == 0

    M_pad = _round_up(max(M, SUBLANE), SUBLANE)
    TM = M_pad if M_pad <= 256 else 256
    M_pad = _round_up(M_pad, TM)
    if M_pad != M:
        pstack = jnp.pad(pstack, ((0, 0), (0, M_pad - M), (0, 0)))
        if residual is not None:
            residual = jnp.pad(residual, ((0, M_pad - M), (0, 0)))

    in_specs = [
        pl.BlockSpec((None, TM, Cin), lambda i, t: (t, i, 0)),   # patch tap
        pl.BlockSpec((None, Cin, Cp), lambda i, t: (t, 0, 0)),   # weight tap
        pl.BlockSpec((1, Cp), lambda i, t: (0, 0)),              # bias (resident)
    ]
    args = [pstack, wstack, bias]
    if residual is not None:
        in_specs.append(pl.BlockSpec((TM, Cp), lambda i, t: (i, 0)))
        args.append(residual)

    out = pl.pallas_call(
        partial(_conv_matmul_kernel, relu, residual is not None),
        out_shape=jax.ShapeDtypeStruct((M_pad, Cp), out_dtype),
        grid=(M_pad // TM, T),
        in_specs=in_specs,
        out_specs=pl.BlockSpec((TM, Cp), lambda i, t: (i, 0)),
        scratch_shapes=[pltpu.VMEM((TM, Cp), jnp.float32)],
        compiler_params=pltpu.CompilerParams(
            dimension_semantics=("parallel", "arbitrary"),
            vmem_limit_bytes=_VMEM_LIMIT,
        ),
    )(*args)
    return out[:M]


# ------------------------------ Conv/BN glue ----------------------------------

def conv2d_bn(x, cp, stride, relu, residual=None, out_dtype=jnp.bfloat16):
    """x: (N,H,W,Cin_pad) bf16 NHWC.  cp: {'w': (T,Cin_pad,Cout_pad) bf16, 'b': (1,Cout_pad) f32}."""
    wst, bias = cp["w"], cp["b"]
    T, cin_pad, cout_pad = wst.shape
    k = int(round(math.sqrt(T)))              # 3 or 1 (static, from shapes)
    pad = (k - 1) // 2                        # 'same' for 3x3, 0 for 1x1
    xp = jnp.pad(x, ((0, 0), (pad, pad), (pad, pad), (0, 0)))
    N, Hp, Wp, _ = xp.shape
    Ho = (Hp - k) // stride + 1
    Wo = (Wp - k) // stride + 1
    M = N * Ho * Wo

    # bf16 tap stack consumed tap-by-tap by the kernel's reduction grid axis
    # (half the HBM bytes of the old f32 im2col concat; K never materialized wide).
    taps = []
    for dy in range(k):
        for dx in range(k):
            taps.append(
                xp[:, dy:dy + (Ho - 1) * stride + 1:stride,
                      dx:dx + (Wo - 1) * stride + 1:stride, :].reshape(M, cin_pad))
    pstack = jnp.stack(taps, axis=0).astype(jnp.bfloat16)

    res = None if residual is None else residual.reshape(M, cout_pad)
    y = fused_tap_matmul(pstack, wst, bias, relu=relu, residual=res,
                         out_dtype=out_dtype)
    return y.reshape(N, Ho, Wo, cout_pad)


def basic_block(x, bp, stride):
    identity = x
    out = conv2d_bn(x, bp["conv1"], stride, relu=True)
    if "down" in bp:
        identity = conv2d_bn(x, bp["down"], stride, relu=False)
    # conv2 + bn2 + residual add + relu fused in one kernel
    out = conv2d_bn(out, bp["conv2"], 1, relu=True, residual=identity)
    return out


def resnet_server_forward(x_nchw, params):
    # PyTorch input convention is NCHW; convert to NHWC, pad channels lane-dense, bf16.
    x = jnp.transpose(x_nchw, (0, 2, 3, 1))
    cin = x.shape[-1]
    cin_pad = _round_up(cin, LANE)
    x = jnp.pad(x, ((0, 0), (0, 0), (0, 0), (0, cin_pad - cin))).astype(jnp.bfloat16)

    for layer_params, stride in zip(params["layers"], (1, 2, 2, 2)):
        for bi, bp in enumerate(layer_params):
            x = basic_block(x, bp, stride if bi == 0 else 1)

    # AdaptiveAvgPool2d((1,1)) + flatten  (tiny; plain jnp)
    x = jnp.mean(x.astype(jnp.float32), axis=(1, 2))          # (N, 512)

    # fc: y = x @ W.T + b, same fused kernel with a single tap, lane-dense padded output.
    pstack = x.astype(jnp.bfloat16)[None]                     # (1, N, 512)
    y = fused_tap_matmul(pstack, params["fc_w"], params["fc_b"],
                         relu=False, out_dtype=jnp.float32)
    return y                                                  # (N, num_classes_padded)


# --------------------------- Parameter preparation ----------------------------

def _fold_conv_bn(w, bn):
    """PyTorch (Cout,Cin,KH,KW) f32 conv weight + eval-mode BN -> kernel-ready taps."""
    cout, cin, kh, kw = w.shape
    cin_pad = _round_up(cin, LANE)
    cout_pad = _round_up(cout, LANE)
    scale = bn["gamma"] / jnp.sqrt(bn["var"] + BN_EPS)
    bias = bn["beta"] - bn["mean"] * scale
    wt = jnp.transpose(w, (2, 3, 1, 0)).reshape(kh * kw, cin, cout)
    wt = wt * scale[None, None, :]                            # fold BN scale (f32)
    wt = jnp.pad(wt, ((0, 0), (0, cin_pad - cin), (0, cout_pad - cout)))
    b = jnp.pad(bias, (0, cout_pad - cout)).reshape(1, cout_pad)
    return dict(w=wt.astype(jnp.bfloat16), b=b.astype(jnp.float32))


def prepare_params(raw):
    layers = []
    for layer in raw["layers"]:
        blocks = []
        for bp in layer:
            pb = dict(conv1=_fold_conv_bn(bp["conv1_w"], bp["bn1"]),
                      conv2=_fold_conv_bn(bp["conv2_w"], bp["bn2"]))
            if "down_w" in bp:
                pb["down"] = _fold_conv_bn(bp["down_w"], bp["down_bn"])
            blocks.append(pb)
        layers.append(blocks)
    num_classes, feat = raw["fc_w"].shape
    ncp = _round_up(num_classes, LANE)
    fc_w = jnp.pad(raw["fc_w"].T, ((0, 0), (0, ncp - num_classes)))[None]   # (1, 512, ncp)
    fc_b = jnp.pad(raw["fc_b"], (0, ncp - num_classes)).reshape(1, ncp)
    return dict(layers=layers,
                fc_w=fc_w.astype(jnp.bfloat16),
                fc_b=fc_b.astype(jnp.float32))


# ------------------------------- Parameter init --------------------------------

def _kaiming_conv(key, cout, cin, kh, kw):
    # kaiming_normal_(mode='fan_out', nonlinearity='relu'): std = sqrt(2 / (Cout*kh*kw))
    fan_out = cout * kh * kw
    std = math.sqrt(2.0 / fan_out)
    return jax.random.normal(key, (cout, cin, kh, kw), jnp.float32) * std


def _make_bn(c):
    return dict(gamma=jnp.ones((c,), jnp.float32),
                beta=jnp.zeros((c,), jnp.float32),
                mean=jnp.zeros((c,), jnp.float32),
                var=jnp.ones((c,), jnp.float32))


def build_params(key, block_layers=(1, 1, 1, 1), num_classes=16):
    inplanes = 64
    keys = iter(jax.random.split(key, 256))
    layers = []
    for planes, blocks, stride in zip((64, 128, 256, 512), block_layers, (1, 2, 2, 2)):
        layer = []
        for bi in range(blocks):
            s = stride if bi == 0 else 1
            bp = dict(
                conv1_w=_kaiming_conv(next(keys), planes, inplanes, 3, 3),
                bn1=_make_bn(planes),
                conv2_w=_kaiming_conv(next(keys), planes, planes, 3, 3),
                bn2=_make_bn(planes),
            )
            if s != 1 or inplanes != planes:
                bp["down_w"] = _kaiming_conv(next(keys), planes, inplanes, 1, 1)
                bp["down_bn"] = _make_bn(planes)
            inplanes = planes
            layer.append(bp)
        layers.append(layer)
    kw_, kb_ = jax.random.split(next(keys))
    bound = 1.0 / math.sqrt(512.0)  # PyTorch default Linear init
    fc_w = jax.random.uniform(kw_, (num_classes, 512), jnp.float32, -bound, bound)
    fc_b = jax.random.uniform(kb_, (num_classes,), jnp.float32, -bound, bound)
    return dict(layers=layers, fc_w=fc_w, fc_b=fc_b)


# ------------------------------------ main --------------------------------------

if __name__ == "__main__":
    NUM_CLASSES = 16
    key = jax.random.PRNGKey(0)
    kx, kp = jax.random.split(key)

    raw = build_params(kp, block_layers=(1, 1, 1, 1), num_classes=NUM_CLASSES)
    params = prepare_params(raw)   # fold BN, pad lane-dense, pre-cast weights to bf16

    # resnet_server starts at layer1, so the input already has 64 channels.
    # NCHW like PyTorch: (batch=2, channels=64, H=8, W=8)
    x = jax.random.normal(kx, (2, 64, 8, 8), jnp.float32)

    fwd = jax.jit(resnet_server_forward)
    y_pad = jax.block_until_ready(fwd(x, params))
    y = y_pad[:, :NUM_CLASSES]

    assert y.shape == (2, NUM_CLASSES), y.shape
    assert bool(jnp.all(jnp.isfinite(y)))
    print("KERNEL_OK")
</pallas_src>

<mosaic_0001>
module attributes {stable_mosaic.version = 11 : i64} {
  func.func @_conv_matmul_kernel(%arg0: i32, %arg1: i32, %arg2: memref<1x128x128xbf16, #tpu.memory_space<vmem>>, %arg3: memref<1x128x128xbf16, #tpu.memory_space<vmem>>, %arg4: memref<1x128xf32, #tpu.memory_space<vmem>>, %arg5: memref<128x128xbf16, #tpu.memory_space<vmem>>, %arg6: memref<128x128xf32, #tpu.memory_space<vmem>>) attributes {dimension_semantics = [#tpu.dimension_semantics<parallel>, #tpu.dimension_semantics<arbitrary>], iteration_bounds = array<i64: 1, 9>, scalar_prefetch = 0 : i64, scratch_operands = 1 : i64, tpu.core_type = #tpu.core_type<tc>, window_params = [{transform_indices = @transform_0, window_bounds = array<i64: 1, 128, 128>}, {transform_indices = @transform_1, window_bounds = array<i64: 1, 128, 128>}, {pipeline_mode = #tpu.pipeline_mode<synchronous>, transform_indices = @transform_2, window_bounds = array<i64: 1, 128>}, {transform_indices = @transform_3, window_bounds = array<i64: 128, 128>}]} {
    %c0_i32 = arith.constant 0 : i32
    %0 = arith.cmpi eq, %arg1, %c0_i32 : i32
    %1 = arith.extui %0 : i1 to i32
    %c0_i32_0 = arith.constant 0 : i32
    %2 = arith.cmpi ne, %1, %c0_i32_0 : i32
    scf.if %2 {
      %cst_11 = arith.constant 0.000000e+00 : f32
      %14 = vector.broadcast %cst_11 : f32 to vector<128x128xf32>
      %c0_12 = arith.constant 0 : index
      %c0_13 = arith.constant 0 : index
      %15 = vector.load %arg6[%c0_12, %c0_13] : memref<128x128xf32, #tpu.memory_space<vmem>>, vector<128x128xf32>
      tpu.vector_store %arg6[%c0_12, %c0_13], %14 {strides = array<i32>} : memref<128x128xf32, #tpu.memory_space<vmem>>, vector<128x128xf32>,
    } else {
    }
    %c0 = arith.constant 0 : index
    %c0_1 = arith.constant 0 : index
    %3 = vector.load %arg6[%c0, %c0_1] : memref<128x128xf32, #tpu.memory_space<vmem>>, vector<128x128xf32>
    %c0_2 = arith.constant 0 : index
    %c0_3 = arith.constant 0 : index
    %c0_4 = arith.constant 0 : index
    %4 = vector.load %arg2[%c0_2, %c0_3, %c0_4] : memref<1x128x128xbf16, #tpu.memory_space<vmem>>, vector<1x128x128xbf16>
    %5 = vector.shape_cast %4 : vector<1x128x128xbf16> to vector<128x128xbf16>
    %c0_5 = arith.constant 0 : index
    %c0_6 = arith.constant 0 : index
    %c0_7 = arith.constant 0 : index
    %6 = vector.load %arg3[%c0_5, %c0_6, %c0_7] : memref<1x128x128xbf16, #tpu.memory_space<vmem>>, vector<1x128x128xbf16>
    %7 = vector.shape_cast %6 : vector<1x128x128xbf16> to vector<128x128xbf16>
    %cst = arith.constant dense<0.000000e+00> : vector<128x128xf32>
    %8 = tpu.matmul %5, %7, %cst {dimension_numbers = #tpu.dot_dimension_numbers<[1], [0], [0], [1], [0, 0, 1, 1], [], []>} : vector<128x128xbf16>, vector<128x128xbf16>, vector<128x128xf32> -> vector<128x128xf32>
    %9 = arith.addf %3, %8 : vector<128x128xf32>
    %c0_8 = arith.constant 0 : index
    %c0_9 = arith.constant 0 : index
    %10 = vector.load %arg6[%c0_8, %c0_9] : memref<128x128xf32, #tpu.memory_space<vmem>>, vector<128x128xf32>
    tpu.vector_store %arg6[%c0_8, %c0_9], %9 {strides = array<i32>} : memref<128x128xf32, #tpu.memory_space<vmem>>, vector<128x128xf32>,
    %c8_i32 = arith.constant 8 : i32
    %11 = arith.cmpi eq, %arg1, %c8_i32 : i32
    %12 = arith.extui %11 : i1 to i32
    %c0_i32_10 = arith.constant 0 : i32
    %13 = arith.cmpi ne, %12, %c0_i32_10 : i32
    scf.if %13 {
      %c0_11 = arith.constant 0 : index
      %c0_12 = arith.constant 0 : index
      %14 = vector.load %arg6[%c0_11, %c0_12] : memref<128x128xf32, #tpu.memory_space<vmem>>, vector<128x128xf32>
      %c0_13 = arith.constant 0 : index
      %c0_14 = arith.constant 0 : index
      %15 = vector.load %arg4[%c0_13, %c0_14] : memref<1x128xf32, #tpu.memory_space<vmem>>, vector<1x128xf32>
      %16 = vector.broadcast %15 : vector<1x128xf32> to vector<128x128xf32>
      %17 = arith.addf %14, %16 : vector<128x128xf32>
      %cst_15 = arith.constant 0.000000e+00 : f32
      %18 = vector.broadcast %cst_15 : f32 to vector<128x128xf32>
      %19 = arith.maximumf %17, %18 : vector<128x128xf32>
      %20 = arith.truncf %19 : vector<128x128xf32> to vector<128x128xbf16>
      %c0_16 = arith.constant 0 : index
      %c0_17 = arith.constant 0 : index
      %21 = vector.load %arg5[%c0_16, %c0_17] : memref<128x128xbf16, #tpu.memory_space<vmem>>, vector<128x128xbf16>
      tpu.vector_store %arg5[%c0_16, %c0_17], %20 {strides = array<i32>} : memref<128x128xbf16, #tpu.memory_space<vmem>>, vector<128x128xbf16>,
    } else {
    }
    return
  }
  func.func @transform_0(%arg0: i32, %arg1: i32) -> (i32, i32, i32) {
    %c0_i32 = arith.constant 0 : i32
    %c0_i32_0 = arith.constant 0 : i32
    return %arg1, %arg0, %c0_i32 : i32, i32, i32
  }
  func.func @transform_1(%arg0: i32, %arg1: i32) -> (i32, i32, i32) {
    %c0_i32 = arith.constant 0 : i32
    %c0_i32_0 = arith.constant 0 : i32
    %c0_i32_1 = arith.constant 0 : i32
    return %arg1, %c0_i32, %c0_i32_0 : i32, i32, i32
  }
  func.func @transform_2(%arg0: i32, %arg1: i32) -> (i32, i32) {
    %c0_i32 = arith.constant 0 : i32
    %c0_i32_0 = arith.constant 0 : i32
    %c0_i32_1 = arith.constant 0 : i32
    return %c0_i32, %c0_i32_0 : i32, i32
  }
  func.func @transform_3(%arg0: i32, %arg1: i32) -> (i32, i32) {
    %c0_i32 = arith.constant 0 : i32
    %c0_i32_0 = arith.constant 0 : i32
    return %arg0, %c0_i32 : i32, i32
  }
}

module attributes {stable_mosaic.version = 11 : i64} {
  func.func @_conv_matmul_kernel(%arg0: i32, %arg1: i32, %arg2: memref<1x128x128xbf16, #tpu.memory_space<vmem>>, %arg3: memref<1x128x128xbf16, #tpu.memory_space<vmem>>, %arg4: memref<1x128xf32, #tpu.memory_space<vmem>>, %arg5: memref<128x128xbf16, #tpu.memory_space<vmem>>, %arg6: memref<128x128xbf16, #tpu.memory_space<vmem>>, %arg7: memref<128x128xf32, #tpu.memory_space<vmem>>) attributes {dimension_semantics = [#tpu.dimension_semantics<parallel>, #tpu.dimension_semantics<arbitrary>], iteration_bounds = array<i64: 1, 9>, scalar_prefetch = 0 : i64, scratch_operands = 1 : i64, tpu.core_type = #tpu.core_type<tc>, window_params = [{transform_indices = @transform_0, window_bounds = array<i64: 1, 128, 128>}, {transform_indices = @transform_1, window_bounds = array<i64: 1, 128, 128>}, {pipeline_mode = #tpu.pipeline_mode<synchronous>, transform_indices = @transform_2, window_bounds = array<i64: 1, 128>}, {transform_indices = @transform_3, window_bounds = array<i64: 128, 128>}, {transform_indices = @transform_4, window_bounds = array<i64: 128, 128>}]} {
    %c0_i32 = arith.constant 0 : i32
    %0 = arith.cmpi eq, %arg1, %c0_i32 : i32
    %1 = arith.extui %0 : i1 to i32
    %c0_i32_0 = arith.constant 0 : i32
    %2 = arith.cmpi ne, %1, %c0_i32_0 : i32
    scf.if %2 {
      %cst_11 = arith.constant 0.000000e+00 : f32
      %14 = vector.broadcast %cst_11 : f32 to vector<128x128xf32>
      %c0_12 = arith.constant 0 : index
      %c0_13 = arith.constant 0 : index
      %15 = vector.load %arg7[%c0_12, %c0_13] : memref<128x128xf32, #tpu.memory_space<vmem>>, vector<128x128xf32>
      tpu.vector_store %arg7[%c0_12, %c0_13], %14 {strides = array<i32>} : memref<128x128xf32, #tpu.memory_space<vmem>>, vector<128x128xf32>,
    } else {
    }
    %c0 = arith.constant 0 : index
    %c0_1 = arith.constant 0 : index
    %3 = vector.load %arg7[%c0, %c0_1] : memref<128x128xf32, #tpu.memory_space<vmem>>, vector<128x128xf32>
    %c0_2 = arith.constant 0 : index
    %c0_3 = arith.constant 0 : index
    %c0_4 = arith.constant 0 : index
    %4 = vector.load %arg2[%c0_2, %c0_3, %c0_4] : memref<1x128x128xbf16, #tpu.memory_space<vmem>>, vector<1x128x128xbf16>
    %5 = vector.shape_cast %4 : vector<1x128x128xbf16> to vector<128x128xbf16>
    %c0_5 = arith.constant 0 : index
    %c0_6 = arith.constant 0 : index
    %c0_7 = arith.constant 0 : index
    %6 = vector.load %arg3[%c0_5, %c0_6, %c0_7] : memref<1x128x128xbf16, #tpu.memory_space<vmem>>, vector<1x128x128xbf16>
    %7 = vector.shape_cast %6 : vector<1x128x128xbf16> to vector<128x128xbf16>
    %cst = arith.constant dense<0.000000e+00> : vector<128x128xf32>
    %8 = tpu.matmul %5, %7, %cst {dimension_numbers = #tpu.dot_dimension_numbers<[1], [0], [0], [1], [0, 0, 1, 1], [], []>} : vector<128x128xbf16>, vector<128x128xbf16>, vector<128x128xf32> -> vector<128x128xf32>
    %9 = arith.addf %3, %8 : vector<128x128xf32>
    %c0_8 = arith.constant 0 : index
    %c0_9 = arith.constant 0 : index
    %10 = vector.load %arg7[%c0_8, %c0_9] : memref<128x128xf32, #tpu.memory_space<vmem>>, vector<128x128xf32>
    tpu.vector_store %arg7[%c0_8, %c0_9], %9 {strides = array<i32>} : memref<128x128xf32, #tpu.memory_space<vmem>>, vector<128x128xf32>,
    %c8_i32 = arith.constant 8 : i32
    %11 = arith.cmpi eq, %arg1, %c8_i32 : i32
    %12 = arith.extui %11 : i1 to i32
    %c0_i32_10 = arith.constant 0 : i32
    %13 = arith.cmpi ne, %12, %c0_i32_10 : i32
    scf.if %13 {
      %c0_11 = arith.constant 0 : index
      %c0_12 = arith.constant 0 : index
      %14 = vector.load %arg7[%c0_11, %c0_12] : memref<128x128xf32, #tpu.memory_space<vmem>>, vector<128x128xf32>
      %c0_13 = arith.constant 0 : index
      %c0_14 = arith.constant 0 : index
      %15 = vector.load %arg4[%c0_13, %c0_14] : memref<1x128xf32, #tpu.memory_space<vmem>>, vector<1x128xf32>
      %16 = vector.broadcast %15 : vector<1x128xf32> to vector<128x128xf32>
      %17 = arith.addf %14, %16 : vector<128x128xf32>
      %c0_15 = arith.constant 0 : index
      %c0_16 = arith.constant 0 : index
      %18 = vector.load %arg5[%c0_15, %c0_16] : memref<128x128xbf16, #tpu.memory_space<vmem>>, vector<128x128xbf16>
      %19 = arith.extf %18 : vector<128x128xbf16> to vector<128x128xf32>
      %20 = arith.addf %17, %19 : vector<128x128xf32>
      %cst_17 = arith.constant 0.000000e+00 : f32
      %21 = vector.broadcast %cst_17 : f32 to vector<128x128xf32>
      %22 = arith.maximumf %20, %21 : vector<128x128xf32>
      %23 = arith.truncf %22 : vector<128x128xf32> to vector<128x128xbf16>
      %c0_18 = arith.constant 0 : index
      %c0_19 = arith.constant 0 : index
      %24 = vector.load %arg6[%c0_18, %c0_19] : memref<128x128xbf16, #tpu.memory_space<vmem>>, vector<128x128xbf16>
      tpu.vector_store %arg6[%c0_18, %c0_19], %23 {strides = array<i32>} : memref<128x128xbf16, #tpu.memory_space<vmem>>, vector<128x128xbf16>,
    } else {
    }
    return
  }
  func.func @transform_0(%arg0: i32, %arg1: i32) -> (i32, i32, i32) {
    %c0_i32 = arith.constant 0 : i32
    %c0_i32_0 = arith.constant 0 : i32
    return %arg1, %arg0, %c0_i32 : i32, i32, i32
  }
  func.func @transform_1(%arg0: i32, %arg1: i32) -> (i32, i32, i32) {
    %c0_i32 = arith.constant 0 : i32
    %c0_i32_0 = arith.constant 0 : i32
    %c0_i32_1 = arith.constant 0 : i32
    return %arg1, %c0_i32, %c0_i32_0 : i32, i32, i32
  }
  func.func @transform_2(%arg0: i32, %arg1: i32) -> (i32, i32) {
    %c0_i32 = arith.constant 0 : i32
    %c0_i32_0 = arith.constant 0 : i32
    %c0_i32_1 = arith.constant 0 : i32
    return %c0_i32, %c0_i32_0 : i32, i32
  }
  func.func @transform_3(%arg0: i32, %arg1: i32) -> (i32, i32) {
    %c0_i32 = arith.constant 0 : i32
    %c0_i32_0 = arith.constant 0 : i32
    return %arg0, %c0_i32 : i32, i32
  }
  func.func @transform_4(%arg0: i32, %arg1: i32) -> (i32, i32) {
    %c0_i32 = arith.constant 0 : i32
    %c0_i32_0 = arith.constant 0 : i32
    return %arg0, %c0_i32 : i32, i32
  }
}

module attributes {stable_mosaic.version = 11 : i64} {
  func.func @_conv_matmul_kernel(%arg0: i32, %arg1: i32, %arg2: memref<1x32x128xbf16, #tpu.memory_space<vmem>>, %arg3: memref<1x128x128xbf16, #tpu.memory_space<vmem>>, %arg4: memref<1x128xf32, #tpu.memory_space<vmem>>, %arg5: memref<32x128xbf16, #tpu.memory_space<vmem>>, %arg6: memref<32x128xf32, #tpu.memory_space<vmem>>) attributes {dimension_semantics = [#tpu.dimension_semantics<parallel>, #tpu.dimension_semantics<arbitrary>], iteration_bounds = array<i64: 1, 9>, scalar_prefetch = 0 : i64, scratch_operands = 1 : i64, tpu.core_type = #tpu.core_type<tc>, window_params = [{transform_indices = @transform_0, window_bounds = array<i64: 1, 32, 128>}, {transform_indices = @transform_1, window_bounds = array<i64: 1, 128, 128>}, {pipeline_mode = #tpu.pipeline_mode<synchronous>, transform_indices = @transform_2, window_bounds = array<i64: 1, 128>}, {transform_indices = @transform_3, window_bounds = array<i64: 32, 128>}]} {
    %c0_i32 = arith.constant 0 : i32
    %0 = arith.cmpi eq, %arg1, %c0_i32 : i32
    %1 = arith.extui %0 : i1 to i32
    %c0_i32_0 = arith.constant 0 : i32
    %2 = arith.cmpi ne, %1, %c0_i32_0 : i32
    scf.if %2 {
      %cst_11 = arith.constant 0.000000e+00 : f32
      %14 = vector.broadcast %cst_11 : f32 to vector<32x128xf32>
      %c0_12 = arith.constant 0 : index
      %c0_13 = arith.constant 0 : index
      %15 = vector.load %arg6[%c0_12, %c0_13] : memref<32x128xf32, #tpu.memory_space<vmem>>, vector<32x128xf32>
      tpu.vector_store %arg6[%c0_12, %c0_13], %14 {strides = array<i32>} : memref<32x128xf32, #tpu.memory_space<vmem>>, vector<32x128xf32>,
    } else {
    }
    %c0 = arith.constant 0 : index
    %c0_1 = arith.constant 0 : index
    %3 = vector.load %arg6[%c0, %c0_1] : memref<32x128xf32, #tpu.memory_space<vmem>>, vector<32x128xf32>
    %c0_2 = arith.constant 0 : index
    %c0_3 = arith.constant 0 : index
    %c0_4 = arith.constant 0 : index
    %4 = vector.load %arg2[%c0_2, %c0_3, %c0_4] : memref<1x32x128xbf16, #tpu.memory_space<vmem>>, vector<1x32x128xbf16>
    %5 = vector.shape_cast %4 : vector<1x32x128xbf16> to vector<32x128xbf16>
    %c0_5 = arith.constant 0 : index
    %c0_6 = arith.constant 0 : index
    %c0_7 = arith.constant 0 : index
    %6 = vector.load %arg3[%c0_5, %c0_6, %c0_7] : memref<1x128x128xbf16, #tpu.memory_space<vmem>>, vector<1x128x128xbf16>
    %7 = vector.shape_cast %6 : vector<1x128x128xbf16> to vector<128x128xbf16>
    %cst = arith.constant dense<0.000000e+00> : vector<32x128xf32>
    %8 = tpu.matmul %5, %7, %cst {dimension_numbers = #tpu.dot_dimension_numbers<[1], [0], [0], [1], [0, 0, 1, 1], [], []>} : vector<32x128xbf16>, vector<128x128xbf16>, vector<32x128xf32> -> vector<32x128xf32>
    %9 = arith.addf %3, %8 : vector<32x128xf32>
    %c0_8 = arith.constant 0 : index
    %c0_9 = arith.constant 0 : index
    %10 = vector.load %arg6[%c0_8, %c0_9] : memref<32x128xf32, #tpu.memory_space<vmem>>, vector<32x128xf32>
    tpu.vector_store %arg6[%c0_8, %c0_9], %9 {strides = array<i32>} : memref<32x128xf32, #tpu.memory_space<vmem>>, vector<32x128xf32>,
    %c8_i32 = arith.constant 8 : i32
    %11 = arith.cmpi eq, %arg1, %c8_i32 : i32
    %12 = arith.extui %11 : i1 to i32
    %c0_i32_10 = arith.constant 0 : i32
    %13 = arith.cmpi ne, %12, %c0_i32_10 : i32
    scf.if %13 {
      %c0_11 = arith.constant 0 : index
      %c0_12 = arith.constant 0 : index
      %14 = vector.load %arg6[%c0_11, %c0_12] : memref<32x128xf32, #tpu.memory_space<vmem>>, vector<32x128xf32>
      %c0_13 = arith.constant 0 : index
      %c0_14 = arith.constant 0 : index
      %15 = vector.load %arg4[%c0_13, %c0_14] : memref<1x128xf32, #tpu.memory_space<vmem>>, vector<1x128xf32>
      %16 = vector.broadcast %15 : vector<1x128xf32> to vector<32x128xf32>
      %17 = arith.addf %14, %16 : vector<32x128xf32>
      %cst_15 = arith.constant 0.000000e+00 : f32
      %18 = vector.broadcast %cst_15 : f32 to vector<32x128xf32>
      %19 = arith.maximumf %17, %18 : vector<32x128xf32>
      %20 = arith.truncf %19 : vector<32x128xf32> to vector<32x128xbf16>
      %c0_16 = arith.constant 0 : index
      %c0_17 = arith.constant 0 : index
      %21 = vector.load %arg5[%c0_16, %c0_17] : memref<32x128xbf16, #tpu.memory_space<vmem>>, vector<32x128xbf16>
      tpu.vector_store %arg5[%c0_16, %c0_17], %20 {strides = array<i32>} : memref<32x128xbf16, #tpu.memory_space<vmem>>, vector<32x128xbf16>,
    } else {
    }
    return
  }
  func.func @transform_0(%arg0: i32, %arg1: i32) -> (i32, i32, i32) {
    %c0_i32 = arith.constant 0 : i32
    %c0_i32_0 = arith.constant 0 : i32
    return %arg1, %arg0, %c0_i32 : i32, i32, i32
  }
  func.func @transform_1(%arg0: i32, %arg1: i32) -> (i32, i32, i32) {
    %c0_i32 = arith.constant 0 : i32
    %c0_i32_0 = arith.constant 0 : i32
    %c0_i32_1 = arith.constant 0 : i32
    return %arg1, %c0_i32, %c0_i32_0 : i32, i32, i32
  }
  func.func @transform_2(%arg0: i32, %arg1: i32) -> (i32, i32) {
    %c0_i32 = arith.constant 0 : i32
    %c0_i32_0 = arith.constant 0 : i32
    %c0_i32_1 = arith.constant 0 : i32
    return %c0_i32, %c0_i32_0 : i32, i32
  }
  func.func @transform_3(%arg0: i32, %arg1: i32) -> (i32, i32) {
    %c0_i32 = arith.constant 0 : i32
    %c0_i32_0 = arith.constant 0 : i32
    return %arg0, %c0_i32 : i32, i32
  }
}

module attributes {stable_mosaic.version = 11 : i64} {
  func.func @_conv_matmul_kernel(%arg0: i32, %arg1: i32, %arg2: memref<1x32x128xbf16, #tpu.memory_space<vmem>>, %arg3: memref<1x128x128xbf16, #tpu.memory_space<vmem>>, %arg4: memref<1x128xf32, #tpu.memory_space<vmem>>, %arg5: memref<32x128xbf16, #tpu.memory_space<vmem>>, %arg6: memref<32x128xbf16, #tpu.memory_space<vmem>>, %arg7: memref<32x128xf32, #tpu.memory_space<vmem>>) attributes {dimension_semantics = [#tpu.dimension_semantics<parallel>, #tpu.dimension_semantics<arbitrary>], iteration_bounds = array<i64: 1, 9>, scalar_prefetch = 0 : i64, scratch_operands = 1 : i64, tpu.core_type = #tpu.core_type<tc>, window_params = [{transform_indices = @transform_0, window_bounds = array<i64: 1, 32, 128>}, {transform_indices = @transform_1, window_bounds = array<i64: 1, 128, 128>}, {pipeline_mode = #tpu.pipeline_mode<synchronous>, transform_indices = @transform_2, window_bounds = array<i64: 1, 128>}, {transform_indices = @transform_3, window_bounds = array<i64: 32, 128>}, {transform_indices = @transform_4, window_bounds = array<i64: 32, 128>}]} {
    %c0_i32 = arith.constant 0 : i32
    %0 = arith.cmpi eq, %arg1, %c0_i32 : i32
    %1 = arith.extui %0 : i1 to i32
    %c0_i32_0 = arith.constant 0 : i32
    %2 = arith.cmpi ne, %1, %c0_i32_0 : i32
    scf.if %2 {
      %cst_11 = arith.constant 0.000000e+00 : f32
      %14 = vector.broadcast %cst_11 : f32 to vector<32x128xf32>
      %c0_12 = arith.constant 0 : index
      %c0_13 = arith.constant 0 : index
      %15 = vector.load %arg7[%c0_12, %c0_13] : memref<32x128xf32, #tpu.memory_space<vmem>>, vector<32x128xf32>
      tpu.vector_store %arg7[%c0_12, %c0_13], %14 {strides = array<i32>} : memref<32x128xf32, #tpu.memory_space<vmem>>, vector<32x128xf32>,
    } else {
    }
    %c0 = arith.constant 0 : index
    %c0_1 = arith.constant 0 : index
    %3 = vector.load %arg7[%c0, %c0_1] : memref<32x128xf32, #tpu.memory_space<vmem>>, vector<32x128xf32>
    %c0_2 = arith.constant 0 : index
    %c0_3 = arith.constant 0 : index
    %c0_4 = arith.constant 0 : index
    %4 = vector.load %arg2[%c0_2, %c0_3, %c0_4] : memref<1x32x128xbf16, #tpu.memory_space<vmem>>, vector<1x32x128xbf16>
    %5 = vector.shape_cast %4 : vector<1x32x128xbf16> to vector<32x128xbf16>
    %c0_5 = arith.constant 0 : index
    %c0_6 = arith.constant 0 : index
    %c0_7 = arith.constant 0 : index
    %6 = vector.load %arg3[%c0_5, %c0_6, %c0_7] : memref<1x128x128xbf16, #tpu.memory_space<vmem>>, vector<1x128x128xbf16>
    %7 = vector.shape_cast %6 : vector<1x128x128xbf16> to vector<128x128xbf16>
    %cst = arith.constant dense<0.000000e+00> : vector<32x128xf32>
    %8 = tpu.matmul %5, %7, %cst {dimension_numbers = #tpu.dot_dimension_numbers<[1], [0], [0], [1], [0, 0, 1, 1], [], []>} : vector<32x128xbf16>, vector<128x128xbf16>, vector<32x128xf32> -> vector<32x128xf32>
    %9 = arith.addf %3, %8 : vector<32x128xf32>
    %c0_8 = arith.constant 0 : index
    %c0_9 = arith.constant 0 : index
    %10 = vector.load %arg7[%c0_8, %c0_9] : memref<32x128xf32, #tpu.memory_space<vmem>>, vector<32x128xf32>
    tpu.vector_store %arg7[%c0_8, %c0_9], %9 {strides = array<i32>} : memref<32x128xf32, #tpu.memory_space<vmem>>, vector<32x128xf32>,
    %c8_i32 = arith.constant 8 : i32
    %11 = arith.cmpi eq, %arg1, %c8_i32 : i32
    %12 = arith.extui %11 : i1 to i32
    %c0_i32_10 = arith.constant 0 : i32
    %13 = arith.cmpi ne, %12, %c0_i32_10 : i32
    scf.if %13 {
      %c0_11 = arith.constant 0 : index
      %c0_12 = arith.constant 0 : index
      %14 = vector.load %arg7[%c0_11, %c0_12] : memref<32x128xf32, #tpu.memory_space<vmem>>, vector<32x128xf32>
      %c0_13 = arith.constant 0 : index
      %c0_14 = arith.constant 0 : index
      %15 = vector.load %arg4[%c0_13, %c0_14] : memref<1x128xf32, #tpu.memory_space<vmem>>, vector<1x128xf32>
      %16 = vector.broadcast %15 : vector<1x128xf32> to vector<32x128xf32>
      %17 = arith.addf %14, %16 : vector<32x128xf32>
      %c0_15 = arith.constant 0 : index
      %c0_16 = arith.constant 0 : index
      %18 = vector.load %arg5[%c0_15, %c0_16] : memref<32x128xbf16, #tpu.memory_space<vmem>>, vector<32x128xbf16>
      %19 = arith.extf %18 : vector<32x128xbf16> to vector<32x128xf32>
      %20 = arith.addf %17, %19 : vector<32x128xf32>
      %cst_17 = arith.constant 0.000000e+00 : f32
      %21 = vector.broadcast %cst_17 : f32 to vector<32x128xf32>
      %22 = arith.maximumf %20, %21 : vector<32x128xf32>
      %23 = arith.truncf %22 : vector<32x128xf32> to vector<32x128xbf16>
      %c0_18 = arith.constant 0 : index
      %c0_19 = arith.constant 0 : index
      %24 = vector.load %arg6[%c0_18, %c0_19] : memref<32x128xbf16, #tpu.memory_space<vmem>>, vector<32x128xbf16>
      tpu.vector_store %arg6[%c0_18, %c0_19], %23 {strides = array<i32>} : memref<32x128xbf16, #tpu.memory_space<vmem>>, vector<32x128xbf16>,
    } else {
    }
    return
  }
  func.func @transform_0(%arg0: i32, %arg1: i32) -> (i32, i32, i32) {
    %c0_i32 = arith.constant 0 : i32
    %c0_i32_0 = arith.constant 0 : i32
    return %arg1, %arg0, %c0_i32 : i32, i32, i32
  }
  func.func @transform_1(%arg0: i32, %arg1: i32) -> (i32, i32, i32) {
    %c0_i32 = arith.constant 0 : i32
    %c0_i32_0 = arith.constant 0 : i32
    %c0_i32_1 = arith.constant 0 : i32
    return %arg1, %c0_i32, %c0_i32_0 : i32, i32, i32
  }
  func.func @transform_2(%arg0: i32, %arg1: i32) -> (i32, i32) {
    %c0_i32 = arith.constant 0 : i32
    %c0_i32_0 = arith.constant 0 : i32
    %c0_i32_1 = arith.constant 0 : i32
    return %c0_i32, %c0_i32_0 : i32, i32
  }
  func.func @transform_3(%arg0: i32, %arg1: i32) -> (i32, i32) {
    %c0_i32 = arith.constant 0 : i32
    %c0_i32_0 = arith.constant 0 : i32
    return %arg0, %c0_i32 : i32, i32
  }
  func.func @transform_4(%arg0: i32, %arg1: i32) -> (i32, i32) {
    %c0_i32 = arith.constant 0 : i32
    %c0_i32_0 = arith.constant 0 : i32
    return %arg0, %c0_i32 : i32, i32
  }
}

module attributes {stable_mosaic.version = 11 : i64} {
  func.func @_conv_matmul_kernel(%arg0: i32, %arg1: i32, %arg2: memref<1x32x128xbf16, #tpu.memory_space<vmem>>, %arg3: memref<1x128x128xbf16, #tpu.memory_space<vmem>>, %arg4: memref<1x128xf32, #tpu.memory_space<vmem>>, %arg5: memref<32x128xbf16, #tpu.memory_space<vmem>>, %arg6: memref<32x128xf32, #tpu.memory_space<vmem>>) attributes {dimension_semantics = [#tpu.dimension_semantics<parallel>, #tpu.dimension_semantics<arbitrary>], iteration_bounds = array<i64: 1, 1>, scalar_prefetch = 0 : i64, scratch_operands = 1 : i64, tpu.core_type = #tpu.core_type<tc>, window_params = [{transform_indices = @transform_0, window_bounds = array<i64: 1, 32, 128>}, {transform_indices = @transform_1, window_bounds = array<i64: 1, 128, 128>}, {pipeline_mode = #tpu.pipeline_mode<synchronous>, transform_indices = @transform_2, window_bounds = array<i64: 1, 128>}, {transform_indices = @transform_3, window_bounds = array<i64: 32, 128>}]} {
    %c0_i32 = arith.constant 0 : i32
    %0 = arith.cmpi eq, %arg1, %c0_i32 : i32
    %1 = arith.extui %0 : i1 to i32
    %c0_i32_0 = arith.constant 0 : i32
    %2 = arith.cmpi ne, %1, %c0_i32_0 : i32
    scf.if %2 {
      %cst_12 = arith.constant 0.000000e+00 : f32
      %14 = vector.broadcast %cst_12 : f32 to vector<32x128xf32>
      %c0_13 = arith.constant 0 : index
      %c0_14 = arith.constant 0 : index
      %15 = vector.load %arg6[%c0_13, %c0_14] : memref<32x128xf32, #tpu.memory_space<vmem>>, vector<32x128xf32>
      tpu.vector_store %arg6[%c0_13, %c0_14], %14 {strides = array<i32>} : memref<32x128xf32, #tpu.memory_space<vmem>>, vector<32x128xf32>,
    } else {
    }
    %c0 = arith.constant 0 : index
    %c0_1 = arith.constant 0 : index
    %3 = vector.load %arg6[%c0, %c0_1] : memref<32x128xf32, #tpu.memory_space<vmem>>, vector<32x128xf32>
    %c0_2 = arith.constant 0 : index
    %c0_3 = arith.constant 0 : index
    %c0_4 = arith.constant 0 : index
    %4 = vector.load %arg2[%c0_2, %c0_3, %c0_4] : memref<1x32x128xbf16, #tpu.memory_space<vmem>>, vector<1x32x128xbf16>
    %5 = vector.shape_cast %4 : vector<1x32x128xbf16> to vector<32x128xbf16>
    %c0_5 = arith.constant 0 : index
    %c0_6 = arith.constant 0 : index
    %c0_7 = arith.constant 0 : index
    %6 = vector.load %arg3[%c0_5, %c0_6, %c0_7] : memref<1x128x128xbf16, #tpu.memory_space<vmem>>, vector<1x128x128xbf16>
    %7 = vector.shape_cast %6 : vector<1x128x128xbf16> to vector<128x128xbf16>
    %cst = arith.constant dense<0.000000e+00> : vector<32x128xf32>
    %8 = tpu.matmul %5, %7, %cst {dimension_numbers = #tpu.dot_dimension_numbers<[1], [0], [0], [1], [0, 0, 1, 1], [], []>} : vector<32x128xbf16>, vector<128x128xbf16>, vector<32x128xf32> -> vector<32x128xf32>
    %9 = arith.addf %3, %8 : vector<32x128xf32>
    %c0_8 = arith.constant 0 : index
    %c0_9 = arith.constant 0 : index
    %10 = vector.load %arg6[%c0_8, %c0_9] : memref<32x128xf32, #tpu.memory_space<vmem>>, vector<32x128xf32>
    tpu.vector_store %arg6[%c0_8, %c0_9], %9 {strides = array<i32>} : memref<32x128xf32, #tpu.memory_space<vmem>>, vector<32x128xf32>,
    %c0_i32_10 = arith.constant 0 : i32
    %11 = arith.cmpi eq, %arg1, %c0_i32_10 : i32
    %12 = arith.extui %11 : i1 to i32
    %c0_i32_11 = arith.constant 0 : i32
    %13 = arith.cmpi ne, %12, %c0_i32_11 : i32
    scf.if %13 {
      %c0_12 = arith.constant 0 : index
      %c0_13 = arith.constant 0 : index
      %14 = vector.load %arg6[%c0_12, %c0_13] : memref<32x128xf32, #tpu.memory_space<vmem>>, vector<32x128xf32>
      %c0_14 = arith.constant 0 : index
      %c0_15 = arith.constant 0 : index
      %15 = vector.load %arg4[%c0_14, %c0_15] : memref<1x128xf32, #tpu.memory_space<vmem>>, vector<1x128xf32>
      %16 = vector.broadcast %15 : vector<1x128xf32> to vector<32x128xf32>
      %17 = arith.addf %14, %16 : vector<32x128xf32>
      %18 = arith.truncf %17 : vector<32x128xf32> to vector<32x128xbf16>
      %c0_16 = arith.constant 0 : index
      %c0_17 = arith.constant 0 : index
      %19 = vector.load %arg5[%c0_16, %c0_17] : memref<32x128xbf16, #tpu.memory_space<vmem>>, vector<32x128xbf16>
      tpu.vector_store %arg5[%c0_16, %c0_17], %18 {strides = array<i32>} : memref<32x128xbf16, #tpu.memory_space<vmem>>, vector<32x128xbf16>,
    } else {
    }
    return
  }
  func.func @transform_0(%arg0: i32, %arg1: i32) -> (i32, i32, i32) {
    %c0_i32 = arith.constant 0 : i32
    %c0_i32_0 = arith.constant 0 : i32
    return %arg1, %arg0, %c0_i32 : i32, i32, i32
  }
  func.func @transform_1(%arg0: i32, %arg1: i32) -> (i32, i32, i32) {
    %c0_i32 = arith.constant 0 : i32
    %c0_i32_0 = arith.constant 0 : i32
    %c0_i32_1 = arith.constant 0 : i32
    return %arg1, %c0_i32, %c0_i32_0 : i32, i32, i32
  }
  func.func @transform_2(%arg0: i32, %arg1: i32) -> (i32, i32) {
    %c0_i32 = arith.constant 0 : i32
    %c0_i32_0 = arith.constant 0 : i32
    %c0_i32_1 = arith.constant 0 : i32
    return %c0_i32, %c0_i32_0 : i32, i32
  }
  func.func @transform_3(%arg0: i32, %arg1: i32) -> (i32, i32) {
    %c0_i32 = arith.constant 0 : i32
    %c0_i32_0 = arith.constant 0 : i32
    return %arg0, %c0_i32 : i32, i32
  }
}

module attributes {stable_mosaic.version = 11 : i64} {
  func.func @_conv_matmul_kernel(%arg0: i32, %arg1: i32, %arg2: memref<1x8x128xbf16, #tpu.memory_space<vmem>>, %arg3: memref<1x128x256xbf16, #tpu.memory_space<vmem>>, %arg4: memref<1x256xf32, #tpu.memory_space<vmem>>, %arg5: memref<8x256xbf16, #tpu.memory_space<vmem>>, %arg6: memref<8x256xf32, #tpu.memory_space<vmem>>) attributes {dimension_semantics = [#tpu.dimension_semantics<parallel>, #tpu.dimension_semantics<arbitrary>], iteration_bounds = array<i64: 1, 9>, scalar_prefetch = 0 : i64, scratch_operands = 1 : i64, tpu.core_type = #tpu.core_type<tc>, window_params = [{transform_indices = @transform_0, window_bounds = array<i64: 1, 8, 128>}, {transform_indices = @transform_1, window_bounds = array<i64: 1, 128, 256>}, {pipeline_mode = #tpu.pipeline_mode<synchronous>, transform_indices = @transform_2, window_bounds = array<i64: 1, 256>}, {transform_indices = @transform_3, window_bounds = array<i64: 8, 256>}]} {
    %c0_i32 = arith.constant 0 : i32
    %0 = arith.cmpi eq, %arg1, %c0_i32 : i32
    %1 = arith.extui %0 : i1 to i32
    %c0_i32_0 = arith.constant 0 : i32
    %2 = arith.cmpi ne, %1, %c0_i32_0 : i32
    scf.if %2 {
      %cst_11 = arith.constant 0.000000e+00 : f32
      %14 = vector.broadcast %cst_11 : f32 to vector<8x256xf32>
      %c0_12 = arith.constant 0 : index
      %c0_13 = arith.constant 0 : index
      %15 = vector.load %arg6[%c0_12, %c0_13] : memref<8x256xf32, #tpu.memory_space<vmem>>, vector<8x256xf32>
      tpu.vector_store %arg6[%c0_12, %c0_13], %14 {strides = array<i32>} : memref<8x256xf32, #tpu.memory_space<vmem>>, vector<8x256xf32>,
    } else {
    }
    %c0 = arith.constant 0 : index
    %c0_1 = arith.constant 0 : index
    %3 = vector.load %arg6[%c0, %c0_1] : memref<8x256xf32, #tpu.memory_space<vmem>>, vector<8x256xf32>
    %c0_2 = arith.constant 0 : index
    %c0_3 = arith.constant 0 : index
    %c0_4 = arith.constant 0 : index
    %4 = vector.load %arg2[%c0_2, %c0_3, %c0_4] : memref<1x8x128xbf16, #tpu.memory_space<vmem>>, vector<1x8x128xbf16>
    %5 = vector.shape_cast %4 : vector<1x8x128xbf16> to vector<8x128xbf16>
    %c0_5 = arith.constant 0 : index
    %c0_6 = arith.constant 0 : index
    %c0_7 = arith.constant 0 : index
    %6 = vector.load %arg3[%c0_5, %c0_6, %c0_7] : memref<1x128x256xbf16, #tpu.memory_space<vmem>>, vector<1x128x256xbf16>
    %7 = vector.shape_cast %6 : vector<1x128x256xbf16> to vector<128x256xbf16>
    %cst = arith.constant dense<0.000000e+00> : vector<8x256xf32>
    %8 = tpu.matmul %5, %7, %cst {dimension_numbers = #tpu.dot_dimension_numbers<[1], [0], [0], [1], [0, 0, 1, 1], [], []>} : vector<8x128xbf16>, vector<128x256xbf16>, vector<8x256xf32> -> vector<8x256xf32>
    %9 = arith.addf %3, %8 : vector<8x256xf32>
    %c0_8 = arith.constant 0 : index
    %c0_9 = arith.constant 0 : index
    %10 = vector.load %arg6[%c0_8, %c0_9] : memref<8x256xf32, #tpu.memory_space<vmem>>, vector<8x256xf32>
    tpu.vector_store %arg6[%c0_8, %c0_9], %9 {strides = array<i32>} : memref<8x256xf32, #tpu.memory_space<vmem>>, vector<8x256xf32>,
    %c8_i32 = arith.constant 8 : i32
    %11 = arith.cmpi eq, %arg1, %c8_i32 : i32
    %12 = arith.extui %11 : i1 to i32
    %c0_i32_10 = arith.constant 0 : i32
    %13 = arith.cmpi ne, %12, %c0_i32_10 : i32
    scf.if %13 {
      %c0_11 = arith.constant 0 : index
      %c0_12 = arith.constant 0 : index
      %14 = vector.load %arg6[%c0_11, %c0_12] : memref<8x256xf32, #tpu.memory_space<vmem>>, vector<8x256xf32>
      %c0_13 = arith.constant 0 : index
      %c0_14 = arith.constant 0 : index
      %15 = vector.load %arg4[%c0_13, %c0_14] : memref<1x256xf32, #tpu.memory_space<vmem>>, vector<1x256xf32>
      %16 = vector.broadcast %15 : vector<1x256xf32> to vector<8x256xf32>
      %17 = arith.addf %14, %16 : vector<8x256xf32>
      %cst_15 = arith.constant 0.000000e+00 : f32
      %18 = vector.broadcast %cst_15 : f32 to vector<8x256xf32>
      %19 = arith.maximumf %17, %18 : vector<8x256xf32>
      %20 = arith.truncf %19 : vector<8x256xf32> to vector<8x256xbf16>
      %c0_16 = arith.constant 0 : index
      %c0_17 = arith.constant 0 : index
      %21 = vector.load %arg5[%c0_16, %c0_17] : memref<8x256xbf16, #tpu.memory_space<vmem>>, vector<8x256xbf16>
      tpu.vector_store %arg5[%c0_16, %c0_17], %20 {strides = array<i32>} : memref<8x256xbf16, #tpu.memory_space<vmem>>, vector<8x256xbf16>,
    } else {
    }
    return
  }
  func.func @transform_0(%arg0: i32, %arg1: i32) -> (i32, i32, i32) {
    %c0_i32 = arith.constant 0 : i32
    %c0_i32_0 = arith.constant 0 : i32
    return %arg1, %arg0, %c0_i32 : i32, i32, i32
  }
  func.func @transform_1(%arg0: i32, %arg1: i32) -> (i32, i32, i32) {
    %c0_i32 = arith.constant 0 : i32
    %c0_i32_0 = arith.constant 0 : i32
    %c0_i32_1 = arith.constant 0 : i32
    return %arg1, %c0_i32, %c0_i32_0 : i32, i32, i32
  }
  func.func @transform_2(%arg0: i32, %arg1: i32) -> (i32, i32) {
    %c0_i32 = arith.constant 0 : i32
    %c0_i32_0 = arith.constant 0 : i32
    %c0_i32_1 = arith.constant 0 : i32
    return %c0_i32, %c0_i32_0 : i32, i32
  }
  func.func @transform_3(%arg0: i32, %arg1: i32) -> (i32, i32) {
    %c0_i32 = arith.constant 0 : i32
    %c0_i32_0 = arith.constant 0 : i32
    return %arg0, %c0_i32 : i32, i32
  }
}

module attributes {stable_mosaic.version = 11 : i64} {
  func.func @_conv_matmul_kernel(%arg0: i32, %arg1: i32, %arg2: memref<1x8x128xbf16, #tpu.memory_space<vmem>>, %arg3: memref<1x128x256xbf16, #tpu.memory_space<vmem>>, %arg4: memref<1x256xf32, #tpu.memory_space<vmem>>, %arg5: memref<8x256xbf16, #tpu.memory_space<vmem>>, %arg6: memref<8x256xf32, #tpu.memory_space<vmem>>) attributes {dimension_semantics = [#tpu.dimension_semantics<parallel>, #tpu.dimension_semantics<arbitrary>], iteration_bounds = array<i64: 1, 1>, scalar_prefetch = 0 : i64, scratch_operands = 1 : i64, tpu.core_type = #tpu.core_type<tc>, window_params = [{transform_indices = @transform_0, window_bounds = array<i64: 1, 8, 128>}, {transform_indices = @transform_1, window_bounds = array<i64: 1, 128, 256>}, {pipeline_mode = #tpu.pipeline_mode<synchronous>, transform_indices = @transform_2, window_bounds = array<i64: 1, 256>}, {transform_indices = @transform_3, window_bounds = array<i64: 8, 256>}]} {
    %c0_i32 = arith.constant 0 : i32
    %0 = arith.cmpi eq, %arg1, %c0_i32 : i32
    %1 = arith.extui %0 : i1 to i32
    %c0_i32_0 = arith.constant 0 : i32
    %2 = arith.cmpi ne, %1, %c0_i32_0 : i32
    scf.if %2 {
      %cst_12 = arith.constant 0.000000e+00 : f32
      %14 = vector.broadcast %cst_12 : f32 to vector<8x256xf32>
      %c0_13 = arith.constant 0 : index
      %c0_14 = arith.constant 0 : index
      %15 = vector.load %arg6[%c0_13, %c0_14] : memref<8x256xf32, #tpu.memory_space<vmem>>, vector<8x256xf32>
      tpu.vector_store %arg6[%c0_13, %c0_14], %14 {strides = array<i32>} : memref<8x256xf32, #tpu.memory_space<vmem>>, vector<8x256xf32>,
    } else {
    }
    %c0 = arith.constant 0 : index
    %c0_1 = arith.constant 0 : index
    %3 = vector.load %arg6[%c0, %c0_1] : memref<8x256xf32, #tpu.memory_space<vmem>>, vector<8x256xf32>
    %c0_2 = arith.constant 0 : index
    %c0_3 = arith.constant 0 : index
    %c0_4 = arith.constant 0 : index
    %4 = vector.load %arg2[%c0_2, %c0_3, %c0_4] : memref<1x8x128xbf16, #tpu.memory_space<vmem>>, vector<1x8x128xbf16>
    %5 = vector.shape_cast %4 : vector<1x8x128xbf16> to vector<8x128xbf16>
    %c0_5 = arith.constant 0 : index
    %c0_6 = arith.constant 0 : index
    %c0_7 = arith.constant 0 : index
    %6 = vector.load %arg3[%c0_5, %c0_6, %c0_7] : memref<1x128x256xbf16, #tpu.memory_space<vmem>>, vector<1x128x256xbf16>
    %7 = vector.shape_cast %6 : vector<1x128x256xbf16> to vector<128x256xbf16>
    %cst = arith.constant dense<0.000000e+00> : vector<8x256xf32>
    %8 = tpu.matmul %5, %7, %cst {dimension_numbers = #tpu.dot_dimension_numbers<[1], [0], [0], [1], [0, 0, 1, 1], [], []>} : vector<8x128xbf16>, vector<128x256xbf16>, vector<8x256xf32> -> vector<8x256xf32>
    %9 = arith.addf %3, %8 : vector<8x256xf32>
    %c0_8 = arith.constant 0 : index
    %c0_9 = arith.constant 0 : index
    %10 = vector.load %arg6[%c0_8, %c0_9] : memref<8x256xf32, #tpu.memory_space<vmem>>, vector<8x256xf32>
    tpu.vector_store %arg6[%c0_8, %c0_9], %9 {strides = array<i32>} : memref<8x256xf32, #tpu.memory_space<vmem>>, vector<8x256xf32>,
    %c0_i32_10 = arith.constant 0 : i32
    %11 = arith.cmpi eq, %arg1, %c0_i32_10 : i32
    %12 = arith.extui %11 : i1 to i32
    %c0_i32_11 = arith.constant 0 : i32
    %13 = arith.cmpi ne, %12, %c0_i32_11 : i32
    scf.if %13 {
      %c0_12 = arith.constant 0 : index
      %c0_13 = arith.constant 0 : index
      %14 = vector.load %arg6[%c0_12, %c0_13] : memref<8x256xf32, #tpu.memory_space<vmem>>, vector<8x256xf32>
      %c0_14 = arith.constant 0 : index
      %c0_15 = arith.constant 0 : index
      %15 = vector.load %arg4[%c0_14, %c0_15] : memref<1x256xf32, #tpu.memory_space<vmem>>, vector<1x256xf32>
      %16 = vector.broadcast %15 : vector<1x256xf32> to vector<8x256xf32>
      %17 = arith.addf %14, %16 : vector<8x256xf32>
      %18 = arith.truncf %17 : vector<8x256xf32> to vector<8x256xbf16>
      %c0_16 = arith.constant 0 : index
      %c0_17 = arith.constant 0 : index
      %19 = vector.load %arg5[%c0_16, %c0_17] : memref<8x256xbf16, #tpu.memory_space<vmem>>, vector<8x256xbf16>
      tpu.vector_store %arg5[%c0_16, %c0_17], %18 {strides = array<i32>} : memref<8x256xbf16, #tpu.memory_space<vmem>>, vector<8x256xbf16>,
    } else {
    }
    return
  }
  func.func @transform_0(%arg0: i32, %arg1: i32) -> (i32, i32, i32) {
    %c0_i32 = arith.constant 0 : i32
    %c0_i32_0 = arith.constant 0 : i32
    return %arg1, %arg0, %c0_i32 : i32, i32, i32
  }
  func.func @transform_1(%arg0: i32, %arg1: i32) -> (i32, i32, i32) {
    %c0_i32 = arith.constant 0 : i32
    %c0_i32_0 = arith.constant 0 : i32
    %c0_i32_1 = arith.constant 0 : i32
    return %arg1, %c0_i32, %c0_i32_0 : i32, i32, i32
  }
  func.func @transform_2(%arg0: i32, %arg1: i32) -> (i32, i32) {
    %c0_i32 = arith.constant 0 : i32
    %c0_i32_0 = arith.constant 0 : i32
    %c0_i32_1 = arith.constant 0 : i32
    return %c0_i32, %c0_i32_0 : i32, i32
  }
  func.func @transform_3(%arg0: i32, %arg1: i32) -> (i32, i32) {
    %c0_i32 = arith.constant 0 : i32
    %c0_i32_0 = arith.constant 0 : i32
    return %arg0, %c0_i32 : i32, i32
  }
}

module attributes {stable_mosaic.version = 11 : i64} {
  func.func @_conv_matmul_kernel(%arg0: i32, %arg1: i32, %arg2: memref<1x8x256xbf16, #tpu.memory_space<vmem>>, %arg3: memref<1x256x256xbf16, #tpu.memory_space<vmem>>, %arg4: memref<1x256xf32, #tpu.memory_space<vmem>>, %arg5: memref<8x256xbf16, #tpu.memory_space<vmem>>, %arg6: memref<8x256xbf16, #tpu.memory_space<vmem>>, %arg7: memref<8x256xf32, #tpu.memory_space<vmem>>) attributes {dimension_semantics = [#tpu.dimension_semantics<parallel>, #tpu.dimension_semantics<arbitrary>], iteration_bounds = array<i64: 1, 9>, scalar_prefetch = 0 : i64, scratch_operands = 1 : i64, tpu.core_type = #tpu.core_type<tc>, window_params = [{transform_indices = @transform_0, window_bounds = array<i64: 1, 8, 256>}, {transform_indices = @transform_1, window_bounds = array<i64: 1, 256, 256>}, {pipeline_mode = #tpu.pipeline_mode<synchronous>, transform_indices = @transform_2, window_bounds = array<i64: 1, 256>}, {transform_indices = @transform_3, window_bounds = array<i64: 8, 256>}, {transform_indices = @transform_4, window_bounds = array<i64: 8, 256>}]} {
    %c0_i32 = arith.constant 0 : i32
    %0 = arith.cmpi eq, %arg1, %c0_i32 : i32
    %1 = arith.extui %0 : i1 to i32
    %c0_i32_0 = arith.constant 0 : i32
    %2 = arith.cmpi ne, %1, %c0_i32_0 : i32
    scf.if %2 {
      %cst_11 = arith.constant 0.000000e+00 : f32
      %14 = vector.broadcast %cst_11 : f32 to vector<8x256xf32>
      %c0_12 = arith.constant 0 : index
      %c0_13 = arith.constant 0 : index
      %15 = vector.load %arg7[%c0_12, %c0_13] : memref<8x256xf32, #tpu.memory_space<vmem>>, vector<8x256xf32>
      tpu.vector_store %arg7[%c0_12, %c0_13], %14 {strides = array<i32>} : memref<8x256xf32, #tpu.memory_space<vmem>>, vector<8x256xf32>,
    } else {
    }
    %c0 = arith.constant 0 : index
    %c0_1 = arith.constant 0 : index
    %3 = vector.load %arg7[%c0, %c0_1] : memref<8x256xf32, #tpu.memory_space<vmem>>, vector<8x256xf32>
    %c0_2 = arith.constant 0 : index
    %c0_3 = arith.constant 0 : index
    %c0_4 = arith.constant 0 : index
    %4 = vector.load %arg2[%c0_2, %c0_3, %c0_4] : memref<1x8x256xbf16, #tpu.memory_space<vmem>>, vector<1x8x256xbf16>
    %5 = vector.shape_cast %4 : vector<1x8x256xbf16> to vector<8x256xbf16>
    %c0_5 = arith.constant 0 : index
    %c0_6 = arith.constant 0 : index
    %c0_7 = arith.constant 0 : index
    %6 = vector.load %arg3[%c0_5, %c0_6, %c0_7] : memref<1x256x256xbf16, #tpu.memory_space<vmem>>, vector<1x256x256xbf16>
    %7 = vector.shape_cast %6 : vector<1x256x256xbf16> to vector<256x256xbf16>
    %cst = arith.constant dense<0.000000e+00> : vector<8x256xf32>
    %8 = tpu.matmul %5, %7, %cst {dimension_numbers = #tpu.dot_dimension_numbers<[1], [0], [0], [1], [0, 0, 1, 1], [], []>} : vector<8x256xbf16>, vector<256x256xbf16>, vector<8x256xf32> -> vector<8x256xf32>
    %9 = arith.addf %3, %8 : vector<8x256xf32>
    %c0_8 = arith.constant 0 : index
    %c0_9 = arith.constant 0 : index
    %10 = vector.load %arg7[%c0_8, %c0_9] : memref<8x256xf32, #tpu.memory_space<vmem>>, vector<8x256xf32>
    tpu.vector_store %arg7[%c0_8, %c0_9], %9 {strides = array<i32>} : memref<8x256xf32, #tpu.memory_space<vmem>>, vector<8x256xf32>,
    %c8_i32 = arith.constant 8 : i32
    %11 = arith.cmpi eq, %arg1, %c8_i32 : i32
    %12 = arith.extui %11 : i1 to i32
    %c0_i32_10 = arith.constant 0 : i32
    %13 = arith.cmpi ne, %12, %c0_i32_10 : i32
    scf.if %13 {
      %c0_11 = arith.constant 0 : index
      %c0_12 = arith.constant 0 : index
      %14 = vector.load %arg7[%c0_11, %c0_12] : memref<8x256xf32, #tpu.memory_space<vmem>>, vector<8x256xf32>
      %c0_13 = arith.constant 0 : index
      %c0_14 = arith.constant 0 : index
      %15 = vector.load %arg4[%c0_13, %c0_14] : memref<1x256xf32, #tpu.memory_space<vmem>>, vector<1x256xf32>
      %16 = vector.broadcast %15 : vector<1x256xf32> to vector<8x256xf32>
      %17 = arith.addf %14, %16 : vector<8x256xf32>
      %c0_15 = arith.constant 0 : index
      %c0_16 = arith.constant 0 : index
      %18 = vector.load %arg5[%c0_15, %c0_16] : memref<8x256xbf16, #tpu.memory_space<vmem>>, vector<8x256xbf16>
      %19 = arith.extf %18 : vector<8x256xbf16> to vector<8x256xf32>
      %20 = arith.addf %17, %19 : vector<8x256xf32>
      %cst_17 = arith.constant 0.000000e+00 : f32
      %21 = vector.broadcast %cst_17 : f32 to vector<8x256xf32>
      %22 = arith.maximumf %20, %21 : vector<8x256xf32>
      %23 = arith.truncf %22 : vector<8x256xf32> to vector<8x256xbf16>
      %c0_18 = arith.constant 0 : index
      %c0_19 = arith.constant 0 : index
      %24 = vector.load %arg6[%c0_18, %c0_19] : memref<8x256xbf16, #tpu.memory_space<vmem>>, vector<8x256xbf16>
      tpu.vector_store %arg6[%c0_18, %c0_19], %23 {strides = array<i32>} : memref<8x256xbf16, #tpu.memory_space<vmem>>, vector<8x256xbf16>,
    } else {
    }
    return
  }
  func.func @transform_0(%arg0: i32, %arg1: i32) -> (i32, i32, i32) {
    %c0_i32 = arith.constant 0 : i32
    %c0_i32_0 = arith.constant 0 : i32
    return %arg1, %arg0, %c0_i32 : i32, i32, i32
  }
  func.func @transform_1(%arg0: i32, %arg1: i32) -> (i32, i32, i32) {
    %c0_i32 = arith.constant 0 : i32
    %c0_i32_0 = arith.constant 0 : i32
    %c0_i32_1 = arith.constant 0 : i32
    return %arg1, %c0_i32, %c0_i32_0 : i32, i32, i32
  }
  func.func @transform_2(%arg0: i32, %arg1: i32) -> (i32, i32) {
    %c0_i32 = arith.constant 0 : i32
    %c0_i32_0 = arith.constant 0 : i32
    %c0_i32_1 = arith.constant 0 : i32
    return %c0_i32, %c0_i32_0 : i32, i32
  }
  func.func @transform_3(%arg0: i32, %arg1: i32) -> (i32, i32) {
    %c0_i32 = arith.constant 0 : i32
    %c0_i32_0 = arith.constant 0 : i32
    return %arg0, %c0_i32 : i32, i32
  }
  func.func @transform_4(%arg0: i32, %arg1: i32) -> (i32, i32) {
    %c0_i32 = arith.constant 0 : i32
    %c0_i32_0 = arith.constant 0 : i32
    return %arg0, %c0_i32 : i32, i32
  }
}

module attributes {stable_mosaic.version = 11 : i64} {
  func.func @_conv_matmul_kernel(%arg0: i32, %arg1: i32, %arg2: memref<1x8x256xbf16, #tpu.memory_space<vmem>>, %arg3: memref<1x256x512xbf16, #tpu.memory_space<vmem>>, %arg4: memref<1x512xf32, #tpu.memory_space<vmem>>, %arg5: memref<8x512xbf16, #tpu.memory_space<vmem>>, %arg6: memref<8x512xf32, #tpu.memory_space<vmem>>) attributes {dimension_semantics = [#tpu.dimension_semantics<parallel>, #tpu.dimension_semantics<arbitrary>], iteration_bounds = array<i64: 1, 9>, scalar_prefetch = 0 : i64, scratch_operands = 1 : i64, tpu.core_type = #tpu.core_type<tc>, window_params = [{transform_indices = @transform_0, window_bounds = array<i64: 1, 8, 256>}, {transform_indices = @transform_1, window_bounds = array<i64: 1, 256, 512>}, {pipeline_mode = #tpu.pipeline_mode<synchronous>, transform_indices = @transform_2, window_bounds = array<i64: 1, 512>}, {transform_indices = @transform_3, window_bounds = array<i64: 8, 512>}]} {
    %c0_i32 = arith.constant 0 : i32
    %0 = arith.cmpi eq, %arg1, %c0_i32 : i32
    %1 = arith.extui %0 : i1 to i32
    %c0_i32_0 = arith.constant 0 : i32
    %2 = arith.cmpi ne, %1, %c0_i32_0 : i32
    scf.if %2 {
      %cst_11 = arith.constant 0.000000e+00 : f32
      %14 = vector.broadcast %cst_11 : f32 to vector<8x512xf32>
      %c0_12 = arith.constant 0 : index
      %c0_13 = arith.constant 0 : index
      %15 = vector.load %arg6[%c0_12, %c0_13] : memref<8x512xf32, #tpu.memory_space<vmem>>, vector<8x512xf32>
      tpu.vector_store %arg6[%c0_12, %c0_13], %14 {strides = array<i32>} : memref<8x512xf32, #tpu.memory_space<vmem>>, vector<8x512xf32>,
    } else {
    }
    %c0 = arith.constant 0 : index
    %c0_1 = arith.constant 0 : index
    %3 = vector.load %arg6[%c0, %c0_1] : memref<8x512xf32, #tpu.memory_space<vmem>>, vector<8x512xf32>
    %c0_2 = arith.constant 0 : index
    %c0_3 = arith.constant 0 : index
    %c0_4 = arith.constant 0 : index
    %4 = vector.load %arg2[%c0_2, %c0_3, %c0_4] : memref<1x8x256xbf16, #tpu.memory_space<vmem>>, vector<1x8x256xbf16>
    %5 = vector.shape_cast %4 : vector<1x8x256xbf16> to vector<8x256xbf16>
    %c0_5 = arith.constant 0 : index
    %c0_6 = arith.constant 0 : index
    %c0_7 = arith.constant 0 : index
    %6 = vector.load %arg3[%c0_5, %c0_6, %c0_7] : memref<1x256x512xbf16, #tpu.memory_space<vmem>>, vector<1x256x512xbf16>
    %7 = vector.shape_cast %6 : vector<1x256x512xbf16> to vector<256x512xbf16>
    %cst = arith.constant dense<0.000000e+00> : vector<8x512xf32>
    %8 = tpu.matmul %5, %7, %cst {dimension_numbers = #tpu.dot_dimension_numbers<[1], [0], [0], [1], [0, 0, 1, 1], [], []>} : vector<8x256xbf16>, vector<256x512xbf16>, vector<8x512xf32> -> vector<8x512xf32>
    %9 = arith.addf %3, %8 : vector<8x512xf32>
    %c0_8 = arith.constant 0 : index
    %c0_9 = arith.constant 0 : index
    %10 = vector.load %arg6[%c0_8, %c0_9] : memref<8x512xf32, #tpu.memory_space<vmem>>, vector<8x512xf32>
    tpu.vector_store %arg6[%c0_8, %c0_9], %9 {strides = array<i32>} : memref<8x512xf32, #tpu.memory_space<vmem>>, vector<8x512xf32>,
    %c8_i32 = arith.constant 8 : i32
    %11 = arith.cmpi eq, %arg1, %c8_i32 : i32
    %12 = arith.extui %11 : i1 to i32
    %c0_i32_10 = arith.constant 0 : i32
    %13 = arith.cmpi ne, %12, %c0_i32_10 : i32
    scf.if %13 {
      %c0_11 = arith.constant 0 : index
      %c0_12 = arith.constant 0 : index
      %14 = vector.load %arg6[%c0_11, %c0_12] : memref<8x512xf32, #tpu.memory_space<vmem>>, vector<8x512xf32>
      %c0_13 = arith.constant 0 : index
      %c0_14 = arith.constant 0 : index
      %15 = vector.load %arg4[%c0_13, %c0_14] : memref<1x512xf32, #tpu.memory_space<vmem>>, vector<1x512xf32>
      %16 = vector.broadcast %15 : vector<1x512xf32> to vector<8x512xf32>
      %17 = arith.addf %14, %16 : vector<8x512xf32>
      %cst_15 = arith.constant 0.000000e+00 : f32
      %18 = vector.broadcast %cst_15 : f32 to vector<8x512xf32>
      %19 = arith.maximumf %17, %18 : vector<8x512xf32>
      %20 = arith.truncf %19 : vector<8x512xf32> to vector<8x512xbf16>
      %c0_16 = arith.constant 0 : index
      %c0_17 = arith.constant 0 : index
      %21 = vector.load %arg5[%c0_16, %c0_17] : memref<8x512xbf16, #tpu.memory_space<vmem>>, vector<8x512xbf16>
      tpu.vector_store %arg5[%c0_16, %c0_17], %20 {strides = array<i32>} : memref<8x512xbf16, #tpu.memory_space<vmem>>, vector<8x512xbf16>,
    } else {
    }
    return
  }
  func.func @transform_0(%arg0: i32, %arg1: i32) -> (i32, i32, i32) {
    %c0_i32 = arith.constant 0 : i32
    %c0_i32_0 = arith.constant 0 : i32
    return %arg1, %arg0, %c0_i32 : i32, i32, i32
  }
  func.func @transform_1(%arg0: i32, %arg1: i32) -> (i32, i32, i32) {
    %c0_i32 = arith.constant 0 : i32
    %c0_i32_0 = arith.constant 0 : i32
    %c0_i32_1 = arith.constant 0 : i32
    return %arg1, %c0_i32, %c0_i32_0 : i32, i32, i32
  }
  func.func @transform_2(%arg0: i32, %arg1: i32) -> (i32, i32) {
    %c0_i32 = arith.constant 0 : i32
    %c0_i32_0 = arith.constant 0 : i32
    %c0_i32_1 = arith.constant 0 : i32
    return %c0_i32, %c0_i32_0 : i32, i32
  }
  func.func @transform_3(%arg0: i32, %arg1: i32) -> (i32, i32) {
    %c0_i32 = arith.constant 0 : i32
    %c0_i32_0 = arith.constant 0 : i32
    return %arg0, %c0_i32 : i32, i32
  }
}

module attributes {stable_mosaic.version = 11 : i64} {
  func.func @_conv_matmul_kernel(%arg0: i32, %arg1: i32, %arg2: memref<1x8x256xbf16, #tpu.memory_space<vmem>>, %arg3: memref<1x256x512xbf16, #tpu.memory_space<vmem>>, %arg4: memref<1x512xf32, #tpu.memory_space<vmem>>, %arg5: memref<8x512xbf16, #tpu.memory_space<vmem>>, %arg6: memref<8x512xf32, #tpu.memory_space<vmem>>) attributes {dimension_semantics = [#tpu.dimension_semantics<parallel>, #tpu.dimension_semantics<arbitrary>], iteration_bounds = array<i64: 1, 1>, scalar_prefetch = 0 : i64, scratch_operands = 1 : i64, tpu.core_type = #tpu.core_type<tc>, window_params = [{transform_indices = @transform_0, window_bounds = array<i64: 1, 8, 256>}, {transform_indices = @transform_1, window_bounds = array<i64: 1, 256, 512>}, {pipeline_mode = #tpu.pipeline_mode<synchronous>, transform_indices = @transform_2, window_bounds = array<i64: 1, 512>}, {transform_indices = @transform_3, window_bounds = array<i64: 8, 512>}]} {
    %c0_i32 = arith.constant 0 : i32
    %0 = arith.cmpi eq, %arg1, %c0_i32 : i32
    %1 = arith.extui %0 : i1 to i32
    %c0_i32_0 = arith.constant 0 : i32
    %2 = arith.cmpi ne, %1, %c0_i32_0 : i32
    scf.if %2 {
      %cst_12 = arith.constant 0.000000e+00 : f32
      %14 = vector.broadcast %cst_12 : f32 to vector<8x512xf32>
      %c0_13 = arith.constant 0 : index
      %c0_14 = arith.constant 0 : index
      %15 = vector.load %arg6[%c0_13, %c0_14] : memref<8x512xf32, #tpu.memory_space<vmem>>, vector<8x512xf32>
      tpu.vector_store %arg6[%c0_13, %c0_14], %14 {strides = array<i32>} : memref<8x512xf32, #tpu.memory_space<vmem>>, vector<8x512xf32>,
    } else {
    }
    %c0 = arith.constant 0 : index
    %c0_1 = arith.constant 0 : index
    %3 = vector.load %arg6[%c0, %c0_1] : memref<8x512xf32, #tpu.memory_space<vmem>>, vector<8x512xf32>
    %c0_2 = arith.constant 0 : index
    %c0_3 = arith.constant 0 : index
    %c0_4 = arith.constant 0 : index
    %4 = vector.load %arg2[%c0_2, %c0_3, %c0_4] : memref<1x8x256xbf16, #tpu.memory_space<vmem>>, vector<1x8x256xbf16>
    %5 = vector.shape_cast %4 : vector<1x8x256xbf16> to vector<8x256xbf16>
    %c0_5 = arith.constant 0 : index
    %c0_6 = arith.constant 0 : index
    %c0_7 = arith.constant 0 : index
    %6 = vector.load %arg3[%c0_5, %c0_6, %c0_7] : memref<1x256x512xbf16, #tpu.memory_space<vmem>>, vector<1x256x512xbf16>
    %7 = vector.shape_cast %6 : vector<1x256x512xbf16> to vector<256x512xbf16>
    %cst = arith.constant dense<0.000000e+00> : vector<8x512xf32>
    %8 = tpu.matmul %5, %7, %cst {dimension_numbers = #tpu.dot_dimension_numbers<[1], [0], [0], [1], [0, 0, 1, 1], [], []>} : vector<8x256xbf16>, vector<256x512xbf16>, vector<8x512xf32> -> vector<8x512xf32>
    %9 = arith.addf %3, %8 : vector<8x512xf32>
    %c0_8 = arith.constant 0 : index
    %c0_9 = arith.constant 0 : index
    %10 = vector.load %arg6[%c0_8, %c0_9] : memref<8x512xf32, #tpu.memory_space<vmem>>, vector<8x512xf32>
    tpu.vector_store %arg6[%c0_8, %c0_9], %9 {strides = array<i32>} : memref<8x512xf32, #tpu.memory_space<vmem>>, vector<8x512xf32>,
    %c0_i32_10 = arith.constant 0 : i32
    %11 = arith.cmpi eq, %arg1, %c0_i32_10 : i32
    %12 = arith.extui %11 : i1 to i32
    %c0_i32_11 = arith.constant 0 : i32
    %13 = arith.cmpi ne, %12, %c0_i32_11 : i32
    scf.if %13 {
      %c0_12 = arith.constant 0 : index
      %c0_13 = arith.constant 0 : index
      %14 = vector.load %arg6[%c0_12, %c0_13] : memref<8x512xf32, #tpu.memory_space<vmem>>, vector<8x512xf32>
      %c0_14 = arith.constant 0 : index
      %c0_15 = arith.constant 0 : index
      %15 = vector.load %arg4[%c0_14, %c0_15] : memref<1x512xf32, #tpu.memory_space<vmem>>, vector<1x512xf32>
      %16 = vector.broadcast %15 : vector<1x512xf32> to vector<8x512xf32>
      %17 = arith.addf %14, %16 : vector<8x512xf32>
      %18 = arith.truncf %17 : vector<8x512xf32> to vector<8x512xbf16>
      %c0_16 = arith.constant 0 : index
      %c0_17 = arith.constant 0 : index
      %19 = vector.load %arg5[%c0_16, %c0_17] : memref<8x512xbf16, #tpu.memory_space<vmem>>, vector<8x512xbf16>
      tpu.vector_store %arg5[%c0_16, %c0_17], %18 {strides = array<i32>} : memref<8x512xbf16, #tpu.memory_space<vmem>>, vector<8x512xbf16>,
    } else {
    }
    return
  }
  func.func @transform_0(%arg0: i32, %arg1: i32) -> (i32, i32, i32) {
    %c0_i32 = arith.constant 0 : i32
    %c0_i32_0 = arith.constant 0 : i32
    return %arg1, %arg0, %c0_i32 : i32, i32, i32
  }
  func.func @transform_1(%arg0: i32, %arg1: i32) -> (i32, i32, i32) {
    %c0_i32 = arith.constant 0 : i32
    %c0_i32_0 = arith.constant 0 : i32
    %c0_i32_1 = arith.constant 0 : i32
    return %arg1, %c0_i32, %c0_i32_0 : i32, i32, i32
  }
  func.func @transform_2(%arg0: i32, %arg1: i32) -> (i32, i32) {
    %c0_i32 = arith.constant 0 : i32
    %c0_i32_0 = arith.constant 0 : i32
    %c0_i32_1 = arith.constant 0 : i32
    return %c0_i32, %c0_i32_0 : i32, i32
  }
  func.func @transform_3(%arg0: i32, %arg1: i32) -> (i32, i32) {
    %c0_i32 = arith.constant 0 : i32
    %c0_i32_0 = arith.constant 0 : i32
    return %arg0, %c0_i32 : i32, i32
  }
}

module attributes {stable_mosaic.version = 11 : i64} {
  func.func @_conv_matmul_kernel(%arg0: i32, %arg1: i32, %arg2: memref<1x8x512xbf16, #tpu.memory_space<vmem>>, %arg3: memref<1x512x512xbf16, #tpu.memory_space<vmem>>, %arg4: memref<1x512xf32, #tpu.memory_space<vmem>>, %arg5: memref<8x512xbf16, #tpu.memory_space<vmem>>, %arg6: memref<8x512xbf16, #tpu.memory_space<vmem>>, %arg7: memref<8x512xf32, #tpu.memory_space<vmem>>) attributes {dimension_semantics = [#tpu.dimension_semantics<parallel>, #tpu.dimension_semantics<arbitrary>], iteration_bounds = array<i64: 1, 9>, scalar_prefetch = 0 : i64, scratch_operands = 1 : i64, tpu.core_type = #tpu.core_type<tc>, window_params = [{transform_indices = @transform_0, window_bounds = array<i64: 1, 8, 512>}, {transform_indices = @transform_1, window_bounds = array<i64: 1, 512, 512>}, {pipeline_mode = #tpu.pipeline_mode<synchronous>, transform_indices = @transform_2, window_bounds = array<i64: 1, 512>}, {transform_indices = @transform_3, window_bounds = array<i64: 8, 512>}, {transform_indices = @transform_4, window_bounds = array<i64: 8, 512>}]} {
    %c0_i32 = arith.constant 0 : i32
    %0 = arith.cmpi eq, %arg1, %c0_i32 : i32
    %1 = arith.extui %0 : i1 to i32
    %c0_i32_0 = arith.constant 0 : i32
    %2 = arith.cmpi ne, %1, %c0_i32_0 : i32
    scf.if %2 {
      %cst_11 = arith.constant 0.000000e+00 : f32
      %14 = vector.broadcast %cst_11 : f32 to vector<8x512xf32>
      %c0_12 = arith.constant 0 : index
      %c0_13 = arith.constant 0 : index
      %15 = vector.load %arg7[%c0_12, %c0_13] : memref<8x512xf32, #tpu.memory_space<vmem>>, vector<8x512xf32>
      tpu.vector_store %arg7[%c0_12, %c0_13], %14 {strides = array<i32>} : memref<8x512xf32, #tpu.memory_space<vmem>>, vector<8x512xf32>,
    } else {
    }
    %c0 = arith.constant 0 : index
    %c0_1 = arith.constant 0 : index
    %3 = vector.load %arg7[%c0, %c0_1] : memref<8x512xf32, #tpu.memory_space<vmem>>, vector<8x512xf32>
    %c0_2 = arith.constant 0 : index
    %c0_3 = arith.constant 0 : index
    %c0_4 = arith.constant 0 : index
    %4 = vector.load %arg2[%c0_2, %c0_3, %c0_4] : memref<1x8x512xbf16, #tpu.memory_space<vmem>>, vector<1x8x512xbf16>
    %5 = vector.shape_cast %4 : vector<1x8x512xbf16> to vector<8x512xbf16>
    %c0_5 = arith.constant 0 : index
    %c0_6 = arith.constant 0 : index
    %c0_7 = arith.constant 0 : index
    %6 = vector.load %arg3[%c0_5, %c0_6, %c0_7] : memref<1x512x512xbf16, #tpu.memory_space<vmem>>, vector<1x512x512xbf16>
    %7 = vector.shape_cast %6 : vector<1x512x512xbf16> to vector<512x512xbf16>
    %cst = arith.constant dense<0.000000e+00> : vector<8x512xf32>
    %8 = tpu.matmul %5, %7, %cst {dimension_numbers = #tpu.dot_dimension_numbers<[1], [0], [0], [1], [0, 0, 1, 1], [], []>} : vector<8x512xbf16>, vector<512x512xbf16>, vector<8x512xf32> -> vector<8x512xf32>
    %9 = arith.addf %3, %8 : vector<8x512xf32>
    %c0_8 = arith.constant 0 : index
    %c0_9 = arith.constant 0 : index
    %10 = vector.load %arg7[%c0_8, %c0_9] : memref<8x512xf32, #tpu.memory_space<vmem>>, vector<8x512xf32>
    tpu.vector_store %arg7[%c0_8, %c0_9], %9 {strides = array<i32>} : memref<8x512xf32, #tpu.memory_space<vmem>>, vector<8x512xf32>,
    %c8_i32 = arith.constant 8 : i32
    %11 = arith.cmpi eq, %arg1, %c8_i32 : i32
    %12 = arith.extui %11 : i1 to i32
    %c0_i32_10 = arith.constant 0 : i32
    %13 = arith.cmpi ne, %12, %c0_i32_10 : i32
    scf.if %13 {
      %c0_11 = arith.constant 0 : index
      %c0_12 = arith.constant 0 : index
      %14 = vector.load %arg7[%c0_11, %c0_12] : memref<8x512xf32, #tpu.memory_space<vmem>>, vector<8x512xf32>
      %c0_13 = arith.constant 0 : index
      %c0_14 = arith.constant 0 : index
      %15 = vector.load %arg4[%c0_13, %c0_14] : memref<1x512xf32, #tpu.memory_space<vmem>>, vector<1x512xf32>
      %16 = vector.broadcast %15 : vector<1x512xf32> to vector<8x512xf32>
      %17 = arith.addf %14, %16 : vector<8x512xf32>
      %c0_15 = arith.constant 0 : index
      %c0_16 = arith.constant 0 : index
      %18 = vector.load %arg5[%c0_15, %c0_16] : memref<8x512xbf16, #tpu.memory_space<vmem>>, vector<8x512xbf16>
      %19 = arith.extf %18 : vector<8x512xbf16> to vector<8x512xf32>
      %20 = arith.addf %17, %19 : vector<8x512xf32>
      %cst_17 = arith.constant 0.000000e+00 : f32
      %21 = vector.broadcast %cst_17 : f32 to vector<8x512xf32>
      %22 = arith.maximumf %20, %21 : vector<8x512xf32>
      %23 = arith.truncf %22 : vector<8x512xf32> to vector<8x512xbf16>
      %c0_18 = arith.constant 0 : index
      %c0_19 = arith.constant 0 : index
      %24 = vector.load %arg6[%c0_18, %c0_19] : memref<8x512xbf16, #tpu.memory_space<vmem>>, vector<8x512xbf16>
      tpu.vector_store %arg6[%c0_18, %c0_19], %23 {strides = array<i32>} : memref<8x512xbf16, #tpu.memory_space<vmem>>, vector<8x512xbf16>,
    } else {
    }
    return
  }
  func.func @transform_0(%arg0: i32, %arg1: i32) -> (i32, i32, i32) {
    %c0_i32 = arith.constant 0 : i32
    %c0_i32_0 = arith.constant 0 : i32
    return %arg1, %arg0, %c0_i32 : i32, i32, i32
  }
  func.func @transform_1(%arg0: i32, %arg1: i32) -> (i32, i32, i32) {
    %c0_i32 = arith.constant 0 : i32
    %c0_i32_0 = arith.constant 0 : i32
    %c0_i32_1 = arith.constant 0 : i32
    return %arg1, %c0_i32, %c0_i32_0 : i32, i32, i32
  }
  func.func @transform_2(%arg0: i32, %arg1: i32) -> (i32, i32) {
    %c0_i32 = arith.constant 0 : i32
    %c0_i32_0 = arith.constant 0 : i32
    %c0_i32_1 = arith.constant 0 : i32
    return %c0_i32, %c0_i32_0 : i32, i32
  }
  func.func @transform_3(%arg0: i32, %arg1: i32) -> (i32, i32) {
    %c0_i32 = arith.constant 0 : i32
    %c0_i32_0 = arith.constant 0 : i32
    return %arg0, %c0_i32 : i32, i32
  }
  func.func @transform_4(%arg0: i32, %arg1: i32) -> (i32, i32) {
    %c0_i32 = arith.constant 0 : i32
    %c0_i32_0 = arith.constant 0 : i32
    return %arg0, %c0_i32 : i32, i32
  }
}

module attributes {stable_mosaic.version = 11 : i64} {
  func.func @_conv_matmul_kernel(%arg0: i32, %arg1: i32, %arg2: memref<1x8x512xbf16, #tpu.memory_space<vmem>>, %arg3: memref<1x512x128xbf16, #tpu.memory_space<vmem>>, %arg4: memref<1x128xf32, #tpu.memory_space<vmem>>, %arg5: memref<8x128xf32, #tpu.memory_space<vmem>>, %arg6: memref<8x128xf32, #tpu.memory_space<vmem>>) attributes {dimension_semantics = [#tpu.dimension_semantics<parallel>, #tpu.dimension_semantics<arbitrary>], iteration_bounds = array<i64: 1, 1>, scalar_prefetch = 0 : i64, scratch_operands = 1 : i64, tpu.core_type = #tpu.core_type<tc>, window_params = [{transform_indices = @transform_0, window_bounds = array<i64: 1, 8, 512>}, {transform_indices = @transform_1, window_bounds = array<i64: 1, 512, 128>}, {pipeline_mode = #tpu.pipeline_mode<synchronous>, transform_indices = @transform_2, window_bounds = array<i64: 1, 128>}, {transform_indices = @transform_3, window_bounds = array<i64: 8, 128>}]} {
    %c0_i32 = arith.constant 0 : i32
    %0 = arith.cmpi eq, %arg1, %c0_i32 : i32
    %1 = arith.extui %0 : i1 to i32
    %c0_i32_0 = arith.constant 0 : i32
    %2 = arith.cmpi ne, %1, %c0_i32_0 : i32
    scf.if %2 {
      %cst_12 = arith.constant 0.000000e+00 : f32
      %14 = vector.broadcast %cst_12 : f32 to vector<8x128xf32>
      %c0_13 = arith.constant 0 : index
      %c0_14 = arith.constant 0 : index
      %15 = vector.load %arg6[%c0_13, %c0_14] : memref<8x128xf32, #tpu.memory_space<vmem>>, vector<8x128xf32>
      tpu.vector_store %arg6[%c0_13, %c0_14], %14 {strides = array<i32>} : memref<8x128xf32, #tpu.memory_space<vmem>>, vector<8x128xf32>,
    } else {
    }
    %c0 = arith.constant 0 : index
    %c0_1 = arith.constant 0 : index
    %3 = vector.load %arg6[%c0, %c0_1] : memref<8x128xf32, #tpu.memory_space<vmem>>, vector<8x128xf32>
    %c0_2 = arith.constant 0 : index
    %c0_3 = arith.constant 0 : index
    %c0_4 = arith.constant 0 : index
    %4 = vector.load %arg2[%c0_2, %c0_3, %c0_4] : memref<1x8x512xbf16, #tpu.memory_space<vmem>>, vector<1x8x512xbf16>
    %5 = vector.shape_cast %4 : vector<1x8x512xbf16> to vector<8x512xbf16>
    %c0_5 = arith.constant 0 : index
    %c0_6 = arith.constant 0 : index
    %c0_7 = arith.constant 0 : index
    %6 = vector.load %arg3[%c0_5, %c0_6, %c0_7] : memref<1x512x128xbf16, #tpu.memory_space<vmem>>, vector<1x512x128xbf16>
    %7 = vector.shape_cast %6 : vector<1x512x128xbf16> to vector<512x128xbf16>
    %cst = arith.constant dense<0.000000e+00> : vector<8x128xf32>
    %8 = tpu.matmul %5, %7, %cst {dimension_numbers = #tpu.dot_dimension_numbers<[1], [0], [0], [1], [0, 0, 1, 1], [], []>} : vector<8x512xbf16>, vector<512x128xbf16>, vector<8x128xf32> -> vector<8x128xf32>
    %9 = arith.addf %3, %8 : vector<8x128xf32>
    %c0_8 = arith.constant 0 : index
    %c0_9 = arith.constant 0 : index
    %10 = vector.load %arg6[%c0_8, %c0_9] : memref<8x128xf32, #tpu.memory_space<vmem>>, vector<8x128xf32>
    tpu.vector_store %arg6[%c0_8, %c0_9], %9 {strides = array<i32>} : memref<8x128xf32, #tpu.memory_space<vmem>>, vector<8x128xf32>,
    %c0_i32_10 = arith.constant 0 : i32
    %11 = arith.cmpi eq, %arg1, %c0_i32_10 : i32
    %12 = arith.extui %11 : i1 to i32
    %c0_i32_11 = arith.constant 0 : i32
    %13 = arith.cmpi ne, %12, %c0_i32_11 : i32
    scf.if %13 {
      %c0_12 = arith.constant 0 : index
      %c0_13 = arith.constant 0 : index
      %14 = vector.load %arg6[%c0_12, %c0_13] : memref<8x128xf32, #tpu.memory_space<vmem>>, vector<8x128xf32>
      %c0_14 = arith.constant 0 : index
      %c0_15 = arith.constant 0 : index
      %15 = vector.load %arg4[%c0_14, %c0_15] : memref<1x128xf32, #tpu.memory_space<vmem>>, vector<1x128xf32>
      %16 = vector.broadcast %15 : vector<1x128xf32> to vector<8x128xf32>
      %17 = arith.addf %14, %16 : vector<8x128xf32>
      %c0_16 = arith.constant 0 : index
      %c0_17 = arith.constant 0 : index
      %18 = vector.load %arg5[%c0_16, %c0_17] : memref<8x128xf32, #tpu.memory_space<vmem>>, vector<8x128xf32>
      tpu.vector_store %arg5[%c0_16, %c0_17], %17 {strides = array<i32>} : memref<8x128xf32, #tpu.memory_space<vmem>>, vector<8x128xf32>,
    } else {
    }
    return
  }
  func.func @transform_0(%arg0: i32, %arg1: i32) -> (i32, i32, i32) {
    %c0_i32 = arith.constant 0 : i32
    %c0_i32_0 = arith.constant 0 : i32
    return %arg1, %arg0, %c0_i32 : i32, i32, i32
  }
  func.func @transform_1(%arg0: i32, %arg1: i32) -> (i32, i32, i32) {
    %c0_i32 = arith.constant 0 : i32
    %c0_i32_0 = arith.constant 0 : i32
    %c0_i32_1 = arith.constant 0 : i32
    return %arg1, %c0_i32, %c0_i32_0 : i32, i32, i32
  }
  func.func @transform_2(%arg0: i32, %arg1: i32) -> (i32, i32) {
    %c0_i32 = arith.constant 0 : i32
    %c0_i32_0 = arith.constant 0 : i32
    %c0_i32_1 = arith.constant 0 : i32
    return %c0_i32, %c0_i32_0 : i32, i32
  }
  func.func @transform_3(%arg0: i32, %arg1: i32) -> (i32, i32) {
    %c0_i32 = arith.constant 0 : i32
    %c0_i32_0 = arith.constant 0 : i32
    return %arg0, %c0_i32 : i32, i32
  }
}

</mosaic_0001>

<llo_original>
// kernel: resnet_server_forward.13
$region0: #{resnet_server_forward.13}
  #allocation0 [shape = 'u32[]', space=smem, size = 0x4, offset = 0x4, fixed_abs, tag = 'smem constant byte address 0x4 - core index']
  #allocation1 [shape = 'u32[144,128]{1,0:T(1,128)}', space=vmem, size = 0x12000, scoped, tag = 'internal scratch']
  #allocation2 [shape = 'f32[128,128]{1,0:T(8,128)}', space=vmem, size = 0x10000, scoped, tag = 'scratch operand']
  %s0 = inlined_call_operand.vmem [shape: bf16[9,128,128], index: 0, kind: input, shape index: {}]
  %s1 = inlined_call_operand.vmem [shape: bf16[9,128,128], index: 1, kind: input, shape index: {}]
  %s2 = inlined_call_operand.vmem [shape: f32[1,128], index: 2, kind: input, shape index: {}]
  %s3 = inlined_call_operand.vmem [shape: bf16[128,128], index: 3, kind: input, shape index: {}]
  %s4 = inlined_call_operand.vmem [shape: bf16[128,128], index: 4, kind: output, shape index: {}]
  %s5 = sld [smem:[#allocation0]]
  $region57: #{resnet_server_forward.13} parent=0
    _
  %s7 = ssub.s32 1, %s5
  %s8 = scalar_select 0, %s7, %s5
  loop: start=0, step=1, limit=11
  $region2: #{resnet_server_forward.13} parent=0 // loop_pre_header
    _
  $region3: #{resnet_server_forward.13} parent=0 // loop_header
    %s10 = sphi 0, %s14
    %p11 = scmp.ge.s32.totalorder %s10, 11
    %s17 = sphi 0, %s29
    %s18 = sphi 0, %s25
    %s19 = sphi 0, %s17
    %s20 = sphi 0, %s18
    %s21 = sphi 0, %s19
    %s22 = sphi 0, %s20
    %s34 = sphi 0, %s36
    %s37 = sphi 0, %s34
    %s38 = sphi 0, %s37
    %s54 = sphi 0, %s38
    %s60 = sphi 0, %s62
    %s63 = sphi 0, %s60
    %s64 = sphi 0, %s63
    %s80 = sphi 0, %s64
    %s84 = sphi 0, %s84
    %s86 = sphi 0, %s84
    %s87 = sphi 0, %s86
    %s101 = sphi 0, %s87
    %s107 = sphi 0, %s109
    %s110 = sphi 0, %s107
    %s111 = sphi 0, %s110
    %s127 = sphi 0, %s111
    %s133 = sphi 0, %s135
    %s136 = sphi 0, %s133
    %s137 = sphi 0, %s136
    %s153 = sphi 0, %s137
  $region4: #{resnet_server_forward.13} parent=0 // loop_header_branch
    %13 = sbr.rel (%p11) target = $region8
  $region5: #{resnet_server_forward.13} parent=0 // loop_body
    %s15 = ssub.s32 %s10, 1
    %s16 = ssub.s32 %s10, 2
    %s23 = sadd.s32 1, %s18
    %p24 = scmp.ge.s32.totalorder %s23, 9
    %s25 = scalar_select %p24, 0, %s23
    %s26 = sadd.s32 1, %s17
    %s27 = scalar_select %p24, %s26, %s17
    %p28 = scmp.ge.s32.totalorder %s27, 1
    %s29 = scalar_select %p28, 0, %s27
    %s30 = ssub.s32 %s18, %s25
    %s31 = ssub.s32 %s17, %s29
    %s32 = sor.u32 %s30, %s31
    %p33 = scmp.eq.s32.totalorder %s32, 0
    %s35 = sadd.s32 %s34, 1
    %s36 = scalar_select %p33, %s34, %s35
    %p39 = pneg %p33
    %p40 = scmp.eq.s32.totalorder %s10, 8
    %p41 = por %p39, %p40
    %p42 = scmp.ne.s32.totalorder %s34, %s37
    %p43 = scmp.eq.s32.totalorder %s10, 0
    %p44 = por %p42, %p43
    %p45 = scmp.ne.s32.totalorder %s34, %s37
    %p46 = scmp.eq.s32.totalorder %s15, 8
    %p47 = por %p45, %p46
    %p48 = scmp.ne.s32.totalorder %s37, %s38
    %p49 = scmp.eq.s32.totalorder %s15, 0
    %p50 = por %p48, %p49
    %p51 = scmp.ne.s32.totalorder %s37, %s38
    %p52 = scmp.eq.s32.totalorder %s16, 8
    %p53 = por %p51, %p52
    %p55 = scmp.ne.s32.totalorder %s38, %s54
    %p56 = scmp.eq.s32.totalorder %s16, 0
    %p57 = por %p55, %p56
    %s58 = ssub.s32 %s18, %s25
    %p59 = scmp.eq.s32.totalorder %s58, 0
    %s61 = sadd.s32 %s60, 1
    %s62 = scalar_select %p59, %s60, %s61
    %p65 = pneg %p59
    %p66 = scmp.eq.s32.totalorder %s10, 8
    %p67 = por %p65, %p66
    %p68 = scmp.ne.s32.totalorder %s60, %s63
    %p69 = scmp.eq.s32.totalorder %s10, 0
    %p70 = por %p68, %p69
    %p71 = scmp.ne.s32.totalorder %s60, %s63
    %p72 = scmp.eq.s32.totalorder %s15, 8
    %p73 = por %p71, %p72
    %p74 = scmp.ne.s32.totalorder %s63, %s64
    %p75 = scmp.eq.s32.totalorder %s15, 0
    %p76 = por %p74, %p75
    %p77 = scmp.ne.s32.totalorder %s63, %s64
    %p78 = scmp.eq.s32.totalorder %s16, 8
    %p79 = por %p77, %p78
    %p81 = scmp.ne.s32.totalorder %s64, %s80
    %p82 = scmp.eq.s32.totalorder %s16, 0
    %p83 = por %p81, %p82
    %s85 = sadd.s32 %s84, 1
    %p88 = scmp.eq.s32.totalorder %s10, 8
    %p89 = scmp.ne.s32.totalorder %s84, %s86
    %p90 = scmp.eq.s32.totalorder %s10, 0
    %p91 = por %p89, %p90
    %p92 = scmp.ne.s32.totalorder %s84, %s86
    %p93 = scmp.eq.s32.totalorder %s15, 8
    %p94 = por %p92, %p93
    %p95 = scmp.ne.s32.totalorder %s86, %s87
    %p96 = scmp.eq.s32.totalorder %s15, 0
    %p97 = por %p95, %p96
    %p98 = scmp.ne.s32.totalorder %s86, %s87
    %p99 = scmp.eq.s32.totalorder %s16, 8
    %p100 = por %p98, %p99
    %p102 = scmp.ne.s32.totalorder %s87, %s101
    %p103 = scmp.eq.s32.totalorder %s16, 0
    %p104 = por %p102, %p103
    %s105 = ssub.s32 %s17, %s29
    %p106 = scmp.eq.s32.totalorder %s105, 0
    %s108 = sadd.s32 %s107, 1
    %s109 = scalar_select %p106, %s107, %s108
    %p112 = pneg %p106
    %p113 = scmp.eq.s32.totalorder %s10, 8
    %p114 = por %p112, %p113
    %p115 = scmp.ne.s32.totalorder %s107, %s110
    %p116 = scmp.eq.s32.totalorder %s10, 0
    %p117 = por %p115, %p116
    %p118 = scmp.ne.s32.totalorder %s107, %s110
    %p119 = scmp.eq.s32.totalorder %s15, 8
    %p120 = por %p118, %p119
    %p121 = scmp.ne.s32.totalorder %s110, %s111
    %p122 = scmp.eq.s32.totalorder %s15, 0
    %p123 = por %p121, %p122
    %p124 = scmp.ne.s32.totalorder %s110, %s111
    %p125 = scmp.eq.s32.totalorder %s16, 8
    %p126 = por %p124, %p125
    %p128 = scmp.ne.s32.totalorder %s111, %s127
    %p129 = scmp.eq.s32.totalorder %s16, 0
    %p130 = por %p128, %p129
    %s131 = ssub.s32 %s17, %s29
    %p132 = scmp.eq.s32.totalorder %s131, 0
    %s134 = sadd.s32 %s133, 1
    %s135 = scalar_select %p132, %s133, %s134
    %p138 = pneg %p132
    %p139 = scmp.eq.s32.totalorder %s10, 8
    %p140 = por %p138, %p139
    %p141 = scmp.ne.s32.totalorder %s133, %s136
    %p142 = scmp.eq.s32.totalorder %s10, 0
    %p143 = por %p141, %p142
    %p144 = scmp.ne.s32.totalorder %s133, %s136
    %p145 = scmp.eq.s32.totalorder %s15, 8
    %p146 = por %p144, %p145
    %p147 = scmp.ne.s32.totalorder %s136, %s137
    %p148 = scmp.eq.s32.totalorder %s15, 0
    %p149 = por %p147, %p148
    %p150 = scmp.ne.s32.totalorder %s136, %s137
    %p151 = scmp.eq.s32.totalorder %s16, 8
    %p152 = por %p150, %p151
    %p154 = scmp.ne.s32.totalorder %s137, %s153
    %p155 = scmp.eq.s32.totalorder %s16, 0
    %p156 = por %p154, %p155
    %p157 = scmp.le.s32.totalorder 1, %s10
    %p158 = scmp.lt.s32.totalorder %s10, 10
    %p159 = pnand %p157, %p158
    %p160 = pneg %p159
    // Predicated region
    $region9: #{resnet_server_forward.13} parent=5 // pred_check
      _
    $region10: #{resnet_server_forward.13} parent=5 // pred_check_branch
      %162 = sbr.rel (%p159) target = $region12
    $region11: #{resnet_server_forward.13} parent=5 // pred_region
      %s163 = ssub.s32 %s10, 1
      // Predicated region
      $region13: #{resnet_server_forward.13} parent=11 // pred_check
        %p164 = pneg %p97
      $region14: #{resnet_server_forward.13} parent=11 // pred_check_branch
        %166 = sbr.rel (%p164) target = $region16
      $region15: #{resnet_server_forward.13} parent=11 // pred_region
        _
      $region16: #{resnet_server_forward.13} parent=11 // pred_fallthru
        _
      // Predicated region
      $region17: #{resnet_server_forward.13} parent=11 // pred_check
        %p167 = pneg %p123
      $region18: #{resnet_server_forward.13} parent=11 // pred_check_branch
        %169 = sbr.rel (%p167) target = $region20
      $region19: #{resnet_server_forward.13} parent=11 // pred_region
        %s170 = smul.u32 16, %s19
        %p171 = scmp.lt.s32.totalorder %s170, 15
        %s172 = scalar_select %p171, %s170, 15
        %s173 = smul.addr %s172, 4
        %s174 = scalar_lea.vmem %s3, %s173
        %s175 = smul.u32 16, %s19
      $region20: #{resnet_server_forward.13} parent=11 // pred_fallthru
        _
    $region12: #{resnet_server_forward.13} parent=5 // pred_fallthru
      _
    %p176 = scmp.lt.s32.totalorder %s10, 9
    // Predicated region
    $region21: #{resnet_server_forward.13} parent=5 // pred_check
      %p177 = pneg %p176
    $region22: #{resnet_server_forward.13} parent=5 // pred_check_branch
      %179 = sbr.rel (%p177) target = $region24
    $region23: #{resnet_server_forward.13} parent=5 // pred_region
      // Predicated region
      $region25: #{resnet_server_forward.13} parent=23 // pred_check
        %p180 = pneg %p44
      $region26: #{resnet_server_forward.13} parent=23 // pred_check_branch
        %182 = sbr.rel (%p180) target = $region28
      $region27: #{resnet_server_forward.13} parent=23 // pred_region
        %s183 = smul.u32 16, %s17
        %p184 = scmp.lt.s32.totalorder %s18, 8
        %s185 = scalar_select %p184, %s18, 8
        %p186 = scmp.lt.s32.totalorder %s183, 15
        %s187 = scalar_select %p186, %s183, 15
        %s188 = smul.addr %s185, 16
        %s189 = sadd.s32 %s187, %s188
        %s190 = smul.addr %s189, 4
        %s191 = scalar_lea.vmem %s0, %s190
        %s192 = smul.u32 16, %s17
      $region28: #{resnet_server_forward.13} parent=23 // pred_fallthru
        _
      // Predicated region
      $region29: #{resnet_server_forward.13} parent=23 // pred_check
        %p193 = pneg %p70
      $region30: #{resnet_server_forward.13} parent=23 // pred_check_branch
        %195 = sbr.rel (%p193) target = $region32
      $region31: #{resnet_server_forward.13} parent=23 // pred_region
        %p196 = scmp.lt.s32.totalorder %s18, 8
        %s197 = scalar_select %p196, %s18, 8
        %s198 = smul.addr %s197, 16
        %s199 = smul.addr %s198, 4
        %s200 = scalar_lea.vmem %s1, %s199
      $region32: #{resnet_server_forward.13} parent=23 // pred_fallthru
        _
    $region24: #{resnet_server_forward.13} parent=5 // pred_fallthru
      _
    %p201 = scmp.le.s32.totalorder 1, %s10
    %p202 = scmp.lt.s32.totalorder %s10, 10
    %p203 = pnand %p201, %p202
    %p204 = pneg %p203
    // Predicated region
    $region33: #{resnet_server_forward.13} parent=5 // pred_check
      _
    $region34: #{resnet_server_forward.13} parent=5 // pred_check_branch
      %206 = sbr.rel (%p203) target = $region36
    $region35: #{resnet_server_forward.13} parent=5 // pred_region
      %s207 = ssub.s32 %s10, 1
      %s208 = smul.u32 16, %s19
      %p209 = scmp.lt.s32.totalorder %s20, 8
      %s210 = scalar_select %p209, %s20, 8
      %p211 = scmp.lt.s32.totalorder %s208, 15
      %s212 = scalar_select %p211, %s208, 15
      %s213 = smul.addr %s210, 16
      %s214 = sadd.s32 %s212, %s213
      %s215 = smul.addr %s214, 4
      %s216 = scalar_lea.vmem %s0, %s215
      %p217 = pneg %p50
      %p218 = pneg %p47
      %p219 = scmp.lt.s32.totalorder %s20, 8
      %s220 = scalar_select %p219, %s20, 8
      %s221 = smul.addr %s220, 16
      %s222 = smul.addr %s221, 4
      %s223 = scalar_lea.vmem %s1, %s222
      %p224 = pneg %p76
      %p225 = pneg %p73
      %p226 = pneg %p97
      %p227 = pneg %p94
      %s228 = smul.u32 16, %s19
      %p229 = scmp.lt.s32.totalorder %s228, 15
      %s230 = scalar_select %p229, %s228, 15
      %s231 = smul.addr %s230, 4
      %s232 = scalar_lea.vmem %s3, %s231
      %p233 = pneg %p123
      %p234 = pneg %p120
      %p235 = pneg %p149
      %p236 = pneg %p146
      %s237 = smul.u32 16, %s19
      %p238 = scmp.lt.s32.totalorder %s237, 15
      %s239 = scalar_select %p238, %s237, 15
      %s240 = smul.addr %s239, 4
      %s241 = scalar_lea.vmem %s4, %s240
      %s242 = smul.u32 16, %s19
      %p243 = scmp.lt.s32.totalorder %s20, 8
      %s244 = scalar_select %p243, %s20, 8
      %p245 = scmp.lt.s32.totalorder %s242, 15
      %s246 = scalar_select %p245, %s242, 15
      %s247 = smul.addr %s244, 16
      %s248 = sadd.s32 %s246, %s247
      %s249 = smul.addr %s248, 4
      %s250 = scalar_lea.vmem %s0, %s249
      %s251 = smul.u32 16, %s19
      %p252 = scmp.lt.s32.totalorder %s20, 8
      %s253 = scalar_select %p252, %s20, 8
      %s254 = smul.addr %s253, 16
      %s255 = smul.addr %s254, 4
      %s256 = scalar_lea.vmem %s1, %s255
      %s257 = smul.u32 16, %s19
      %p258 = scmp.lt.s32.totalorder %s257, 15
      %s259 = scalar_select %p258, %s257, 15
      %s260 = smul.addr %s259, 4
      %s261 = scalar_lea.vmem %s3, %s260
      %s262 = smul.u32 16, %s19
      %s263 = smul.u32 16, %s19
      %p264 = scmp.lt.s32.totalorder %s263, 15
      %s265 = scalar_select %p264, %s263, 15
      %s266 = smul.addr %s265, 4
      %s267 = scalar_lea.vmem %s4, %s266
      %s268 = smul.u32 16, %s19
      %p270 = scmp.eq.s32.totalorder %s20, 0
      // Predicated region
      $region37: #{resnet_server_forward.13} parent=35 // pred_check
        %p271 = pneg %p270
      $region38: #{resnet_server_forward.13} parent=35 // pred_check_branch
        %273 = sbr.rel (%p271) target = $region40
      $region39: #{resnet_server_forward.13} parent=35 // pred_region
        %274 = vst [vmem:[#allocation2] sm:$0xff] 0.0
        %275 = vst [vmem:[#allocation2 + $0x8] sm:$0xff] 0.0
        %276 = vst [vmem:[#allocation2 + $0x10] sm:$0xff] 0.0
        %277 = vst [vmem:[#allocation2 + $0x18] sm:$0xff] 0.0
        %278 = vst [vmem:[#allocation2 + $0x20] sm:$0xff] 0.0
        %279 = vst [vmem:[#allocation2 + $0x28] sm:$0xff] 0.0
        %280 = vst [vmem:[#allocation2 + $0x30] sm:$0xff] 0.0
        %281 = vst [vmem:[#allocation2 + $0x38] sm:$0xff] 0.0
        %282 = vst [vmem:[#allocation2 + $0x40] sm:$0xff] 0.0
        %283 = vst [vmem:[#allocation2 + $0x48] sm:$0xff] 0.0
        %284 = vst [vmem:[#allocation2 + $0x50] sm:$0xff] 0.0
        %285 = vst [vmem:[#allocation2 + $0x58] sm:$0xff] 0.0
        %286 = vst [vmem:[#allocation2 + $0x60] sm:$0xff] 0.0
        %287 = vst [vmem:[#allocation2 + $0x68] sm:$0xff] 0.0
        %288 = vst [vmem:[#allocation2 + $0x70] sm:$0xff] 0.0
        %289 = vst [vmem:[#allocation2 + $0x78] sm:$0xff] 0.0
      $region40: #{resnet_server_forward.13} parent=35 // pred_fallthru
        _
      %v290 = vld [vmem:[#allocation2] sm:$0xff]
      %v291 = vld [vmem:[#allocation2 + $0x8] sm:$0xff]
      %v292 = vld [vmem:[#allocation2 + $0x10] sm:$0xff]
      %v293 = vld [vmem:[#allocation2 + $0x18] sm:$0xff]
      %v294 = vld [vmem:[#allocation2 + $0x20] sm:$0xff]
      %v295 = vld [vmem:[#allocation2 + $0x28] sm:$0xff]
      %v296 = vld [vmem:[#allocation2 + $0x30] sm:$0xff]
      %v297 = vld [vmem:[#allocation2 + $0x38] sm:$0xff]
      %v298 = vld [vmem:[#allocation2 + $0x40] sm:$0xff]
      %v299 = vld [vmem:[#allocation2 + $0x48] sm:$0xff]
      %v300 = vld [vmem:[#allocation2 + $0x50] sm:$0xff]
      %v301 = vld [vmem:[#allocation2 + $0x58] sm:$0xff]
      %v302 = vld [vmem:[#allocation2 + $0x60] sm:$0xff]
      %v303 = vld [vmem:[#allocation2 + $0x68] sm:$0xff]
      %v304 = vld [vmem:[#allocation2 + $0x70] sm:$0xff]
      %v305 = vld [vmem:[#allocation2 + $0x78] sm:$0xff]
      %v306 = vld [vmem:[%s250] sm:$0xf]
      %v307 = vld [vmem:[%s250 + $0x4] sm:$0xf]
      %v308 = vld [vmem:[%s250 + $0x8] sm:$0xf]
      %v309 = vld [vmem:[%s250 + $0xc] sm:$0xf]
      %v310 = vld [vmem:[%s250 + $0x10] sm:$0xf]
      %v311 = vld [vmem:[%s250 + $0x14] sm:$0xf]
      %v312 = vld [vmem:[%s250 + $0x18] sm:$0xf]
      %v313 = vld [vmem:[%s250 + $0x1c] sm:$0xf]
      %v314 = vld [vmem:[%s250 + $0x20] sm:$0xf]
      %v315 = vld [vmem:[%s250 + $0x24] sm:$0xf]
      %v316 = vld [vmem:[%s250 + $0x28] sm:$0xf]
      %v317 = vld [vmem:[%s250 + $0x2c] sm:$0xf]
      %v318 = vld [vmem:[%s250 + $0x30] sm:$0xf]
      %v319 = vld [vmem:[%s250 + $0x34] sm:$0xf]
      %v320 = vld [vmem:[%s250 + $0x38] sm:$0xf]
      %v321 = vld [vmem:[%s250 + $0x3c] sm:$0xf]
      %v322 = vld [vmem:[%s256] sm:$0xf]
      %v323 = vld [vmem:[%s256 + $0x4] sm:$0xf]
      %v324 = vld [vmem:[%s256 + $0x8] sm:$0xf]
      %v325 = vld [vmem:[%s256 + $0xc] sm:$0xf]
      %v326 = vld [vmem:[%s256 + $0x10] sm:$0xf]
      %v327 = vld [vmem:[%s256 + $0x14] sm:$0xf]
      %v328 = vld [vmem:[%s256 + $0x18] sm:$0xf]
      %v329 = vld [vmem:[%s256 + $0x1c] sm:$0xf]
      %v330 = vld [vmem:[%s256 + $0x20] sm:$0xf]
      %v331 = vld [vmem:[%s256 + $0x24] sm:$0xf]
      %v332 = vld [vmem:[%s256 + $0x28] sm:$0xf]
      %v333 = vld [vmem:[%s256 + $0x2c] sm:$0xf]
      %v334 = vld [vmem:[%s256 + $0x30] sm:$0xf]
      %v335 = vld [vmem:[%s256 + $0x34] sm:$0xf]
      %v336 = vld [vmem:[%s256 + $0x38] sm:$0xf]
      %v337 = vld [vmem:[%s256 + $0x3c] sm:$0xf]
      %v354 = vunpack.c.l.b16 %v306
      %v355 = vunpack.c.l.b16 %v307
      %v356 = vunpack.c.l.b16 %v308
      %v357 = vunpack.c.l.b16 %v309
      %v358 = vunpack.c.l.b16 %v310
      %v359 = vunpack.c.l.b16 %v311
      %v360 = vunpack.c.l.b16 %v312
      %v361 = vunpack.c.l.b16 %v313
      %v362 = vunpack.c.l.b16 %v314
      %v363 = vunpack.c.l.b16 %v315
      %v364 = vunpack.c.l.b16 %v316
      %v365 = vunpack.c.l.b16 %v317
      %v366 = vunpack.c.l.b16 %v318
      %v367 = vunpack.c.l.b16 %v319
      %v368 = vunpack.c.l.b16 %v320
      %v369 = vunpack.c.l.b16 %v321
      %v370 = vpack.c.b16 %v355, %v354
      %v371 = vpack.c.b16 %v357, %v356
      %v372 = vpack.c.b16 %v359, %v358
      %v373 = vpack.c.b16 %v361, %v360
      %v374 = vpack.c.b16 %v363, %v362
      %v375 = vpack.c.b16 %v365, %v364
      %v376 = vpack.c.b16 %v367, %v366
      %v377 = vpack.c.b16 %v369, %v368
      %v402 = vunpack.c.l.b16 %v322
      %v403 = vunpack.c.l.b16 %v323
      %v404 = vunpack.c.l.b16 %v324
      %v405 = vunpack.c.l.b16 %v325
      %v406 = vunpack.c.l.b16 %v326
      %v407 = vunpack.c.l.b16 %v327
      %v408 = vunpack.c.l.b16 %v328
      %v409 = vunpack.c.l.b16 %v329
      %v410 = vunpack.c.l.b16 %v330
      %v411 = vunpack.c.l.b16 %v331
      %v412 = vunpack.c.l.b16 %v332
      %v413 = vunpack.c.l.b16 %v333
      %v414 = vunpack.c.l.b16 %v334
      %v415 = vunpack.c.l.b16 %v335
      %v416 = vunpack.c.l.b16 %v336
      %v417 = vunpack.c.l.b16 %v337
      %v418 = vpack.c.b16 %v403, %v402
      %v419 = vpack.c.b16 %v405, %v404
      %v420 = vpack.c.b16 %v407, %v406
      %v421 = vpack.c.b16 %v409, %v408
      %v422 = vpack.c.b16 %v411, %v410
      %v423 = vpack.c.b16 %v413, %v412
      %v424 = vpack.c.b16 %v415, %v414
      %v425 = vpack.c.b16 %v417, %v416
      %434 = vmatprep.subr.bf16.mxu0 0
      %435 = vmatpush1.bf16.msra.mxu0 %v425
      %436 = vmatprep.subr.bf16.mxu0 0
      %437 = vmatpush1.bf16.msra.mxu0 %v424
      %438 = vmatprep.subr.bf16.mxu0 0
      %439 = vmatpush1.bf16.msra.mxu0 %v423
      %440 = vmatprep.subr.bf16.mxu0 0
      %441 = vmatpush1.bf16.msra.mxu0 %v422
      %442 = vmatprep.subr.bf16.mxu0 0
      %443 = vmatpush1.bf16.msra.mxu0 %v421
      %444 = vmatprep.subr.bf16.mxu0 0
      %445 = vmatpush1.bf16.msra.mxu0 %v420
      %446 = vmatprep.subr.bf16.mxu0 0
      %447 = vmatpush1.bf16.msra.mxu0 %v419
      %448 = vmatprep.subr.bf16.mxu0 0
      %449 = vmatpush1.bf16.msra.mxu0 %v418
      %450 = vmatprep.subr.bf16.mxu0 0
      %451 = vmatpush2.bf16.msra.mxu0 0
      %452 = vmatprep.subr.bf16.mxu0 0
      %453 = vmatpush2.bf16.msra.mxu0 0
      %454 = vmatprep.subr.bf16.mxu0 0
      %455 = vmatpush2.bf16.msra.mxu0 0
      %456 = vmatprep.subr.bf16.mxu0 0
      %457 = vmatpush2.bf16.msra.mxu0 0
      %458 = vmatprep.subr.bf16.mxu0 0
      %459 = vmatpush2.bf16.msra.mxu0 0
      %460 = vmatprep.subr.bf16.mxu0 0
      %461 = vmatpush2.bf16.msra.mxu0 0
      %462 = vmatprep.subr.bf16.mxu0 0
      %463 = vmatpush2.bf16.msra.mxu0 0
      %464 = vmatprep.subr.bf16.mxu0 0
      %465 = vmatpush2.bf16.msra.mxu0 0
      %466 = vmatprep.mubr.bf16.mxu0 0
      %467 = vmatmul.mubr.bf16.gmra.mxu0 %v370
      %v468 = vpop.f32.mrf.mxu0
      %v469 = vadd.f32 0.0, %v468
      %v470 = vpop.f32.mrf.mxu0
      %v471 = vpop.f32.mrf.mxu0
      %v472 = vadd.f32 0.0, %v471
      %v473 = vpop.f32.mrf.mxu0
      %474 = vmatprep.mubr.bf16.mxu0 0
      %475 = vmatmul.mubr.bf16.gmra.mxu0 %v371
      %v476 = vpop.f32.mrf.mxu0
      %v477 = vadd.f32 0.0, %v476
      %v478 = vpop.f32.mrf.mxu0
      %v479 = vpop.f32.mrf.mxu0
      %v480 = vadd.f32 0.0, %v479
      %v481 = vpop.f32.mrf.mxu0
      %482 = vmatprep.mubr.bf16.mxu0 0
      %483 = vmatmul.mubr.bf16.gmra.mxu0 %v372
      %v484 = vpop.f32.mrf.mxu0
      %v485 = vadd.f32 0.0, %v484
      %v486 = vpop.f32.mrf.mxu0
      %v487 = vpop.f32.mrf.mxu0
      %v488 = vadd.f32 0.0, %v487
      %v489 = vpop.f32.mrf.mxu0
      %490 = vmatprep.mubr.bf16.mxu0 0
      %491 = vmatmul.mubr.bf16.gmra.mxu0 %v373
      %v492 = vpop.f32.mrf.mxu0
      %v493 = vadd.f32 0.0, %v492
      %v494 = vpop.f32.mrf.mxu0
      %v495 = vpop.f32.mrf.mxu0
      %v496 = vadd.f32 0.0, %v495
      %v497 = vpop.f32.mrf.mxu0
      %498 = vmatprep.mubr.bf16.mxu0 0
      %499 = vmatmul.mubr.bf16.gmra.mxu0 %v374
      %v500 = vpop.f32.mrf.mxu0
      %v501 = vadd.f32 0.0, %v500
      %v502 = vpop.f32.mrf.mxu0
      %v503 = vpop.f32.mrf.mxu0
      %v504 = vadd.f32 0.0, %v503
      %v505 = vpop.f32.mrf.mxu0
      %506 = vmatprep.mubr.bf16.mxu0 0
      %507 = vmatmul.mubr.bf16.gmra.mxu0 %v375
      %v508 = vpop.f32.mrf.mxu0
      %v509 = vadd.f32 0.0, %v508
      %v510 = vpop.f32.mrf.mxu0
      %v511 = vpop.f32.mrf.mxu0
      %v512 = vadd.f32 0.0, %v511
      %v513 = vpop.f32.mrf.mxu0
      %514 = vmatprep.mubr.bf16.mxu0 0
      %515 = vmatmul.mubr.bf16.gmra.mxu0 %v376
      %v516 = vpop.f32.mrf.mxu0
      %v517 = vadd.f32 0.0, %v516
      %v518 = vpop.f32.mrf.mxu0
      %v519 = vpop.f32.mrf.mxu0
      %v520 = vadd.f32 0.0, %v519
      %v521 = vpop.f32.mrf.mxu0
      %522 = vmatprep.mubr.bf16.mxu0 0
      %523 = vmatmul.mubr.bf16.gmra.mxu0 %v377
      %v524 = vpop.f32.mrf.mxu0
      %v525 = vadd.f32 0.0, %v524
      %v526 = vpop.f32.mrf.mxu0
      %v527 = vpop.f32.mrf.mxu0
      %v528 = vadd.f32 0.0, %v527
      %v529 = vpop.f32.mrf.mxu0
      %530 = vdwg.mxu0
      %v531 = vadd.f32 %v290, %v469
      %v532 = vadd.f32 %v291, %v472
      %v533 = vadd.f32 %v292, %v477
      %v534 = vadd.f32 %v293, %v480
      %v535 = vadd.f32 %v294, %v485
      %v536 = vadd.f32 %v295, %v488
      %v537 = vadd.f32 %v296, %v493
      %v538 = vadd.f32 %v297, %v496
      %v539 = vadd.f32 %v298, %v501
      %v540 = vadd.f32 %v299, %v504
      %v541 = vadd.f32 %v300, %v509
      %v542 = vadd.f32 %v301, %v512
      %v543 = vadd.f32 %v302, %v517
      %v544 = vadd.f32 %v303, %v520
      %v545 = vadd.f32 %v304, %v525
      %v546 = vadd.f32 %v305, %v528
      %547 = vst [vmem:[#allocation2] sm:$0xff] %v531
      %548 = vst [vmem:[#allocation2 + $0x8] sm:$0xff] %v532
      %549 = vst [vmem:[#allocation2 + $0x10] sm:$0xff] %v533
      %550 = vst [vmem:[#allocation2 + $0x18] sm:$0xff] %v534
      %551 = vst [vmem:[#allocation2 + $0x20] sm:$0xff] %v535
      %552 = vst [vmem:[#allocation2 + $0x28] sm:$0xff] %v536
      %553 = vst [vmem:[#allocation2 + $0x30] sm:$0xff] %v537
      %554 = vst [vmem:[#allocation2 + $0x38] sm:$0xff] %v538
      %555 = vst [vmem:[#allocation2 + $0x40] sm:$0xff] %v539
      %556 = vst [vmem:[#allocation2 + $0x48] sm:$0xff] %v540
      %557 = vst [vmem:[#allocation2 + $0x50] sm:$0xff] %v541
      %558 = vst [vmem:[#allocation2 + $0x58] sm:$0xff] %v542
      %559 = vst [vmem:[#allocation2 + $0x60] sm:$0xff] %v543
      %560 = vst [vmem:[#allocation2 + $0x68] sm:$0xff] %v544
      %561 = vst [vmem:[#allocation2 + $0x70] sm:$0xff] %v545
      %562 = vst [vmem:[#allocation2 + $0x78] sm:$0xff] %v546
      %p563 = scmp.eq.s32.totalorder %s20, 8
      // Predicated region
      $region41: #{resnet_server_forward.13} parent=35 // pred_check
        %p564 = pneg %p563
      $region42: #{resnet_server_forward.13} parent=35 // pred_check_branch
        %566 = sbr.rel (%p564) target = $region44
      $region43: #{resnet_server_forward.13} parent=35 // pred_region
        %v567 = vld [vmem:[#allocation2] sm:$0xff]
        %v568 = vld [vmem:[#allocation2 + $0x8] sm:$0xff]
        %v569 = vld [vmem:[#allocation2 + $0x10] sm:$0xff]
        %v570 = vld [vmem:[#allocation2 + $0x18] sm:$0xff]
        %v571 = vld [vmem:[#allocation2 + $0x20] sm:$0xff]
        %v572 = vld [vmem:[#allocation2 + $0x28] sm:$0xff]
        %v573 = vld [vmem:[#allocation2 + $0x30] sm:$0xff]
        %v574 = vld [vmem:[#allocation2 + $0x38] sm:$0xff]
        %v575 = vld [vmem:[#allocation2 + $0x40] sm:$0xff]
        %v576 = vld [vmem:[#allocation2 + $0x48] sm:$0xff]
        %v577 = vld [vmem:[#allocation2 + $0x50] sm:$0xff]
        %v578 = vld [vmem:[#allocation2 + $0x58] sm:$0xff]
        %v579 = vld [vmem:[#allocation2 + $0x60] sm:$0xff]
        %v580 = vld [vmem:[#allocation2 + $0x68] sm:$0xff]
        %v581 = vld [vmem:[#allocation2 + $0x70] sm:$0xff]
        %v582 = vld [vmem:[#allocation2 + $0x78] sm:$0xff]
        %v583 = vld [vmem:[%s2] sm:$0x1]
        %v585 = vlaneseq
        %v586 = vshrl.u32 %v585, 7
        %v587 = vsub.s32 0, %v586
        %v588 = vrot.slane %v583, %v587
        %v590 = vadd.f32 %v567, %v588
        %v591 = vadd.f32 %v568, %v588
        %v592 = vadd.f32 %v569, %v588
        %v593 = vadd.f32 %v570, %v588
        %v594 = vadd.f32 %v571, %v588
        %v595 = vadd.f32 %v572, %v588
        %v596 = vadd.f32 %v573, %v588
        %v597 = vadd.f32 %v574, %v588
        %v598 = vadd.f32 %v575, %v588
        %v599 = vadd.f32 %v576, %v588
        %v600 = vadd.f32 %v577, %v588
        %v601 = vadd.f32 %v578, %v588
        %v602 = vadd.f32 %v579, %v588
        %v603 = vadd.f32 %v580, %v588
        %v604 = vadd.f32 %v581, %v588
        %v605 = vadd.f32 %v582, %v588
        %v606 = vld [vmem:[%s261] sm:$0xf]
        %v607 = vld [vmem:[%s261 + $0x4] sm:$0xf]
        %v608 = vld [vmem:[%s261 + $0x8] sm:$0xf]
        %v609 = vld [vmem:[%s261 + $0xc] sm:$0xf]
        %v610 = vld [vmem:[%s261 + $0x10] sm:$0xf]
        %v611 = vld [vmem:[%s261 + $0x14] sm:$0xf]
        %v612 = vld [vmem:[%s261 + $0x18] sm:$0xf]
        %v613 = vld [vmem:[%s261 + $0x1c] sm:$0xf]
        %v614 = vld [vmem:[%s261 + $0x20] sm:$0xf]
        %v615 = vld [vmem:[%s261 + $0x24] sm:$0xf]
        %v616 = vld [vmem:[%s261 + $0x28] sm:$0xf]
        %v617 = vld [vmem:[%s261 + $0x2c] sm:$0xf]
        %v618 = vld [vmem:[%s261 + $0x30] sm:$0xf]
        %v619 = vld [vmem:[%s261 + $0x34] sm:$0xf]
        %v620 = vld [vmem:[%s261 + $0x38] sm:$0xf]
        %v621 = vld [vmem:[%s261 + $0x3c] sm:$0xf]
        %v622 = vunpack.c.l.bf16 %v606
        %v623 = vunpack.c.l.bf16 %v607
        %v624 = vunpack.c.l.bf16 %v608
        %v625 = vunpack.c.l.bf16 %v609
        %v626 = vunpack.c.l.bf16 %v610
        %v627 = vunpack.c.l.bf16 %v611
        %v628 = vunpack.c.l.bf16 %v612
        %v629 = vunpack.c.l.bf16 %v613
        %v630 = vunpack.c.l.bf16 %v614
        %v631 = vunpack.c.l.bf16 %v615
        %v632 = vunpack.c.l.bf16 %v616
        %v633 = vunpack.c.l.bf16 %v617
        %v634 = vunpack.c.l.bf16 %v618
        %v635 = vunpack.c.l.bf16 %v619
        %v636 = vunpack.c.l.bf16 %v620
        %v637 = vunpack.c.l.bf16 %v621
        %v638 = vadd.f32 %v590, %v622
        %v639 = vadd.f32 %v591, %v623
        %v640 = vadd.f32 %v592, %v624
        %v641 = vadd.f32 %v593, %v625
        %v642 = vadd.f32 %v594, %v626
        %v643 = vadd.f32 %v595, %v627
        %v644 = vadd.f32 %v596, %v628
        %v645 = vadd.f32 %v597, %v629
        %v646 = vadd.f32 %v598, %v630
        %v647 = vadd.f32 %v599, %v631
        %v648 = vadd.f32 %v600, %v632
        %v649 = vadd.f32 %v601, %v633
        %v650 = vadd.f32 %v602, %v634
        %v651 = vadd.f32 %v603, %v635
        %v652 = vadd.f32 %v604, %v636
        %v653 = vadd.f32 %v605, %v637
        %v654 = vmax.f32 %v638, 0.0
        %v655 = vmax.f32 %v639, 0.0
        %v656 = vmax.f32 %v640, 0.0
        %v657 = vmax.f32 %v641, 0.0
        %v658 = vmax.f32 %v642, 0.0
        %v659 = vmax.f32 %v643, 0.0
        %v660 = vmax.f32 %v644, 0.0
        %v661 = vmax.f32 %v645, 0.0
        %v662 = vmax.f32 %v646, 0.0
        %v663 = vmax.f32 %v647, 0.0
        %v664 = vmax.f32 %v648, 0.0
        %v665 = vmax.f32 %v649, 0.0
        %v666 = vmax.f32 %v650, 0.0
        %v667 = vmax.f32 %v651, 0.0
        %v668 = vmax.f32 %v652, 0.0
        %v669 = vmax.f32 %v653, 0.0
        %v670 = vpack.c.bf16 %v655, %v654
        %v671 = vpack.c.bf16 %v657, %v656
        %v672 = vpack.c.bf16 %v659, %v658
        %v673 = vpack.c.bf16 %v661, %v660
        %v674 = vpack.c.bf16 %v663, %v662
        %v675 = vpack.c.bf16 %v665, %v664
        %v676 = vpack.c.bf16 %v667, %v666
        %v677 = vpack.c.bf16 %v669, %v668
        %v686 = vunpack.c.l.b16 %v670
        %v687 = vunpack.c.h.b16 %v670
        %v688 = vunpack.c.l.b16 %v671
        %v689 = vunpack.c.h.b16 %v671
        %v690 = vunpack.c.l.b16 %v672
        %v691 = vunpack.c.h.b16 %v672
        %v692 = vunpack.c.l.b16 %v673
        %v693 = vunpack.c.h.b16 %v673
        %v694 = vunpack.c.l.b16 %v674
        %v695 = vunpack.c.h.b16 %v674
        %v696 = vunpack.c.l.b16 %v675
        %v697 = vunpack.c.h.b16 %v675
        %v698 = vunpack.c.l.b16 %v676
        %v699 = vunpack.c.h.b16 %v676
        %v700 = vunpack.c.l.b16 %v677
        %v701 = vunpack.c.h.b16 %v677
        %v702 = vpack.c.b16 %v686, %v686
        %v703 = vpack.c.b16 %v687, %v687
        %v704 = vpack.c.b16 %v688, %v688
        %v705 = vpack.c.b16 %v689, %v689
        %v706 = vpack.c.b16 %v690, %v690
        %v707 = vpack.c.b16 %v691, %v691
        %v708 = vpack.c.b16 %v692, %v692
        %v709 = vpack.c.b16 %v693, %v693
        %v710 = vpack.c.b16 %v694, %v694
        %v711 = vpack.c.b16 %v695, %v695
        %v712 = vpack.c.b16 %v696, %v696
        %v713 = vpack.c.b16 %v697, %v697
        %v714 = vpack.c.b16 %v698, %v698
        %v715 = vpack.c.b16 %v699, %v699
        %v716 = vpack.c.b16 %v700, %v700
        %v717 = vpack.c.b16 %v701, %v701
        %734 = vst [vmem:[%s267] sm:$0xf] %v702
        %735 = vst [vmem:[%s267 + $0x4] sm:$0xf] %v703
        %736 = vst [vmem:[%s267 + $0x8] sm:$0xf] %v704
        %737 = vst [vmem:[%s267 + $0xc] sm:$0xf] %v705
        %738 = vst [vmem:[%s267 + $0x10] sm:$0xf] %v706
        %739 = vst [vmem:[%s267 + $0x14] sm:$0xf] %v707
        %740 = vst [vmem:[%s267 + $0x18] sm:$0xf] %v708
        %741 = vst [vmem:[%s267 + $0x1c] sm:$0xf] %v709
        %742 = vst [vmem:[%s267 + $0x20] sm:$0xf] %v710
        %743 = vst [vmem:[%s267 + $0x24] sm:$0xf] %v711
        %744 = vst [vmem:[%s267 + $0x28] sm:$0xf] %v712
        %745 = vst [vmem:[%s267 + $0x2c] sm:$0xf] %v713
        %746 = vst [vmem:[%s267 + $0x30] sm:$0xf] %v714
        %747 = vst [vmem:[%s267 + $0x34] sm:$0xf] %v715
        %748 = vst [vmem:[%s267 + $0x38] sm:$0xf] %v716
        %749 = vst [vmem:[%s267 + $0x3c] sm:$0xf] %v717
      $region44: #{resnet_server_forward.13} parent=35 // pred_fallthru
        _
      %s750 = smul.u32 16, %s19
      %p751 = scmp.lt.s32.totalorder %s750, 15
      %s752 = scalar_select %p751, %s750, 15
      %s753 = smul.addr %s752, 4
      %s754 = scalar_lea.vmem %s4, %s753
      // Predicated region
      $region45: #{resnet_server_forward.13} parent=35 // pred_check
        %p755 = pneg %p146
      $region46: #{resnet_server_forward.13} parent=35 // pred_check_branch
        %757 = sbr.rel (%p755) target = $region48
      $region47: #{resnet_server_forward.13} parent=35 // pred_region
        %s758 = smul.u32 16, %s19
      $region48: #{resnet_server_forward.13} parent=35 // pred_fallthru
        _
      // Predicated region
      $region49: #{resnet_server_forward.13} parent=35 // pred_check
        %p759 = pneg %p146
      $region50: #{resnet_server_forward.13} parent=35 // pred_check_branch
        %761 = sbr.rel (%p759) target = $region52
      $region51: #{resnet_server_forward.13} parent=35 // pred_region
        %s762 = smul.u32 16, %s19
        %p763 = scmp.lt.s32.totalorder %s762, 15
        %s764 = scalar_select %p763, %s762, 15
        %s765 = smul.addr %s764, 4
        %s766 = scalar_lea.vmem %s4, %s765
      $region52: #{resnet_server_forward.13} parent=35 // pred_fallthru
        _
    $region36: #{resnet_server_forward.13} parent=5 // pred_fallthru
      _
    %p767 = scmp.le.s32.totalorder 2, %s10
    // Predicated region
    $region53: #{resnet_server_forward.13} parent=5 // pred_check
      %p768 = pneg %p767
    $region54: #{resnet_server_forward.13} parent=5 // pred_check_branch
      %770 = sbr.rel (%p768) target = $region56
    $region55: #{resnet_server_forward.13} parent=5 // pred_region
      %s771 = ssub.s32 %s10, 2
    $region56: #{resnet_server_forward.13} parent=5 // pred_fallthru
      _
  $region6: #{resnet_server_forward.13} parent=0 // loop_footer
    %s14 = sadd.s32 1, %s10
  $region7: #{resnet_server_forward.13} parent=0 // loop_footer_branch
    %9 = sbr.rel target = $region3
  $region8: #{resnet_server_forward.13} parent=0 // loop_exit
    _

// kernel: resnet_server_forward.12
$region0: #{resnet_server_forward.12}
  #allocation0 [shape = 'u32[]', space=smem, size = 0x4, offset = 0x4, fixed_abs, tag = 'smem constant byte address 0x4 - core index']
  #allocation1 [shape = 'u32[144,128]{1,0:T(1,128)}', space=vmem, size = 0x12000, scoped, tag = 'internal scratch']
  #allocation2 [shape = 'f32[128,128]{1,0:T(8,128)}', space=vmem, size = 0x10000, scoped, tag = 'scratch operand']
  %s0 = inlined_call_operand.vmem [shape: bf16[9,128,128], index: 0, kind: input, shape index: {}]
  %s1 = inlined_call_operand.hbm [shape: bf16[9,128,128], index: 1, kind: input, shape index: {}]
  %s2 = inlined_call_operand.hbm [shape: f32[1,128], index: 2, kind: input, shape index: {}]
  %s3 = inlined_call_operand.vmem [shape: bf16[128,128], index: 3, kind: output, shape index: {}]
  %s4 = sld [smem:[#allocation0]]
  $region61: #{resnet_server_forward.12} parent=0
    _
  %s6 = ssub.s32 1, %s4
  %s7 = scalar_select 0, %s6, %s4
  $region1: #{resnet_server_forward.12} parent=0
    #allocation3 [shape = 'u8[65536]{0}', space=vmem, size = 0x10000, scoped, tag = 'input window, operand 1']
    #allocation4 [shape = 's32[2]{0}', space=sflag, size = 0x8, scoped, tag = 'scoped memory for resnet_server_forward.12']
    #allocation5 [shape = 'u8[512]{0}', space=vmem, size = 0x400, scoped, tag = 'input window, operand 2, single buffered']
    #allocation6 [shape = 's32[1]{0}', space=sflag, size = 0x4, scoped, tag = 'scoped memory for resnet_server_forward.12']
    %8 = vsyncpa [#allocation4], 0
    %s9 = scalar_lea.sflag [#allocation4], 1
    %10 = vsyncpa %s9, 0
    %11 = vsyncpa [#allocation6], 0
    loop: start=0, step=1, limit=11
    $region2: #{resnet_server_forward.12} parent=1 // loop_pre_header
      _
    $region3: #{resnet_server_forward.12} parent=1 // loop_header
      %s13 = sphi 0, %s17
      %p14 = scmp.ge.s32.totalorder %s13, 11
      %s20 = sphi 0, %s32
      %s21 = sphi 0, %s28
      %s22 = sphi 0, %s20
      %s23 = sphi 0, %s21
      %s24 = sphi 0, %s22
      %s25 = sphi 0, %s23
      %s37 = sphi 0, %s39
      %s40 = sphi 0, %s37
      %s41 = sphi 0, %s40
      %s57 = sphi 0, %s41
      %s63 = sphi 0, %s65
      %s66 = sphi 0, %s63
      %s67 = sphi 0, %s66
      %s83 = sphi 0, %s67
      %s87 = sphi 0, %s87
      %s89 = sphi 0, %s87
      %s90 = sphi 0, %s89
      %s104 = sphi 0, %s90
      %s110 = sphi 0, %s112
      %s113 = sphi 0, %s110
      %s114 = sphi 0, %s113
      %s130 = sphi 0, %s114
    $region4: #{resnet_server_forward.12} parent=1 // loop_header_branch
      %16 = sbr.rel (%p14) target = $region8
    $region5: #{resnet_server_forward.12} parent=1 // loop_body
      %s18 = ssub.s32 %s13, 1
      %s19 = ssub.s32 %s13, 2
      %s26 = sadd.s32 1, %s21
      %p27 = scmp.ge.s32.totalorder %s26, 9
      %s28 = scalar_select %p27, 0, %s26
      %s29 = sadd.s32 1, %s20
      %s30 = scalar_select %p27, %s29, %s20
      %p31 = scmp.ge.s32.totalorder %s30, 1
      %s32 = scalar_select %p31, 0, %s30
      %s33 = ssub.s32 %s21, %s28
      %s34 = ssub.s32 %s20, %s32
      %s35 = sor.u32 %s33, %s34
      %p36 = scmp.eq.s32.totalorder %s35, 0
      %s38 = sadd.s32 %s37, 1
      %s39 = scalar_select %p36, %s37, %s38
      %p42 = pneg %p36
      %p43 = scmp.eq.s32.totalorder %s13, 8
      %p44 = por %p42, %p43
      %p45 = scmp.ne.s32.totalorder %s37, %s40
      %p46 = scmp.eq.s32.totalorder %s13, 0
      %p47 = por %p45, %p46
      %p48 = scmp.ne.s32.totalorder %s37, %s40
      %p49 = scmp.eq.s32.totalorder %s18, 8
      %p50 = por %p48, %p49
      %p51 = scmp.ne.s32.totalorder %s40, %s41
      %p52 = scmp.eq.s32.totalorder %s18, 0
      %p53 = por %p51, %p52
      %p54 = scmp.ne.s32.totalorder %s40, %s41
      %p55 = scmp.eq.s32.totalorder %s19, 8
      %p56 = por %p54, %p55
      %p58 = scmp.ne.s32.totalorder %s41, %s57
      %p59 = scmp.eq.s32.totalorder %s19, 0
      %p60 = por %p58, %p59
      %s61 = ssub.s32 %s21, %s28
      %p62 = scmp.eq.s32.totalorder %s61, 0
      %s64 = sadd.s32 %s63, 1
      %s65 = scalar_select %p62, %s63, %s64
      %p68 = pneg %p62
      %p69 = scmp.eq.s32.totalorder %s13, 8
      %p70 = por %p68, %p69
      %p71 = scmp.ne.s32.totalorder %s63, %s66
      %p72 = scmp.eq.s32.totalorder %s13, 0
      %p73 = por %p71, %p72
      %p74 = scmp.ne.s32.totalorder %s63, %s66
      %p75 = scmp.eq.s32.totalorder %s18, 8
      %p76 = por %p74, %p75
      %p77 = scmp.ne.s32.totalorder %s66, %s67
      %p78 = scmp.eq.s32.totalorder %s18, 0
      %p79 = por %p77, %p78
      %p80 = scmp.ne.s32.totalorder %s66, %s67
      %p81 = scmp.eq.s32.totalorder %s19, 8
      %p82 = por %p80, %p81
      %p84 = scmp.ne.s32.totalorder %s67, %s83
      %p85 = scmp.eq.s32.totalorder %s19, 0
      %p86 = por %p84, %p85
      %s88 = sadd.s32 %s87, 1
      %p91 = scmp.eq.s32.totalorder %s13, 8
      %p92 = scmp.ne.s32.totalorder %s87, %s89
      %p93 = scmp.eq.s32.totalorder %s13, 0
      %p94 = por %p92, %p93
      %p95 = scmp.ne.s32.totalorder %s87, %s89
      %p96 = scmp.eq.s32.totalorder %s18, 8
      %p97 = por %p95, %p96
      %p98 = scmp.ne.s32.totalorder %s89, %s90
      %p99 = scmp.eq.s32.totalorder %s18, 0
      %p100 = por %p98, %p99
      %p101 = scmp.ne.s32.totalorder %s89, %s90
      %p102 = scmp.eq.s32.totalorder %s19, 8
      %p103 = por %p101, %p102
      %p105 = scmp.ne.s32.totalorder %s90, %s104
      %p106 = scmp.eq.s32.totalorder %s19, 0
      %p107 = por %p105, %p106
      %s108 = ssub.s32 %s20, %s32
      %p109 = scmp.eq.s32.totalorder %s108, 0
      %s111 = sadd.s32 %s110, 1
      %s112 = scalar_select %p109, %s110, %s111
      %p115 = pneg %p109
      %p116 = scmp.eq.s32.totalorder %s13, 8
      %p117 = por %p115, %p116
      %p118 = scmp.ne.s32.totalorder %s110, %s113
      %p119 = scmp.eq.s32.totalorder %s13, 0
      %p120 = por %p118, %p119
      %p121 = scmp.ne.s32.totalorder %s110, %s113
      %p122 = scmp.eq.s32.totalorder %s18, 8
      %p123 = por %p121, %p122
      %p124 = scmp.ne.s32.totalorder %s113, %s114
      %p125 = scmp.eq.s32.totalorder %s18, 0
      %p126 = por %p124, %p125
      %p127 = scmp.ne.s32.totalorder %s113, %s114
      %p128 = scmp.eq.s32.totalorder %s19, 8
      %p129 = por %p127, %p128
      %p131 = scmp.ne.s32.totalorder %s114, %s130
      %p132 = scmp.eq.s32.totalorder %s19, 0
      %p133 = por %p131, %p132
      %p134 = scmp.le.s32.totalorder 1, %s13
      %p135 = scmp.lt.s32.totalorder %s13, 10
      %p136 = pnand %p134, %p135
      %p137 = pneg %p136
      // Predicated region
      $region9: #{resnet_server_forward.12} parent=5 // pred_check
        _
      $region10: #{resnet_server_forward.12} parent=5 // pred_check_branch
        %139 = sbr.rel (%p136) target = $region12
      $region11: #{resnet_server_forward.12} parent=5 // pred_region
        %s140 = ssub.s32 %s13, 1
        // Predicated region
        $region13: #{resnet_server_forward.12} parent=11 // pred_check
          %p141 = pneg %p100
        $region14: #{resnet_server_forward.12} parent=11 // pred_check_branch
          %143 = sbr.rel (%p141) target = $region16
        $region15: #{resnet_server_forward.12} parent=11 // pred_region
          %s145 = ssub.s32 16, 16
          %146 = vsyncadd [#allocation6], %s145
          %s148 = sshll.u32 [#allocation5], 4
          %s149 = int_to_ptr.vmem [resolvable:$true] %s148
          %151 = dma.hbm_to_vmem [thread:$0]  %s2, 16, %s149, [#allocation6]
        $region16: #{resnet_server_forward.12} parent=11 // pred_fallthru
          _
      $region12: #{resnet_server_forward.12} parent=5 // pred_fallthru
        _
      %p152 = scmp.lt.s32.totalorder %s13, 9
      // Predicated region
      $region17: #{resnet_server_forward.12} parent=5 // pred_check
        %p153 = pneg %p152
      $region18: #{resnet_server_forward.12} parent=5 // pred_check_branch
        %155 = sbr.rel (%p153) target = $region20
      $region19: #{resnet_server_forward.12} parent=5 // pred_region
        // Predicated region
        $region21: #{resnet_server_forward.12} parent=19 // pred_check
          %p156 = pneg %p47
        $region22: #{resnet_server_forward.12} parent=19 // pred_check_branch
          %158 = sbr.rel (%p156) target = $region24
        $region23: #{resnet_server_forward.12} parent=19 // pred_region
          %s159 = smul.u32 16, %s20
          %p160 = scmp.lt.s32.totalorder %s21, 8
          %s161 = scalar_select %p160, %s21, 8
          %p162 = scmp.lt.s32.totalorder %s159, 15
          %s163 = scalar_select %p162, %s159, 15
          %s164 = smul.addr %s161, 16
          %s165 = sadd.s32 %s163, %s164
          %s166 = smul.addr %s165, 4
          %s167 = scalar_lea.vmem %s0, %s166
          %s168 = smul.u32 16, %s20
        $region24: #{resnet_server_forward.12} parent=19 // pred_fallthru
          _
        // Predicated region
        $region25: #{resnet_server_forward.12} parent=19 // pred_check
          %p169 = pneg %p73
        $region26: #{resnet_server_forward.12} parent=19 // pred_check_branch
          %171 = sbr.rel (%p169) target = $region28
        $region27: #{resnet_server_forward.12} parent=19 // pred_region
          %s172 = sand.u32 %s63, 1
          %s173 = scalar_lea.sflag [#allocation4], %s172
          %s174 = sand.u32 %s63, 1
          %s175 = smul.addr %s174, 64
          %s176 = scalar_lea.vmem [#allocation3], %s175
          %s178 = ssub.s32 1024, 1024
          %179 = vsyncadd %s173, %s178
          %s180 = smul.addr %s21, 16
          %s181 = smul.addr %s180, 64
          %s182 = scalar_lea.hbm %s1, %s181
          %s183 = sshll.u32 %s176, 4
          %s184 = int_to_ptr.vmem [resolvable:$true] %s183
          %189 = dma.hbm_to_vmem [thread:$0]  %s182, 1024, %s184, %s173, 64, 64, 4
        $region28: #{resnet_server_forward.12} parent=19 // pred_fallthru
          _
      $region20: #{resnet_server_forward.12} parent=5 // pred_fallthru
        _
      %p190 = scmp.le.s32.totalorder 1, %s13
      %p191 = scmp.lt.s32.totalorder %s13, 10
      %p192 = pnand %p190, %p191
      %p193 = pneg %p192
      // Predicated region
      $region29: #{resnet_server_forward.12} parent=5 // pred_check
        _
      $region30: #{resnet_server_forward.12} parent=5 // pred_check_branch
        %195 = sbr.rel (%p192) target = $region32
      $region31: #{resnet_server_forward.12} parent=5 // pred_region
        %s196 = ssub.s32 %s13, 1
        %s197 = sand.u32 %s66, 1
        %s198 = scalar_lea.sflag [#allocation4], %s197
        %s199 = sand.u32 %s66, 1
        %s200 = smul.addr %s199, 64
        %s201 = scalar_lea.vmem [#allocation3], %s200
        // Predicated region
        $region33: #{resnet_server_forward.12} parent=31 // pred_check
          %p202 = pneg %p79
        $region34: #{resnet_server_forward.12} parent=31 // pred_check_branch
          %204 = sbr.rel (%p202) target = $region36
        $region35: #{resnet_server_forward.12} parent=31 // pred_region
          %205 = dma.done %s198, 1024
        $region36: #{resnet_server_forward.12} parent=31 // pred_fallthru
          _
        // Predicated region
        $region37: #{resnet_server_forward.12} parent=31 // pred_check
          %p206 = pneg %p100
        $region38: #{resnet_server_forward.12} parent=31 // pred_check_branch
          %208 = sbr.rel (%p206) target = $region40
        $region39: #{resnet_server_forward.12} parent=31 // pred_region
          %209 = dma.done [#allocation6], 16
        $region40: #{resnet_server_forward.12} parent=31 // pred_fallthru
          _
        %s210 = smul.u32 16, %s22
        %p211 = scmp.lt.s32.totalorder %s23, 8
        %s212 = scalar_select %p211, %s23, 8
        %p213 = scmp.lt.s32.totalorder %s210, 15
        %s214 = scalar_select %p213, %s210, 15
        %s215 = smul.addr %s212, 16
        %s216 = sadd.s32 %s214, %s215
        %s217 = smul.addr %s216, 4
        %s218 = scalar_lea.vmem %s0, %s217
        %p219 = pneg %p53
        %p220 = pneg %p50
        %s221 = sand.u32 %s66, 1
        %s222 = scalar_lea.sflag [#allocation4], %s221
        %s223 = sand.u32 %s66, 1
        %s224 = smul.addr %s223, 64
        %s225 = scalar_lea.vmem [#allocation3], %s224
        %p226 = pneg %p79
        %p227 = pneg %p76
        %p228 = pneg %p100
        %p229 = pneg %p97
        %p230 = pneg %p126
        %p231 = pneg %p123
        %s232 = smul.u32 16, %s22
        %p233 = scmp.lt.s32.totalorder %s232, 15
        %s234 = scalar_select %p233, %s232, 15
        %s235 = smul.addr %s234, 4
        %s236 = scalar_lea.vmem %s3, %s235
        %s237 = smul.u32 16, %s22
        %p238 = scmp.lt.s32.totalorder %s23, 8
        %s239 = scalar_select %p238, %s23, 8
        %p240 = scmp.lt.s32.totalorder %s237, 15
        %s241 = scalar_select %p240, %s237, 15
        %s242 = smul.addr %s239, 16
        %s243 = sadd.s32 %s241, %s242
        %s244 = smul.addr %s243, 4
        %s245 = scalar_lea.vmem %s0, %s244
        %s246 = smul.u32 16, %s22
        %s247 = smul.u32 16, %s22
        %p248 = scmp.lt.s32.totalorder %s247, 15
        %s249 = scalar_select %p248, %s247, 15
        %s250 = smul.addr %s249, 4
        %s251 = scalar_lea.vmem %s3, %s250
        %s252 = smul.u32 16, %s22
        %p254 = scmp.eq.s32.totalorder %s23, 0
        // Predicated region
        $region41: #{resnet_server_forward.12} parent=31 // pred_check
          %p255 = pneg %p254
        $region42: #{resnet_server_forward.12} parent=31 // pred_check_branch
          %257 = sbr.rel (%p255) target = $region44
        $region43: #{resnet_server_forward.12} parent=31 // pred_region
          %258 = vst [vmem:[#allocation2] sm:$0xff] 0.0
          %259 = vst [vmem:[#allocation2 + $0x8] sm:$0xff] 0.0
          %260 = vst [vmem:[#allocation2 + $0x10] sm:$0xff] 0.0
          %261 = vst [vmem:[#allocation2 + $0x18] sm:$0xff] 0.0
          %262 = vst [vmem:[#allocation2 + $0x20] sm:$0xff] 0.0
          %263 = vst [vmem:[#allocation2 + $0x28] sm:$0xff] 0.0
          %264 = vst [vmem:[#allocation2 + $0x30] sm:$0xff] 0.0
          %265 = vst [vmem:[#allocation2 + $0x38] sm:$0xff] 0.0
          %266 = vst [vmem:[#allocation2 + $0x40] sm:$0xff] 0.0
          %267 = vst [vmem:[#allocation2 + $0x48] sm:$0xff] 0.0
          %268 = vst [vmem:[#allocation2 + $0x50] sm:$0xff] 0.0
          %269 = vst [vmem:[#allocation2 + $0x58] sm:$0xff] 0.0
          %270 = vst [vmem:[#allocation2 + $0x60] sm:$0xff] 0.0
          %271 = vst [vmem:[#allocation2 + $0x68] sm:$0xff] 0.0
          %272 = vst [vmem:[#allocation2 + $0x70] sm:$0xff] 0.0
          %273 = vst [vmem:[#allocation2 + $0x78] sm:$0xff] 0.0
        $region44: #{resnet_server_forward.12} parent=31 // pred_fallthru
          _
        %v274 = vld [vmem:[#allocation2] sm:$0xff]
        %v275 = vld [vmem:[#allocation2 + $0x8] sm:$0xff]
        %v276 = vld [vmem:[#allocation2 + $0x10] sm:$0xff]
        %v277 = vld [vmem:[#allocation2 + $0x18] sm:$0xff]
        %v278 = vld [vmem:[#allocation2 + $0x20] sm:$0xff]
        %v279 = vld [vmem:[#allocation2 + $0x28] sm:$0xff]
        %v280 = vld [vmem:[#allocation2 + $0x30] sm:$0xff]
        %v281 = vld [vmem:[#allocation2 + $0x38] sm:$0xff]
        %v282 = vld [vmem:[#allocation2 + $0x40] sm:$0xff]
        %v283 = vld [vmem:[#allocation2 + $0x48] sm:$0xff]
        %v284 = vld [vmem:[#allocation2 + $0x50] sm:$0xff]
        %v285 = vld [vmem:[#allocation2 + $0x58] sm:$0xff]
        %v286 = vld [vmem:[#allocation2 + $0x60] sm:$0xff]
        %v287 = vld [vmem:[#allocation2 + $0x68] sm:$0xff]
        %v288 = vld [vmem:[#allocation2 + $0x70] sm:$0xff]
        %v289 = vld [vmem:[#allocation2 + $0x78] sm:$0xff]
        %v290 = vld [vmem:[%s245] sm:$0xf]
        %v291 = vld [vmem:[%s245 + $0x4] sm:$0xf]
        %v292 = vld [vmem:[%s245 + $0x8] sm:$0xf]
        %v293 = vld [vmem:[%s245 + $0xc] sm:$0xf]
        %v294 = vld [vmem:[%s245 + $0x10] sm:$0xf]
        %v295 = vld [vmem:[%s245 + $0x14] sm:$0xf]
        %v296 = vld [vmem:[%s245 + $0x18] sm:$0xf]
        %v297 = vld [vmem:[%s245 + $0x1c] sm:$0xf]
        %v298 = vld [vmem:[%s245 + $0x20] sm:$0xf]
        %v299 = vld [vmem:[%s245 + $0x24] sm:$0xf]
        %v300 = vld [vmem:[%s245 + $0x28] sm:$0xf]
        %v301 = vld [vmem:[%s245 + $0x2c] sm:$0xf]
        %v302 = vld [vmem:[%s245 + $0x30] sm:$0xf]
        %v303 = vld [vmem:[%s245 + $0x34] sm:$0xf]
        %v304 = vld [vmem:[%s245 + $0x38] sm:$0xf]
        %v305 = vld [vmem:[%s245 + $0x3c] sm:$0xf]
        %v306 = vld [vmem:[%s201] sm:$0xf]
        %v307 = vld [vmem:[%s201 + $0x4] sm:$0xf]
        %v308 = vld [vmem:[%s201 + $0x8] sm:$0xf]
        %v309 = vld [vmem:[%s201 + $0xc] sm:$0xf]
        %v310 = vld [vmem:[%s201 + $0x10] sm:$0xf]
        %v311 = vld [vmem:[%s201 + $0x14] sm:$0xf]
        %v312 = vld [vmem:[%s201 + $0x18] sm:$0xf]
        %v313 = vld [vmem:[%s201 + $0x1c] sm:$0xf]
        %v314 = vld [vmem:[%s201 + $0x20] sm:$0xf]
        %v315 = vld [vmem:[%s201 + $0x24] sm:$0xf]
        %v316 = vld [vmem:[%s201 + $0x28] sm:$0xf]
        %v317 = vld [vmem:[%s201 + $0x2c] sm:$0xf]
        %v318 = vld [vmem:[%s201 + $0x30] sm:$0xf]
        %v319 = vld [vmem:[%s201 + $0x34] sm:$0xf]
        %v320 = vld [vmem:[%s201 + $0x38] sm:$0xf]
        %v321 = vld [vmem:[%s201 + $0x3c] sm:$0xf]
        %v338 = vunpack.c.l.b16 %v290
        %v339 = vunpack.c.l.b16 %v291
        %v340 = vunpack.c.l.b16 %v292
        %v341 = vunpack.c.l.b16 %v293
        %v342 = vunpack.c.l.b16 %v294
        %v343 = vunpack.c.l.b16 %v295
        %v344 = vunpack.c.l.b16 %v296
        %v345 = vunpack.c.l.b16 %v297
        %v346 = vunpack.c.l.b16 %v298
        %v347 = vunpack.c.l.b16 %v299
        %v348 = vunpack.c.l.b16 %v300
        %v349 = vunpack.c.l.b16 %v301
        %v350 = vunpack.c.l.b16 %v302
        %v351 = vunpack.c.l.b16 %v303
        %v352 = vunpack.c.l.b16 %v304
        %v353 = vunpack.c.l.b16 %v305
        %v354 = vpack.c.b16 %v339, %v338
        %v355 = vpack.c.b16 %v341, %v340
        %v356 = vpack.c.b16 %v343, %v342
        %v357 = vpack.c.b16 %v345, %v344
        %v358 = vpack.c.b16 %v347, %v346
        %v359 = vpack.c.b16 %v349, %v348
        %v360 = vpack.c.b16 %v351, %v350
        %v361 = vpack.c.b16 %v353, %v352
        %v386 = vunpack.c.l.b16 %v306
        %v387 = vunpack.c.l.b16 %v307
        %v388 = vunpack.c.l.b16 %v308
        %v389 = vunpack.c.l.b16 %v309
        %v390 = vunpack.c.l.b16 %v310
        %v391 = vunpack.c.l.b16 %v311
        %v392 = vunpack.c.l.b16 %v312
        %v393 = vunpack.c.l.b16 %v313
        %v394 = vunpack.c.l.b16 %v314
        %v395 = vunpack.c.l.b16 %v315
        %v396 = vunpack.c.l.b16 %v316
        %v397 = vunpack.c.l.b16 %v317
        %v398 = vunpack.c.l.b16 %v318
        %v399 = vunpack.c.l.b16 %v319
        %v400 = vunpack.c.l.b16 %v320
        %v401 = vunpack.c.l.b16 %v321
        %v402 = vpack.c.b16 %v387, %v386
        %v403 = vpack.c.b16 %v389, %v388
        %v404 = vpack.c.b16 %v391, %v390
        %v405 = vpack.c.b16 %v393, %v392
        %v406 = vpack.c.b16 %v395, %v394
        %v407 = vpack.c.b16 %v397, %v396
        %v408 = vpack.c.b16 %v399, %v398
        %v409 = vpack.c.b16 %v401, %v400
        %418 = vmatprep.subr.bf16.mxu0 0
        %419 = vmatpush1.bf16.msra.mxu0 %v409
        %420 = vmatprep.subr.bf16.mxu0 0
        %421 = vmatpush1.bf16.msra.mxu0 %v408
        %422 = vmatprep.subr.bf16.mxu0 0
        %423 = vmatpush1.bf16.msra.mxu0 %v407
        %424 = vmatprep.subr.bf16.mxu0 0
        %425 = vmatpush1.bf16.msra.mxu0 %v406
        %426 = vmatprep.subr.bf16.mxu0 0
        %427 = vmatpush1.bf16.msra.mxu0 %v405
        %428 = vmatprep.subr.bf16.mxu0 0
        %429 = vmatpush1.bf16.msra.mxu0 %v404
        %430 = vmatprep.subr.bf16.mxu0 0
        %431 = vmatpush1.bf16.msra.mxu0 %v403
        %432 = vmatprep.subr.bf16.mxu0 0
        %433 = vmatpush1.bf16.msra.mxu0 %v402
        %434 = vmatprep.subr.bf16.mxu0 0
        %435 = vmatpush2.bf16.msra.mxu0 0
        %436 = vmatprep.subr.bf16.mxu0 0
        %437 = vmatpush2.bf16.msra.mxu0 0
        %438 = vmatprep.subr.bf16.mxu0 0
        %439 = vmatpush2.bf16.msra.mxu0 0
        %440 = vmatprep.subr.bf16.mxu0 0
        %441 = vmatpush2.bf16.msra.mxu0 0
        %442 = vmatprep.subr.bf16.mxu0 0
        %443 = vmatpush2.bf16.msra.mxu0 0
        %444 = vmatprep.subr.bf16.mxu0 0
        %445 = vmatpush2.bf16.msra.mxu0 0
        %446 = vmatprep.subr.bf16.mxu0 0
        %447 = vmatpush2.bf16.msra.mxu0 0
        %448 = vmatprep.subr.bf16.mxu0 0
        %449 = vmatpush2.bf16.msra.mxu0 0
        %450 = vmatprep.mubr.bf16.mxu0 0
        %451 = vmatmul.mubr.bf16.gmra.mxu0 %v354
        %v452 = vpop.f32.mrf.mxu0
        %v453 = vadd.f32 0.0, %v452
        %v454 = vpop.f32.mrf.mxu0
        %v455 = vpop.f32.mrf.mxu0
        %v456 = vadd.f32 0.0, %v455
        %v457 = vpop.f32.mrf.mxu0
        %458 = vmatprep.mubr.bf16.mxu0 0
        %459 = vmatmul.mubr.bf16.gmra.mxu0 %v355
        %v460 = vpop.f32.mrf.mxu0
        %v461 = vadd.f32 0.0, %v460
        %v462 = vpop.f32.mrf.mxu0
        %v463 = vpop.f32.mrf.mxu0
        %v464 = vadd.f32 0.0, %v463
        %v465 = vpop.f32.mrf.mxu0
        %466 = vmatprep.mubr.bf16.mxu0 0
        %467 = vmatmul.mubr.bf16.gmra.mxu0 %v356
        %v468 = vpop.f32.mrf.mxu0
        %v469 = vadd.f32 0.0, %v468
        %v470 = vpop.f32.mrf.mxu0
        %v471 = vpop.f32.mrf.mxu0
        %v472 = vadd.f32 0.0, %v471
        %v473 = vpop.f32.mrf.mxu0
        %474 = vmatprep.mubr.bf16.mxu0 0
        %475 = vmatmul.mubr.bf16.gmra.mxu0 %v357
        %v476 = vpop.f32.mrf.mxu0
        %v477 = vadd.f32 0.0, %v476
        %v478 = vpop.f32.mrf.mxu0
        %v479 = vpop.f32.mrf.mxu0
        %v480 = vadd.f32 0.0, %v479
        %v481 = vpop.f32.mrf.mxu0
        %482 = vmatprep.mubr.bf16.mxu0 0
        %483 = vmatmul.mubr.bf16.gmra.mxu0 %v358
        %v484 = vpop.f32.mrf.mxu0
        %v485 = vadd.f32 0.0, %v484
        %v486 = vpop.f32.mrf.mxu0
        %v487 = vpop.f32.mrf.mxu0
        %v488 = vadd.f32 0.0, %v487
        %v489 = vpop.f32.mrf.mxu0
        %490 = vmatprep.mubr.bf16.mxu0 0
        %491 = vmatmul.mubr.bf16.gmra.mxu0 %v359
        %v492 = vpop.f32.mrf.mxu0
        %v493 = vadd.f32 0.0, %v492
        %v494 = vpop.f32.mrf.mxu0
        %v495 = vpop.f32.mrf.mxu0
        %v496 = vadd.f32 0.0, %v495
        %v497 = vpop.f32.mrf.mxu0
        %498 = vmatprep.mubr.bf16.mxu0 0
        %499 = vmatmul.mubr.bf16.gmra.mxu0 %v360
        %v500 = vpop.f32.mrf.mxu0
        %v501 = vadd.f32 0.0, %v500
        %v502 = vpop.f32.mrf.mxu0
        %v503 = vpop.f32.mrf.mxu0
        %v504 = vadd.f32 0.0, %v503
        %v505 = vpop.f32.mrf.mxu0
        %506 = vmatprep.mubr.bf16.mxu0 0
        %507 = vmatmul.mubr.bf16.gmra.mxu0 %v361
        %v508 = vpop.f32.mrf.mxu0
        %v509 = vadd.f32 0.0, %v508
        %v510 = vpop.f32.mrf.mxu0
        %v511 = vpop.f32.mrf.mxu0
        %v512 = vadd.f32 0.0, %v511
        %v513 = vpop.f32.mrf.mxu0
        %514 = vdwg.mxu0
        %v515 = vadd.f32 %v274, %v453
        %v516 = vadd.f32 %v275, %v456
        %v517 = vadd.f32 %v276, %v461
        %v518 = vadd.f32 %v277, %v464
        %v519 = vadd.f32 %v278, %v469
        %v520 = vadd.f32 %v279, %v472
        %v521 = vadd.f32 %v280, %v477
        %v522 = vadd.f32 %v281, %v480
        %v523 = vadd.f32 %v282, %v485
        %v524 = vadd.f32 %v283, %v488
        %v525 = vadd.f32 %v284, %v493
        %v526 = vadd.f32 %v285, %v496
        %v527 = vadd.f32 %v286, %v501
        %v528 = vadd.f32 %v287, %v504
        %v529 = vadd.f32 %v288, %v509
        %v530 = vadd.f32 %v289, %v512
        %531 = vst [vmem:[#allocation2] sm:$0xff] %v515
        %532 = vst [vmem:[#allocation2 + $0x8] sm:$0xff] %v516
        %533 = vst [vmem:[#allocation2 + $0x10] sm:$0xff] %v517
        %534 = vst [vmem:[#allocation2 + $0x18] sm:$0xff] %v518
        %535 = vst [vmem:[#allocation2 + $0x20] sm:$0xff] %v519
        %536 = vst [vmem:[#allocation2 + $0x28] sm:$0xff] %v520
        %537 = vst [vmem:[#allocation2 + $0x30] sm:$0xff] %v521
        %538 = vst [vmem:[#allocation2 + $0x38] sm:$0xff] %v522
        %539 = vst [vmem:[#allocation2 + $0x40] sm:$0xff] %v523
        %540 = vst [vmem:[#allocation2 + $0x48] sm:$0xff] %v524
        %541 = vst [vmem:[#allocation2 + $0x50] sm:$0xff] %v525
        %542 = vst [vmem:[#allocation2 + $0x58] sm:$0xff] %v526
        %543 = vst [vmem:[#allocation2 + $0x60] sm:$0xff] %v527
        %544 = vst [vmem:[#allocation2 + $0x68] sm:$0xff] %v528
        %545 = vst [vmem:[#allocation2 + $0x70] sm:$0xff] %v529
        %546 = vst [vmem:[#allocation2 + $0x78] sm:$0xff] %v530
        %p547 = scmp.eq.s32.totalorder %s23, 8
        // Predicated region
        $region45: #{resnet_server_forward.12} parent=31 // pred_check
          %p548 = pneg %p547
        $region46: #{resnet_server_forward.12} parent=31 // pred_check_branch
          %550 = sbr.rel (%p548) target = $region48
        $region47: #{resnet_server_forward.12} parent=31 // pred_region
          %v551 = vld [vmem:[#allocation2] sm:$0xff]
          %v552 = vld [vmem:[#allocation2 + $0x8] sm:$0xff]
          %v553 = vld [vmem:[#allocation2 + $0x10] sm:$0xff]
          %v554 = vld [vmem:[#allocation2 + $0x18] sm:$0xff]
          %v555 = vld [vmem:[#allocation2 + $0x20] sm:$0xff]
          %v556 = vld [vmem:[#allocation2 + $0x28] sm:$0xff]
          %v557 = vld [vmem:[#allocation2 + $0x30] sm:$0xff]
          %v558 = vld [vmem:[#allocation2 + $0x38] sm:$0xff]
          %v559 = vld [vmem:[#allocation2 + $0x40] sm:$0xff]
          %v560 = vld [vmem:[#allocation2 + $0x48] sm:$0xff]
          %v561 = vld [vmem:[#allocation2 + $0x50] sm:$0xff]
          %v562 = vld [vmem:[#allocation2 + $0x58] sm:$0xff]
          %v563 = vld [vmem:[#allocation2 + $0x60] sm:$0xff]
          %v564 = vld [vmem:[#allocation2 + $0x68] sm:$0xff]
          %v565 = vld [vmem:[#allocation2 + $0x70] sm:$0xff]
          %v566 = vld [vmem:[#allocation2 + $0x78] sm:$0xff]
          %v567 = vld [vmem:[#allocation5] sm:$0x1]
          %v569 = vlaneseq
          %v570 = vshrl.u32 %v569, 7
          %v571 = vsub.s32 0, %v570
          %v572 = vrot.slane %v567, %v571
          %v574 = vadd.f32 %v551, %v572
          %v575 = vadd.f32 %v552, %v572
          %v576 = vadd.f32 %v553, %v572
          %v577 = vadd.f32 %v554, %v572
          %v578 = vadd.f32 %v555, %v572
          %v579 = vadd.f32 %v556, %v572
          %v580 = vadd.f32 %v557, %v572
          %v581 = vadd.f32 %v558, %v572
          %v582 = vadd.f32 %v559, %v572
          %v583 = vadd.f32 %v560, %v572
          %v584 = vadd.f32 %v561, %v572
          %v585 = vadd.f32 %v562, %v572
          %v586 = vadd.f32 %v563, %v572
          %v587 = vadd.f32 %v564, %v572
          %v588 = vadd.f32 %v565, %v572
          %v589 = vadd.f32 %v566, %v572
          %v590 = vmax.f32 %v574, 0.0
          %v591 = vmax.f32 %v575, 0.0
          %v592 = vmax.f32 %v576, 0.0
          %v593 = vmax.f32 %v577, 0.0
          %v594 = vmax.f32 %v578, 0.0
          %v595 = vmax.f32 %v579, 0.0
          %v596 = vmax.f32 %v580, 0.0
          %v597 = vmax.f32 %v581, 0.0
          %v598 = vmax.f32 %v582, 0.0
          %v599 = vmax.f32 %v583, 0.0
          %v600 = vmax.f32 %v584, 0.0
          %v601 = vmax.f32 %v585, 0.0
          %v602 = vmax.f32 %v586, 0.0
          %v603 = vmax.f32 %v587, 0.0
          %v604 = vmax.f32 %v588, 0.0
          %v605 = vmax.f32 %v589, 0.0
          %v606 = vpack.c.bf16 %v591, %v590
          %v607 = vpack.c.bf16 %v593, %v592
          %v608 = vpack.c.bf16 %v595, %v594
          %v609 = vpack.c.bf16 %v597, %v596
          %v610 = vpack.c.bf16 %v599, %v598
          %v611 = vpack.c.bf16 %v601, %v600
          %v612 = vpack.c.bf16 %v603, %v602
          %v613 = vpack.c.bf16 %v605, %v604
          %v622 = vunpack.c.l.b16 %v606
          %v623 = vunpack.c.h.b16 %v606
          %v624 = vunpack.c.l.b16 %v607
          %v625 = vunpack.c.h.b16 %v607
          %v626 = vunpack.c.l.b16 %v608
          %v627 = vunpack.c.h.b16 %v608
          %v628 = vunpack.c.l.b16 %v609
          %v629 = vunpack.c.h.b16 %v609
          %v630 = vunpack.c.l.b16 %v610
          %v631 = vunpack.c.h.b16 %v610
          %v632 = vunpack.c.l.b16 %v611
          %v633 = vunpack.c.h.b16 %v611
          %v634 = vunpack.c.l.b16 %v612
          %v635 = vunpack.c.h.b16 %v612
          %v636 = vunpack.c.l.b16 %v613
          %v637 = vunpack.c.h.b16 %v613
          %v638 = vpack.c.b16 %v622, %v622
          %v639 = vpack.c.b16 %v623, %v623
          %v640 = vpack.c.b16 %v624, %v624
          %v641 = vpack.c.b16 %v625, %v625
          %v642 = vpack.c.b16 %v626, %v626
          %v643 = vpack.c.b16 %v627, %v627
          %v644 = vpack.c.b16 %v628, %v628
          %v645 = vpack.c.b16 %v629, %v629
          %v646 = vpack.c.b16 %v630, %v630
          %v647 = vpack.c.b16 %v631, %v631
          %v648 = vpack.c.b16 %v632, %v632
          %v649 = vpack.c.b16 %v633, %v633
          %v650 = vpack.c.b16 %v634, %v634
          %v651 = vpack.c.b16 %v635, %v635
          %v652 = vpack.c.b16 %v636, %v636
          %v653 = vpack.c.b16 %v637, %v637
          %670 = vst [vmem:[%s251] sm:$0xf] %v638
          %671 = vst [vmem:[%s251 + $0x4] sm:$0xf] %v639
          %672 = vst [vmem:[%s251 + $0x8] sm:$0xf] %v640
          %673 = vst [vmem:[%s251 + $0xc] sm:$0xf] %v641
          %674 = vst [vmem:[%s251 + $0x10] sm:$0xf] %v642
          %675 = vst [vmem:[%s251 + $0x14] sm:$0xf] %v643
          %676 = vst [vmem:[%s251 + $0x18] sm:$0xf] %v644
          %677 = vst [vmem:[%s251 + $0x1c] sm:$0xf] %v645
          %678 = vst [vmem:[%s251 + $0x20] sm:$0xf] %v646
          %679 = vst [vmem:[%s251 + $0x24] sm:$0xf] %v647
          %680 = vst [vmem:[%s251 + $0x28] sm:$0xf] %v648
          %681 = vst [vmem:[%s251 + $0x2c] sm:$0xf] %v649
          %682 = vst [vmem:[%s251 + $0x30] sm:$0xf] %v650
          %683 = vst [vmem:[%s251 + $0x34] sm:$0xf] %v651
          %684 = vst [vmem:[%s251 + $0x38] sm:$0xf] %v652
          %685 = vst [vmem:[%s251 + $0x3c] sm:$0xf] %v653
        $region48: #{resnet_server_forward.12} parent=31 // pred_fallthru
          _
        %s686 = smul.u32 16, %s22
        %p687 = scmp.lt.s32.totalorder %s686, 15
        %s688 = scalar_select %p687, %s686, 15
        %s689 = smul.addr %s688, 4
        %s690 = scalar_lea.vmem %s3, %s689
        // Predicated region
        $region49: #{resnet_server_forward.12} parent=31 // pred_check
          %p691 = pneg %p123
        $region50: #{resnet_server_forward.12} parent=31 // pred_check_branch
          %693 = sbr.rel (%p691) target = $region52
        $region51: #{resnet_server_forward.12} parent=31 // pred_region
          %s694 = smul.u32 16, %s22
        $region52: #{resnet_server_forward.12} parent=31 // pred_fallthru
          _
        // Predicated region
        $region53: #{resnet_server_forward.12} parent=31 // pred_check
          %p695 = pneg %p123
        $region54: #{resnet_server_forward.12} parent=31 // pred_check_branch
          %697 = sbr.rel (%p695) target = $region56
        $region55: #{resnet_server_forward.12} parent=31 // pred_region
          %s698 = smul.u32 16, %s22
          %p699 = scmp.lt.s32.totalorder %s698, 15
          %s700 = scalar_select %p699, %s698, 15
          %s701 = smul.addr %s700, 4
          %s702 = scalar_lea.vmem %s3, %s701
        $region56: #{resnet_server_forward.12} parent=31 // pred_fallthru
          _
      $region32: #{resnet_server_forward.12} parent=5 // pred_fallthru
        _
      %p703 = scmp.le.s32.totalorder 2, %s13
      // Predicated region
      $region57: #{resnet_server_forward.12} parent=5 // pred_check
        %p704 = pneg %p703
      $region58: #{resnet_server_forward.12} parent=5 // pred_check_branch
        %706 = sbr.rel (%p704) target = $region60
      $region59: #{resnet_server_forward.12} parent=5 // pred_region
        %s707 = ssub.s32 %s13, 2
      $region60: #{resnet_server_forward.12} parent=5 // pred_fallthru
        _
    $region6: #{resnet_server_forward.12} parent=1 // loop_footer
      %s17 = sadd.s32 1, %s13
    $region7: #{resnet_server_forward.12} parent=1 // loop_footer_branch
      %12 = sbr.rel target = $region3
    $region8: #{resnet_server_forward.12} parent=1 // loop_exit
      _
    %708 = vsyncpa [#allocation4], 1
    %s709 = scalar_lea.sflag [#allocation4], 1
    %710 = vsyncpa %s709, 1
    %711 = vsyncpa [#allocation6], 1

// kernel: resnet_server_forward.14
$region0: #{resnet_server_forward.14}
  #allocation0 [shape = 'u32[]', space=smem, size = 0x4, offset = 0x4, fixed_abs, tag = 'smem constant byte address 0x4 - core index']
  #allocation1 [shape = 'u32[144,128]{1,0:T(1,128)}', space=vmem, size = 0x12000, scoped, tag = 'internal scratch']
  #allocation2 [shape = 'f32[32,128]{1,0:T(8,128)}', space=vmem, size = 0x4000, scoped, tag = 'scratch operand']
  %s0 = inlined_call_operand.vmem [shape: bf16[9,32,128], index: 0, kind: input, shape index: {}]
  %s1 = inlined_call_operand.vmem [shape: bf16[9,128,128], index: 1, kind: input, shape index: {}]
  %s2 = inlined_call_operand.vmem [shape: f32[1,128], index: 2, kind: input, shape index: {}]
  %s3 = inlined_call_operand.vmem [shape: bf16[32,128], index: 3, kind: output, shape index: {}]
  %s4 = sld [smem:[#allocation0]]
  $region53: #{resnet_server_forward.14} parent=0
    _
  %s6 = ssub.s32 1, %s4
  %s7 = scalar_select 0, %s6, %s4
  loop: start=0, step=1, limit=11
  $region2: #{resnet_server_forward.14} parent=0 // loop_pre_header
    _
  $region3: #{resnet_server_forward.14} parent=0 // loop_header
    %s9 = sphi 0, %s13
    %p10 = scmp.ge.s32.totalorder %s9, 11
    %s16 = sphi 0, %s28
    %s17 = sphi 0, %s24
    %s18 = sphi 0, %s16
    %s19 = sphi 0, %s17
    %s20 = sphi 0, %s18
    %s21 = sphi 0, %s19
    %s33 = sphi 0, %s35
    %s36 = sphi 0, %s33
    %s37 = sphi 0, %s36
    %s53 = sphi 0, %s37
    %s59 = sphi 0, %s61
    %s62 = sphi 0, %s59
    %s63 = sphi 0, %s62
    %s79 = sphi 0, %s63
    %s83 = sphi 0, %s83
    %s85 = sphi 0, %s83
    %s86 = sphi 0, %s85
    %s100 = sphi 0, %s86
    %s106 = sphi 0, %s108
    %s109 = sphi 0, %s106
    %s110 = sphi 0, %s109
    %s126 = sphi 0, %s110
  $region4: #{resnet_server_forward.14} parent=0 // loop_header_branch
    %12 = sbr.rel (%p10) target = $region8
  $region5: #{resnet_server_forward.14} parent=0 // loop_body
    %s14 = ssub.s32 %s9, 1
    %s15 = ssub.s32 %s9, 2
    %s22 = sadd.s32 1, %s17
    %p23 = scmp.ge.s32.totalorder %s22, 9
    %s24 = scalar_select %p23, 0, %s22
    %s25 = sadd.s32 1, %s16
    %s26 = scalar_select %p23, %s25, %s16
    %p27 = scmp.ge.s32.totalorder %s26, 1
    %s28 = scalar_select %p27, 0, %s26
    %s29 = ssub.s32 %s17, %s24
    %s30 = ssub.s32 %s16, %s28
    %s31 = sor.u32 %s29, %s30
    %p32 = scmp.eq.s32.totalorder %s31, 0
    %s34 = sadd.s32 %s33, 1
    %s35 = scalar_select %p32, %s33, %s34
    %p38 = pneg %p32
    %p39 = scmp.eq.s32.totalorder %s9, 8
    %p40 = por %p38, %p39
    %p41 = scmp.ne.s32.totalorder %s33, %s36
    %p42 = scmp.eq.s32.totalorder %s9, 0
    %p43 = por %p41, %p42
    %p44 = scmp.ne.s32.totalorder %s33, %s36
    %p45 = scmp.eq.s32.totalorder %s14, 8
    %p46 = por %p44, %p45
    %p47 = scmp.ne.s32.totalorder %s36, %s37
    %p48 = scmp.eq.s32.totalorder %s14, 0
    %p49 = por %p47, %p48
    %p50 = scmp.ne.s32.totalorder %s36, %s37
    %p51 = scmp.eq.s32.totalorder %s15, 8
    %p52 = por %p50, %p51
    %p54 = scmp.ne.s32.totalorder %s37, %s53
    %p55 = scmp.eq.s32.totalorder %s15, 0
    %p56 = por %p54, %p55
    %s57 = ssub.s32 %s17, %s24
    %p58 = scmp.eq.s32.totalorder %s57, 0
    %s60 = sadd.s32 %s59, 1
    %s61 = scalar_select %p58, %s59, %s60
    %p64 = pneg %p58
    %p65 = scmp.eq.s32.totalorder %s9, 8
    %p66 = por %p64, %p65
    %p67 = scmp.ne.s32.totalorder %s59, %s62
    %p68 = scmp.eq.s32.totalorder %s9, 0
    %p69 = por %p67, %p68
    %p70 = scmp.ne.s32.totalorder %s59, %s62
    %p71 = scmp.eq.s32.totalorder %s14, 8
    %p72 = por %p70, %p71
    %p73 = scmp.ne.s32.totalorder %s62, %s63
    %p74 = scmp.eq.s32.totalorder %s14, 0
    %p75 = por %p73, %p74
    %p76 = scmp.ne.s32.totalorder %s62, %s63
    %p77 = scmp.eq.s32.totalorder %s15, 8
    %p78 = por %p76, %p77
    %p80 = scmp.ne.s32.totalorder %s63, %s79
    %p81 = scmp.eq.s32.totalorder %s15, 0
    %p82 = por %p80, %p81
    %s84 = sadd.s32 %s83, 1
    %p87 = scmp.eq.s32.totalorder %s9, 8
    %p88 = scmp.ne.s32.totalorder %s83, %s85
    %p89 = scmp.eq.s32.totalorder %s9, 0
    %p90 = por %p88, %p89
    %p91 = scmp.ne.s32.totalorder %s83, %s85
    %p92 = scmp.eq.s32.totalorder %s14, 8
    %p93 = por %p91, %p92
    %p94 = scmp.ne.s32.totalorder %s85, %s86
    %p95 = scmp.eq.s32.totalorder %s14, 0
    %p96 = por %p94, %p95
    %p97 = scmp.ne.s32.totalorder %s85, %s86
    %p98 = scmp.eq.s32.totalorder %s15, 8
    %p99 = por %p97, %p98
    %p101 = scmp.ne.s32.totalorder %s86, %s100
    %p102 = scmp.eq.s32.totalorder %s15, 0
    %p103 = por %p101, %p102
    %s104 = ssub.s32 %s16, %s28
    %p105 = scmp.eq.s32.totalorder %s104, 0
    %s107 = sadd.s32 %s106, 1
    %s108 = scalar_select %p105, %s106, %s107
    %p111 = pneg %p105
    %p112 = scmp.eq.s32.totalorder %s9, 8
    %p113 = por %p111, %p112
    %p114 = scmp.ne.s32.totalorder %s106, %s109
    %p115 = scmp.eq.s32.totalorder %s9, 0
    %p116 = por %p114, %p115
    %p117 = scmp.ne.s32.totalorder %s106, %s109
    %p118 = scmp.eq.s32.totalorder %s14, 8
    %p119 = por %p117, %p118
    %p120 = scmp.ne.s32.totalorder %s109, %s110
    %p121 = scmp.eq.s32.totalorder %s14, 0
    %p122 = por %p120, %p121
    %p123 = scmp.ne.s32.totalorder %s109, %s110
    %p124 = scmp.eq.s32.totalorder %s15, 8
    %p125 = por %p123, %p124
    %p127 = scmp.ne.s32.totalorder %s110, %s126
    %p128 = scmp.eq.s32.totalorder %s15, 0
    %p129 = por %p127, %p128
    %p130 = scmp.le.s32.totalorder 1, %s9
    %p131 = scmp.lt.s32.totalorder %s9, 10
    %p132 = pnand %p130, %p131
    %p133 = pneg %p132
    // Predicated region
    $region9: #{resnet_server_forward.14} parent=5 // pred_check
      _
    $region10: #{resnet_server_forward.14} parent=5 // pred_check_branch
      %135 = sbr.rel (%p132) target = $region12
    $region11: #{resnet_server_forward.14} parent=5 // pred_region
      %s136 = ssub.s32 %s9, 1
      // Predicated region
      $region13: #{resnet_server_forward.14} parent=11 // pred_check
        %p137 = pneg %p96
      $region14: #{resnet_server_forward.14} parent=11 // pred_check_branch
        %139 = sbr.rel (%p137) target = $region16
      $region15: #{resnet_server_forward.14} parent=11 // pred_region
        _
      $region16: #{resnet_server_forward.14} parent=11 // pred_fallthru
        _
    $region12: #{resnet_server_forward.14} parent=5 // pred_fallthru
      _
    %p140 = scmp.lt.s32.totalorder %s9, 9
    // Predicated region
    $region17: #{resnet_server_forward.14} parent=5 // pred_check
      %p141 = pneg %p140
    $region18: #{resnet_server_forward.14} parent=5 // pred_check_branch
      %143 = sbr.rel (%p141) target = $region20
    $region19: #{resnet_server_forward.14} parent=5 // pred_region
      // Predicated region
      $region21: #{resnet_server_forward.14} parent=19 // pred_check
        %p144 = pneg %p43
      $region22: #{resnet_server_forward.14} parent=19 // pred_check_branch
        %146 = sbr.rel (%p144) target = $region24
      $region23: #{resnet_server_forward.14} parent=19 // pred_region
        %s147 = smul.u32 4, %s16
        %p148 = scmp.lt.s32.totalorder %s17, 8
        %s149 = scalar_select %p148, %s17, 8
        %p150 = scmp.lt.s32.totalorder %s147, 3
        %s151 = scalar_select %p150, %s147, 3
        %s152 = smul.addr %s149, 4
        %s153 = sadd.s32 %s151, %s152
        %s154 = smul.addr %s153, 4
        %s155 = scalar_lea.vmem %s0, %s154
        %s156 = smul.u32 4, %s16
      $region24: #{resnet_server_forward.14} parent=19 // pred_fallthru
        _
      // Predicated region
      $region25: #{resnet_server_forward.14} parent=19 // pred_check
        %p157 = pneg %p69
      $region26: #{resnet_server_forward.14} parent=19 // pred_check_branch
        %159 = sbr.rel (%p157) target = $region28
      $region27: #{resnet_server_forward.14} parent=19 // pred_region
        %p160 = scmp.lt.s32.totalorder %s17, 8
        %s161 = scalar_select %p160, %s17, 8
        %s162 = smul.addr %s161, 16
        %s163 = smul.addr %s162, 4
        %s164 = scalar_lea.vmem %s1, %s163
      $region28: #{resnet_server_forward.14} parent=19 // pred_fallthru
        _
    $region20: #{resnet_server_forward.14} parent=5 // pred_fallthru
      _
    %p165 = scmp.le.s32.totalorder 1, %s9
    %p166 = scmp.lt.s32.totalorder %s9, 10
    %p167 = pnand %p165, %p166
    %p168 = pneg %p167
    // Predicated region
    $region29: #{resnet_server_forward.14} parent=5 // pred_check
      _
    $region30: #{resnet_server_forward.14} parent=5 // pred_check_branch
      %170 = sbr.rel (%p167) target = $region32
    $region31: #{resnet_server_forward.14} parent=5 // pred_region
      %s171 = ssub.s32 %s9, 1
      %s172 = smul.u32 4, %s18
      %p173 = scmp.lt.s32.totalorder %s19, 8
      %s174 = scalar_select %p173, %s19, 8
      %p175 = scmp.lt.s32.totalorder %s172, 3
      %s176 = scalar_select %p175, %s172, 3
      %s177 = smul.addr %s174, 4
      %s178 = sadd.s32 %s176, %s177
      %s179 = smul.addr %s178, 4
      %s180 = scalar_lea.vmem %s0, %s179
      %p181 = pneg %p49
      %p182 = pneg %p46
      %p183 = scmp.lt.s32.totalorder %s19, 8
      %s184 = scalar_select %p183, %s19, 8
      %s185 = smul.addr %s184, 16
      %s186 = smul.addr %s185, 4
      %s187 = scalar_lea.vmem %s1, %s186
      %p188 = pneg %p75
      %p189 = pneg %p72
      %p190 = pneg %p96
      %p191 = pneg %p93
      %p192 = pneg %p122
      %p193 = pneg %p119
      %s194 = smul.u32 4, %s18
      %p195 = scmp.lt.s32.totalorder %s194, 3
      %s196 = scalar_select %p195, %s194, 3
      %s197 = smul.addr %s196, 4
      %s198 = scalar_lea.vmem %s3, %s197
      %s199 = smul.u32 4, %s18
      %p200 = scmp.lt.s32.totalorder %s19, 8
      %s201 = scalar_select %p200, %s19, 8
      %p202 = scmp.lt.s32.totalorder %s199, 3
      %s203 = scalar_select %p202, %s199, 3
      %s204 = smul.addr %s201, 4
      %s205 = sadd.s32 %s203, %s204
      %s206 = smul.addr %s205, 4
      %s207 = scalar_lea.vmem %s0, %s206
      %s208 = smul.u32 4, %s18
      %p209 = scmp.lt.s32.totalorder %s19, 8
      %s210 = scalar_select %p209, %s19, 8
      %s211 = smul.addr %s210, 16
      %s212 = smul.addr %s211, 4
      %s213 = scalar_lea.vmem %s1, %s212
      %s214 = smul.u32 4, %s18
      %p215 = scmp.lt.s32.totalorder %s214, 3
      %s216 = scalar_select %p215, %s214, 3
      %s217 = smul.addr %s216, 4
      %s218 = scalar_lea.vmem %s3, %s217
      %s219 = smul.u32 4, %s18
      %p221 = scmp.eq.s32.totalorder %s19, 0
      // Predicated region
      $region33: #{resnet_server_forward.14} parent=31 // pred_check
        %p222 = pneg %p221
      $region34: #{resnet_server_forward.14} parent=31 // pred_check_branch
        %224 = sbr.rel (%p222) target = $region36
      $region35: #{resnet_server_forward.14} parent=31 // pred_region
        %225 = vst [vmem:[#allocation2] sm:$0xff] 0.0
        %226 = vst [vmem:[#allocation2 + $0x8] sm:$0xff] 0.0
        %227 = vst [vmem:[#allocation2 + $0x10] sm:$0xff] 0.0
        %228 = vst [vmem:[#allocation2 + $0x18] sm:$0xff] 0.0
      $region36: #{resnet_server_forward.14} parent=31 // pred_fallthru
        _
      %v229 = vld [vmem:[#allocation2] sm:$0xff]
      %v230 = vld [vmem:[#allocation2 + $0x8] sm:$0xff]
      %v231 = vld [vmem:[#allocation2 + $0x10] sm:$0xff]
      %v232 = vld [vmem:[#allocation2 + $0x18] sm:$0xff]
      %v233 = vld [vmem:[%s207] sm:$0xf]
      %v234 = vld [vmem:[%s207 + $0x4] sm:$0xf]
      %v235 = vld [vmem:[%s207 + $0x8] sm:$0xf]
      %v236 = vld [vmem:[%s207 + $0xc] sm:$0xf]
      %v237 = vld [vmem:[%s213] sm:$0xf]
      %v238 = vld [vmem:[%s213 + $0x4] sm:$0xf]
      %v239 = vld [vmem:[%s213 + $0x8] sm:$0xf]
      %v240 = vld [vmem:[%s213 + $0xc] sm:$0xf]
      %v241 = vld [vmem:[%s213 + $0x10] sm:$0xf]
      %v242 = vld [vmem:[%s213 + $0x14] sm:$0xf]
      %v243 = vld [vmem:[%s213 + $0x18] sm:$0xf]
      %v244 = vld [vmem:[%s213 + $0x1c] sm:$0xf]
      %v245 = vld [vmem:[%s213 + $0x20] sm:$0xf]
      %v246 = vld [vmem:[%s213 + $0x24] sm:$0xf]
      %v247 = vld [vmem:[%s213 + $0x28] sm:$0xf]
      %v248 = vld [vmem:[%s213 + $0x2c] sm:$0xf]
      %v249 = vld [vmem:[%s213 + $0x30] sm:$0xf]
      %v250 = vld [vmem:[%s213 + $0x34] sm:$0xf]
      %v251 = vld [vmem:[%s213 + $0x38] sm:$0xf]
      %v252 = vld [vmem:[%s213 + $0x3c] sm:$0xf]
      %v257 = vunpack.c.l.b16 %v233
      %v258 = vunpack.c.l.b16 %v234
      %v259 = vunpack.c.l.b16 %v235
      %v260 = vunpack.c.l.b16 %v236
      %v261 = vpack.c.b16 %v258, %v257
      %v262 = vpack.c.b16 %v260, %v259
      %v281 = vunpack.c.l.b16 %v237
      %v282 = vunpack.c.l.b16 %v238
      %v283 = vunpack.c.l.b16 %v239
      %v284 = vunpack.c.l.b16 %v240
      %v285 = vunpack.c.l.b16 %v241
      %v286 = vunpack.c.l.b16 %v242
      %v287 = vunpack.c.l.b16 %v243
      %v288 = vunpack.c.l.b16 %v244
      %v289 = vunpack.c.l.b16 %v245
      %v290 = vunpack.c.l.b16 %v246
      %v291 = vunpack.c.l.b16 %v247
      %v292 = vunpack.c.l.b16 %v248
      %v293 = vunpack.c.l.b16 %v249
      %v294 = vunpack.c.l.b16 %v250
      %v295 = vunpack.c.l.b16 %v251
      %v296 = vunpack.c.l.b16 %v252
      %v297 = vpack.c.b16 %v282, %v281
      %v298 = vpack.c.b16 %v284, %v283
      %v299 = vpack.c.b16 %v286, %v285
      %v300 = vpack.c.b16 %v288, %v287
      %v301 = vpack.c.b16 %v290, %v289
      %v302 = vpack.c.b16 %v292, %v291
      %v303 = vpack.c.b16 %v294, %v293
      %v304 = vpack.c.b16 %v296, %v295
      %313 = vmatprep.subr.bf16.mxu0 0
      %314 = vmatpush1.bf16.msra.mxu0 %v304
      %315 = vmatprep.subr.bf16.mxu0 0
      %316 = vmatpush1.bf16.msra.mxu0 %v303
      %317 = vmatprep.subr.bf16.mxu0 0
      %318 = vmatpush1.bf16.msra.mxu0 %v302
      %319 = vmatprep.subr.bf16.mxu0 0
      %320 = vmatpush1.bf16.msra.mxu0 %v301
      %321 = vmatprep.subr.bf16.mxu0 0
      %322 = vmatpush1.bf16.msra.mxu0 %v300
      %323 = vmatprep.subr.bf16.mxu0 0
      %324 = vmatpush1.bf16.msra.mxu0 %v299
      %325 = vmatprep.subr.bf16.mxu0 0
      %326 = vmatpush1.bf16.msra.mxu0 %v298
      %327 = vmatprep.subr.bf16.mxu0 0
      %328 = vmatpush1.bf16.msra.mxu0 %v297
      %329 = vmatprep.subr.bf16.mxu0 0
      %330 = vmatpush2.bf16.msra.mxu0 0
      %331 = vmatprep.subr.bf16.mxu0 0
      %332 = vmatpush2.bf16.msra.mxu0 0
      %333 = vmatprep.subr.bf16.mxu0 0
      %334 = vmatpush2.bf16.msra.mxu0 0
      %335 = vmatprep.subr.bf16.mxu0 0
      %336 = vmatpush2.bf16.msra.mxu0 0
      %337 = vmatprep.subr.bf16.mxu0 0
      %338 = vmatpush2.bf16.msra.mxu0 0
      %339 = vmatprep.subr.bf16.mxu0 0
      %340 = vmatpush2.bf16.msra.mxu0 0
      %341 = vmatprep.subr.bf16.mxu0 0
      %342 = vmatpush2.bf16.msra.mxu0 0
      %343 = vmatprep.subr.bf16.mxu0 0
      %344 = vmatpush2.bf16.msra.mxu0 0
      %345 = vmatprep.mubr.bf16.mxu0 0
      %346 = vmatmul.mubr.bf16.gmra.mxu0 %v261
      %v347 = vpop.f32.mrf.mxu0
      %v348 = vadd.f32 0.0, %v347
      %v349 = vpop.f32.mrf.mxu0
      %v350 = vpop.f32.mrf.mxu0
      %v351 = vadd.f32 0.0, %v350
      %v352 = vpop.f32.mrf.mxu0
      %353 = vmatprep.mubr.bf16.mxu0 0
      %354 = vmatmul.mubr.bf16.gmra.mxu0 %v262
      %v355 = vpop.f32.mrf.mxu0
      %v356 = vadd.f32 0.0, %v355
      %v357 = vpop.f32.mrf.mxu0
      %v358 = vpop.f32.mrf.mxu0
      %v359 = vadd.f32 0.0, %v358
      %v360 = vpop.f32.mrf.mxu0
      %361 = vdwg.mxu0
      %v362 = vadd.f32 %v229, %v348
      %v363 = vadd.f32 %v230, %v351
      %v364 = vadd.f32 %v231, %v356
      %v365 = vadd.f32 %v232, %v359
      %366 = vst [vmem:[#allocation2] sm:$0xff] %v362
      %367 = vst [vmem:[#allocation2 + $0x8] sm:$0xff] %v363
      %368 = vst [vmem:[#allocation2 + $0x10] sm:$0xff] %v364
      %369 = vst [vmem:[#allocation2 + $0x18] sm:$0xff] %v365
      %p370 = scmp.eq.s32.totalorder %s19, 8
      // Predicated region
      $region37: #{resnet_server_forward.14} parent=31 // pred_check
        %p371 = pneg %p370
      $region38: #{resnet_server_forward.14} parent=31 // pred_check_branch
        %373 = sbr.rel (%p371) target = $region40
      $region39: #{resnet_server_forward.14} parent=31 // pred_region
        %v374 = vld [vmem:[#allocation2] sm:$0xff]
        %v375 = vld [vmem:[#allocation2 + $0x8] sm:$0xff]
        %v376 = vld [vmem:[#allocation2 + $0x10] sm:$0xff]
        %v377 = vld [vmem:[#allocation2 + $0x18] sm:$0xff]
        %v378 = vld [vmem:[%s2] sm:$0x1]
        %v380 = vlaneseq
        %v381 = vshrl.u32 %v380, 7
        %v382 = vsub.s32 0, %v381
        %v383 = vrot.slane %v378, %v382
        %v385 = vadd.f32 %v374, %v383
        %v386 = vadd.f32 %v375, %v383
        %v387 = vadd.f32 %v376, %v383
        %v388 = vadd.f32 %v377, %v383
        %v389 = vmax.f32 %v385, 0.0
        %v390 = vmax.f32 %v386, 0.0
        %v391 = vmax.f32 %v387, 0.0
        %v392 = vmax.f32 %v388, 0.0
        %v393 = vpack.c.bf16 %v390, %v389
        %v394 = vpack.c.bf16 %v392, %v391
        %v397 = vunpack.c.l.b16 %v393
        %v398 = vunpack.c.h.b16 %v393
        %v399 = vunpack.c.l.b16 %v394
        %v400 = vunpack.c.h.b16 %v394
        %v401 = vpack.c.b16 %v397, %v397
        %v402 = vpack.c.b16 %v398, %v398
        %v403 = vpack.c.b16 %v399, %v399
        %v404 = vpack.c.b16 %v400, %v400
        %409 = vst [vmem:[%s218] sm:$0xf] %v401
        %410 = vst [vmem:[%s218 + $0x4] sm:$0xf] %v402
        %411 = vst [vmem:[%s218 + $0x8] sm:$0xf] %v403
        %412 = vst [vmem:[%s218 + $0xc] sm:$0xf] %v404
      $region40: #{resnet_server_forward.14} parent=31 // pred_fallthru
        _
      %s413 = smul.u32 4, %s18
      %p414 = scmp.lt.s32.totalorder %s413, 3
      %s415 = scalar_select %p414, %s413, 3
      %s416 = smul.addr %s415, 4
      %s417 = scalar_lea.vmem %s3, %s416
      // Predicated region
      $region41: #{resnet_server_forward.14} parent=31 // pred_check
        %p418 = pneg %p119
      $region42: #{resnet_server_forward.14} parent=31 // pred_check_branch
        %420 = sbr.rel (%p418) target = $region44
      $region43: #{resnet_server_forward.14} parent=31 // pred_region
        %s421 = smul.u32 4, %s18
      $region44: #{resnet_server_forward.14} parent=31 // pred_fallthru
        _
      // Predicated region
      $region45: #{resnet_server_forward.14} parent=31 // pred_check
        %p422 = pneg %p119
      $region46: #{resnet_server_forward.14} parent=31 // pred_check_branch
        %424 = sbr.rel (%p422) target = $region48
      $region47: #{resnet_server_forward.14} parent=31 // pred_region
        %s425 = smul.u32 4, %s18
        %p426 = scmp.lt.s32.totalorder %s425, 3
        %s427 = scalar_select %p426, %s425, 3
        %s428 = smul.addr %s427, 4
        %s429 = scalar_lea.vmem %s3, %s428
      $region48: #{resnet_server_forward.14} parent=31 // pred_fallthru
        _
    $region32: #{resnet_server_forward.14} parent=5 // pred_fallthru
      _
    %p430 = scmp.le.s32.totalorder 2, %s9
    // Predicated region
    $region49: #{resnet_server_forward.14} parent=5 // pred_check
      %p431 = pneg %p430
    $region50: #{resnet_server_forward.14} parent=5 // pred_check_branch
      %433 = sbr.rel (%p431) target = $region52
    $region51: #{resnet_server_forward.14} parent=5 // pred_region
      %s434 = ssub.s32 %s9, 2
    $region52: #{resnet_server_forward.14} parent=5 // pred_fallthru
      _
  $region6: #{resnet_server_forward.14} parent=0 // loop_footer
    %s13 = sadd.s32 1, %s9
  $region7: #{resnet_server_forward.14} parent=0 // loop_footer_branch
    %8 = sbr.rel target = $region3
  $region8: #{resnet_server_forward.14} parent=0 // loop_exit
    _

// kernel: resnet_server_forward.16
$region0: #{resnet_server_forward.16}
  #allocation0 [shape = 'u32[]', space=smem, size = 0x4, offset = 0x4, fixed_abs, tag = 'smem constant byte address 0x4 - core index']
  #allocation1 [shape = 'u32[144,128]{1,0:T(1,128)}', space=vmem, size = 0x12000, scoped, tag = 'internal scratch']
  #allocation2 [shape = 'f32[32,128]{1,0:T(8,128)}', space=vmem, size = 0x4000, scoped, tag = 'scratch operand']
  %s0 = inlined_call_operand.vmem [shape: bf16[9,32,128], index: 0, kind: input, shape index: {}]
  %s1 = inlined_call_operand.vmem [shape: bf16[9,128,128], index: 1, kind: input, shape index: {}]
  %s2 = inlined_call_operand.vmem [shape: f32[1,128], index: 2, kind: input, shape index: {}]
  %s3 = inlined_call_operand.vmem [shape: bf16[32,128], index: 3, kind: input, shape index: {}]
  %s4 = inlined_call_operand.vmem [shape: bf16[32,128], index: 4, kind: output, shape index: {}]
  %s5 = sld [smem:[#allocation0]]
  $region57: #{resnet_server_forward.16} parent=0
    _
  %s7 = ssub.s32 1, %s5
  %s8 = scalar_select 0, %s7, %s5
  loop: start=0, step=1, limit=11
  $region2: #{resnet_server_forward.16} parent=0 // loop_pre_header
    _
  $region3: #{resnet_server_forward.16} parent=0 // loop_header
    %s10 = sphi 0, %s14
    %p11 = scmp.ge.s32.totalorder %s10, 11
    %s17 = sphi 0, %s29
    %s18 = sphi 0, %s25
    %s19 = sphi 0, %s17
    %s20 = sphi 0, %s18
    %s21 = sphi 0, %s19
    %s22 = sphi 0, %s20
    %s34 = sphi 0, %s36
    %s37 = sphi 0, %s34
    %s38 = sphi 0, %s37
    %s54 = sphi 0, %s38
    %s60 = sphi 0, %s62
    %s63 = sphi 0, %s60
    %s64 = sphi 0, %s63
    %s80 = sphi 0, %s64
    %s84 = sphi 0, %s84
    %s86 = sphi 0, %s84
    %s87 = sphi 0, %s86
    %s101 = sphi 0, %s87
    %s107 = sphi 0, %s109
    %s110 = sphi 0, %s107
    %s111 = sphi 0, %s110
    %s127 = sphi 0, %s111
    %s133 = sphi 0, %s135
    %s136 = sphi 0, %s133
    %s137 = sphi 0, %s136
    %s153 = sphi 0, %s137
  $region4: #{resnet_server_forward.16} parent=0 // loop_header_branch
    %13 = sbr.rel (%p11) target = $region8
  $region5: #{resnet_server_forward.16} parent=0 // loop_body
    %s15 = ssub.s32 %s10, 1
    %s16 = ssub.s32 %s10, 2
    %s23 = sadd.s32 1, %s18
    %p24 = scmp.ge.s32.totalorder %s23, 9
    %s25 = scalar_select %p24, 0, %s23
    %s26 = sadd.s32 1, %s17
    %s27 = scalar_select %p24, %s26, %s17
    %p28 = scmp.ge.s32.totalorder %s27, 1
    %s29 = scalar_select %p28, 0, %s27
    %s30 = ssub.s32 %s18, %s25
    %s31 = ssub.s32 %s17, %s29
    %s32 = sor.u32 %s30, %s31
    %p33 = scmp.eq.s32.totalorder %s32, 0
    %s35 = sadd.s32 %s34, 1
    %s36 = scalar_select %p33, %s34, %s35
    %p39 = pneg %p33
    %p40 = scmp.eq.s32.totalorder %s10, 8
    %p41 = por %p39, %p40
    %p42 = scmp.ne.s32.totalorder %s34, %s37
    %p43 = scmp.eq.s32.totalorder %s10, 0
    %p44 = por %p42, %p43
    %p45 = scmp.ne.s32.totalorder %s34, %s37
    %p46 = scmp.eq.s32.totalorder %s15, 8
    %p47 = por %p45, %p46
    %p48 = scmp.ne.s32.totalorder %s37, %s38
    %p49 = scmp.eq.s32.totalorder %s15, 0
    %p50 = por %p48, %p49
    %p51 = scmp.ne.s32.totalorder %s37, %s38
    %p52 = scmp.eq.s32.totalorder %s16, 8
    %p53 = por %p51, %p52
    %p55 = scmp.ne.s32.totalorder %s38, %s54
    %p56 = scmp.eq.s32.totalorder %s16, 0
    %p57 = por %p55, %p56
    %s58 = ssub.s32 %s18, %s25
    %p59 = scmp.eq.s32.totalorder %s58, 0
    %s61 = sadd.s32 %s60, 1
    %s62 = scalar_select %p59, %s60, %s61
    %p65 = pneg %p59
    %p66 = scmp.eq.s32.totalorder %s10, 8
    %p67 = por %p65, %p66
    %p68 = scmp.ne.s32.totalorder %s60, %s63
    %p69 = scmp.eq.s32.totalorder %s10, 0
    %p70 = por %p68, %p69
    %p71 = scmp.ne.s32.totalorder %s60, %s63
    %p72 = scmp.eq.s32.totalorder %s15, 8
    %p73 = por %p71, %p72
    %p74 = scmp.ne.s32.totalorder %s63, %s64
    %p75 = scmp.eq.s32.totalorder %s15, 0
    %p76 = por %p74, %p75
    %p77 = scmp.ne.s32.totalorder %s63, %s64
    %p78 = scmp.eq.s32.totalorder %s16, 8
    %p79 = por %p77, %p78
    %p81 = scmp.ne.s32.totalorder %s64, %s80
    %p82 = scmp.eq.s32.totalorder %s16, 0
    %p83 = por %p81, %p82
    %s85 = sadd.s32 %s84, 1
    %p88 = scmp.eq.s32.totalorder %s10, 8
    %p89 = scmp.ne.s32.totalorder %s84, %s86
    %p90 = scmp.eq.s32.totalorder %s10, 0
    %p91 = por %p89, %p90
    %p92 = scmp.ne.s32.totalorder %s84, %s86
    %p93 = scmp.eq.s32.totalorder %s15, 8
    %p94 = por %p92, %p93
    %p95 = scmp.ne.s32.totalorder %s86, %s87
    %p96 = scmp.eq.s32.totalorder %s15, 0
    %p97 = por %p95, %p96
    %p98 = scmp.ne.s32.totalorder %s86, %s87
    %p99 = scmp.eq.s32.totalorder %s16, 8
    %p100 = por %p98, %p99
    %p102 = scmp.ne.s32.totalorder %s87, %s101
    %p103 = scmp.eq.s32.totalorder %s16, 0
    %p104 = por %p102, %p103
    %s105 = ssub.s32 %s17, %s29
    %p106 = scmp.eq.s32.totalorder %s105, 0
    %s108 = sadd.s32 %s107, 1
    %s109 = scalar_select %p106, %s107, %s108
    %p112 = pneg %p106
    %p113 = scmp.eq.s32.totalorder %s10, 8
    %p114 = por %p112, %p113
    %p115 = scmp.ne.s32.totalorder %s107, %s110
    %p116 = scmp.eq.s32.totalorder %s10, 0
    %p117 = por %p115, %p116
    %p118 = scmp.ne.s32.totalorder %s107, %s110
    %p119 = scmp.eq.s32.totalorder %s15, 8
    %p120 = por %p118, %p119
    %p121 = scmp.ne.s32.totalorder %s110, %s111
    %p122 = scmp.eq.s32.totalorder %s15, 0
    %p123 = por %p121, %p122
    %p124 = scmp.ne.s32.totalorder %s110, %s111
    %p125 = scmp.eq.s32.totalorder %s16, 8
    %p126 = por %p124, %p125
    %p128 = scmp.ne.s32.totalorder %s111, %s127
    %p129 = scmp.eq.s32.totalorder %s16, 0
    %p130 = por %p128, %p129
    %s131 = ssub.s32 %s17, %s29
    %p132 = scmp.eq.s32.totalorder %s131, 0
    %s134 = sadd.s32 %s133, 1
    %s135 = scalar_select %p132, %s133, %s134
    %p138 = pneg %p132
    %p139 = scmp.eq.s32.totalorder %s10, 8
    %p140 = por %p138, %p139
    %p141 = scmp.ne.s32.totalorder %s133, %s136
    %p142 = scmp.eq.s32.totalorder %s10, 0
    %p143 = por %p141, %p142
    %p144 = scmp.ne.s32.totalorder %s133, %s136
    %p145 = scmp.eq.s32.totalorder %s15, 8
    %p146 = por %p144, %p145
    %p147 = scmp.ne.s32.totalorder %s136, %s137
    %p148 = scmp.eq.s32.totalorder %s15, 0
    %p149 = por %p147, %p148
    %p150 = scmp.ne.s32.totalorder %s136, %s137
    %p151 = scmp.eq.s32.totalorder %s16, 8
    %p152 = por %p150, %p151
    %p154 = scmp.ne.s32.totalorder %s137, %s153
    %p155 = scmp.eq.s32.totalorder %s16, 0
    %p156 = por %p154, %p155
    %p157 = scmp.le.s32.totalorder 1, %s10
    %p158 = scmp.lt.s32.totalorder %s10, 10
    %p159 = pnand %p157, %p158
    %p160 = pneg %p159
    // Predicated region
    $region9: #{resnet_server_forward.16} parent=5 // pred_check
      _
    $region10: #{resnet_server_forward.16} parent=5 // pred_check_branch
      %162 = sbr.rel (%p159) target = $region12
    $region11: #{resnet_server_forward.16} parent=5 // pred_region
      %s163 = ssub.s32 %s10, 1
      // Predicated region
      $region13: #{resnet_server_forward.16} parent=11 // pred_check
        %p164 = pneg %p97
      $region14: #{resnet_server_forward.16} parent=11 // pred_check_branch
        %166 = sbr.rel (%p164) target = $region16
      $region15: #{resnet_server_forward.16} parent=11 // pred_region
        _
      $region16: #{resnet_server_forward.16} parent=11 // pred_fallthru
        _
      // Predicated region
      $region17: #{resnet_server_forward.16} parent=11 // pred_check
        %p167 = pneg %p123
      $region18: #{resnet_server_forward.16} parent=11 // pred_check_branch
        %169 = sbr.rel (%p167) target = $region20
      $region19: #{resnet_server_forward.16} parent=11 // pred_region
        %s170 = smul.u32 4, %s19
        %p171 = scmp.lt.s32.totalorder %s170, 3
        %s172 = scalar_select %p171, %s170, 3
        %s173 = smul.addr %s172, 4
        %s174 = scalar_lea.vmem %s3, %s173
        %s175 = smul.u32 4, %s19
      $region20: #{resnet_server_forward.16} parent=11 // pred_fallthru
        _
    $region12: #{resnet_server_forward.16} parent=5 // pred_fallthru
      _
    %p176 = scmp.lt.s32.totalorder %s10, 9
    // Predicated region
    $region21: #{resnet_server_forward.16} parent=5 // pred_check
      %p177 = pneg %p176
    $region22: #{resnet_server_forward.16} parent=5 // pred_check_branch
      %179 = sbr.rel (%p177) target = $region24
    $region23: #{resnet_server_forward.16} parent=5 // pred_region
      // Predicated region
      $region25: #{resnet_server_forward.16} parent=23 // pred_check
        %p180 = pneg %p44
      $region26: #{resnet_server_forward.16} parent=23 // pred_check_branch
        %182 = sbr.rel (%p180) target = $region28
      $region27: #{resnet_server_forward.16} parent=23 // pred_region
        %s183 = smul.u32 4, %s17
        %p184 = scmp.lt.s32.totalorder %s18, 8
        %s185 = scalar_select %p184, %s18, 8
        %p186 = scmp.lt.s32.totalorder %s183, 3
        %s187 = scalar_select %p186, %s183, 3
        %s188 = smul.addr %s185, 4
        %s189 = sadd.s32 %s187, %s188
        %s190 = smul.addr %s189, 4
        %s191 = scalar_lea.vmem %s0, %s190
        %s192 = smul.u32 4, %s17
      $region28: #{resnet_server_forward.16} parent=23 // pred_fallthru
        _
      // Predicated region
      $region29: #{resnet_server_forward.16} parent=23 // pred_check
        %p193 = pneg %p70
      $region30: #{resnet_server_forward.16} parent=23 // pred_check_branch
        %195 = sbr.rel (%p193) target = $region32
      $region31: #{resnet_server_forward.16} parent=23 // pred_region
        %p196 = scmp.lt.s32.totalorder %s18, 8
        %s197 = scalar_select %p196, %s18, 8
        %s198 = smul.addr %s197, 16
        %s199 = smul.addr %s198, 4
        %s200 = scalar_lea.vmem %s1, %s199
      $region32: #{resnet_server_forward.16} parent=23 // pred_fallthru
        _
    $region24: #{resnet_server_forward.16} parent=5 // pred_fallthru
      _
    %p201 = scmp.le.s32.totalorder 1, %s10
    %p202 = scmp.lt.s32.totalorder %s10, 10
    %p203 = pnand %p201, %p202
    %p204 = pneg %p203
    // Predicated region
    $region33: #{resnet_server_forward.16} parent=5 // pred_check
      _
    $region34: #{resnet_server_forward.16} parent=5 // pred_check_branch
      %206 = sbr.rel (%p203) target = $region36
    $region35: #{resnet_server_forward.16} parent=5 // pred_region
      %s207 = ssub.s32 %s10, 1
      %s208 = smul.u32 4, %s19
      %p209 = scmp.lt.s32.totalorder %s20, 8
      %s210 = scalar_select %p209, %s20, 8
      %p211 = scmp.lt.s32.totalorder %s208, 3
      %s212 = scalar_select %p211, %s208, 3
      %s213 = smul.addr %s210, 4
      %s214 = sadd.s32 %s212, %s213
      %s215 = smul.addr %s214, 4
      %s216 = scalar_lea.vmem %s0, %s215
      %p217 = pneg %p50
      %p218 = pneg %p47
      %p219 = scmp.lt.s32.totalorder %s20, 8
      %s220 = scalar_select %p219, %s20, 8
      %s221 = smul.addr %s220, 16
      %s222 = smul.addr %s221, 4
      %s223 = scalar_lea.vmem %s1, %s222
      %p224 = pneg %p76
      %p225 = pneg %p73
      %p226 = pneg %p97
      %p227 = pneg %p94
      %s228 = smul.u32 4, %s19
      %p229 = scmp.lt.s32.totalorder %s228, 3
      %s230 = scalar_select %p229, %s228, 3
      %s231 = smul.addr %s230, 4
      %s232 = scalar_lea.vmem %s3, %s231
      %p233 = pneg %p123
      %p234 = pneg %p120
      %p235 = pneg %p149
      %p236 = pneg %p146
      %s237 = smul.u32 4, %s19
      %p238 = scmp.lt.s32.totalorder %s237, 3
      %s239 = scalar_select %p238, %s237, 3
      %s240 = smul.addr %s239, 4
      %s241 = scalar_lea.vmem %s4, %s240
      %s242 = smul.u32 4, %s19
      %p243 = scmp.lt.s32.totalorder %s20, 8
      %s244 = scalar_select %p243, %s20, 8
      %p245 = scmp.lt.s32.totalorder %s242, 3
      %s246 = scalar_select %p245, %s242, 3
      %s247 = smul.addr %s244, 4
      %s248 = sadd.s32 %s246, %s247
      %s249 = smul.addr %s248, 4
      %s250 = scalar_lea.vmem %s0, %s249
      %s251 = smul.u32 4, %s19
      %p252 = scmp.lt.s32.totalorder %s20, 8
      %s253 = scalar_select %p252, %s20, 8
      %s254 = smul.addr %s253, 16
      %s255 = smul.addr %s254, 4
      %s256 = scalar_lea.vmem %s1, %s255
      %s257 = smul.u32 4, %s19
      %p258 = scmp.lt.s32.totalorder %s257, 3
      %s259 = scalar_select %p258, %s257, 3
      %s260 = smul.addr %s259, 4
      %s261 = scalar_lea.vmem %s3, %s260
      %s262 = smul.u32 4, %s19
      %s263 = smul.u32 4, %s19
      %p264 = scmp.lt.s32.totalorder %s263, 3
      %s265 = scalar_select %p264, %s263, 3
      %s266 = smul.addr %s265, 4
      %s267 = scalar_lea.vmem %s4, %s266
      %s268 = smul.u32 4, %s19
      %p270 = scmp.eq.s32.totalorder %s20, 0
      // Predicated region
      $region37: #{resnet_server_forward.16} parent=35 // pred_check
        %p271 = pneg %p270
      $region38: #{resnet_server_forward.16} parent=35 // pred_check_branch
        %273 = sbr.rel (%p271) target = $region40
      $region39: #{resnet_server_forward.16} parent=35 // pred_region
        %274 = vst [vmem:[#allocation2] sm:$0xff] 0.0
        %275 = vst [vmem:[#allocation2 + $0x8] sm:$0xff] 0.0
        %276 = vst [vmem:[#allocation2 + $0x10] sm:$0xff] 0.0
        %277 = vst [vmem:[#allocation2 + $0x18] sm:$0xff] 0.0
      $region40: #{resnet_server_forward.16} parent=35 // pred_fallthru
        _
      %v278 = vld [vmem:[#allocation2] sm:$0xff]
      %v279 = vld [vmem:[#allocation2 + $0x8] sm:$0xff]
      %v280 = vld [vmem:[#allocation2 + $0x10] sm:$0xff]
      %v281 = vld [vmem:[#allocation2 + $0x18] sm:$0xff]
      %v282 = vld [vmem:[%s250] sm:$0xf]
      %v283 = vld [vmem:[%s250 + $0x4] sm:$0xf]
      %v284 = vld [vmem:[%s250 + $0x8] sm:$0xf]
      %v285 = vld [vmem:[%s250 + $0xc] sm:$0xf]
      %v286 = vld [vmem:[%s256] sm:$0xf]
      %v287 = vld [vmem:[%s256 + $0x4] sm:$0xf]
      %v288 = vld [vmem:[%s256 + $0x8] sm:$0xf]
      %v289 = vld [vmem:[%s256 + $0xc] sm:$0xf]
      %v290 = vld [vmem:[%s256 + $0x10] sm:$0xf]
      %v291 = vld [vmem:[%s256 + $0x14] sm:$0xf]
      %v292 = vld [vmem:[%s256 + $0x18] sm:$0xf]
      %v293 = vld [vmem:[%s256 + $0x1c] sm:$0xf]
      %v294 = vld [vmem:[%s256 + $0x20] sm:$0xf]
      %v295 = vld [vmem:[%s256 + $0x24] sm:$0xf]
      %v296 = vld [vmem:[%s256 + $0x28] sm:$0xf]
      %v297 = vld [vmem:[%s256 + $0x2c] sm:$0xf]
      %v298 = vld [vmem:[%s256 + $0x30] sm:$0xf]
      %v299 = vld [vmem:[%s256 + $0x34] sm:$0xf]
      %v300 = vld [vmem:[%s256 + $0x38] sm:$0xf]
      %v301 = vld [vmem:[%s256 + $0x3c] sm:$0xf]
      %v306 = vunpack.c.l.b16 %v282
      %v307 = vunpack.c.l.b16 %v283
      %v308 = vunpack.c.l.b16 %v284
      %v309 = vunpack.c.l.b16 %v285
      %v310 = vpack.c.b16 %v307, %v306
      %v311 = vpack.c.b16 %v309, %v308
      %v330 = vunpack.c.l.b16 %v286
      %v331 = vunpack.c.l.b16 %v287
      %v332 = vunpack.c.l.b16 %v288
      %v333 = vunpack.c.l.b16 %v289
      %v334 = vunpack.c.l.b16 %v290
      %v335 = vunpack.c.l.b16 %v291
      %v336 = vunpack.c.l.b16 %v292
      %v337 = vunpack.c.l.b16 %v293
      %v338 = vunpack.c.l.b16 %v294
      %v339 = vunpack.c.l.b16 %v295
      %v340 = vunpack.c.l.b16 %v296
      %v341 = vunpack.c.l.b16 %v297
      %v342 = vunpack.c.l.b16 %v298
      %v343 = vunpack.c.l.b16 %v299
      %v344 = vunpack.c.l.b16 %v300
      %v345 = vunpack.c.l.b16 %v301
      %v346 = vpack.c.b16 %v331, %v330
      %v347 = vpack.c.b16 %v333, %v332
      %v348 = vpack.c.b16 %v335, %v334
      %v349 = vpack.c.b16 %v337, %v336
      %v350 = vpack.c.b16 %v339, %v338
      %v351 = vpack.c.b16 %v341, %v340
      %v352 = vpack.c.b16 %v343, %v342
      %v353 = vpack.c.b16 %v345, %v344
      %362 = vmatprep.subr.bf16.mxu0 0
      %363 = vmatpush1.bf16.msra.mxu0 %v353
      %364 = vmatprep.subr.bf16.mxu0 0
      %365 = vmatpush1.bf16.msra.mxu0 %v352
      %366 = vmatprep.subr.bf16.mxu0 0
      %367 = vmatpush1.bf16.msra.mxu0 %v351
      %368 = vmatprep.subr.bf16.mxu0 0
      %369 = vmatpush1.bf16.msra.mxu0 %v350
      %370 = vmatprep.subr.bf16.mxu0 0
      %371 = vmatpush1.bf16.msra.mxu0 %v349
      %372 = vmatprep.subr.bf16.mxu0 0
      %373 = vmatpush1.bf16.msra.mxu0 %v348
      %374 = vmatprep.subr.bf16.mxu0 0
      %375 = vmatpush1.bf16.msra.mxu0 %v347
      %376 = vmatprep.subr.bf16.mxu0 0
      %377 = vmatpush1.bf16.msra.mxu0 %v346
      %378 = vmatprep.subr.bf16.mxu0 0
      %379 = vmatpush2.bf16.msra.mxu0 0
      %380 = vmatprep.subr.bf16.mxu0 0
      %381 = vmatpush2.bf16.msra.mxu0 0
      %382 = vmatprep.subr.bf16.mxu0 0
      %383 = vmatpush2.bf16.msra.mxu0 0
      %384 = vmatprep.subr.bf16.mxu0 0
      %385 = vmatpush2.bf16.msra.mxu0 0
      %386 = vmatprep.subr.bf16.mxu0 0
      %387 = vmatpush2.bf16.msra.mxu0 0
      %388 = vmatprep.subr.bf16.mxu0 0
      %389 = vmatpush2.bf16.msra.mxu0 0
      %390 = vmatprep.subr.bf16.mxu0 0
      %391 = vmatpush2.bf16.msra.mxu0 0
      %392 = vmatprep.subr.bf16.mxu0 0
      %393 = vmatpush2.bf16.msra.mxu0 0
      %394 = vmatprep.mubr.bf16.mxu0 0
      %395 = vmatmul.mubr.bf16.gmra.mxu0 %v310
      %v396 = vpop.f32.mrf.mxu0
      %v397 = vadd.f32 0.0, %v396
      %v398 = vpop.f32.mrf.mxu0
      %v399 = vpop.f32.mrf.mxu0
      %v400 = vadd.f32 0.0, %v399
      %v401 = vpop.f32.mrf.mxu0
      %402 = vmatprep.mubr.bf16.mxu0 0
      %403 = vmatmul.mubr.bf16.gmra.mxu0 %v311
      %v404 = vpop.f32.mrf.mxu0
      %v405 = vadd.f32 0.0, %v404
      %v406 = vpop.f32.mrf.mxu0
      %v407 = vpop.f32.mrf.mxu0
      %v408 = vadd.f32 0.0, %v407
      %v409 = vpop.f32.mrf.mxu0
      %410 = vdwg.mxu0
      %v411 = vadd.f32 %v278, %v397
      %v412 = vadd.f32 %v279, %v400
      %v413 = vadd.f32 %v280, %v405
      %v414 = vadd.f32 %v281, %v408
      %415 = vst [vmem:[#allocation2] sm:$0xff] %v411
      %416 = vst [vmem:[#allocation2 + $0x8] sm:$0xff] %v412
      %417 = vst [vmem:[#allocation2 + $0x10] sm:$0xff] %v413
      %418 = vst [vmem:[#allocation2 + $0x18] sm:$0xff] %v414
      %p419 = scmp.eq.s32.totalorder %s20, 8
      // Predicated region
      $region41: #{resnet_server_forward.16} parent=35 // pred_check
        %p420 = pneg %p419
      $region42: #{resnet_server_forward.16} parent=35 // pred_check_branch
        %422 = sbr.rel (%p420) target = $region44
      $region43: #{resnet_server_forward.16} parent=35 // pred_region
        %v423 = vld [vmem:[#allocation2] sm:$0xff]
        %v424 = vld [vmem:[#allocation2 + $0x8] sm:$0xff]
        %v425 = vld [vmem:[#allocation2 + $0x10] sm:$0xff]
        %v426 = vld [vmem:[#allocation2 + $0x18] sm:$0xff]
        %v427 = vld [vmem:[%s2] sm:$0x1]
        %v429 = vlaneseq
        %v430 = vshrl.u32 %v429, 7
        %v431 = vsub.s32 0, %v430
        %v432 = vrot.slane %v427, %v431
        %v434 = vadd.f32 %v423, %v432
        %v435 = vadd.f32 %v424, %v432
        %v436 = vadd.f32 %v425, %v432
        %v437 = vadd.f32 %v426, %v432
        %v438 = vld [vmem:[%s261] sm:$0xf]
        %v439 = vld [vmem:[%s261 + $0x4] sm:$0xf]
        %v440 = vld [vmem:[%s261 + $0x8] sm:$0xf]
        %v441 = vld [vmem:[%s261 + $0xc] sm:$0xf]
        %v442 = vunpack.c.l.bf16 %v438
        %v443 = vunpack.c.l.bf16 %v439
        %v444 = vunpack.c.l.bf16 %v440
        %v445 = vunpack.c.l.bf16 %v441
        %v446 = vadd.f32 %v434, %v442
        %v447 = vadd.f32 %v435, %v443
        %v448 = vadd.f32 %v436, %v444
        %v449 = vadd.f32 %v437, %v445
        %v450 = vmax.f32 %v446, 0.0
        %v451 = vmax.f32 %v447, 0.0
        %v452 = vmax.f32 %v448, 0.0
        %v453 = vmax.f32 %v449, 0.0
        %v454 = vpack.c.bf16 %v451, %v450
        %v455 = vpack.c.bf16 %v453, %v452
        %v458 = vunpack.c.l.b16 %v454
        %v459 = vunpack.c.h.b16 %v454
        %v460 = vunpack.c.l.b16 %v455
        %v461 = vunpack.c.h.b16 %v455
        %v462 = vpack.c.b16 %v458, %v458
        %v463 = vpack.c.b16 %v459, %v459
        %v464 = vpack.c.b16 %v460, %v460
        %v465 = vpack.c.b16 %v461, %v461
        %470 = vst [vmem:[%s267] sm:$0xf] %v462
        %471 = vst [vmem:[%s267 + $0x4] sm:$0xf] %v463
        %472 = vst [vmem:[%s267 + $0x8] sm:$0xf] %v464
        %473 = vst [vmem:[%s267 + $0xc] sm:$0xf] %v465
      $region44: #{resnet_server_forward.16} parent=35 // pred_fallthru
        _
      %s474 = smul.u32 4, %s19
      %p475 = scmp.lt.s32.totalorder %s474, 3
      %s476 = scalar_select %p475, %s474, 3
      %s477 = smul.addr %s476, 4
      %s478 = scalar_lea.vmem %s4, %s477
      // Predicated region
      $region45: #{resnet_server_forward.16} parent=35 // pred_check
        %p479 = pneg %p146
      $region46: #{resnet_server_forward.16} parent=35 // pred_check_branch
        %481 = sbr.rel (%p479) target = $region48
      $region47: #{resnet_server_forward.16} parent=35 // pred_region
        %s482 = smul.u32 4, %s19
      $region48: #{resnet_server_forward.16} parent=35 // pred_fallthru
        _
      // Predicated region
      $region49: #{resnet_server_forward.16} parent=35 // pred_check
        %p483 = pneg %p146
      $region50: #{resnet_server_forward.16} parent=35 // pred_check_branch
        %485 = sbr.rel (%p483) target = $region52
      $region51: #{resnet_server_forward.16} parent=35 // pred_region
        %s486 = smul.u32 4, %s19
        %p487 = scmp.lt.s32.totalorder %s486, 3
        %s488 = scalar_select %p487, %s486, 3
        %s489 = smul.addr %s488, 4
        %s490 = scalar_lea.vmem %s4, %s489
      $region52: #{resnet_server_forward.16} parent=35 // pred_fallthru
        _
    $region36: #{resnet_server_forward.16} parent=5 // pred_fallthru
      _
    %p491 = scmp.le.s32.totalorder 2, %s10
    // Predicated region
    $region53: #{resnet_server_forward.16} parent=5 // pred_check
      %p492 = pneg %p491
    $region54: #{resnet_server_forward.16} parent=5 // pred_check_branch
      %494 = sbr.rel (%p492) target = $region56
    $region55: #{resnet_server_forward.16} parent=5 // pred_region
      %s495 = ssub.s32 %s10, 2
    $region56: #{resnet_server_forward.16} parent=5 // pred_fallthru
      _
  $region6: #{resnet_server_forward.16} parent=0 // loop_footer
    %s14 = sadd.s32 1, %s10
  $region7: #{resnet_server_forward.16} parent=0 // loop_footer_branch
    %9 = sbr.rel target = $region3
  $region8: #{resnet_server_forward.16} parent=0 // loop_exit
    _

// kernel: resnet_server_forward.15
$region0: #{resnet_server_forward.15}
  #allocation0 [shape = 'u32[]', space=smem, size = 0x4, offset = 0x4, fixed_abs, tag = 'smem constant byte address 0x4 - core index']
  #allocation1 [shape = 'u32[144,128]{1,0:T(1,128)}', space=vmem, size = 0x12000, scoped, tag = 'internal scratch']
  #allocation2 [shape = 'f32[32,128]{1,0:T(8,128)}', space=vmem, size = 0x4000, scoped, tag = 'scratch operand']
  %s0 = inlined_call_operand.vmem [shape: bf16[1,32,128], index: 0, kind: input, shape index: {}]
  %s1 = inlined_call_operand.vmem [shape: bf16[1,128,128], index: 1, kind: input, shape index: {}]
  %s2 = inlined_call_operand.vmem [shape: f32[1,128], index: 2, kind: input, shape index: {}]
  %s3 = inlined_call_operand.vmem [shape: bf16[32,128], index: 3, kind: output, shape index: {}]
  %s4 = sld [smem:[#allocation0]]
  $region30: #{resnet_server_forward.15} parent=0
    _
  %s6 = ssub.s32 1, %s4
  %s7 = scalar_select 0, %s6, %s4
  // Predicated region
  $region2: #{resnet_server_forward.15} parent=0 // pred_check
    _
  $region3: #{resnet_server_forward.15} parent=0 // pred_check_branch
    %9 = sbr.rel (0) target = $region5
  $region4: #{resnet_server_forward.15} parent=0 // pred_region
    _
  $region5: #{resnet_server_forward.15} parent=0 // pred_fallthru
    _
  // Predicated region
  $region6: #{resnet_server_forward.15} parent=0 // pred_check
    _
  $region7: #{resnet_server_forward.15} parent=0 // pred_check_branch
    %11 = sbr.rel (0) target = $region9
  $region8: #{resnet_server_forward.15} parent=0 // pred_region
    _
  $region9: #{resnet_server_forward.15} parent=0 // pred_fallthru
    _
  // Predicated region
  $region10: #{resnet_server_forward.15} parent=0 // pred_check
    _
  $region11: #{resnet_server_forward.15} parent=0 // pred_check_branch
    %13 = sbr.rel (0) target = $region13
  $region12: #{resnet_server_forward.15} parent=0 // pred_region
    _
  $region13: #{resnet_server_forward.15} parent=0 // pred_fallthru
    _
  %p15 = scmp.eq.s32.totalorder 0, 0
  // Predicated region
  $region14: #{resnet_server_forward.15} parent=0 // pred_check
    %p16 = pneg %p15
  $region15: #{resnet_server_forward.15} parent=0 // pred_check_branch
    %18 = sbr.rel (%p16) target = $region17
  $region16: #{resnet_server_forward.15} parent=0 // pred_region
    %19 = vst [vmem:[#allocation2] sm:$0xff] 0.0
    %20 = vst [vmem:[#allocation2 + $0x8] sm:$0xff] 0.0
    %21 = vst [vmem:[#allocation2 + $0x10] sm:$0xff] 0.0
    %22 = vst [vmem:[#allocation2 + $0x18] sm:$0xff] 0.0
  $region17: #{resnet_server_forward.15} parent=0 // pred_fallthru
    _
  %v23 = vld [vmem:[#allocation2] sm:$0xff]
  %v24 = vld [vmem:[#allocation2 + $0x8] sm:$0xff]
  %v25 = vld [vmem:[#allocation2 + $0x10] sm:$0xff]
  %v26 = vld [vmem:[#allocation2 + $0x18] sm:$0xff]
  %v27 = vld [vmem:[%s0] sm:$0xf]
  %v28 = vld [vmem:[%s0 + $0x4] sm:$0xf]
  %v29 = vld [vmem:[%s0 + $0x8] sm:$0xf]
  %v30 = vld [vmem:[%s0 + $0xc] sm:$0xf]
  %v31 = vld [vmem:[%s1] sm:$0xf]
  %v32 = vld [vmem:[%s1 + $0x4] sm:$0xf]
  %v33 = vld [vmem:[%s1 + $0x8] sm:$0xf]
  %v34 = vld [vmem:[%s1 + $0xc] sm:$0xf]
  %v35 = vld [vmem:[%s1 + $0x10] sm:$0xf]
  %v36 = vld [vmem:[%s1 + $0x14] sm:$0xf]
  %v37 = vld [vmem:[%s1 + $0x18] sm:$0xf]
  %v38 = vld [vmem:[%s1 + $0x1c] sm:$0xf]
  %v39 = vld [vmem:[%s1 + $0x20] sm:$0xf]
  %v40 = vld [vmem:[%s1 + $0x24] sm:$0xf]
  %v41 = vld [vmem:[%s1 + $0x28] sm:$0xf]
  %v42 = vld [vmem:[%s1 + $0x2c] sm:$0xf]
  %v43 = vld [vmem:[%s1 + $0x30] sm:$0xf]
  %v44 = vld [vmem:[%s1 + $0x34] sm:$0xf]
  %v45 = vld [vmem:[%s1 + $0x38] sm:$0xf]
  %v46 = vld [vmem:[%s1 + $0x3c] sm:$0xf]
  %v51 = vunpack.c.l.b16 %v27
  %v52 = vunpack.c.l.b16 %v28
  %v53 = vunpack.c.l.b16 %v29
  %v54 = vunpack.c.l.b16 %v30
  %v55 = vpack.c.b16 %v52, %v51
  %v56 = vpack.c.b16 %v54, %v53
  %v75 = vunpack.c.l.b16 %v31
  %v76 = vunpack.c.l.b16 %v32
  %v77 = vunpack.c.l.b16 %v33
  %v78 = vunpack.c.l.b16 %v34
  %v79 = vunpack.c.l.b16 %v35
  %v80 = vunpack.c.l.b16 %v36
  %v81 = vunpack.c.l.b16 %v37
  %v82 = vunpack.c.l.b16 %v38
  %v83 = vunpack.c.l.b16 %v39
  %v84 = vunpack.c.l.b16 %v40
  %v85 = vunpack.c.l.b16 %v41
  %v86 = vunpack.c.l.b16 %v42
  %v87 = vunpack.c.l.b16 %v43
  %v88 = vunpack.c.l.b16 %v44
  %v89 = vunpack.c.l.b16 %v45
  %v90 = vunpack.c.l.b16 %v46
  %v91 = vpack.c.b16 %v76, %v75
  %v92 = vpack.c.b16 %v78, %v77
  %v93 = vpack.c.b16 %v80, %v79
  %v94 = vpack.c.b16 %v82, %v81
  %v95 = vpack.c.b16 %v84, %v83
  %v96 = vpack.c.b16 %v86, %v85
  %v97 = vpack.c.b16 %v88, %v87
  %v98 = vpack.c.b16 %v90, %v89
  %107 = vmatprep.subr.bf16.mxu0 0
  %108 = vmatpush1.bf16.msra.mxu0 %v98
  %109 = vmatprep.subr.bf16.mxu0 0
  %110 = vmatpush1.bf16.msra.mxu0 %v97
  %111 = vmatprep.subr.bf16.mxu0 0
  %112 = vmatpush1.bf16.msra.mxu0 %v96
  %113 = vmatprep.subr.bf16.mxu0 0
  %114 = vmatpush1.bf16.msra.mxu0 %v95
  %115 = vmatprep.subr.bf16.mxu0 0
  %116 = vmatpush1.bf16.msra.mxu0 %v94
  %117 = vmatprep.subr.bf16.mxu0 0
  %118 = vmatpush1.bf16.msra.mxu0 %v93
  %119 = vmatprep.subr.bf16.mxu0 0
  %120 = vmatpush1.bf16.msra.mxu0 %v92
  %121 = vmatprep.subr.bf16.mxu0 0
  %122 = vmatpush1.bf16.msra.mxu0 %v91
  %123 = vmatprep.subr.bf16.mxu0 0
  %124 = vmatpush2.bf16.msra.mxu0 0
  %125 = vmatprep.subr.bf16.mxu0 0
  %126 = vmatpush2.bf16.msra.mxu0 0
  %127 = vmatprep.subr.bf16.mxu0 0
  %128 = vmatpush2.bf16.msra.mxu0 0
  %129 = vmatprep.subr.bf16.mxu0 0
  %130 = vmatpush2.bf16.msra.mxu0 0
  %131 = vmatprep.subr.bf16.mxu0 0
  %132 = vmatpush2.bf16.msra.mxu0 0
  %133 = vmatprep.subr.bf16.mxu0 0
  %134 = vmatpush2.bf16.msra.mxu0 0
  %135 = vmatprep.subr.bf16.mxu0 0
  %136 = vmatpush2.bf16.msra.mxu0 0
  %137 = vmatprep.subr.bf16.mxu0 0
  %138 = vmatpush2.bf16.msra.mxu0 0
  %139 = vmatprep.mubr.bf16.mxu0 0
  %140 = vmatmul.mubr.bf16.gmra.mxu0 %v55
  %v141 = vpop.f32.mrf.mxu0
  %v142 = vadd.f32 0.0, %v141
  %v143 = vpop.f32.mrf.mxu0
  %v144 = vpop.f32.mrf.mxu0
  %v145 = vadd.f32 0.0, %v144
  %v146 = vpop.f32.mrf.mxu0
  %147 = vmatprep.mubr.bf16.mxu0 0
  %148 = vmatmul.mubr.bf16.gmra.mxu0 %v56
  %v149 = vpop.f32.mrf.mxu0
  %v150 = vadd.f32 0.0, %v149
  %v151 = vpop.f32.mrf.mxu0
  %v152 = vpop.f32.mrf.mxu0
  %v153 = vadd.f32 0.0, %v152
  %v154 = vpop.f32.mrf.mxu0
  %155 = vdwg.mxu0
  %v156 = vadd.f32 %v23, %v142
  %v157 = vadd.f32 %v24, %v145
  %v158 = vadd.f32 %v25, %v150
  %v159 = vadd.f32 %v26, %v153
  %160 = vst [vmem:[#allocation2] sm:$0xff] %v156
  %161 = vst [vmem:[#allocation2 + $0x8] sm:$0xff] %v157
  %162 = vst [vmem:[#allocation2 + $0x10] sm:$0xff] %v158
  %163 = vst [vmem:[#allocation2 + $0x18] sm:$0xff] %v159
  // Predicated region
  $region18: #{resnet_server_forward.15} parent=0 // pred_check
    %p164 = pneg %p15
  $region19: #{resnet_server_forward.15} parent=0 // pred_check_branch
    %166 = sbr.rel (%p164) target = $region21
  $region20: #{resnet_server_forward.15} parent=0 // pred_region
    %v167 = vld [vmem:[#allocation2] sm:$0xff]
    %v168 = vld [vmem:[#allocation2 + $0x8] sm:$0xff]
    %v169 = vld [vmem:[#allocation2 + $0x10] sm:$0xff]
    %v170 = vld [vmem:[#allocation2 + $0x18] sm:$0xff]
    %v171 = vld [vmem:[%s2] sm:$0x1]
    %v173 = vlaneseq
    %v174 = vshrl.u32 %v173, 7
    %v175 = vsub.s32 0, %v174
    %v176 = vrot.slane %v171, %v175
    %v178 = vadd.f32 %v167, %v176
    %v179 = vadd.f32 %v168, %v176
    %v180 = vadd.f32 %v169, %v176
    %v181 = vadd.f32 %v170, %v176
    %v182 = vpack.c.bf16 %v179, %v178
    %v183 = vpack.c.bf16 %v181, %v180
    %v186 = vunpack.c.l.b16 %v182
    %v187 = vunpack.c.h.b16 %v182
    %v188 = vunpack.c.l.b16 %v183
    %v189 = vunpack.c.h.b16 %v183
    %v190 = vpack.c.b16 %v186, %v186
    %v191 = vpack.c.b16 %v187, %v187
    %v192 = vpack.c.b16 %v188, %v188
    %v193 = vpack.c.b16 %v189, %v189
    %198 = vst [vmem:[%s3] sm:$0xf] %v190
    %199 = vst [vmem:[%s3 + $0x4] sm:$0xf] %v191
    %200 = vst [vmem:[%s3 + $0x8] sm:$0xf] %v192
    %201 = vst [vmem:[%s3 + $0xc] sm:$0xf] %v193
  $region21: #{resnet_server_forward.15} parent=0 // pred_fallthru
    _
  // Predicated region
  $region22: #{resnet_server_forward.15} parent=0 // pred_check
    _
  $region23: #{resnet_server_forward.15} parent=0 // pred_check_branch
    %203 = sbr.rel (0) target = $region25
  $region24: #{resnet_server_forward.15} parent=0 // pred_region
    _
  $region25: #{resnet_server_forward.15} parent=0 // pred_fallthru
    _
  // Predicated region
  $region26: #{resnet_server_forward.15} parent=0 // pred_check
    _
  $region27: #{resnet_server_forward.15} parent=0 // pred_check_branch
    %205 = sbr.rel (0) target = $region29
  $region28: #{resnet_server_forward.15} parent=0 // pred_region
    _
  $region29: #{resnet_server_forward.15} parent=0 // pred_fallthru
    _

// kernel: resnet_server_forward.17
$region0: #{resnet_server_forward.17}
  #allocation0 [shape = 'u32[]', space=smem, size = 0x4, offset = 0x4, fixed_abs, tag = 'smem constant byte address 0x4 - core index']
  #allocation1 [shape = 'u32[144,128]{1,0:T(1,128)}', space=vmem, size = 0x12000, scoped, tag = 'internal scratch']
  #allocation2 [shape = 'f32[8,256]{1,0:T(8,128)}', space=vmem, size = 0x2000, scoped, tag = 'scratch operand']
  %s0 = inlined_call_operand.vmem [shape: bf16[9,8,128], index: 0, kind: input, shape index: {}]
  %s1 = inlined_call_operand.vmem [shape: bf16[9,128,256], index: 1, kind: input, shape index: {}]
  %s2 = inlined_call_operand.vmem [shape: f32[1,256], index: 2, kind: input, shape index: {}]
  %s3 = inlined_call_operand.vmem [shape: bf16[8,256], index: 3, kind: output, shape index: {}]
  %s4 = sld [smem:[#allocation0]]
  $region53: #{resnet_server_forward.17} parent=0
    _
  %s6 = ssub.s32 1, %s4
  %s7 = scalar_select 0, %s6, %s4
  loop: start=0, step=1, limit=11
  $region2: #{resnet_server_forward.17} parent=0 // loop_pre_header
    _
  $region3: #{resnet_server_forward.17} parent=0 // loop_header
    %s9 = sphi 0, %s13
    %p10 = scmp.ge.s32.totalorder %s9, 11
    %s16 = sphi 0, %s28
    %s17 = sphi 0, %s24
    %s18 = sphi 0, %s16
    %s19 = sphi 0, %s17
    %s20 = sphi 0, %s18
    %s21 = sphi 0, %s19
    %s33 = sphi 0, %s35
    %s36 = sphi 0, %s33
    %s37 = sphi 0, %s36
    %s53 = sphi 0, %s37
    %s59 = sphi 0, %s61
    %s62 = sphi 0, %s59
    %s63 = sphi 0, %s62
    %s79 = sphi 0, %s63
    %s83 = sphi 0, %s83
    %s85 = sphi 0, %s83
    %s86 = sphi 0, %s85
    %s100 = sphi 0, %s86
    %s106 = sphi 0, %s108
    %s109 = sphi 0, %s106
    %s110 = sphi 0, %s109
    %s126 = sphi 0, %s110
  $region4: #{resnet_server_forward.17} parent=0 // loop_header_branch
    %12 = sbr.rel (%p10) target = $region8
  $region5: #{resnet_server_forward.17} parent=0 // loop_body
    %s14 = ssub.s32 %s9, 1
    %s15 = ssub.s32 %s9, 2
    %s22 = sadd.s32 1, %s17
    %p23 = scmp.ge.s32.totalorder %s22, 9
    %s24 = scalar_select %p23, 0, %s22
    %s25 = sadd.s32 1, %s16
    %s26 = scalar_select %p23, %s25, %s16
    %p27 = scmp.ge.s32.totalorder %s26, 1
    %s28 = scalar_select %p27, 0, %s26
    %s29 = ssub.s32 %s17, %s24
    %s30 = ssub.s32 %s16, %s28
    %s31 = sor.u32 %s29, %s30
    %p32 = scmp.eq.s32.totalorder %s31, 0
    %s34 = sadd.s32 %s33, 1
    %s35 = scalar_select %p32, %s33, %s34
    %p38 = pneg %p32
    %p39 = scmp.eq.s32.totalorder %s9, 8
    %p40 = por %p38, %p39
    %p41 = scmp.ne.s32.totalorder %s33, %s36
    %p42 = scmp.eq.s32.totalorder %s9, 0
    %p43 = por %p41, %p42
    %p44 = scmp.ne.s32.totalorder %s33, %s36
    %p45 = scmp.eq.s32.totalorder %s14, 8
    %p46 = por %p44, %p45
    %p47 = scmp.ne.s32.totalorder %s36, %s37
    %p48 = scmp.eq.s32.totalorder %s14, 0
    %p49 = por %p47, %p48
    %p50 = scmp.ne.s32.totalorder %s36, %s37
    %p51 = scmp.eq.s32.totalorder %s15, 8
    %p52 = por %p50, %p51
    %p54 = scmp.ne.s32.totalorder %s37, %s53
    %p55 = scmp.eq.s32.totalorder %s15, 0
    %p56 = por %p54, %p55
    %s57 = ssub.s32 %s17, %s24
    %p58 = scmp.eq.s32.totalorder %s57, 0
    %s60 = sadd.s32 %s59, 1
    %s61 = scalar_select %p58, %s59, %s60
    %p64 = pneg %p58
    %p65 = scmp.eq.s32.totalorder %s9, 8
    %p66 = por %p64, %p65
    %p67 = scmp.ne.s32.totalorder %s59, %s62
    %p68 = scmp.eq.s32.totalorder %s9, 0
    %p69 = por %p67, %p68
    %p70 = scmp.ne.s32.totalorder %s59, %s62
    %p71 = scmp.eq.s32.totalorder %s14, 8
    %p72 = por %p70, %p71
    %p73 = scmp.ne.s32.totalorder %s62, %s63
    %p74 = scmp.eq.s32.totalorder %s14, 0
    %p75 = por %p73, %p74
    %p76 = scmp.ne.s32.totalorder %s62, %s63
    %p77 = scmp.eq.s32.totalorder %s15, 8
    %p78 = por %p76, %p77
    %p80 = scmp.ne.s32.totalorder %s63, %s79
    %p81 = scmp.eq.s32.totalorder %s15, 0
    %p82 = por %p80, %p81
    %s84 = sadd.s32 %s83, 1
    %p87 = scmp.eq.s32.totalorder %s9, 8
    %p88 = scmp.ne.s32.totalorder %s83, %s85
    %p89 = scmp.eq.s32.totalorder %s9, 0
    %p90 = por %p88, %p89
    %p91 = scmp.ne.s32.totalorder %s83, %s85
    %p92 = scmp.eq.s32.totalorder %s14, 8
    %p93 = por %p91, %p92
    %p94 = scmp.ne.s32.totalorder %s85, %s86
    %p95 = scmp.eq.s32.totalorder %s14, 0
    %p96 = por %p94, %p95
    %p97 = scmp.ne.s32.totalorder %s85, %s86
    %p98 = scmp.eq.s32.totalorder %s15, 8
    %p99 = por %p97, %p98
    %p101 = scmp.ne.s32.totalorder %s86, %s100
    %p102 = scmp.eq.s32.totalorder %s15, 0
    %p103 = por %p101, %p102
    %s104 = ssub.s32 %s16, %s28
    %p105 = scmp.eq.s32.totalorder %s104, 0
    %s107 = sadd.s32 %s106, 1
    %s108 = scalar_select %p105, %s106, %s107
    %p111 = pneg %p105
    %p112 = scmp.eq.s32.totalorder %s9, 8
    %p113 = por %p111, %p112
    %p114 = scmp.ne.s32.totalorder %s106, %s109
    %p115 = scmp.eq.s32.totalorder %s9, 0
    %p116 = por %p114, %p115
    %p117 = scmp.ne.s32.totalorder %s106, %s109
    %p118 = scmp.eq.s32.totalorder %s14, 8
    %p119 = por %p117, %p118
    %p120 = scmp.ne.s32.totalorder %s109, %s110
    %p121 = scmp.eq.s32.totalorder %s14, 0
    %p122 = por %p120, %p121
    %p123 = scmp.ne.s32.totalorder %s109, %s110
    %p124 = scmp.eq.s32.totalorder %s15, 8
    %p125 = por %p123, %p124
    %p127 = scmp.ne.s32.totalorder %s110, %s126
    %p128 = scmp.eq.s32.totalorder %s15, 0
    %p129 = por %p127, %p128
    %p130 = scmp.le.s32.totalorder 1, %s9
    %p131 = scmp.lt.s32.totalorder %s9, 10
    %p132 = pnand %p130, %p131
    %p133 = pneg %p132
    // Predicated region
    $region9: #{resnet_server_forward.17} parent=5 // pred_check
      _
    $region10: #{resnet_server_forward.17} parent=5 // pred_check_branch
      %135 = sbr.rel (%p132) target = $region12
    $region11: #{resnet_server_forward.17} parent=5 // pred_region
      %s136 = ssub.s32 %s9, 1
      // Predicated region
      $region13: #{resnet_server_forward.17} parent=11 // pred_check
        %p137 = pneg %p96
      $region14: #{resnet_server_forward.17} parent=11 // pred_check_branch
        %139 = sbr.rel (%p137) target = $region16
      $region15: #{resnet_server_forward.17} parent=11 // pred_region
        _
      $region16: #{resnet_server_forward.17} parent=11 // pred_fallthru
        _
    $region12: #{resnet_server_forward.17} parent=5 // pred_fallthru
      _
    %p140 = scmp.lt.s32.totalorder %s9, 9
    // Predicated region
    $region17: #{resnet_server_forward.17} parent=5 // pred_check
      %p141 = pneg %p140
    $region18: #{resnet_server_forward.17} parent=5 // pred_check_branch
      %143 = sbr.rel (%p141) target = $region20
    $region19: #{resnet_server_forward.17} parent=5 // pred_region
      // Predicated region
      $region21: #{resnet_server_forward.17} parent=19 // pred_check
        %p144 = pneg %p43
      $region22: #{resnet_server_forward.17} parent=19 // pred_check_branch
        %146 = sbr.rel (%p144) target = $region24
      $region23: #{resnet_server_forward.17} parent=19 // pred_region
        %p147 = scmp.lt.s32.totalorder %s17, 8
        %s148 = scalar_select %p147, %s17, 8
        %p149 = scmp.lt.s32.totalorder %s16, 0
        %s150 = scalar_select %p149, %s16, 0
        %s151 = sadd.s32 %s150, %s148
        %s152 = smul.addr %s151, 4
        %s153 = scalar_lea.vmem %s0, %s152
      $region24: #{resnet_server_forward.17} parent=19 // pred_fallthru
        _
      // Predicated region
      $region25: #{resnet_server_forward.17} parent=19 // pred_check
        %p154 = pneg %p69
      $region26: #{resnet_server_forward.17} parent=19 // pred_check_branch
        %156 = sbr.rel (%p154) target = $region28
      $region27: #{resnet_server_forward.17} parent=19 // pred_region
        %p157 = scmp.lt.s32.totalorder %s17, 8
        %s158 = scalar_select %p157, %s17, 8
        %s159 = smul.addr %s158, 32
        %s160 = smul.addr %s159, 4
        %s161 = scalar_lea.vmem %s1, %s160
      $region28: #{resnet_server_forward.17} parent=19 // pred_fallthru
        _
    $region20: #{resnet_server_forward.17} parent=5 // pred_fallthru
      _
    %p162 = scmp.le.s32.totalorder 1, %s9
    %p163 = scmp.lt.s32.totalorder %s9, 10
    %p164 = pnand %p162, %p163
    %p165 = pneg %p164
    // Predicated region
    $region29: #{resnet_server_forward.17} parent=5 // pred_check
      _
    $region30: #{resnet_server_forward.17} parent=5 // pred_check_branch
      %167 = sbr.rel (%p164) target = $region32
    $region31: #{resnet_server_forward.17} parent=5 // pred_region
      %s168 = ssub.s32 %s9, 1
      %p169 = scmp.lt.s32.totalorder %s19, 8
      %s170 = scalar_select %p169, %s19, 8
      %p171 = scmp.lt.s32.totalorder %s18, 0
      %s172 = scalar_select %p171, %s18, 0
      %s173 = sadd.s32 %s172, %s170
      %s174 = smul.addr %s173, 4
      %s175 = scalar_lea.vmem %s0, %s174
      %p176 = pneg %p49
      %p177 = pneg %p46
      %p178 = scmp.lt.s32.totalorder %s19, 8
      %s179 = scalar_select %p178, %s19, 8
      %s180 = smul.addr %s179, 32
      %s181 = smul.addr %s180, 4
      %s182 = scalar_lea.vmem %s1, %s181
      %p183 = pneg %p75
      %p184 = pneg %p72
      %p185 = pneg %p96
      %p186 = pneg %p93
      %p187 = pneg %p122
      %p188 = pneg %p119
      %p189 = scmp.lt.s32.totalorder %s18, 0
      %s190 = scalar_select %p189, %s18, 0
      %s191 = smul.addr %s190, 2
      %s192 = smul.addr %s191, 4
      %s193 = scalar_lea.vmem %s3, %s192
      %p194 = scmp.lt.s32.totalorder %s19, 8
      %s195 = scalar_select %p194, %s19, 8
      %p196 = scmp.lt.s32.totalorder %s18, 0
      %s197 = scalar_select %p196, %s18, 0
      %s198 = sadd.s32 %s197, %s195
      %s199 = smul.addr %s198, 4
      %s200 = scalar_lea.vmem %s0, %s199
      %p201 = scmp.lt.s32.totalorder %s19, 8
      %s202 = scalar_select %p201, %s19, 8
      %s203 = smul.addr %s202, 32
      %s204 = smul.addr %s203, 4
      %s205 = scalar_lea.vmem %s1, %s204
      %p206 = scmp.lt.s32.totalorder %s18, 0
      %s207 = scalar_select %p206, %s18, 0
      %s208 = smul.addr %s207, 2
      %s209 = smul.addr %s208, 4
      %s210 = scalar_lea.vmem %s3, %s209
      %p212 = scmp.eq.s32.totalorder %s19, 0
      // Predicated region
      $region33: #{resnet_server_forward.17} parent=31 // pred_check
        %p213 = pneg %p212
      $region34: #{resnet_server_forward.17} parent=31 // pred_check_branch
        %215 = sbr.rel (%p213) target = $region36
      $region35: #{resnet_server_forward.17} parent=31 // pred_region
        %216 = vst [vmem:[#allocation2] sm:$0xff] 0.0
        %217 = vst [vmem:[#allocation2 + $0x8] sm:$0xff] 0.0
      $region36: #{resnet_server_forward.17} parent=31 // pred_fallthru
        _
      %v218 = vld [vmem:[#allocation2] sm:$0xff]
      %v219 = vld [vmem:[#allocation2 + $0x8] sm:$0xff]
      %v220 = vld [vmem:[%s200] sm:$0xf]
      %v221 = vld [vmem:[%s205] sm:$0xff]
      %v222 = vld [vmem:[%s205 + $0x8] sm:$0xff]
      %v223 = vld [vmem:[%s205 + $0x10] sm:$0xff]
      %v224 = vld [vmem:[%s205 + $0x18] sm:$0xff]
      %v225 = vld [vmem:[%s205 + $0x20] sm:$0xff]
      %v226 = vld [vmem:[%s205 + $0x28] sm:$0xff]
      %v227 = vld [vmem:[%s205 + $0x30] sm:$0xff]
      %v228 = vld [vmem:[%s205 + $0x38] sm:$0xff]
      %v229 = vld [vmem:[%s205 + $0x40] sm:$0xff]
      %v230 = vld [vmem:[%s205 + $0x48] sm:$0xff]
      %v231 = vld [vmem:[%s205 + $0x50] sm:$0xff]
      %v232 = vld [vmem:[%s205 + $0x58] sm:$0xff]
      %v233 = vld [vmem:[%s205 + $0x60] sm:$0xff]
      %v234 = vld [vmem:[%s205 + $0x68] sm:$0xff]
      %v235 = vld [vmem:[%s205 + $0x70] sm:$0xff]
      %v236 = vld [vmem:[%s205 + $0x78] sm:$0xff]
      %v253 = vunpack.c.l.b16 %v221
      %v254 = vunpack.c.h.b16 %v221
      %v255 = vunpack.c.l.b16 %v222
      %v256 = vunpack.c.h.b16 %v222
      %v257 = vunpack.c.l.b16 %v223
      %v258 = vunpack.c.h.b16 %v223
      %v259 = vunpack.c.l.b16 %v224
      %v260 = vunpack.c.h.b16 %v224
      %v261 = vunpack.c.l.b16 %v225
      %v262 = vunpack.c.h.b16 %v225
      %v263 = vunpack.c.l.b16 %v226
      %v264 = vunpack.c.h.b16 %v226
      %v265 = vunpack.c.l.b16 %v227
      %v266 = vunpack.c.h.b16 %v227
      %v267 = vunpack.c.l.b16 %v228
      %v268 = vunpack.c.h.b16 %v228
      %v269 = vunpack.c.l.b16 %v229
      %v270 = vunpack.c.h.b16 %v229
      %v271 = vunpack.c.l.b16 %v230
      %v272 = vunpack.c.h.b16 %v230
      %v273 = vunpack.c.l.b16 %v231
      %v274 = vunpack.c.h.b16 %v231
      %v275 = vunpack.c.l.b16 %v232
      %v276 = vunpack.c.h.b16 %v232
      %v277 = vunpack.c.l.b16 %v233
      %v278 = vunpack.c.h.b16 %v233
      %v279 = vunpack.c.l.b16 %v234
      %v280 = vunpack.c.h.b16 %v234
      %v281 = vunpack.c.l.b16 %v235
      %v282 = vunpack.c.h.b16 %v235
      %v283 = vunpack.c.l.b16 %v236
      %v284 = vunpack.c.h.b16 %v236
      %v285 = vpack.c.b16 %v255, %v253
      %v286 = vpack.c.b16 %v256, %v254
      %v287 = vpack.c.b16 %v259, %v257
      %v288 = vpack.c.b16 %v260, %v258
      %v289 = vpack.c.b16 %v263, %v261
      %v290 = vpack.c.b16 %v264, %v262
      %v291 = vpack.c.b16 %v267, %v265
      %v292 = vpack.c.b16 %v268, %v266
      %v293 = vpack.c.b16 %v271, %v269
      %v294 = vpack.c.b16 %v272, %v270
      %v295 = vpack.c.b16 %v275, %v273
      %v296 = vpack.c.b16 %v276, %v274
      %v297 = vpack.c.b16 %v279, %v277
      %v298 = vpack.c.b16 %v280, %v278
      %v299 = vpack.c.b16 %v283, %v281
      %v300 = vpack.c.b16 %v284, %v282
      %317 = vmatprep.subr.bf16.mxu0 %v300
      %318 = vmatpush1.bf16.msra.mxu0 %v299
      %319 = vmatprep.subr.bf16.mxu0 %v298
      %320 = vmatpush1.bf16.msra.mxu0 %v297
      %321 = vmatprep.subr.bf16.mxu0 %v296
      %322 = vmatpush1.bf16.msra.mxu0 %v295
      %323 = vmatprep.subr.bf16.mxu0 %v294
      %324 = vmatpush1.bf16.msra.mxu0 %v293
      %325 = vmatprep.subr.bf16.mxu0 %v292
      %326 = vmatpush1.bf16.msra.mxu0 %v291
      %327 = vmatprep.subr.bf16.mxu0 %v290
      %328 = vmatpush1.bf16.msra.mxu0 %v289
      %329 = vmatprep.subr.bf16.mxu0 %v288
      %330 = vmatpush1.bf16.msra.mxu0 %v287
      %331 = vmatprep.subr.bf16.mxu0 %v286
      %332 = vmatpush1.bf16.msra.mxu0 %v285
      %333 = vmatprep.subr.bf16.mxu0 0
      %334 = vmatpush2.bf16.msra.mxu0 0
      %335 = vmatprep.subr.bf16.mxu0 0
      %336 = vmatpush2.bf16.msra.mxu0 0
      %337 = vmatprep.subr.bf16.mxu0 0
      %338 = vmatpush2.bf16.msra.mxu0 0
      %339 = vmatprep.subr.bf16.mxu0 0
      %340 = vmatpush2.bf16.msra.mxu0 0
      %341 = vmatprep.subr.bf16.mxu0 0
      %342 = vmatpush2.bf16.msra.mxu0 0
      %343 = vmatprep.subr.bf16.mxu0 0
      %344 = vmatpush2.bf16.msra.mxu0 0
      %345 = vmatprep.subr.bf16.mxu0 0
      %346 = vmatpush2.bf16.msra.mxu0 0
      %347 = vmatprep.subr.bf16.mxu0 0
      %348 = vmatpush2.bf16.msra.mxu0 0
      %349 = vmatprep.mubr.bf16.mxu0 0
      %350 = vmatmul.mubr.bf16.gmra.mxu0 %v220
      %v351 = vpop.f32.mrf.mxu0
      %v352 = vadd.f32 0.0, %v351
      %v353 = vpop.f32.mrf.mxu0
      %v354 = vadd.f32 0.0, %v353
      %v355 = vpop.f32.mrf.mxu0
      %v356 = vpop.f32.mrf.mxu0
      %357 = vdwg.mxu0
      %v358 = vadd.f32 %v218, %v352
      %v359 = vadd.f32 %v219, %v354
      %360 = vst [vmem:[#allocation2] sm:$0xff] %v358
      %361 = vst [vmem:[#allocation2 + $0x8] sm:$0xff] %v359
      %p362 = scmp.eq.s32.totalorder %s19, 8
      // Predicated region
      $region37: #{resnet_server_forward.17} parent=31 // pred_check
        %p363 = pneg %p362
      $region38: #{resnet_server_forward.17} parent=31 // pred_check_branch
        %365 = sbr.rel (%p363) target = $region40
      $region39: #{resnet_server_forward.17} parent=31 // pred_region
        %v366 = vld [vmem:[#allocation2] sm:$0xff]
        %v367 = vld [vmem:[#allocation2 + $0x8] sm:$0xff]
        %v368 = vld [vmem:[%s2] sm:$0x3]
        %v370 = vlaneseq
        %v371 = vshrl.u32 %v370, 7
        %v372 = vsub.s32 0, %v371
        %v373 = vrot.slane %v368, %v372
        %v374 = vlaneseq
        %v375 = vshrl.u32 %v374, 7
        %v376 = vsub.s32 1, %v375
        %v377 = vrot.slane %v368, %v376
        %v380 = vadd.f32 %v366, %v373
        %v381 = vadd.f32 %v367, %v377
        %v382 = vmax.f32 %v380, 0.0
        %v383 = vmax.f32 %v381, 0.0
        %v384 = vpack.c.bf16 %v382, %v382
        %v385 = vpack.c.bf16 %v383, %v383
        %v388 = vunpack.c.l.b16 %v384
        %v389 = vunpack.c.l.b16 %v385
        %v390 = vpack.c.b16 %v389, %v388
        %392 = vst [vmem:[%s210] sm:$0xff] %v390
      $region40: #{resnet_server_forward.17} parent=31 // pred_fallthru
        _
      %p393 = scmp.lt.s32.totalorder %s18, 0
      %s394 = scalar_select %p393, %s18, 0
      %s395 = smul.addr %s394, 2
      %s396 = smul.addr %s395, 4
      %s397 = scalar_lea.vmem %s3, %s396
      // Predicated region
      $region41: #{resnet_server_forward.17} parent=31 // pred_check
        %p398 = pneg %p119
      $region42: #{resnet_server_forward.17} parent=31 // pred_check_branch
        %400 = sbr.rel (%p398) target = $region44
      $region43: #{resnet_server_forward.17} parent=31 // pred_region
        _
      $region44: #{resnet_server_forward.17} parent=31 // pred_fallthru
        _
      // Predicated region
      $region45: #{resnet_server_forward.17} parent=31 // pred_check
        %p401 = pneg %p119
      $region46: #{resnet_server_forward.17} parent=31 // pred_check_branch
        %403 = sbr.rel (%p401) target = $region48
      $region47: #{resnet_server_forward.17} parent=31 // pred_region
        %p404 = scmp.lt.s32.totalorder %s18, 0
        %s405 = scalar_select %p404, %s18, 0
        %s406 = smul.addr %s405, 2
        %s407 = smul.addr %s406, 4
        %s408 = scalar_lea.vmem %s3, %s407
      $region48: #{resnet_server_forward.17} parent=31 // pred_fallthru
        _
    $region32: #{resnet_server_forward.17} parent=5 // pred_fallthru
      _
    %p409 = scmp.le.s32.totalorder 2, %s9
    // Predicated region
    $region49: #{resnet_server_forward.17} parent=5 // pred_check
      %p410 = pneg %p409
    $region50: #{resnet_server_forward.17} parent=5 // pred_check_branch
      %412 = sbr.rel (%p410) target = $region52
    $region51: #{resnet_server_forward.17} parent=5 // pred_region
      %s413 = ssub.s32 %s9, 2
    $region52: #{resnet_server_forward.17} parent=5 // pred_fallthru
      _
  $region6: #{resnet_server_forward.17} parent=0 // loop_footer
    %s13 = sadd.s32 1, %s9
  $region7: #{resnet_server_forward.17} parent=0 // loop_footer_branch
    %8 = sbr.rel target = $region3
  $region8: #{resnet_server_forward.17} parent=0 // loop_exit
    _

// kernel: resnet_server_forward.18
$region0: #{resnet_server_forward.18}
  #allocation0 [shape = 'u32[]', space=smem, size = 0x4, offset = 0x4, fixed_abs, tag = 'smem constant byte address 0x4 - core index']
  #allocation1 [shape = 'u32[144,128]{1,0:T(1,128)}', space=vmem, size = 0x12000, scoped, tag = 'internal scratch']
  #allocation2 [shape = 'f32[8,256]{1,0:T(8,128)}', space=vmem, size = 0x2000, scoped, tag = 'scratch operand']
  %s0 = inlined_call_operand.vmem [shape: bf16[1,8,128], index: 0, kind: input, shape index: {}]
  %s1 = inlined_call_operand.vmem [shape: bf16[1,128,256], index: 1, kind: input, shape index: {}]
  %s2 = inlined_call_operand.vmem [shape: f32[1,256], index: 2, kind: input, shape index: {}]
  %s3 = inlined_call_operand.vmem [shape: bf16[8,256], index: 3, kind: output, shape index: {}]
  %s4 = sld [smem:[#allocation0]]
  $region30: #{resnet_server_forward.18} parent=0
    _
  %s6 = ssub.s32 1, %s4
  %s7 = scalar_select 0, %s6, %s4
  // Predicated region
  $region2: #{resnet_server_forward.18} parent=0 // pred_check
    _
  $region3: #{resnet_server_forward.18} parent=0 // pred_check_branch
    %9 = sbr.rel (0) target = $region5
  $region4: #{resnet_server_forward.18} parent=0 // pred_region
    _
  $region5: #{resnet_server_forward.18} parent=0 // pred_fallthru
    _
  // Predicated region
  $region6: #{resnet_server_forward.18} parent=0 // pred_check
    _
  $region7: #{resnet_server_forward.18} parent=0 // pred_check_branch
    %11 = sbr.rel (0) target = $region9
  $region8: #{resnet_server_forward.18} parent=0 // pred_region
    _
  $region9: #{resnet_server_forward.18} parent=0 // pred_fallthru
    _
  // Predicated region
  $region10: #{resnet_server_forward.18} parent=0 // pred_check
    _
  $region11: #{resnet_server_forward.18} parent=0 // pred_check_branch
    %13 = sbr.rel (0) target = $region13
  $region12: #{resnet_server_forward.18} parent=0 // pred_region
    _
  $region13: #{resnet_server_forward.18} parent=0 // pred_fallthru
    _
  %p15 = scmp.eq.s32.totalorder 0, 0
  // Predicated region
  $region14: #{resnet_server_forward.18} parent=0 // pred_check
    %p16 = pneg %p15
  $region15: #{resnet_server_forward.18} parent=0 // pred_check_branch
    %18 = sbr.rel (%p16) target = $region17
  $region16: #{resnet_server_forward.18} parent=0 // pred_region
    %19 = vst [vmem:[#allocation2] sm:$0xff] 0.0
    %20 = vst [vmem:[#allocation2 + $0x8] sm:$0xff] 0.0
  $region17: #{resnet_server_forward.18} parent=0 // pred_fallthru
    _
  %v21 = vld [vmem:[#allocation2] sm:$0xff]
  %v22 = vld [vmem:[#allocation2 + $0x8] sm:$0xff]
  %v23 = vld [vmem:[%s0] sm:$0xf]
  %v24 = vld [vmem:[%s1] sm:$0xff]
  %v25 = vld [vmem:[%s1 + $0x8] sm:$0xff]
  %v26 = vld [vmem:[%s1 + $0x10] sm:$0xff]
  %v27 = vld [vmem:[%s1 + $0x18] sm:$0xff]
  %v28 = vld [vmem:[%s1 + $0x20] sm:$0xff]
  %v29 = vld [vmem:[%s1 + $0x28] sm:$0xff]
  %v30 = vld [vmem:[%s1 + $0x30] sm:$0xff]
  %v31 = vld [vmem:[%s1 + $0x38] sm:$0xff]
  %v32 = vld [vmem:[%s1 + $0x40] sm:$0xff]
  %v33 = vld [vmem:[%s1 + $0x48] sm:$0xff]
  %v34 = vld [vmem:[%s1 + $0x50] sm:$0xff]
  %v35 = vld [vmem:[%s1 + $0x58] sm:$0xff]
  %v36 = vld [vmem:[%s1 + $0x60] sm:$0xff]
  %v37 = vld [vmem:[%s1 + $0x68] sm:$0xff]
  %v38 = vld [vmem:[%s1 + $0x70] sm:$0xff]
  %v39 = vld [vmem:[%s1 + $0x78] sm:$0xff]
  %v56 = vunpack.c.l.b16 %v24
  %v57 = vunpack.c.h.b16 %v24
  %v58 = vunpack.c.l.b16 %v25
  %v59 = vunpack.c.h.b16 %v25
  %v60 = vunpack.c.l.b16 %v26
  %v61 = vunpack.c.h.b16 %v26
  %v62 = vunpack.c.l.b16 %v27
  %v63 = vunpack.c.h.b16 %v27
  %v64 = vunpack.c.l.b16 %v28
  %v65 = vunpack.c.h.b16 %v28
  %v66 = vunpack.c.l.b16 %v29
  %v67 = vunpack.c.h.b16 %v29
  %v68 = vunpack.c.l.b16 %v30
  %v69 = vunpack.c.h.b16 %v30
  %v70 = vunpack.c.l.b16 %v31
  %v71 = vunpack.c.h.b16 %v31
  %v72 = vunpack.c.l.b16 %v32
  %v73 = vunpack.c.h.b16 %v32
  %v74 = vunpack.c.l.b16 %v33
  %v75 = vunpack.c.h.b16 %v33
  %v76 = vunpack.c.l.b16 %v34
  %v77 = vunpack.c.h.b16 %v34
  %v78 = vunpack.c.l.b16 %v35
  %v79 = vunpack.c.h.b16 %v35
  %v80 = vunpack.c.l.b16 %v36
  %v81 = vunpack.c.h.b16 %v36
  %v82 = vunpack.c.l.b16 %v37
  %v83 = vunpack.c.h.b16 %v37
  %v84 = vunpack.c.l.b16 %v38
  %v85 = vunpack.c.h.b16 %v38
  %v86 = vunpack.c.l.b16 %v39
  %v87 = vunpack.c.h.b16 %v39
  %v88 = vpack.c.b16 %v58, %v56
  %v89 = vpack.c.b16 %v59, %v57
  %v90 = vpack.c.b16 %v62, %v60
  %v91 = vpack.c.b16 %v63, %v61
  %v92 = vpack.c.b16 %v66, %v64
  %v93 = vpack.c.b16 %v67, %v65
  %v94 = vpack.c.b16 %v70, %v68
  %v95 = vpack.c.b16 %v71, %v69
  %v96 = vpack.c.b16 %v74, %v72
  %v97 = vpack.c.b16 %v75, %v73
  %v98 = vpack.c.b16 %v78, %v76
  %v99 = vpack.c.b16 %v79, %v77
  %v100 = vpack.c.b16 %v82, %v80
  %v101 = vpack.c.b16 %v83, %v81
  %v102 = vpack.c.b16 %v86, %v84
  %v103 = vpack.c.b16 %v87, %v85
  %120 = vmatprep.subr.bf16.mxu0 %v103
  %121 = vmatpush1.bf16.msra.mxu0 %v102
  %122 = vmatprep.subr.bf16.mxu0 %v101
  %123 = vmatpush1.bf16.msra.mxu0 %v100
  %124 = vmatprep.subr.bf16.mxu0 %v99
  %125 = vmatpush1.bf16.msra.mxu0 %v98
  %126 = vmatprep.subr.bf16.mxu0 %v97
  %127 = vmatpush1.bf16.msra.mxu0 %v96
  %128 = vmatprep.subr.bf16.mxu0 %v95
  %129 = vmatpush1.bf16.msra.mxu0 %v94
  %130 = vmatprep.subr.bf16.mxu0 %v93
  %131 = vmatpush1.bf16.msra.mxu0 %v92
  %132 = vmatprep.subr.bf16.mxu0 %v91
  %133 = vmatpush1.bf16.msra.mxu0 %v90
  %134 = vmatprep.subr.bf16.mxu0 %v89
  %135 = vmatpush1.bf16.msra.mxu0 %v88
  %136 = vmatprep.subr.bf16.mxu0 0
  %137 = vmatpush2.bf16.msra.mxu0 0
  %138 = vmatprep.subr.bf16.mxu0 0
  %139 = vmatpush2.bf16.msra.mxu0 0
  %140 = vmatprep.subr.bf16.mxu0 0
  %141 = vmatpush2.bf16.msra.mxu0 0
  %142 = vmatprep.subr.bf16.mxu0 0
  %143 = vmatpush2.bf16.msra.mxu0 0
  %144 = vmatprep.subr.bf16.mxu0 0
  %145 = vmatpush2.bf16.msra.mxu0 0
  %146 = vmatprep.subr.bf16.mxu0 0
  %147 = vmatpush2.bf16.msra.mxu0 0
  %148 = vmatprep.subr.bf16.mxu0 0
  %149 = vmatpush2.bf16.msra.mxu0 0
  %150 = vmatprep.subr.bf16.mxu0 0
  %151 = vmatpush2.bf16.msra.mxu0 0
  %152 = vmatprep.mubr.bf16.mxu0 0
  %153 = vmatmul.mubr.bf16.gmra.mxu0 %v23
  %v154 = vpop.f32.mrf.mxu0
  %v155 = vadd.f32 0.0, %v154
  %v156 = vpop.f32.mrf.mxu0
  %v157 = vadd.f32 0.0, %v156
  %v158 = vpop.f32.mrf.mxu0
  %v159 = vpop.f32.mrf.mxu0
  %160 = vdwg.mxu0
  %v161 = vadd.f32 %v21, %v155
  %v162 = vadd.f32 %v22, %v157
  %163 = vst [vmem:[#allocation2] sm:$0xff] %v161
  %164 = vst [vmem:[#allocation2 + $0x8] sm:$0xff] %v162
  // Predicated region
  $region18: #{resnet_server_forward.18} parent=0 // pred_check
    %p165 = pneg %p15
  $region19: #{resnet_server_forward.18} parent=0 // pred_check_branch
    %167 = sbr.rel (%p165) target = $region21
  $region20: #{resnet_server_forward.18} parent=0 // pred_region
    %v168 = vld [vmem:[#allocation2] sm:$0xff]
    %v169 = vld [vmem:[#allocation2 + $0x8] sm:$0xff]
    %v170 = vld [vmem:[%s2] sm:$0x3]
    %v172 = vlaneseq
    %v173 = vshrl.u32 %v172, 7
    %v174 = vsub.s32 0, %v173
    %v175 = vrot.slane %v170, %v174
    %v176 = vlaneseq
    %v177 = vshrl.u32 %v176, 7
    %v178 = vsub.s32 1, %v177
    %v179 = vrot.slane %v170, %v178
    %v182 = vadd.f32 %v168, %v175
    %v183 = vadd.f32 %v169, %v179
    %v184 = vpack.c.bf16 %v182, %v182
    %v185 = vpack.c.bf16 %v183, %v183
    %v188 = vunpack.c.l.b16 %v184
    %v189 = vunpack.c.l.b16 %v185
    %v190 = vpack.c.b16 %v189, %v188
    %192 = vst [vmem:[%s3] sm:$0xff] %v190
  $region21: #{resnet_server_forward.18} parent=0 // pred_fallthru
    _
  // Predicated region
  $region22: #{resnet_server_forward.18} parent=0 // pred_check
    _
  $region23: #{resnet_server_forward.18} parent=0 // pred_check_branch
    %194 = sbr.rel (0) target = $region25
  $region24: #{resnet_server_forward.18} parent=0 // pred_region
    _
  $region25: #{resnet_server_forward.18} parent=0 // pred_fallthru
    _
  // Predicated region
  $region26: #{resnet_server_forward.18} parent=0 // pred_check
    _
  $region27: #{resnet_server_forward.18} parent=0 // pred_check_branch
    %196 = sbr.rel (0) target = $region29
  $region28: #{resnet_server_forward.18} parent=0 // pred_region
    _
  $region29: #{resnet_server_forward.18} parent=0 // pred_fallthru
    _

// kernel: resnet_server_forward.19
$region0: #{resnet_server_forward.19}
  #allocation0 [shape = 'u32[]', space=smem, size = 0x4, offset = 0x4, fixed_abs, tag = 'smem constant byte address 0x4 - core index']
  #allocation1 [shape = 'u32[144,128]{1,0:T(1,128)}', space=vmem, size = 0x12000, scoped, tag = 'internal scratch']
  #allocation2 [shape = 'f32[8,256]{1,0:T(8,128)}', space=vmem, size = 0x2000, scoped, tag = 'scratch operand']
  %s0 = inlined_call_operand.vmem [shape: bf16[9,8,256], index: 0, kind: input, shape index: {}]
  %s1 = inlined_call_operand.vmem [shape: bf16[9,256,256], index: 1, kind: input, shape index: {}]
  %s2 = inlined_call_operand.vmem [shape: f32[1,256], index: 2, kind: input, shape index: {}]
  %s3 = inlined_call_operand.vmem [shape: bf16[8,256], index: 3, kind: input, shape index: {}]
  %s4 = inlined_call_operand.vmem [shape: bf16[8,256], index: 4, kind: output, shape index: {}]
  %s5 = sld [smem:[#allocation0]]
  $region57: #{resnet_server_forward.19} parent=0
    _
  %s7 = ssub.s32 1, %s5
  %s8 = scalar_select 0, %s7, %s5
  loop: start=0, step=1, limit=11
  $region2: #{resnet_server_forward.19} parent=0 // loop_pre_header
    _
  $region3: #{resnet_server_forward.19} parent=0 // loop_header
    %s10 = sphi 0, %s14
    %p11 = scmp.ge.s32.totalorder %s10, 11
    %s17 = sphi 0, %s29
    %s18 = sphi 0, %s25
    %s19 = sphi 0, %s17
    %s20 = sphi 0, %s18
    %s21 = sphi 0, %s19
    %s22 = sphi 0, %s20
    %s34 = sphi 0, %s36
    %s37 = sphi 0, %s34
    %s38 = sphi 0, %s37
    %s54 = sphi 0, %s38
    %s60 = sphi 0, %s62
    %s63 = sphi 0, %s60
    %s64 = sphi 0, %s63
    %s80 = sphi 0, %s64
    %s84 = sphi 0, %s84
    %s86 = sphi 0, %s84
    %s87 = sphi 0, %s86
    %s101 = sphi 0, %s87
    %s107 = sphi 0, %s109
    %s110 = sphi 0, %s107
    %s111 = sphi 0, %s110
    %s127 = sphi 0, %s111
    %s133 = sphi 0, %s135
    %s136 = sphi 0, %s133
    %s137 = sphi 0, %s136
    %s153 = sphi 0, %s137
  $region4: #{resnet_server_forward.19} parent=0 // loop_header_branch
    %13 = sbr.rel (%p11) target = $region8
  $region5: #{resnet_server_forward.19} parent=0 // loop_body
    %s15 = ssub.s32 %s10, 1
    %s16 = ssub.s32 %s10, 2
    %s23 = sadd.s32 1, %s18
    %p24 = scmp.ge.s32.totalorder %s23, 9
    %s25 = scalar_select %p24, 0, %s23
    %s26 = sadd.s32 1, %s17
    %s27 = scalar_select %p24, %s26, %s17
    %p28 = scmp.ge.s32.totalorder %s27, 1
    %s29 = scalar_select %p28, 0, %s27
    %s30 = ssub.s32 %s18, %s25
    %s31 = ssub.s32 %s17, %s29
    %s32 = sor.u32 %s30, %s31
    %p33 = scmp.eq.s32.totalorder %s32, 0
    %s35 = sadd.s32 %s34, 1
    %s36 = scalar_select %p33, %s34, %s35
    %p39 = pneg %p33
    %p40 = scmp.eq.s32.totalorder %s10, 8
    %p41 = por %p39, %p40
    %p42 = scmp.ne.s32.totalorder %s34, %s37
    %p43 = scmp.eq.s32.totalorder %s10, 0
    %p44 = por %p42, %p43
    %p45 = scmp.ne.s32.totalorder %s34, %s37
    %p46 = scmp.eq.s32.totalorder %s15, 8
    %p47 = por %p45, %p46
    %p48 = scmp.ne.s32.totalorder %s37, %s38
    %p49 = scmp.eq.s32.totalorder %s15, 0
    %p50 = por %p48, %p49
    %p51 = scmp.ne.s32.totalorder %s37, %s38
    %p52 = scmp.eq.s32.totalorder %s16, 8
    %p53 = por %p51, %p52
    %p55 = scmp.ne.s32.totalorder %s38, %s54
    %p56 = scmp.eq.s32.totalorder %s16, 0
    %p57 = por %p55, %p56
    %s58 = ssub.s32 %s18, %s25
    %p59 = scmp.eq.s32.totalorder %s58, 0
    %s61 = sadd.s32 %s60, 1
    %s62 = scalar_select %p59, %s60, %s61
    %p65 = pneg %p59
    %p66 = scmp.eq.s32.totalorder %s10, 8
    %p67 = por %p65, %p66
    %p68 = scmp.ne.s32.totalorder %s60, %s63
    %p69 = scmp.eq.s32.totalorder %s10, 0
    %p70 = por %p68, %p69
    %p71 = scmp.ne.s32.totalorder %s60, %s63
    %p72 = scmp.eq.s32.totalorder %s15, 8
    %p73 = por %p71, %p72
    %p74 = scmp.ne.s32.totalorder %s63, %s64
    %p75 = scmp.eq.s32.totalorder %s15, 0
    %p76 = por %p74, %p75
    %p77 = scmp.ne.s32.totalorder %s63, %s64
    %p78 = scmp.eq.s32.totalorder %s16, 8
    %p79 = por %p77, %p78
    %p81 = scmp.ne.s32.totalorder %s64, %s80
    %p82 = scmp.eq.s32.totalorder %s16, 0
    %p83 = por %p81, %p82
    %s85 = sadd.s32 %s84, 1
    %p88 = scmp.eq.s32.totalorder %s10, 8
    %p89 = scmp.ne.s32.totalorder %s84, %s86
    %p90 = scmp.eq.s32.totalorder %s10, 0
    %p91 = por %p89, %p90
    %p92 = scmp.ne.s32.totalorder %s84, %s86
    %p93 = scmp.eq.s32.totalorder %s15, 8
    %p94 = por %p92, %p93
    %p95 = scmp.ne.s32.totalorder %s86, %s87
    %p96 = scmp.eq.s32.totalorder %s15, 0
    %p97 = por %p95, %p96
    %p98 = scmp.ne.s32.totalorder %s86, %s87
    %p99 = scmp.eq.s32.totalorder %s16, 8
    %p100 = por %p98, %p99
    %p102 = scmp.ne.s32.totalorder %s87, %s101
    %p103 = scmp.eq.s32.totalorder %s16, 0
    %p104 = por %p102, %p103
    %s105 = ssub.s32 %s17, %s29
    %p106 = scmp.eq.s32.totalorder %s105, 0
    %s108 = sadd.s32 %s107, 1
    %s109 = scalar_select %p106, %s107, %s108
    %p112 = pneg %p106
    %p113 = scmp.eq.s32.totalorder %s10, 8
    %p114 = por %p112, %p113
    %p115 = scmp.ne.s32.totalorder %s107, %s110
    %p116 = scmp.eq.s32.totalorder %s10, 0
    %p117 = por %p115, %p116
    %p118 = scmp.ne.s32.totalorder %s107, %s110
    %p119 = scmp.eq.s32.totalorder %s15, 8
    %p120 = por %p118, %p119
    %p121 = scmp.ne.s32.totalorder %s110, %s111
    %p122 = scmp.eq.s32.totalorder %s15, 0
    %p123 = por %p121, %p122
    %p124 = scmp.ne.s32.totalorder %s110, %s111
    %p125 = scmp.eq.s32.totalorder %s16, 8
    %p126 = por %p124, %p125
    %p128 = scmp.ne.s32.totalorder %s111, %s127
    %p129 = scmp.eq.s32.totalorder %s16, 0
    %p130 = por %p128, %p129
    %s131 = ssub.s32 %s17, %s29
    %p132 = scmp.eq.s32.totalorder %s131, 0
    %s134 = sadd.s32 %s133, 1
    %s135 = scalar_select %p132, %s133, %s134
    %p138 = pneg %p132
    %p139 = scmp.eq.s32.totalorder %s10, 8
    %p140 = por %p138, %p139
    %p141 = scmp.ne.s32.totalorder %s133, %s136
    %p142 = scmp.eq.s32.totalorder %s10, 0
    %p143 = por %p141, %p142
    %p144 = scmp.ne.s32.totalorder %s133, %s136
    %p145 = scmp.eq.s32.totalorder %s15, 8
    %p146 = por %p144, %p145
    %p147 = scmp.ne.s32.totalorder %s136, %s137
    %p148 = scmp.eq.s32.totalorder %s15, 0
    %p149 = por %p147, %p148
    %p150 = scmp.ne.s32.totalorder %s136, %s137
    %p151 = scmp.eq.s32.totalorder %s16, 8
    %p152 = por %p150, %p151
    %p154 = scmp.ne.s32.totalorder %s137, %s153
    %p155 = scmp.eq.s32.totalorder %s16, 0
    %p156 = por %p154, %p155
    %p157 = scmp.le.s32.totalorder 1, %s10
    %p158 = scmp.lt.s32.totalorder %s10, 10
    %p159 = pnand %p157, %p158
    %p160 = pneg %p159
    // Predicated region
    $region9: #{resnet_server_forward.19} parent=5 // pred_check
      _
    $region10: #{resnet_server_forward.19} parent=5 // pred_check_branch
      %162 = sbr.rel (%p159) target = $region12
    $region11: #{resnet_server_forward.19} parent=5 // pred_region
      %s163 = ssub.s32 %s10, 1
      // Predicated region
      $region13: #{resnet_server_forward.19} parent=11 // pred_check
        %p164 = pneg %p97
      $region14: #{resnet_server_forward.19} parent=11 // pred_check_branch
        %166 = sbr.rel (%p164) target = $region16
      $region15: #{resnet_server_forward.19} parent=11 // pred_region
        _
      $region16: #{resnet_server_forward.19} parent=11 // pred_fallthru
        _
      // Predicated region
      $region17: #{resnet_server_forward.19} parent=11 // pred_check
        %p167 = pneg %p123
      $region18: #{resnet_server_forward.19} parent=11 // pred_check_branch
        %169 = sbr.rel (%p167) target = $region20
      $region19: #{resnet_server_forward.19} parent=11 // pred_region
        %p170 = scmp.lt.s32.totalorder %s19, 0
        %s171 = scalar_select %p170, %s19, 0
        %s172 = smul.addr %s171, 2
        %s173 = smul.addr %s172, 4
        %s174 = scalar_lea.vmem %s3, %s173
      $region20: #{resnet_server_forward.19} parent=11 // pred_fallthru
        _
    $region12: #{resnet_server_forward.19} parent=5 // pred_fallthru
      _
    %p175 = scmp.lt.s32.totalorder %s10, 9
    // Predicated region
    $region21: #{resnet_server_forward.19} parent=5 // pred_check
      %p176 = pneg %p175
    $region22: #{resnet_server_forward.19} parent=5 // pred_check_branch
      %178 = sbr.rel (%p176) target = $region24
    $region23: #{resnet_server_forward.19} parent=5 // pred_region
      // Predicated region
      $region25: #{resnet_server_forward.19} parent=23 // pred_check
        %p179 = pneg %p44
      $region26: #{resnet_server_forward.19} parent=23 // pred_check_branch
        %181 = sbr.rel (%p179) target = $region28
      $region27: #{resnet_server_forward.19} parent=23 // pred_region
        %p182 = scmp.lt.s32.totalorder %s18, 8
        %s183 = scalar_select %p182, %s18, 8
        %p184 = scmp.lt.s32.totalorder %s17, 0
        %s185 = scalar_select %p184, %s17, 0
        %s186 = smul.addr %s185, 2
        %s187 = smul.addr %s183, 2
        %s188 = sadd.s32 %s186, %s187
        %s189 = smul.addr %s188, 4
        %s190 = scalar_lea.vmem %s0, %s189
      $region28: #{resnet_server_forward.19} parent=23 // pred_fallthru
        _
      // Predicated region
      $region29: #{resnet_server_forward.19} parent=23 // pred_check
        %p191 = pneg %p70
      $region30: #{resnet_server_forward.19} parent=23 // pred_check_branch
        %193 = sbr.rel (%p191) target = $region32
      $region31: #{resnet_server_forward.19} parent=23 // pred_region
        %p194 = scmp.lt.s32.totalorder %s18, 8
        %s195 = scalar_select %p194, %s18, 8
        %s196 = smul.addr %s195, 64
        %s197 = smul.addr %s196, 4
        %s198 = scalar_lea.vmem %s1, %s197
      $region32: #{resnet_server_forward.19} parent=23 // pred_fallthru
        _
    $region24: #{resnet_server_forward.19} parent=5 // pred_fallthru
      _
    %p199 = scmp.le.s32.totalorder 1, %s10
    %p200 = scmp.lt.s32.totalorder %s10, 10
    %p201 = pnand %p199, %p200
    %p202 = pneg %p201
    // Predicated region
    $region33: #{resnet_server_forward.19} parent=5 // pred_check
      _
    $region34: #{resnet_server_forward.19} parent=5 // pred_check_branch
      %204 = sbr.rel (%p201) target = $region36
    $region35: #{resnet_server_forward.19} parent=5 // pred_region
      %s205 = ssub.s32 %s10, 1
      %p206 = scmp.lt.s32.totalorder %s20, 8
      %s207 = scalar_select %p206, %s20, 8
      %p208 = scmp.lt.s32.totalorder %s19, 0
      %s209 = scalar_select %p208, %s19, 0
      %s210 = smul.addr %s209, 2
      %s211 = smul.addr %s207, 2
      %s212 = sadd.s32 %s210, %s211
      %s213 = smul.addr %s212, 4
      %s214 = scalar_lea.vmem %s0, %s213
      %p215 = pneg %p50
      %p216 = pneg %p47
      %p217 = scmp.lt.s32.totalorder %s20, 8
      %s218 = scalar_select %p217, %s20, 8
      %s219 = smul.addr %s218, 64
      %s220 = smul.addr %s219, 4
      %s221 = scalar_lea.vmem %s1, %s220
      %p222 = pneg %p76
      %p223 = pneg %p73
      %p224 = pneg %p97
      %p225 = pneg %p94
      %p226 = scmp.lt.s32.totalorder %s19, 0
      %s227 = scalar_select %p226, %s19, 0
      %s228 = smul.addr %s227, 2
      %s229 = smul.addr %s228, 4
      %s230 = scalar_lea.vmem %s3, %s229
      %p231 = pneg %p123
      %p232 = pneg %p120
      %p233 = pneg %p149
      %p234 = pneg %p146
      %p235 = scmp.lt.s32.totalorder %s19, 0
      %s236 = scalar_select %p235, %s19, 0
      %s237 = smul.addr %s236, 2
      %s238 = smul.addr %s237, 4
      %s239 = scalar_lea.vmem %s4, %s238
      %p240 = scmp.lt.s32.totalorder %s20, 8
      %s241 = scalar_select %p240, %s20, 8
      %p242 = scmp.lt.s32.totalorder %s19, 0
      %s243 = scalar_select %p242, %s19, 0
      %s244 = smul.addr %s243, 2
      %s245 = smul.addr %s241, 2
      %s246 = sadd.s32 %s244, %s245
      %s247 = smul.addr %s246, 4
      %s248 = scalar_lea.vmem %s0, %s247
      %p249 = scmp.lt.s32.totalorder %s20, 8
      %s250 = scalar_select %p249, %s20, 8
      %s251 = smul.addr %s250, 64
      %s252 = smul.addr %s251, 4
      %s253 = scalar_lea.vmem %s1, %s252
      %p254 = scmp.lt.s32.totalorder %s19, 0
      %s255 = scalar_select %p254, %s19, 0
      %s256 = smul.addr %s255, 2
      %s257 = smul.addr %s256, 4
      %s258 = scalar_lea.vmem %s3, %s257
      %p259 = scmp.lt.s32.totalorder %s19, 0
      %s260 = scalar_select %p259, %s19, 0
      %s261 = smul.addr %s260, 2
      %s262 = smul.addr %s261, 4
      %s263 = scalar_lea.vmem %s4, %s262
      %p264 = scmp.eq.s32.totalorder %s20, 0
      // Predicated region
      $region37: #{resnet_server_forward.19} parent=35 // pred_check
        %p265 = pneg %p264
      $region38: #{resnet_server_forward.19} parent=35 // pred_check_branch
        %267 = sbr.rel (%p265) target = $region40
      $region39: #{resnet_server_forward.19} parent=35 // pred_region
        %268 = vst [vmem:[#allocation2] sm:$0xff] 0.0
        %269 = vst [vmem:[#allocation2 + $0x8] sm:$0xff] 0.0
      $region40: #{resnet_server_forward.19} parent=35 // pred_fallthru
        _
      %v270 = vld [vmem:[#allocation2] sm:$0xff]
      %v271 = vld [vmem:[#allocation2 + $0x8] sm:$0xff]
      %v272 = vld [vmem:[%s248] sm:$0xff]
      %v273 = vld [vmem:[%s253] sm:$0xff]
      %v274 = vld [vmem:[%s253 + $0x8] sm:$0xff]
      %v275 = vld [vmem:[%s253 + $0x10] sm:$0xff]
      %v276 = vld [vmem:[%s253 + $0x18] sm:$0xff]
      %v277 = vld [vmem:[%s253 + $0x20] sm:$0xff]
      %v278 = vld [vmem:[%s253 + $0x28] sm:$0xff]
      %v279 = vld [vmem:[%s253 + $0x30] sm:$0xff]
      %v280 = vld [vmem:[%s253 + $0x38] sm:$0xff]
      %v281 = vld [vmem:[%s253 + $0x40] sm:$0xff]
      %v282 = vld [vmem:[%s253 + $0x48] sm:$0xff]
      %v283 = vld [vmem:[%s253 + $0x50] sm:$0xff]
      %v284 = vld [vmem:[%s253 + $0x58] sm:$0xff]
      %v285 = vld [vmem:[%s253 + $0x60] sm:$0xff]
      %v286 = vld [vmem:[%s253 + $0x68] sm:$0xff]
      %v287 = vld [vmem:[%s253 + $0x70] sm:$0xff]
      %v288 = vld [vmem:[%s253 + $0x78] sm:$0xff]
      %v289 = vld [vmem:[%s253 + $0x80] sm:$0xff]
      %v290 = vld [vmem:[%s253 + $0x88] sm:$0xff]
      %v291 = vld [vmem:[%s253 + $0x90] sm:$0xff]
      %v292 = vld [vmem:[%s253 + $0x98] sm:$0xff]
      %v293 = vld [vmem:[%s253 + $0xa0] sm:$0xff]
      %v294 = vld [vmem:[%s253 + $0xa8] sm:$0xff]
      %v295 = vld [vmem:[%s253 + $0xb0] sm:$0xff]
      %v296 = vld [vmem:[%s253 + $0xb8] sm:$0xff]
      %v297 = vld [vmem:[%s253 + $0xc0] sm:$0xff]
      %v298 = vld [vmem:[%s253 + $0xc8] sm:$0xff]
      %v299 = vld [vmem:[%s253 + $0xd0] sm:$0xff]
      %v300 = vld [vmem:[%s253 + $0xd8] sm:$0xff]
      %v301 = vld [vmem:[%s253 + $0xe0] sm:$0xff]
      %v302 = vld [vmem:[%s253 + $0xe8] sm:$0xff]
      %v303 = vld [vmem:[%s253 + $0xf0] sm:$0xff]
      %v304 = vld [vmem:[%s253 + $0xf8] sm:$0xff]
      %v306 = vunpack.c.l.b16 %v272
      %v307 = vunpack.c.h.b16 %v272
      %v308 = vpack.c.b16 %v306, %v306
      %v309 = vpack.c.b16 %v307, %v307
      %v344 = vunpack.c.l.b16 %v273
      %v345 = vunpack.c.h.b16 %v273
      %v346 = vunpack.c.l.b16 %v274
      %v347 = vunpack.c.h.b16 %v274
      %v348 = vunpack.c.l.b16 %v275
      %v349 = vunpack.c.h.b16 %v275
      %v350 = vunpack.c.l.b16 %v276
      %v351 = vunpack.c.h.b16 %v276
      %v352 = vunpack.c.l.b16 %v277
      %v353 = vunpack.c.h.b16 %v277
      %v354 = vunpack.c.l.b16 %v278
      %v355 = vunpack.c.h.b16 %v278
      %v356 = vunpack.c.l.b16 %v279
      %v357 = vunpack.c.h.b16 %v279
      %v358 = vunpack.c.l.b16 %v280
      %v359 = vunpack.c.h.b16 %v280
      %v360 = vunpack.c.l.b16 %v281
      %v361 = vunpack.c.h.b16 %v281
      %v362 = vunpack.c.l.b16 %v282
      %v363 = vunpack.c.h.b16 %v282
      %v364 = vunpack.c.l.b16 %v283
      %v365 = vunpack.c.h.b16 %v283
      %v366 = vunpack.c.l.b16 %v284
      %v367 = vunpack.c.h.b16 %v284
      %v368 = vunpack.c.l.b16 %v285
      %v369 = vunpack.c.h.b16 %v285
      %v370 = vunpack.c.l.b16 %v286
      %v371 = vunpack.c.h.b16 %v286
      %v372 = vunpack.c.l.b16 %v287
      %v373 = vunpack.c.h.b16 %v287
      %v374 = vunpack.c.l.b16 %v288
      %v375 = vunpack.c.h.b16 %v288
      %v376 = vunpack.c.l.b16 %v289
      %v377 = vunpack.c.h.b16 %v289
      %v378 = vunpack.c.l.b16 %v290
      %v379 = vunpack.c.h.b16 %v290
      %v380 = vunpack.c.l.b16 %v291
      %v381 = vunpack.c.h.b16 %v291
      %v382 = vunpack.c.l.b16 %v292
      %v383 = vunpack.c.h.b16 %v292
      %v384 = vunpack.c.l.b16 %v293
      %v385 = vunpack.c.h.b16 %v293
      %v386 = vunpack.c.l.b16 %v294
      %v387 = vunpack.c.h.b16 %v294
      %v388 = vunpack.c.l.b16 %v295
      %v389 = vunpack.c.h.b16 %v295
      %v390 = vunpack.c.l.b16 %v296
      %v391 = vunpack.c.h.b16 %v296
      %v392 = vunpack.c.l.b16 %v297
      %v393 = vunpack.c.h.b16 %v297
      %v394 = vunpack.c.l.b16 %v298
      %v395 = vunpack.c.h.b16 %v298
      %v396 = vunpack.c.l.b16 %v299
      %v397 = vunpack.c.h.b16 %v299
      %v398 = vunpack.c.l.b16 %v300
      %v399 = vunpack.c.h.b16 %v300
      %v400 = vunpack.c.l.b16 %v301
      %v401 = vunpack.c.h.b16 %v301
      %v402 = vunpack.c.l.b16 %v302
      %v403 = vunpack.c.h.b16 %v302
      %v404 = vunpack.c.l.b16 %v303
      %v405 = vunpack.c.h.b16 %v303
      %v406 = vunpack.c.l.b16 %v304
      %v407 = vunpack.c.h.b16 %v304
      %v408 = vpack.c.b16 %v346, %v344
      %v409 = vpack.c.b16 %v347, %v345
      %v410 = vpack.c.b16 %v350, %v348
      %v411 = vpack.c.b16 %v351, %v349
      %v412 = vpack.c.b16 %v354, %v352
      %v413 = vpack.c.b16 %v355, %v353
      %v414 = vpack.c.b16 %v358, %v356
      %v415 = vpack.c.b16 %v359, %v357
      %v416 = vpack.c.b16 %v362, %v360
      %v417 = vpack.c.b16 %v363, %v361
      %v418 = vpack.c.b16 %v366, %v364
      %v419 = vpack.c.b16 %v367, %v365
      %v420 = vpack.c.b16 %v370, %v368
      %v421 = vpack.c.b16 %v371, %v369
      %v422 = vpack.c.b16 %v374, %v372
      %v423 = vpack.c.b16 %v375, %v373
      %v424 = vpack.c.b16 %v378, %v376
      %v425 = vpack.c.b16 %v379, %v377
      %v426 = vpack.c.b16 %v382, %v380
      %v427 = vpack.c.b16 %v383, %v381
      %v428 = vpack.c.b16 %v386, %v384
      %v429 = vpack.c.b16 %v387, %v385
      %v430 = vpack.c.b16 %v390, %v388
      %v431 = vpack.c.b16 %v391, %v389
      %v432 = vpack.c.b16 %v394, %v392
      %v433 = vpack.c.b16 %v395, %v393
      %v434 = vpack.c.b16 %v398, %v396
      %v435 = vpack.c.b16 %v399, %v397
      %v436 = vpack.c.b16 %v402, %v400
      %v437 = vpack.c.b16 %v403, %v401
      %v438 = vpack.c.b16 %v406, %v404
      %v439 = vpack.c.b16 %v407, %v405
      %472 = vmatprep.subr.bf16.mxu0 %v423
      %473 = vmatpush1.bf16.msra.mxu0 %v422
      %474 = vmatprep.subr.bf16.mxu0 %v421
      %475 = vmatpush1.bf16.msra.mxu0 %v420
      %476 = vmatprep.subr.bf16.mxu0 %v419
      %477 = vmatpush1.bf16.msra.mxu0 %v418
      %478 = vmatprep.subr.bf16.mxu0 %v417
      %479 = vmatpush1.bf16.msra.mxu0 %v416
      %480 = vmatprep.subr.bf16.mxu0 %v415
      %481 = vmatpush1.bf16.msra.mxu0 %v414
      %482 = vmatprep.subr.bf16.mxu0 %v413
      %483 = vmatpush1.bf16.msra.mxu0 %v412
      %484 = vmatprep.subr.bf16.mxu0 %v411
      %485 = vmatpush1.bf16.msra.mxu0 %v410
      %486 = vmatprep.subr.bf16.mxu0 %v409
      %487 = vmatpush1.bf16.msra.mxu0 %v408
      %488 = vmatprep.subr.bf16.mxu0 %v439
      %489 = vmatpush2.bf16.msra.mxu0 %v438
      %490 = vmatprep.subr.bf16.mxu0 %v437
      %491 = vmatpush2.bf16.msra.mxu0 %v436
      %492 = vmatprep.subr.bf16.mxu0 %v435
      %493 = vmatpush2.bf16.msra.mxu0 %v434
      %494 = vmatprep.subr.bf16.mxu0 %v433
      %495 = vmatpush2.bf16.msra.mxu0 %v432
      %496 = vmatprep.subr.bf16.mxu0 %v431
      %497 = vmatpush2.bf16.msra.mxu0 %v430
      %498 = vmatprep.subr.bf16.mxu0 %v429
      %499 = vmatpush2.bf16.msra.mxu0 %v428
      %500 = vmatprep.subr.bf16.mxu0 %v427
      %501 = vmatpush2.bf16.msra.mxu0 %v426
      %502 = vmatprep.subr.bf16.mxu0 %v425
      %503 = vmatpush2.bf16.msra.mxu0 %v424
      %504 = vmatprep.mubr.bf16.mxu0 %v309
      %505 = vmatmul.mubr.bf16.gmra.mxu0 %v308
      %v506 = vpop.f32.mrf.mxu0
      %v507 = vadd.f32 0.0, %v506
      %v508 = vpop.f32.mrf.mxu0
      %v509 = vadd.f32 0.0, %v508
      %v510 = vpop.f32.mrf.mxu0
      %v511 = vpop.f32.mrf.mxu0
      %512 = vdwg.mxu0
      %v513 = vadd.f32 %v270, %v507
      %v514 = vadd.f32 %v271, %v509
      %515 = vst [vmem:[#allocation2] sm:$0xff] %v513
      %516 = vst [vmem:[#allocation2 + $0x8] sm:$0xff] %v514
      %p517 = scmp.eq.s32.totalorder %s20, 8
      // Predicated region
      $region41: #{resnet_server_forward.19} parent=35 // pred_check
        %p518 = pneg %p517
      $region42: #{resnet_server_forward.19} parent=35 // pred_check_branch
        %520 = sbr.rel (%p518) target = $region44
      $region43: #{resnet_server_forward.19} parent=35 // pred_region
        %v521 = vld [vmem:[#allocation2] sm:$0xff]
        %v522 = vld [vmem:[#allocation2 + $0x8] sm:$0xff]
        %v523 = vld [vmem:[%s2] sm:$0x3]
        %v525 = vlaneseq
        %v526 = vshrl.u32 %v525, 7
        %v527 = vsub.s32 0, %v526
        %v528 = vrot.slane %v523, %v527
        %v529 = vlaneseq
        %v530 = vshrl.u32 %v529, 7
        %v531 = vsub.s32 1, %v530
        %v532 = vrot.slane %v523, %v531
        %v535 = vadd.f32 %v521, %v528
        %v536 = vadd.f32 %v522, %v532
        %v537 = vld [vmem:[%s258] sm:$0xff]
        %v538 = vunpack.c.l.bf16 %v537
        %v539 = vunpack.c.h.bf16 %v537
        %v540 = vadd.f32 %v535, %v538
        %v541 = vadd.f32 %v536, %v539
        %v542 = vmax.f32 %v540, 0.0
        %v543 = vmax.f32 %v541, 0.0
        %v544 = vpack.c.bf16 %v542, %v542
        %v545 = vpack.c.bf16 %v543, %v543
        %v548 = vunpack.c.l.b16 %v544
        %v549 = vunpack.c.l.b16 %v545
        %v550 = vpack.c.b16 %v549, %v548
        %552 = vst [vmem:[%s263] sm:$0xff] %v550
      $region44: #{resnet_server_forward.19} parent=35 // pred_fallthru
        _
      %p553 = scmp.lt.s32.totalorder %s19, 0
      %s554 = scalar_select %p553, %s19, 0
      %s555 = smul.addr %s554, 2
      %s556 = smul.addr %s555, 4
      %s557 = scalar_lea.vmem %s4, %s556
      // Predicated region
      $region45: #{resnet_server_forward.19} parent=35 // pred_check
        %p558 = pneg %p146
      $region46: #{resnet_server_forward.19} parent=35 // pred_check_branch
        %560 = sbr.rel (%p558) target = $region48
      $region47: #{resnet_server_forward.19} parent=35 // pred_region
        _
      $region48: #{resnet_server_forward.19} parent=35 // pred_fallthru
        _
      // Predicated region
      $region49: #{resnet_server_forward.19} parent=35 // pred_check
        %p561 = pneg %p146
      $region50: #{resnet_server_forward.19} parent=35 // pred_check_branch
        %563 = sbr.rel (%p561) target = $region52
      $region51: #{resnet_server_forward.19} parent=35 // pred_region
        %p564 = scmp.lt.s32.totalorder %s19, 0
        %s565 = scalar_select %p564, %s19, 0
        %s566 = smul.addr %s565, 2
        %s567 = smul.addr %s566, 4
        %s568 = scalar_lea.vmem %s4, %s567
      $region52: #{resnet_server_forward.19} parent=35 // pred_fallthru
        _
    $region36: #{resnet_server_forward.19} parent=5 // pred_fallthru
      _
    %p569 = scmp.le.s32.totalorder 2, %s10
    // Predicated region
    $region53: #{resnet_server_forward.19} parent=5 // pred_check
      %p570 = pneg %p569
    $region54: #{resnet_server_forward.19} parent=5 // pred_check_branch
      %572 = sbr.rel (%p570) target = $region56
    $region55: #{resnet_server_forward.19} parent=5 // pred_region
      %s573 = ssub.s32 %s10, 2
    $region56: #{resnet_server_forward.19} parent=5 // pred_fallthru
      _
  $region6: #{resnet_server_forward.19} parent=0 // loop_footer
    %s14 = sadd.s32 1, %s10
  $region7: #{resnet_server_forward.19} parent=0 // loop_footer_branch
    %9 = sbr.rel target = $region3
  $region8: #{resnet_server_forward.19} parent=0 // loop_exit
    _

// kernel: resnet_server_forward.20
$region0: #{resnet_server_forward.20}
  #allocation0 [shape = 'u32[]', space=smem, size = 0x4, offset = 0x4, fixed_abs, tag = 'smem constant byte address 0x4 - core index']
  #allocation1 [shape = 'u32[144,128]{1,0:T(1,128)}', space=vmem, size = 0x12000, scoped, tag = 'internal scratch']
  #allocation2 [shape = 'f32[8,512]{1,0:T(8,128)}', space=vmem, size = 0x4000, scoped, tag = 'scratch operand']
  %s0 = inlined_call_operand.vmem [shape: bf16[9,8,256], index: 0, kind: input, shape index: {}]
  %s1 = inlined_call_operand.vmem [shape: bf16[9,256,512], index: 1, kind: input, shape index: {}]
  %s2 = inlined_call_operand.vmem [shape: f32[1,512], index: 2, kind: input, shape index: {}]
  %s3 = inlined_call_operand.vmem [shape: bf16[8,512], index: 3, kind: output, shape index: {}]
  %s4 = sld [smem:[#allocation0]]
  $region53: #{resnet_server_forward.20} parent=0
    _
  %s6 = ssub.s32 1, %s4
  %s7 = scalar_select 0, %s6, %s4
  loop: start=0, step=1, limit=11
  $region2: #{resnet_server_forward.20} parent=0 // loop_pre_header
    _
  $region3: #{resnet_server_forward.20} parent=0 // loop_header
    %s9 = sphi 0, %s13
    %p10 = scmp.ge.s32.totalorder %s9, 11
    %s16 = sphi 0, %s28
    %s17 = sphi 0, %s24
    %s18 = sphi 0, %s16
    %s19 = sphi 0, %s17
    %s20 = sphi 0, %s18
    %s21 = sphi 0, %s19
    %s33 = sphi 0, %s35
    %s36 = sphi 0, %s33
    %s37 = sphi 0, %s36
    %s53 = sphi 0, %s37
    %s59 = sphi 0, %s61
    %s62 = sphi 0, %s59
    %s63 = sphi 0, %s62
    %s79 = sphi 0, %s63
    %s83 = sphi 0, %s83
    %s85 = sphi 0, %s83
    %s86 = sphi 0, %s85
    %s100 = sphi 0, %s86
    %s106 = sphi 0, %s108
    %s109 = sphi 0, %s106
    %s110 = sphi 0, %s109
    %s126 = sphi 0, %s110
  $region4: #{resnet_server_forward.20} parent=0 // loop_header_branch
    %12 = sbr.rel (%p10) target = $region8
  $region5: #{resnet_server_forward.20} parent=0 // loop_body
    %s14 = ssub.s32 %s9, 1
    %s15 = ssub.s32 %s9, 2
    %s22 = sadd.s32 1, %s17
    %p23 = scmp.ge.s32.totalorder %s22, 9
    %s24 = scalar_select %p23, 0, %s22
    %s25 = sadd.s32 1, %s16
    %s26 = scalar_select %p23, %s25, %s16
    %p27 = scmp.ge.s32.totalorder %s26, 1
    %s28 = scalar_select %p27, 0, %s26
    %s29 = ssub.s32 %s17, %s24
    %s30 = ssub.s32 %s16, %s28
    %s31 = sor.u32 %s29, %s30
    %p32 = scmp.eq.s32.totalorder %s31, 0
    %s34 = sadd.s32 %s33, 1
    %s35 = scalar_select %p32, %s33, %s34
    %p38 = pneg %p32
    %p39 = scmp.eq.s32.totalorder %s9, 8
    %p40 = por %p38, %p39
    %p41 = scmp.ne.s32.totalorder %s33, %s36
    %p42 = scmp.eq.s32.totalorder %s9, 0
    %p43 = por %p41, %p42
    %p44 = scmp.ne.s32.totalorder %s33, %s36
    %p45 = scmp.eq.s32.totalorder %s14, 8
    %p46 = por %p44, %p45
    %p47 = scmp.ne.s32.totalorder %s36, %s37
    %p48 = scmp.eq.s32.totalorder %s14, 0
    %p49 = por %p47, %p48
    %p50 = scmp.ne.s32.totalorder %s36, %s37
    %p51 = scmp.eq.s32.totalorder %s15, 8
    %p52 = por %p50, %p51
    %p54 = scmp.ne.s32.totalorder %s37, %s53
    %p55 = scmp.eq.s32.totalorder %s15, 0
    %p56 = por %p54, %p55
    %s57 = ssub.s32 %s17, %s24
    %p58 = scmp.eq.s32.totalorder %s57, 0
    %s60 = sadd.s32 %s59, 1
    %s61 = scalar_select %p58, %s59, %s60
    %p64 = pneg %p58
    %p65 = scmp.eq.s32.totalorder %s9, 8
    %p66 = por %p64, %p65
    %p67 = scmp.ne.s32.totalorder %s59, %s62
    %p68 = scmp.eq.s32.totalorder %s9, 0
    %p69 = por %p67, %p68
    %p70 = scmp.ne.s32.totalorder %s59, %s62
    %p71 = scmp.eq.s32.totalorder %s14, 8
    %p72 = por %p70, %p71
    %p73 = scmp.ne.s32.totalorder %s62, %s63
    %p74 = scmp.eq.s32.totalorder %s14, 0
    %p75 = por %p73, %p74
    %p76 = scmp.ne.s32.totalorder %s62, %s63
    %p77 = scmp.eq.s32.totalorder %s15, 8
    %p78 = por %p76, %p77
    %p80 = scmp.ne.s32.totalorder %s63, %s79
    %p81 = scmp.eq.s32.totalorder %s15, 0
    %p82 = por %p80, %p81
    %s84 = sadd.s32 %s83, 1
    %p87 = scmp.eq.s32.totalorder %s9, 8
    %p88 = scmp.ne.s32.totalorder %s83, %s85
    %p89 = scmp.eq.s32.totalorder %s9, 0
    %p90 = por %p88, %p89
    %p91 = scmp.ne.s32.totalorder %s83, %s85
    %p92 = scmp.eq.s32.totalorder %s14, 8
    %p93 = por %p91, %p92
    %p94 = scmp.ne.s32.totalorder %s85, %s86
    %p95 = scmp.eq.s32.totalorder %s14, 0
    %p96 = por %p94, %p95
    %p97 = scmp.ne.s32.totalorder %s85, %s86
    %p98 = scmp.eq.s32.totalorder %s15, 8
    %p99 = por %p97, %p98
    %p101 = scmp.ne.s32.totalorder %s86, %s100
    %p102 = scmp.eq.s32.totalorder %s15, 0
    %p103 = por %p101, %p102
    %s104 = ssub.s32 %s16, %s28
    %p105 = scmp.eq.s32.totalorder %s104, 0
    %s107 = sadd.s32 %s106, 1
    %s108 = scalar_select %p105, %s106, %s107
    %p111 = pneg %p105
    %p112 = scmp.eq.s32.totalorder %s9, 8
    %p113 = por %p111, %p112
    %p114 = scmp.ne.s32.totalorder %s106, %s109
    %p115 = scmp.eq.s32.totalorder %s9, 0
    %p116 = por %p114, %p115
    %p117 = scmp.ne.s32.totalorder %s106, %s109
    %p118 = scmp.eq.s32.totalorder %s14, 8
    %p119 = por %p117, %p118
    %p120 = scmp.ne.s32.totalorder %s109, %s110
    %p121 = scmp.eq.s32.totalorder %s14, 0
    %p122 = por %p120, %p121
    %p123 = scmp.ne.s32.totalorder %s109, %s110
    %p124 = scmp.eq.s32.totalorder %s15, 8
    %p125 = por %p123, %p124
    %p127 = scmp.ne.s32.totalorder %s110, %s126
    %p128 = scmp.eq.s32.totalorder %s15, 0
    %p129 = por %p127, %p128
    %p130 = scmp.le.s32.totalorder 1, %s9
    %p131 = scmp.lt.s32.totalorder %s9, 10
    %p132 = pnand %p130, %p131
    %p133 = pneg %p132
    // Predicated region
    $region9: #{resnet_server_forward.20} parent=5 // pred_check
      _
    $region10: #{resnet_server_forward.20} parent=5 // pred_check_branch
      %135 = sbr.rel (%p132) target = $region12
    $region11: #{resnet_server_forward.20} parent=5 // pred_region
      %s136 = ssub.s32 %s9, 1
      // Predicated region
      $region13: #{resnet_server_forward.20} parent=11 // pred_check
        %p137 = pneg %p96
      $region14: #{resnet_server_forward.20} parent=11 // pred_check_branch
        %139 = sbr.rel (%p137) target = $region16
      $region15: #{resnet_server_forward.20} parent=11 // pred_region
        _
      $region16: #{resnet_server_forward.20} parent=11 // pred_fallthru
        _
    $region12: #{resnet_server_forward.20} parent=5 // pred_fallthru
      _
    %p140 = scmp.lt.s32.totalorder %s9, 9
    // Predicated region
    $region17: #{resnet_server_forward.20} parent=5 // pred_check
      %p141 = pneg %p140
    $region18: #{resnet_server_forward.20} parent=5 // pred_check_branch
      %143 = sbr.rel (%p141) target = $region20
    $region19: #{resnet_server_forward.20} parent=5 // pred_region
      // Predicated region
      $region21: #{resnet_server_forward.20} parent=19 // pred_check
        %p144 = pneg %p43
      $region22: #{resnet_server_forward.20} parent=19 // pred_check_branch
        %146 = sbr.rel (%p144) target = $region24
      $region23: #{resnet_server_forward.20} parent=19 // pred_region
        %p147 = scmp.lt.s32.totalorder %s17, 8
        %s148 = scalar_select %p147, %s17, 8
        %p149 = scmp.lt.s32.totalorder %s16, 0
        %s150 = scalar_select %p149, %s16, 0
        %s151 = smul.addr %s150, 2
        %s152 = smul.addr %s148, 2
        %s153 = sadd.s32 %s151, %s152
        %s154 = smul.addr %s153, 4
        %s155 = scalar_lea.vmem %s0, %s154
      $region24: #{resnet_server_forward.20} parent=19 // pred_fallthru
        _
      // Predicated region
      $region25: #{resnet_server_forward.20} parent=19 // pred_check
        %p156 = pneg %p69
      $region26: #{resnet_server_forward.20} parent=19 // pred_check_branch
        %158 = sbr.rel (%p156) target = $region28
      $region27: #{resnet_server_forward.20} parent=19 // pred_region
        %p159 = scmp.lt.s32.totalorder %s17, 8
        %s160 = scalar_select %p159, %s17, 8
        %s161 = smul.addr %s160, 128
        %s162 = smul.addr %s161, 4
        %s163 = scalar_lea.vmem %s1, %s162
      $region28: #{resnet_server_forward.20} parent=19 // pred_fallthru
        _
    $region20: #{resnet_server_forward.20} parent=5 // pred_fallthru
      _
    %p164 = scmp.le.s32.totalorder 1, %s9
    %p165 = scmp.lt.s32.totalorder %s9, 10
    %p166 = pnand %p164, %p165
    %p167 = pneg %p166
    // Predicated region
    $region29: #{resnet_server_forward.20} parent=5 // pred_check
      _
    $region30: #{resnet_server_forward.20} parent=5 // pred_check_branch
      %169 = sbr.rel (%p166) target = $region32
    $region31: #{resnet_server_forward.20} parent=5 // pred_region
      %s170 = ssub.s32 %s9, 1
      %p171 = scmp.lt.s32.totalorder %s19, 8
      %s172 = scalar_select %p171, %s19, 8
      %p173 = scmp.lt.s32.totalorder %s18, 0
      %s174 = scalar_select %p173, %s18, 0
      %s175 = smul.addr %s174, 2
      %s176 = smul.addr %s172, 2
      %s177 = sadd.s32 %s175, %s176
      %s178 = smul.addr %s177, 4
      %s179 = scalar_lea.vmem %s0, %s178
      %p180 = pneg %p49
      %p181 = pneg %p46
      %p182 = scmp.lt.s32.totalorder %s19, 8
      %s183 = scalar_select %p182, %s19, 8
      %s184 = smul.addr %s183, 128
      %s185 = smul.addr %s184, 4
      %s186 = scalar_lea.vmem %s1, %s185
      %p187 = pneg %p75
      %p188 = pneg %p72
      %p189 = pneg %p96
      %p190 = pneg %p93
      %p191 = pneg %p122
      %p192 = pneg %p119
      %p193 = scmp.lt.s32.totalorder %s18, 0
      %s194 = scalar_select %p193, %s18, 0
      %s195 = smul.addr %s194, 4
      %s196 = smul.addr %s195, 4
      %s197 = scalar_lea.vmem %s3, %s196
      %p198 = scmp.lt.s32.totalorder %s19, 8
      %s199 = scalar_select %p198, %s19, 8
      %p200 = scmp.lt.s32.totalorder %s18, 0
      %s201 = scalar_select %p200, %s18, 0
      %s202 = smul.addr %s201, 2
      %s203 = smul.addr %s199, 2
      %s204 = sadd.s32 %s202, %s203
      %s205 = smul.addr %s204, 4
      %s206 = scalar_lea.vmem %s0, %s205
      %p207 = scmp.lt.s32.totalorder %s19, 8
      %s208 = scalar_select %p207, %s19, 8
      %s209 = smul.addr %s208, 128
      %s210 = smul.addr %s209, 4
      %s211 = scalar_lea.vmem %s1, %s210
      %p212 = scmp.lt.s32.totalorder %s18, 0
      %s213 = scalar_select %p212, %s18, 0
      %s214 = smul.addr %s213, 4
      %s215 = smul.addr %s214, 4
      %s216 = scalar_lea.vmem %s3, %s215
      %p217 = scmp.eq.s32.totalorder %s19, 0
      // Predicated region
      $region33: #{resnet_server_forward.20} parent=31 // pred_check
        %p218 = pneg %p217
      $region34: #{resnet_server_forward.20} parent=31 // pred_check_branch
        %220 = sbr.rel (%p218) target = $region36
      $region35: #{resnet_server_forward.20} parent=31 // pred_region
        %221 = vst [vmem:[#allocation2] sm:$0xff] 0.0
        %222 = vst [vmem:[#allocation2 + $0x8] sm:$0xff] 0.0
        %223 = vst [vmem:[#allocation2 + $0x10] sm:$0xff] 0.0
        %224 = vst [vmem:[#allocation2 + $0x18] sm:$0xff] 0.0
      $region36: #{resnet_server_forward.20} parent=31 // pred_fallthru
        _
      %v225 = vld [vmem:[#allocation2] sm:$0xff]
      %v226 = vld [vmem:[#allocation2 + $0x8] sm:$0xff]
      %v227 = vld [vmem:[#allocation2 + $0x10] sm:$0xff]
      %v228 = vld [vmem:[#allocation2 + $0x18] sm:$0xff]
      %v229 = vld [vmem:[%s206] sm:$0xff]
      %v230 = vld [vmem:[%s211] sm:$0xff]
      %v231 = vld [vmem:[%s211 + $0x8] sm:$0xff]
      %v232 = vld [vmem:[%s211 + $0x10] sm:$0xff]
      %v233 = vld [vmem:[%s211 + $0x18] sm:$0xff]
      %v234 = vld [vmem:[%s211 + $0x20] sm:$0xff]
      %v235 = vld [vmem:[%s211 + $0x28] sm:$0xff]
      %v236 = vld [vmem:[%s211 + $0x30] sm:$0xff]
      %v237 = vld [vmem:[%s211 + $0x38] sm:$0xff]
      %v238 = vld [vmem:[%s211 + $0x40] sm:$0xff]
      %v239 = vld [vmem:[%s211 + $0x48] sm:$0xff]
      %v240 = vld [vmem:[%s211 + $0x50] sm:$0xff]
      %v241 = vld [vmem:[%s211 + $0x58] sm:$0xff]
      %v242 = vld [vmem:[%s211 + $0x60] sm:$0xff]
      %v243 = vld [vmem:[%s211 + $0x68] sm:$0xff]
      %v244 = vld [vmem:[%s211 + $0x70] sm:$0xff]
      %v245 = vld [vmem:[%s211 + $0x78] sm:$0xff]
      %v246 = vld [vmem:[%s211 + $0x80] sm:$0xff]
      %v247 = vld [vmem:[%s211 + $0x88] sm:$0xff]
      %v248 = vld [vmem:[%s211 + $0x90] sm:$0xff]
      %v249 = vld [vmem:[%s211 + $0x98] sm:$0xff]
      %v250 = vld [vmem:[%s211 + $0xa0] sm:$0xff]
      %v251 = vld [vmem:[%s211 + $0xa8] sm:$0xff]
      %v252 = vld [vmem:[%s211 + $0xb0] sm:$0xff]
      %v253 = vld [vmem:[%s211 + $0xb8] sm:$0xff]
      %v254 = vld [vmem:[%s211 + $0xc0] sm:$0xff]
      %v255 = vld [vmem:[%s211 + $0xc8] sm:$0xff]
      %v256 = vld [vmem:[%s211 + $0xd0] sm:$0xff]
      %v257 = vld [vmem:[%s211 + $0xd8] sm:$0xff]
      %v258 = vld [vmem:[%s211 + $0xe0] sm:$0xff]
      %v259 = vld [vmem:[%s211 + $0xe8] sm:$0xff]
      %v260 = vld [vmem:[%s211 + $0xf0] sm:$0xff]
      %v261 = vld [vmem:[%s211 + $0xf8] sm:$0xff]
      %v262 = vld [vmem:[%s211 + $0x100] sm:$0xff]
      %v263 = vld [vmem:[%s211 + $0x108] sm:$0xff]
      %v264 = vld [vmem:[%s211 + $0x110] sm:$0xff]
      %v265 = vld [vmem:[%s211 + $0x118] sm:$0xff]
      %v266 = vld [vmem:[%s211 + $0x120] sm:$0xff]
      %v267 = vld [vmem:[%s211 + $0x128] sm:$0xff]
      %v268 = vld [vmem:[%s211 + $0x130] sm:$0xff]
      %v269 = vld [vmem:[%s211 + $0x138] sm:$0xff]
      %v270 = vld [vmem:[%s211 + $0x140] sm:$0xff]
      %v271 = vld [vmem:[%s211 + $0x148] sm:$0xff]
      %v272 = vld [vmem:[%s211 + $0x150] sm:$0xff]
      %v273 = vld [vmem:[%s211 + $0x158] sm:$0xff]
      %v274 = vld [vmem:[%s211 + $0x160] sm:$0xff]
      %v275 = vld [vmem:[%s211 + $0x168] sm:$0xff]
      %v276 = vld [vmem:[%s211 + $0x170] sm:$0xff]
      %v277 = vld [vmem:[%s211 + $0x178] sm:$0xff]
      %v278 = vld [vmem:[%s211 + $0x180] sm:$0xff]
      %v279 = vld [vmem:[%s211 + $0x188] sm:$0xff]
      %v280 = vld [vmem:[%s211 + $0x190] sm:$0xff]
      %v281 = vld [vmem:[%s211 + $0x198] sm:$0xff]
      %v282 = vld [vmem:[%s211 + $0x1a0] sm:$0xff]
      %v283 = vld [vmem:[%s211 + $0x1a8] sm:$0xff]
      %v284 = vld [vmem:[%s211 + $0x1b0] sm:$0xff]
      %v285 = vld [vmem:[%s211 + $0x1b8] sm:$0xff]
      %v286 = vld [vmem:[%s211 + $0x1c0] sm:$0xff]
      %v287 = vld [vmem:[%s211 + $0x1c8] sm:$0xff]
      %v288 = vld [vmem:[%s211 + $0x1d0] sm:$0xff]
      %v289 = vld [vmem:[%s211 + $0x1d8] sm:$0xff]
      %v290 = vld [vmem:[%s211 + $0x1e0] sm:$0xff]
      %v291 = vld [vmem:[%s211 + $0x1e8] sm:$0xff]
      %v292 = vld [vmem:[%s211 + $0x1f0] sm:$0xff]
      %v293 = vld [vmem:[%s211 + $0x1f8] sm:$0xff]
      %v295 = vunpack.c.l.b16 %v229
      %v296 = vunpack.c.h.b16 %v229
      %v297 = vpack.c.b16 %v295, %v295
      %v298 = vpack.c.b16 %v296, %v296
      %v365 = vunpack.c.l.b16 %v230
      %v366 = vunpack.c.h.b16 %v230
      %v367 = vunpack.c.l.b16 %v231
      %v368 = vunpack.c.h.b16 %v231
      %v369 = vunpack.c.l.b16 %v232
      %v370 = vunpack.c.h.b16 %v232
      %v371 = vunpack.c.l.b16 %v233
      %v372 = vunpack.c.h.b16 %v233
      %v373 = vunpack.c.l.b16 %v234
      %v374 = vunpack.c.h.b16 %v234
      %v375 = vunpack.c.l.b16 %v235
      %v376 = vunpack.c.h.b16 %v235
      %v377 = vunpack.c.l.b16 %v236
      %v378 = vunpack.c.h.b16 %v236
      %v379 = vunpack.c.l.b16 %v237
      %v380 = vunpack.c.h.b16 %v237
      %v381 = vunpack.c.l.b16 %v238
      %v382 = vunpack.c.h.b16 %v238
      %v383 = vunpack.c.l.b16 %v239
      %v384 = vunpack.c.h.b16 %v239
      %v385 = vunpack.c.l.b16 %v240
      %v386 = vunpack.c.h.b16 %v240
      %v387 = vunpack.c.l.b16 %v241
      %v388 = vunpack.c.h.b16 %v241
      %v389 = vunpack.c.l.b16 %v242
      %v390 = vunpack.c.h.b16 %v242
      %v391 = vunpack.c.l.b16 %v243
      %v392 = vunpack.c.h.b16 %v243
      %v393 = vunpack.c.l.b16 %v244
      %v394 = vunpack.c.h.b16 %v244
      %v395 = vunpack.c.l.b16 %v245
      %v396 = vunpack.c.h.b16 %v245
      %v397 = vunpack.c.l.b16 %v246
      %v398 = vunpack.c.h.b16 %v246
      %v399 = vunpack.c.l.b16 %v247
      %v400 = vunpack.c.h.b16 %v247
      %v401 = vunpack.c.l.b16 %v248
      %v402 = vunpack.c.h.b16 %v248
      %v403 = vunpack.c.l.b16 %v249
      %v404 = vunpack.c.h.b16 %v249
      %v405 = vunpack.c.l.b16 %v250
      %v406 = vunpack.c.h.b16 %v250
      %v407 = vunpack.c.l.b16 %v251
      %v408 = vunpack.c.h.b16 %v251
      %v409 = vunpack.c.l.b16 %v252
      %v410 = vunpack.c.h.b16 %v252
      %v411 = vunpack.c.l.b16 %v253
      %v412 = vunpack.c.h.b16 %v253
      %v413 = vunpack.c.l.b16 %v254
      %v414 = vunpack.c.h.b16 %v254
      %v415 = vunpack.c.l.b16 %v255
      %v416 = vunpack.c.h.b16 %v255
      %v417 = vunpack.c.l.b16 %v256
      %v418 = vunpack.c.h.b16 %v256
      %v419 = vunpack.c.l.b16 %v257
      %v420 = vunpack.c.h.b16 %v257
      %v421 = vunpack.c.l.b16 %v258
      %v422 = vunpack.c.h.b16 %v258
      %v423 = vunpack.c.l.b16 %v259
      %v424 = vunpack.c.h.b16 %v259
      %v425 = vunpack.c.l.b16 %v260
      %v426 = vunpack.c.h.b16 %v260
      %v427 = vunpack.c.l.b16 %v261
      %v428 = vunpack.c.h.b16 %v261
      %v429 = vunpack.c.l.b16 %v262
      %v430 = vunpack.c.h.b16 %v262
      %v431 = vunpack.c.l.b16 %v263
      %v432 = vunpack.c.h.b16 %v263
      %v433 = vunpack.c.l.b16 %v264
      %v434 = vunpack.c.h.b16 %v264
      %v435 = vunpack.c.l.b16 %v265
      %v436 = vunpack.c.h.b16 %v265
      %v437 = vunpack.c.l.b16 %v266
      %v438 = vunpack.c.h.b16 %v266
      %v439 = vunpack.c.l.b16 %v267
      %v440 = vunpack.c.h.b16 %v267
      %v441 = vunpack.c.l.b16 %v268
      %v442 = vunpack.c.h.b16 %v268
      %v443 = vunpack.c.l.b16 %v269
      %v444 = vunpack.c.h.b16 %v269
      %v445 = vunpack.c.l.b16 %v270
      %v446 = vunpack.c.h.b16 %v270
      %v447 = vunpack.c.l.b16 %v271
      %v448 = vunpack.c.h.b16 %v271
      %v449 = vunpack.c.l.b16 %v272
      %v450 = vunpack.c.h.b16 %v272
      %v451 = vunpack.c.l.b16 %v273
      %v452 = vunpack.c.h.b16 %v273
      %v453 = vunpack.c.l.b16 %v274
      %v454 = vunpack.c.h.b16 %v274
      %v455 = vunpack.c.l.b16 %v275
      %v456 = vunpack.c.h.b16 %v275
      %v457 = vunpack.c.l.b16 %v276
      %v458 = vunpack.c.h.b16 %v276
      %v459 = vunpack.c.l.b16 %v277
      %v460 = vunpack.c.h.b16 %v277
      %v461 = vunpack.c.l.b16 %v278
      %v462 = vunpack.c.h.b16 %v278
      %v463 = vunpack.c.l.b16 %v279
      %v464 = vunpack.c.h.b16 %v279
      %v465 = vunpack.c.l.b16 %v280
      %v466 = vunpack.c.h.b16 %v280
      %v467 = vunpack.c.l.b16 %v281
      %v468 = vunpack.c.h.b16 %v281
      %v469 = vunpack.c.l.b16 %v282
      %v470 = vunpack.c.h.b16 %v282
      %v471 = vunpack.c.l.b16 %v283
      %v472 = vunpack.c.h.b16 %v283
      %v473 = vunpack.c.l.b16 %v284
      %v474 = vunpack.c.h.b16 %v284
      %v475 = vunpack.c.l.b16 %v285
      %v476 = vunpack.c.h.b16 %v285
      %v477 = vunpack.c.l.b16 %v286
      %v478 = vunpack.c.h.b16 %v286
      %v479 = vunpack.c.l.b16 %v287
      %v480 = vunpack.c.h.b16 %v287
      %v481 = vunpack.c.l.b16 %v288
      %v482 = vunpack.c.h.b16 %v288
      %v483 = vunpack.c.l.b16 %v289
      %v484 = vunpack.c.h.b16 %v289
      %v485 = vunpack.c.l.b16 %v290
      %v486 = vunpack.c.h.b16 %v290
      %v487 = vunpack.c.l.b16 %v291
      %v488 = vunpack.c.h.b16 %v291
      %v489 = vunpack.c.l.b16 %v292
      %v490 = vunpack.c.h.b16 %v292
      %v491 = vunpack.c.l.b16 %v293
      %v492 = vunpack.c.h.b16 %v293
      %v493 = vpack.c.b16 %v369, %v365
      %v494 = vpack.c.b16 %v370, %v366
      %v495 = vpack.c.b16 %v371, %v367
      %v496 = vpack.c.b16 %v372, %v368
      %v497 = vpack.c.b16 %v377, %v373
      %v498 = vpack.c.b16 %v378, %v374
      %v499 = vpack.c.b16 %v379, %v375
      %v500 = vpack.c.b16 %v380, %v376
      %v501 = vpack.c.b16 %v385, %v381
      %v502 = vpack.c.b16 %v386, %v382
      %v503 = vpack.c.b16 %v387, %v383
      %v504 = vpack.c.b16 %v388, %v384
      %v505 = vpack.c.b16 %v393, %v389
      %v506 = vpack.c.b16 %v394, %v390
      %v507 = vpack.c.b16 %v395, %v391
      %v508 = vpack.c.b16 %v396, %v392
      %v509 = vpack.c.b16 %v401, %v397
      %v510 = vpack.c.b16 %v402, %v398
      %v511 = vpack.c.b16 %v403, %v399
      %v512 = vpack.c.b16 %v404, %v400
      %v513 = vpack.c.b16 %v409, %v405
      %v514 = vpack.c.b16 %v410, %v406
      %v515 = vpack.c.b16 %v411, %v407
      %v516 = vpack.c.b16 %v412, %v408
      %v517 = vpack.c.b16 %v417, %v413
      %v518 = vpack.c.b16 %v418, %v414
      %v519 = vpack.c.b16 %v419, %v415
      %v520 = vpack.c.b16 %v420, %v416
      %v521 = vpack.c.b16 %v425, %v421
      %v522 = vpack.c.b16 %v426, %v422
      %v523 = vpack.c.b16 %v427, %v423
      %v524 = vpack.c.b16 %v428, %v424
      %v525 = vpack.c.b16 %v433, %v429
      %v526 = vpack.c.b16 %v434, %v430
      %v527 = vpack.c.b16 %v435, %v431
      %v528 = vpack.c.b16 %v436, %v432
      %v529 = vpack.c.b16 %v441, %v437
      %v530 = vpack.c.b16 %v442, %v438
      %v531 = vpack.c.b16 %v443, %v439
      %v532 = vpack.c.b16 %v444, %v440
      %v533 = vpack.c.b16 %v449, %v445
      %v534 = vpack.c.b16 %v450, %v446
      %v535 = vpack.c.b16 %v451, %v447
      %v536 = vpack.c.b16 %v452, %v448
      %v537 = vpack.c.b16 %v457, %v453
      %v538 = vpack.c.b16 %v458, %v454
      %v539 = vpack.c.b16 %v459, %v455
      %v540 = vpack.c.b16 %v460, %v456
      %v541 = vpack.c.b16 %v465, %v461
      %v542 = vpack.c.b16 %v466, %v462
      %v543 = vpack.c.b16 %v467, %v463
      %v544 = vpack.c.b16 %v468, %v464
      %v545 = vpack.c.b16 %v473, %v469
      %v546 = vpack.c.b16 %v474, %v470
      %v547 = vpack.c.b16 %v475, %v471
      %v548 = vpack.c.b16 %v476, %v472
      %v549 = vpack.c.b16 %v481, %v477
      %v550 = vpack.c.b16 %v482, %v478
      %v551 = vpack.c.b16 %v483, %v479
      %v552 = vpack.c.b16 %v484, %v480
      %v553 = vpack.c.b16 %v489, %v485
      %v554 = vpack.c.b16 %v490, %v486
      %v555 = vpack.c.b16 %v491, %v487
      %v556 = vpack.c.b16 %v492, %v488
      %621 = vmatprep.subr.bf16.mxu0 %v522
      %622 = vmatpush1.bf16.msra.mxu0 %v521
      %623 = vmatprep.subr.bf16.mxu0 %v518
      %624 = vmatpush1.bf16.msra.mxu0 %v517
      %625 = vmatprep.subr.bf16.mxu0 %v514
      %626 = vmatpush1.bf16.msra.mxu0 %v513
      %627 = vmatprep.subr.bf16.mxu0 %v510
      %628 = vmatpush1.bf16.msra.mxu0 %v509
      %629 = vmatprep.subr.bf16.mxu0 %v506
      %630 = vmatpush1.bf16.msra.mxu0 %v505
      %631 = vmatprep.subr.bf16.mxu0 %v502
      %632 = vmatpush1.bf16.msra.mxu0 %v501
      %633 = vmatprep.subr.bf16.mxu0 %v498
      %634 = vmatpush1.bf16.msra.mxu0 %v497
      %635 = vmatprep.subr.bf16.mxu0 %v494
      %636 = vmatpush1.bf16.msra.mxu0 %v493
      %637 = vmatprep.subr.bf16.mxu0 %v554
      %638 = vmatpush2.bf16.msra.mxu0 %v553
      %639 = vmatprep.subr.bf16.mxu0 %v550
      %640 = vmatpush2.bf16.msra.mxu0 %v549
      %641 = vmatprep.subr.bf16.mxu0 %v546
      %642 = vmatpush2.bf16.msra.mxu0 %v545
      %643 = vmatprep.subr.bf16.mxu0 %v542
      %644 = vmatpush2.bf16.msra.mxu0 %v541
      %645 = vmatprep.subr.bf16.mxu0 %v538
      %646 = vmatpush2.bf16.msra.mxu0 %v537
      %647 = vmatprep.subr.bf16.mxu0 %v534
      %648 = vmatpush2.bf16.msra.mxu0 %v533
      %649 = vmatprep.subr.bf16.mxu0 %v530
      %650 = vmatpush2.bf16.msra.mxu0 %v529
      %651 = vmatprep.subr.bf16.mxu0 %v526
      %652 = vmatpush2.bf16.msra.mxu0 %v525
      %653 = vmatprep.mubr.bf16.mxu0 %v298
      %654 = vmatmul.mubr.bf16.gmra.mxu0 %v297
      %v655 = vpop.f32.mrf.mxu0
      %v656 = vadd.f32 0.0, %v655
      %v657 = vpop.f32.mrf.mxu0
      %v658 = vadd.f32 0.0, %v657
      %v659 = vpop.f32.mrf.mxu0
      %v660 = vpop.f32.mrf.mxu0
      %661 = vdwg.mxu0
      %662 = vmatprep.subr.bf16.mxu0 %v524
      %663 = vmatpush1.bf16.msra.mxu0 %v523
      %664 = vmatprep.subr.bf16.mxu0 %v520
      %665 = vmatpush1.bf16.msra.mxu0 %v519
      %666 = vmatprep.subr.bf16.mxu0 %v516
      %667 = vmatpush1.bf16.msra.mxu0 %v515
      %668 = vmatprep.subr.bf16.mxu0 %v512
      %669 = vmatpush1.bf16.msra.mxu0 %v511
      %670 = vmatprep.subr.bf16.mxu0 %v508
      %671 = vmatpush1.bf16.msra.mxu0 %v507
      %672 = vmatprep.subr.bf16.mxu0 %v504
      %673 = vmatpush1.bf16.msra.mxu0 %v503
      %674 = vmatprep.subr.bf16.mxu0 %v500
      %675 = vmatpush1.bf16.msra.mxu0 %v499
      %676 = vmatprep.subr.bf16.mxu0 %v496
      %677 = vmatpush1.bf16.msra.mxu0 %v495
      %678 = vmatprep.subr.bf16.mxu0 %v556
      %679 = vmatpush2.bf16.msra.mxu0 %v555
      %680 = vmatprep.subr.bf16.mxu0 %v552
      %681 = vmatpush2.bf16.msra.mxu0 %v551
      %682 = vmatprep.subr.bf16.mxu0 %v548
      %683 = vmatpush2.bf16.msra.mxu0 %v547
      %684 = vmatprep.subr.bf16.mxu0 %v544
      %685 = vmatpush2.bf16.msra.mxu0 %v543
      %686 = vmatprep.subr.bf16.mxu0 %v540
      %687 = vmatpush2.bf16.msra.mxu0 %v539
      %688 = vmatprep.subr.bf16.mxu0 %v536
      %689 = vmatpush2.bf16.msra.mxu0 %v535
      %690 = vmatprep.subr.bf16.mxu0 %v532
      %691 = vmatpush2.bf16.msra.mxu0 %v531
      %692 = vmatprep.subr.bf16.mxu0 %v528
      %693 = vmatpush2.bf16.msra.mxu0 %v527
      %694 = vmatprep.mubr.bf16.mxu0 %v298
      %695 = vmatmul.mubr.bf16.gmra.mxu0 %v297
      %v696 = vpop.f32.mrf.mxu0
      %v697 = vadd.f32 0.0, %v696
      %v698 = vpop.f32.mrf.mxu0
      %v699 = vadd.f32 0.0, %v698
      %v700 = vpop.f32.mrf.mxu0
      %v701 = vpop.f32.mrf.mxu0
      %702 = vdwg.mxu0
      %v703 = vadd.f32 %v225, %v656
      %v704 = vadd.f32 %v226, %v658
      %v705 = vadd.f32 %v227, %v697
      %v706 = vadd.f32 %v228, %v699
      %707 = vst [vmem:[#allocation2] sm:$0xff] %v703
      %708 = vst [vmem:[#allocation2 + $0x8] sm:$0xff] %v704
      %709 = vst [vmem:[#allocation2 + $0x10] sm:$0xff] %v705
      %710 = vst [vmem:[#allocation2 + $0x18] sm:$0xff] %v706
      %p711 = scmp.eq.s32.totalorder %s19, 8
      // Predicated region
      $region37: #{resnet_server_forward.20} parent=31 // pred_check
        %p712 = pneg %p711
      $region38: #{resnet_server_forward.20} parent=31 // pred_check_branch
        %714 = sbr.rel (%p712) target = $region40
      $region39: #{resnet_server_forward.20} parent=31 // pred_region
        %v715 = vld [vmem:[#allocation2] sm:$0xff]
        %v716 = vld [vmem:[#allocation2 + $0x8] sm:$0xff]
        %v717 = vld [vmem:[#allocation2 + $0x10] sm:$0xff]
        %v718 = vld [vmem:[#allocation2 + $0x18] sm:$0xff]
        %v719 = vld [vmem:[%s2] sm:$0xf]
        %v721 = vlaneseq
        %v722 = vshrl.u32 %v721, 7
        %v723 = vsub.s32 0, %v722
        %v724 = vrot.slane %v719, %v723
        %v725 = vlaneseq
        %v726 = vshrl.u32 %v725, 7
        %v727 = vsub.s32 1, %v726
        %v728 = vrot.slane %v719, %v727
        %v729 = vlaneseq
        %v730 = vshrl.u32 %v729, 7
        %v731 = vsub.s32 2, %v730
        %v732 = vrot.slane %v719, %v731
        %v733 = vlaneseq
        %v734 = vshrl.u32 %v733, 7
        %v735 = vsub.s32 3, %v734
        %v736 = vrot.slane %v719, %v735
        %v741 = vadd.f32 %v715, %v724
        %v742 = vadd.f32 %v716, %v728
        %v743 = vadd.f32 %v717, %v732
        %v744 = vadd.f32 %v718, %v736
        %v745 = vmax.f32 %v741, 0.0
        %v746 = vmax.f32 %v742, 0.0
        %v747 = vmax.f32 %v743, 0.0
        %v748 = vmax.f32 %v744, 0.0
        %v749 = vpack.c.bf16 %v745, %v745
        %v750 = vpack.c.bf16 %v746, %v746
        %v751 = vpack.c.bf16 %v747, %v747
        %v752 = vpack.c.bf16 %v748, %v748
        %v757 = vunpack.c.l.b16 %v749
        %v758 = vunpack.c.l.b16 %v750
        %v759 = vunpack.c.l.b16 %v751
        %v760 = vunpack.c.l.b16 %v752
        %v761 = vpack.c.b16 %v758, %v757
        %v762 = vpack.c.b16 %v760, %v759
        %765 = vst [vmem:[%s216] sm:$0xff] %v761
        %766 = vst [vmem:[%s216 + $0x8] sm:$0xff] %v762
      $region40: #{resnet_server_forward.20} parent=31 // pred_fallthru
        _
      %p767 = scmp.lt.s32.totalorder %s18, 0
      %s768 = scalar_select %p767, %s18, 0
      %s769 = smul.addr %s768, 4
      %s770 = smul.addr %s769, 4
      %s771 = scalar_lea.vmem %s3, %s770
      // Predicated region
      $region41: #{resnet_server_forward.20} parent=31 // pred_check
        %p772 = pneg %p119
      $region42: #{resnet_server_forward.20} parent=31 // pred_check_branch
        %774 = sbr.rel (%p772) target = $region44
      $region43: #{resnet_server_forward.20} parent=31 // pred_region
        _
      $region44: #{resnet_server_forward.20} parent=31 // pred_fallthru
        _
      // Predicated region
      $region45: #{resnet_server_forward.20} parent=31 // pred_check
        %p775 = pneg %p119
      $region46: #{resnet_server_forward.20} parent=31 // pred_check_branch
        %777 = sbr.rel (%p775) target = $region48
      $region47: #{resnet_server_forward.20} parent=31 // pred_region
        %p778 = scmp.lt.s32.totalorder %s18, 0
        %s779 = scalar_select %p778, %s18, 0
        %s780 = smul.addr %s779, 4
        %s781 = smul.addr %s780, 4
        %s782 = scalar_lea.vmem %s3, %s781
      $region48: #{resnet_server_forward.20} parent=31 // pred_fallthru
        _
    $region32: #{resnet_server_forward.20} parent=5 // pred_fallthru
      _
    %p783 = scmp.le.s32.totalorder 2, %s9
    // Predicated region
    $region49: #{resnet_server_forward.20} parent=5 // pred_check
      %p784 = pneg %p783
    $region50: #{resnet_server_forward.20} parent=5 // pred_check_branch
      %786 = sbr.rel (%p784) target = $region52
    $region51: #{resnet_server_forward.20} parent=5 // pred_region
      %s787 = ssub.s32 %s9, 2
    $region52: #{resnet_server_forward.20} parent=5 // pred_fallthru
      _
  $region6: #{resnet_server_forward.20} parent=0 // loop_footer
    %s13 = sadd.s32 1, %s9
  $region7: #{resnet_server_forward.20} parent=0 // loop_footer_branch
    %8 = sbr.rel target = $region3
  $region8: #{resnet_server_forward.20} parent=0 // loop_exit
    _

// kernel: resnet_server_forward.21
$region0: #{resnet_server_forward.21}
  #allocation0 [shape = 'u32[]', space=smem, size = 0x4, offset = 0x4, fixed_abs, tag = 'smem constant byte address 0x4 - core index']
  #allocation1 [shape = 'u32[144,128]{1,0:T(1,128)}', space=vmem, size = 0x12000, scoped, tag = 'internal scratch']
  #allocation2 [shape = 'f32[8,512]{1,0:T(8,128)}', space=vmem, size = 0x4000, scoped, tag = 'scratch operand']
  %s0 = inlined_call_operand.vmem [shape: bf16[1,8,256], index: 0, kind: input, shape index: {}]
  %s1 = inlined_call_operand.hbm [shape: bf16[1,256,512], index: 1, kind: input, shape index: {}]
  %s2 = inlined_call_operand.vmem [shape: f32[1,512], index: 2, kind: input, shape index: {}]
  %s3 = inlined_call_operand.vmem [shape: bf16[8,512], index: 3, kind: output, shape index: {}]
  %s4 = sld [smem:[#allocation0]]
  $region34: #{resnet_server_forward.21} parent=0
    _
  %s6 = ssub.s32 1, %s4
  %s7 = scalar_select 0, %s6, %s4
  $region1: #{resnet_server_forward.21} parent=0
    #allocation3 [shape = 'u8[262144]{0}', space=vmem, size = 0x40000, scoped, tag = 'input window, operand 1, single buffered']
    #allocation4 [shape = 's32[1]{0}', space=sflag, size = 0x4, scoped, tag = 'scoped memory for resnet_server_forward.21']
    %8 = vsyncpa [#allocation4], 0
    // Predicated region
    $region2: #{resnet_server_forward.21} parent=1 // pred_check
      _
    $region3: #{resnet_server_forward.21} parent=1 // pred_check_branch
      %10 = sbr.rel (0) target = $region5
    $region4: #{resnet_server_forward.21} parent=1 // pred_region
      _
    $region5: #{resnet_server_forward.21} parent=1 // pred_fallthru
      _
    // Predicated region
    $region6: #{resnet_server_forward.21} parent=1 // pred_check
      _
    $region7: #{resnet_server_forward.21} parent=1 // pred_check_branch
      %12 = sbr.rel (0) target = $region9
    $region8: #{resnet_server_forward.21} parent=1 // pred_region
      %s14 = ssub.s32 8192, 8192
      %15 = vsyncadd [#allocation4], %s14
      %s16 = sshll.u32 [#allocation3], 4
      %s17 = int_to_ptr.vmem [resolvable:$true] %s16
      %22 = dma.hbm_to_vmem [thread:$0]  %s1, 8192, %s17, [#allocation4], 256, 256, 16
    $region9: #{resnet_server_forward.21} parent=1 // pred_fallthru
      _
    // Predicated region
    $region10: #{resnet_server_forward.21} parent=1 // pred_check
      _
    $region11: #{resnet_server_forward.21} parent=1 // pred_check_branch
      %24 = sbr.rel (0) target = $region13
    $region12: #{resnet_server_forward.21} parent=1 // pred_region
      _
    $region13: #{resnet_server_forward.21} parent=1 // pred_fallthru
      _
    // Predicated region
    $region14: #{resnet_server_forward.21} parent=1 // pred_check
      _
    $region15: #{resnet_server_forward.21} parent=1 // pred_check_branch
      %26 = sbr.rel (0) target = $region17
    $region16: #{resnet_server_forward.21} parent=1 // pred_region
      %27 = dma.done [#allocation4], 8192
    $region17: #{resnet_server_forward.21} parent=1 // pred_fallthru
      _
    %p28 = scmp.eq.s32.totalorder 0, 0
    // Predicated region
    $region18: #{resnet_server_forward.21} parent=1 // pred_check
      %p29 = pneg %p28
    $region19: #{resnet_server_forward.21} parent=1 // pred_check_branch
      %31 = sbr.rel (%p29) target = $region21
    $region20: #{resnet_server_forward.21} parent=1 // pred_region
      %32 = vst [vmem:[#allocation2] sm:$0xff] 0.0
      %33 = vst [vmem:[#allocation2 + $0x8] sm:$0xff] 0.0
      %34 = vst [vmem:[#allocation2 + $0x10] sm:$0xff] 0.0
      %35 = vst [vmem:[#allocation2 + $0x18] sm:$0xff] 0.0
    $region21: #{resnet_server_forward.21} parent=1 // pred_fallthru
      _
    %v36 = vld [vmem:[#allocation2] sm:$0xff]
    %v37 = vld [vmem:[#allocation2 + $0x8] sm:$0xff]
    %v38 = vld [vmem:[#allocation2 + $0x10] sm:$0xff]
    %v39 = vld [vmem:[#allocation2 + $0x18] sm:$0xff]
    %v40 = vld [vmem:[%s0] sm:$0xff]
    %v41 = vld [vmem:[#allocation3] sm:$0xff]
    %v42 = vld [vmem:[#allocation3 + $0x8] sm:$0xff]
    %v43 = vld [vmem:[#allocation3 + $0x10] sm:$0xff]
    %v44 = vld [vmem:[#allocation3 + $0x18] sm:$0xff]
    %v45 = vld [vmem:[#allocation3 + $0x20] sm:$0xff]
    %v46 = vld [vmem:[#allocation3 + $0x28] sm:$0xff]
    %v47 = vld [vmem:[#allocation3 + $0x30] sm:$0xff]
    %v48 = vld [vmem:[#allocation3 + $0x38] sm:$0xff]
    %v49 = vld [vmem:[#allocation3 + $0x40] sm:$0xff]
    %v50 = vld [vmem:[#allocation3 + $0x48] sm:$0xff]
    %v51 = vld [vmem:[#allocation3 + $0x50] sm:$0xff]
    %v52 = vld [vmem:[#allocation3 + $0x58] sm:$0xff]
    %v53 = vld [vmem:[#allocation3 + $0x60] sm:$0xff]
    %v54 = vld [vmem:[#allocation3 + $0x68] sm:$0xff]
    %v55 = vld [vmem:[#allocation3 + $0x70] sm:$0xff]
    %v56 = vld [vmem:[#allocation3 + $0x78] sm:$0xff]
    %v57 = vld [vmem:[#allocation3 + $0x80] sm:$0xff]
    %v58 = vld [vmem:[#allocation3 + $0x88] sm:$0xff]
    %v59 = vld [vmem:[#allocation3 + $0x90] sm:$0xff]
    %v60 = vld [vmem:[#allocation3 + $0x98] sm:$0xff]
    %v61 = vld [vmem:[#allocation3 + $0xa0] sm:$0xff]
    %v62 = vld [vmem:[#allocation3 + $0xa8] sm:$0xff]
    %v63 = vld [vmem:[#allocation3 + $0xb0] sm:$0xff]
    %v64 = vld [vmem:[#allocation3 + $0xb8] sm:$0xff]
    %v65 = vld [vmem:[#allocation3 + $0xc0] sm:$0xff]
    %v66 = vld [vmem:[#allocation3 + $0xc8] sm:$0xff]
    %v67 = vld [vmem:[#allocation3 + $0xd0] sm:$0xff]
    %v68 = vld [vmem:[#allocation3 + $0xd8] sm:$0xff]
    %v69 = vld [vmem:[#allocation3 + $0xe0] sm:$0xff]
    %v70 = vld [vmem:[#allocation3 + $0xe8] sm:$0xff]
    %v71 = vld [vmem:[#allocation3 + $0xf0] sm:$0xff]
    %v72 = vld [vmem:[#allocation3 + $0xf8] sm:$0xff]
    %v73 = vld [vmem:[#allocation3 + $0x100] sm:$0xff]
    %v74 = vld [vmem:[#allocation3 + $0x108] sm:$0xff]
    %v75 = vld [vmem:[#allocation3 + $0x110] sm:$0xff]
    %v76 = vld [vmem:[#allocation3 + $0x118] sm:$0xff]
    %v77 = vld [vmem:[#allocation3 + $0x120] sm:$0xff]
    %v78 = vld [vmem:[#allocation3 + $0x128] sm:$0xff]
    %v79 = vld [vmem:[#allocation3 + $0x130] sm:$0xff]
    %v80 = vld [vmem:[#allocation3 + $0x138] sm:$0xff]
    %v81 = vld [vmem:[#allocation3 + $0x140] sm:$0xff]
    %v82 = vld [vmem:[#allocation3 + $0x148] sm:$0xff]
    %v83 = vld [vmem:[#allocation3 + $0x150] sm:$0xff]
    %v84 = vld [vmem:[#allocation3 + $0x158] sm:$0xff]
    %v85 = vld [vmem:[#allocation3 + $0x160] sm:$0xff]
    %v86 = vld [vmem:[#allocation3 + $0x168] sm:$0xff]
    %v87 = vld [vmem:[#allocation3 + $0x170] sm:$0xff]
    %v88 = vld [vmem:[#allocation3 + $0x178] sm:$0xff]
    %v89 = vld [vmem:[#allocation3 + $0x180] sm:$0xff]
    %v90 = vld [vmem:[#allocation3 + $0x188] sm:$0xff]
    %v91 = vld [vmem:[#allocation3 + $0x190] sm:$0xff]
    %v92 = vld [vmem:[#allocation3 + $0x198] sm:$0xff]
    %v93 = vld [vmem:[#allocation3 + $0x1a0] sm:$0xff]
    %v94 = vld [vmem:[#allocation3 + $0x1a8] sm:$0xff]
    %v95 = vld [vmem:[#allocation3 + $0x1b0] sm:$0xff]
    %v96 = vld [vmem:[#allocation3 + $0x1b8] sm:$0xff]
    %v97 = vld [vmem:[#allocation3 + $0x1c0] sm:$0xff]
    %v98 = vld [vmem:[#allocation3 + $0x1c8] sm:$0xff]
    %v99 = vld [vmem:[#allocation3 + $0x1d0] sm:$0xff]
    %v100 = vld [vmem:[#allocation3 + $0x1d8] sm:$0xff]
    %v101 = vld [vmem:[#allocation3 + $0x1e0] sm:$0xff]
    %v102 = vld [vmem:[#allocation3 + $0x1e8] sm:$0xff]
    %v103 = vld [vmem:[#allocation3 + $0x1f0] sm:$0xff]
    %v104 = vld [vmem:[#allocation3 + $0x1f8] sm:$0xff]
    %v106 = vunpack.c.l.b16 %v40
    %v107 = vunpack.c.h.b16 %v40
    %v108 = vpack.c.b16 %v106, %v106
    %v109 = vpack.c.b16 %v107, %v107
    %v176 = vunpack.c.l.b16 %v41
    %v177 = vunpack.c.h.b16 %v41
    %v178 = vunpack.c.l.b16 %v42
    %v179 = vunpack.c.h.b16 %v42
    %v180 = vunpack.c.l.b16 %v43
    %v181 = vunpack.c.h.b16 %v43
    %v182 = vunpack.c.l.b16 %v44
    %v183 = vunpack.c.h.b16 %v44
    %v184 = vunpack.c.l.b16 %v45
    %v185 = vunpack.c.h.b16 %v45
    %v186 = vunpack.c.l.b16 %v46
    %v187 = vunpack.c.h.b16 %v46
    %v188 = vunpack.c.l.b16 %v47
    %v189 = vunpack.c.h.b16 %v47
    %v190 = vunpack.c.l.b16 %v48
    %v191 = vunpack.c.h.b16 %v48
    %v192 = vunpack.c.l.b16 %v49
    %v193 = vunpack.c.h.b16 %v49
    %v194 = vunpack.c.l.b16 %v50
    %v195 = vunpack.c.h.b16 %v50
    %v196 = vunpack.c.l.b16 %v51
    %v197 = vunpack.c.h.b16 %v51
    %v198 = vunpack.c.l.b16 %v52
    %v199 = vunpack.c.h.b16 %v52
    %v200 = vunpack.c.l.b16 %v53
    %v201 = vunpack.c.h.b16 %v53
    %v202 = vunpack.c.l.b16 %v54
    %v203 = vunpack.c.h.b16 %v54
    %v204 = vunpack.c.l.b16 %v55
    %v205 = vunpack.c.h.b16 %v55
    %v206 = vunpack.c.l.b16 %v56
    %v207 = vunpack.c.h.b16 %v56
    %v208 = vunpack.c.l.b16 %v57
    %v209 = vunpack.c.h.b16 %v57
    %v210 = vunpack.c.l.b16 %v58
    %v211 = vunpack.c.h.b16 %v58
    %v212 = vunpack.c.l.b16 %v59
    %v213 = vunpack.c.h.b16 %v59
    %v214 = vunpack.c.l.b16 %v60
    %v215 = vunpack.c.h.b16 %v60
    %v216 = vunpack.c.l.b16 %v61
    %v217 = vunpack.c.h.b16 %v61
    %v218 = vunpack.c.l.b16 %v62
    %v219 = vunpack.c.h.b16 %v62
    %v220 = vunpack.c.l.b16 %v63
    %v221 = vunpack.c.h.b16 %v63
    %v222 = vunpack.c.l.b16 %v64
    %v223 = vunpack.c.h.b16 %v64
    %v224 = vunpack.c.l.b16 %v65
    %v225 = vunpack.c.h.b16 %v65
    %v226 = vunpack.c.l.b16 %v66
    %v227 = vunpack.c.h.b16 %v66
    %v228 = vunpack.c.l.b16 %v67
    %v229 = vunpack.c.h.b16 %v67
    %v230 = vunpack.c.l.b16 %v68
    %v231 = vunpack.c.h.b16 %v68
    %v232 = vunpack.c.l.b16 %v69
    %v233 = vunpack.c.h.b16 %v69
    %v234 = vunpack.c.l.b16 %v70
    %v235 = vunpack.c.h.b16 %v70
    %v236 = vunpack.c.l.b16 %v71
    %v237 = vunpack.c.h.b16 %v71
    %v238 = vunpack.c.l.b16 %v72
    %v239 = vunpack.c.h.b16 %v72
    %v240 = vunpack.c.l.b16 %v73
    %v241 = vunpack.c.h.b16 %v73
    %v242 = vunpack.c.l.b16 %v74
    %v243 = vunpack.c.h.b16 %v74
    %v244 = vunpack.c.l.b16 %v75
    %v245 = vunpack.c.h.b16 %v75
    %v246 = vunpack.c.l.b16 %v76
    %v247 = vunpack.c.h.b16 %v76
    %v248 = vunpack.c.l.b16 %v77
    %v249 = vunpack.c.h.b16 %v77
    %v250 = vunpack.c.l.b16 %v78
    %v251 = vunpack.c.h.b16 %v78
    %v252 = vunpack.c.l.b16 %v79
    %v253 = vunpack.c.h.b16 %v79
    %v254 = vunpack.c.l.b16 %v80
    %v255 = vunpack.c.h.b16 %v80
    %v256 = vunpack.c.l.b16 %v81
    %v257 = vunpack.c.h.b16 %v81
    %v258 = vunpack.c.l.b16 %v82
    %v259 = vunpack.c.h.b16 %v82
    %v260 = vunpack.c.l.b16 %v83
    %v261 = vunpack.c.h.b16 %v83
    %v262 = vunpack.c.l.b16 %v84
    %v263 = vunpack.c.h.b16 %v84
    %v264 = vunpack.c.l.b16 %v85
    %v265 = vunpack.c.h.b16 %v85
    %v266 = vunpack.c.l.b16 %v86
    %v267 = vunpack.c.h.b16 %v86
    %v268 = vunpack.c.l.b16 %v87
    %v269 = vunpack.c.h.b16 %v87
    %v270 = vunpack.c.l.b16 %v88
    %v271 = vunpack.c.h.b16 %v88
    %v272 = vunpack.c.l.b16 %v89
    %v273 = vunpack.c.h.b16 %v89
    %v274 = vunpack.c.l.b16 %v90
    %v275 = vunpack.c.h.b16 %v90
    %v276 = vunpack.c.l.b16 %v91
    %v277 = vunpack.c.h.b16 %v91
    %v278 = vunpack.c.l.b16 %v92
    %v279 = vunpack.c.h.b16 %v92
    %v280 = vunpack.c.l.b16 %v93
    %v281 = vunpack.c.h.b16 %v93
    %v282 = vunpack.c.l.b16 %v94
    %v283 = vunpack.c.h.b16 %v94
    %v284 = vunpack.c.l.b16 %v95
    %v285 = vunpack.c.h.b16 %v95
    %v286 = vunpack.c.l.b16 %v96
    %v287 = vunpack.c.h.b16 %v96
    %v288 = vunpack.c.l.b16 %v97
    %v289 = vunpack.c.h.b16 %v97
    %v290 = vunpack.c.l.b16 %v98
    %v291 = vunpack.c.h.b16 %v98
    %v292 = vunpack.c.l.b16 %v99
    %v293 = vunpack.c.h.b16 %v99
    %v294 = vunpack.c.l.b16 %v100
    %v295 = vunpack.c.h.b16 %v100
    %v296 = vunpack.c.l.b16 %v101
    %v297 = vunpack.c.h.b16 %v101
    %v298 = vunpack.c.l.b16 %v102
    %v299 = vunpack.c.h.b16 %v102
    %v300 = vunpack.c.l.b16 %v103
    %v301 = vunpack.c.h.b16 %v103
    %v302 = vunpack.c.l.b16 %v104
    %v303 = vunpack.c.h.b16 %v104
    %v304 = vpack.c.b16 %v180, %v176
    %v305 = vpack.c.b16 %v181, %v177
    %v306 = vpack.c.b16 %v182, %v178
    %v307 = vpack.c.b16 %v183, %v179
    %v308 = vpack.c.b16 %v188, %v184
    %v309 = vpack.c.b16 %v189, %v185
    %v310 = vpack.c.b16 %v190, %v186
    %v311 = vpack.c.b16 %v191, %v187
    %v312 = vpack.c.b16 %v196, %v192
    %v313 = vpack.c.b16 %v197, %v193
    %v314 = vpack.c.b16 %v198, %v194
    %v315 = vpack.c.b16 %v199, %v195
    %v316 = vpack.c.b16 %v204, %v200
    %v317 = vpack.c.b16 %v205, %v201
    %v318 = vpack.c.b16 %v206, %v202
    %v319 = vpack.c.b16 %v207, %v203
    %v320 = vpack.c.b16 %v212, %v208
    %v321 = vpack.c.b16 %v213, %v209
    %v322 = vpack.c.b16 %v214, %v210
    %v323 = vpack.c.b16 %v215, %v211
    %v324 = vpack.c.b16 %v220, %v216
    %v325 = vpack.c.b16 %v221, %v217
    %v326 = vpack.c.b16 %v222, %v218
    %v327 = vpack.c.b16 %v223, %v219
    %v328 = vpack.c.b16 %v228, %v224
    %v329 = vpack.c.b16 %v229, %v225
    %v330 = vpack.c.b16 %v230, %v226
    %v331 = vpack.c.b16 %v231, %v227
    %v332 = vpack.c.b16 %v236, %v232
    %v333 = vpack.c.b16 %v237, %v233
    %v334 = vpack.c.b16 %v238, %v234
    %v335 = vpack.c.b16 %v239, %v235
    %v336 = vpack.c.b16 %v244, %v240
    %v337 = vpack.c.b16 %v245, %v241
    %v338 = vpack.c.b16 %v246, %v242
    %v339 = vpack.c.b16 %v247, %v243
    %v340 = vpack.c.b16 %v252, %v248
    %v341 = vpack.c.b16 %v253, %v249
    %v342 = vpack.c.b16 %v254, %v250
    %v343 = vpack.c.b16 %v255, %v251
    %v344 = vpack.c.b16 %v260, %v256
    %v345 = vpack.c.b16 %v261, %v257
    %v346 = vpack.c.b16 %v262, %v258
    %v347 = vpack.c.b16 %v263, %v259
    %v348 = vpack.c.b16 %v268, %v264
    %v349 = vpack.c.b16 %v269, %v265
    %v350 = vpack.c.b16 %v270, %v266
    %v351 = vpack.c.b16 %v271, %v267
    %v352 = vpack.c.b16 %v276, %v272
    %v353 = vpack.c.b16 %v277, %v273
    %v354 = vpack.c.b16 %v278, %v274
    %v355 = vpack.c.b16 %v279, %v275
    %v356 = vpack.c.b16 %v284, %v280
    %v357 = vpack.c.b16 %v285, %v281
    %v358 = vpack.c.b16 %v286, %v282
    %v359 = vpack.c.b16 %v287, %v283
    %v360 = vpack.c.b16 %v292, %v288
    %v361 = vpack.c.b16 %v293, %v289
    %v362 = vpack.c.b16 %v294, %v290
    %v363 = vpack.c.b16 %v295, %v291
    %v364 = vpack.c.b16 %v300, %v296
    %v365 = vpack.c.b16 %v301, %v297
    %v366 = vpack.c.b16 %v302, %v298
    %v367 = vpack.c.b16 %v303, %v299
    %432 = vmatprep.subr.bf16.mxu0 %v333
    %433 = vmatpush1.bf16.msra.mxu0 %v332
    %434 = vmatprep.subr.bf16.mxu0 %v329
    %435 = vmatpush1.bf16.msra.mxu0 %v328
    %436 = vmatprep.subr.bf16.mxu0 %v325
    %437 = vmatpush1.bf16.msra.mxu0 %v324
    %438 = vmatprep.subr.bf16.mxu0 %v321
    %439 = vmatpush1.bf16.msra.mxu0 %v320
    %440 = vmatprep.subr.bf16.mxu0 %v317
    %441 = vmatpush1.bf16.msra.mxu0 %v316
    %442 = vmatprep.subr.bf16.mxu0 %v313
    %443 = vmatpush1.bf16.msra.mxu0 %v312
    %444 = vmatprep.subr.bf16.mxu0 %v309
    %445 = vmatpush1.bf16.msra.mxu0 %v308
    %446 = vmatprep.subr.bf16.mxu0 %v305
    %447 = vmatpush1.bf16.msra.mxu0 %v304
    %448 = vmatprep.subr.bf16.mxu0 %v365
    %449 = vmatpush2.bf16.msra.mxu0 %v364
    %450 = vmatprep.subr.bf16.mxu0 %v361
    %451 = vmatpush2.bf16.msra.mxu0 %v360
    %452 = vmatprep.subr.bf16.mxu0 %v357
    %453 = vmatpush2.bf16.msra.mxu0 %v356
    %454 = vmatprep.subr.bf16.mxu0 %v353
    %455 = vmatpush2.bf16.msra.mxu0 %v352
    %456 = vmatprep.subr.bf16.mxu0 %v349
    %457 = vmatpush2.bf16.msra.mxu0 %v348
    %458 = vmatprep.subr.bf16.mxu0 %v345
    %459 = vmatpush2.bf16.msra.mxu0 %v344
    %460 = vmatprep.subr.bf16.mxu0 %v341
    %461 = vmatpush2.bf16.msra.mxu0 %v340
    %462 = vmatprep.subr.bf16.mxu0 %v337
    %463 = vmatpush2.bf16.msra.mxu0 %v336
    %464 = vmatprep.mubr.bf16.mxu0 %v109
    %465 = vmatmul.mubr.bf16.gmra.mxu0 %v108
    %v466 = vpop.f32.mrf.mxu0
    %v467 = vadd.f32 0.0, %v466
    %v468 = vpop.f32.mrf.mxu0
    %v469 = vadd.f32 0.0, %v468
    %v470 = vpop.f32.mrf.mxu0
    %v471 = vpop.f32.mrf.mxu0
    %472 = vdwg.mxu0
    %473 = vmatprep.subr.bf16.mxu0 %v335
    %474 = vmatpush1.bf16.msra.mxu0 %v334
    %475 = vmatprep.subr.bf16.mxu0 %v331
    %476 = vmatpush1.bf16.msra.mxu0 %v330
    %477 = vmatprep.subr.bf16.mxu0 %v327
    %478 = vmatpush1.bf16.msra.mxu0 %v326
    %479 = vmatprep.subr.bf16.mxu0 %v323
    %480 = vmatpush1.bf16.msra.mxu0 %v322
    %481 = vmatprep.subr.bf16.mxu0 %v319
    %482 = vmatpush1.bf16.msra.mxu0 %v318
    %483 = vmatprep.subr.bf16.mxu0 %v315
    %484 = vmatpush1.bf16.msra.mxu0 %v314
    %485 = vmatprep.subr.bf16.mxu0 %v311
    %486 = vmatpush1.bf16.msra.mxu0 %v310
    %487 = vmatprep.subr.bf16.mxu0 %v307
    %488 = vmatpush1.bf16.msra.mxu0 %v306
    %489 = vmatprep.subr.bf16.mxu0 %v367
    %490 = vmatpush2.bf16.msra.mxu0 %v366
    %491 = vmatprep.subr.bf16.mxu0 %v363
    %492 = vmatpush2.bf16.msra.mxu0 %v362
    %493 = vmatprep.subr.bf16.mxu0 %v359
    %494 = vmatpush2.bf16.msra.mxu0 %v358
    %495 = vmatprep.subr.bf16.mxu0 %v355
    %496 = vmatpush2.bf16.msra.mxu0 %v354
    %497 = vmatprep.subr.bf16.mxu0 %v351
    %498 = vmatpush2.bf16.msra.mxu0 %v350
    %499 = vmatprep.subr.bf16.mxu0 %v347
    %500 = vmatpush2.bf16.msra.mxu0 %v346
    %501 = vmatprep.subr.bf16.mxu0 %v343
    %502 = vmatpush2.bf16.msra.mxu0 %v342
    %503 = vmatprep.subr.bf16.mxu0 %v339
    %504 = vmatpush2.bf16.msra.mxu0 %v338
    %505 = vmatprep.mubr.bf16.mxu0 %v109
    %506 = vmatmul.mubr.bf16.gmra.mxu0 %v108
    %v507 = vpop.f32.mrf.mxu0
    %v508 = vadd.f32 0.0, %v507
    %v509 = vpop.f32.mrf.mxu0
    %v510 = vadd.f32 0.0, %v509
    %v511 = vpop.f32.mrf.mxu0
    %v512 = vpop.f32.mrf.mxu0
    %513 = vdwg.mxu0
    %v514 = vadd.f32 %v36, %v467
    %v515 = vadd.f32 %v37, %v469
    %v516 = vadd.f32 %v38, %v508
    %v517 = vadd.f32 %v39, %v510
    %518 = vst [vmem:[#allocation2] sm:$0xff] %v514
    %519 = vst [vmem:[#allocation2 + $0x8] sm:$0xff] %v515
    %520 = vst [vmem:[#allocation2 + $0x10] sm:$0xff] %v516
    %521 = vst [vmem:[#allocation2 + $0x18] sm:$0xff] %v517
    // Predicated region
    $region22: #{resnet_server_forward.21} parent=1 // pred_check
      %p522 = pneg %p28
    $region23: #{resnet_server_forward.21} parent=1 // pred_check_branch
      %524 = sbr.rel (%p522) target = $region25
    $region24: #{resnet_server_forward.21} parent=1 // pred_region
      %v525 = vld [vmem:[#allocation2] sm:$0xff]
      %v526 = vld [vmem:[#allocation2 + $0x8] sm:$0xff]
      %v527 = vld [vmem:[#allocation2 + $0x10] sm:$0xff]
      %v528 = vld [vmem:[#allocation2 + $0x18] sm:$0xff]
      %v529 = vld [vmem:[%s2] sm:$0xf]
      %v531 = vlaneseq
      %v532 = vshrl.u32 %v531, 7
      %v533 = vsub.s32 0, %v532
      %v534 = vrot.slane %v529, %v533
      %v535 = vlaneseq
      %v536 = vshrl.u32 %v535, 7
      %v537 = vsub.s32 1, %v536
      %v538 = vrot.slane %v529, %v537
      %v539 = vlaneseq
      %v540 = vshrl.u32 %v539, 7
      %v541 = vsub.s32 2, %v540
      %v542 = vrot.slane %v529, %v541
      %v543 = vlaneseq
      %v544 = vshrl.u32 %v543, 7
      %v545 = vsub.s32 3, %v544
      %v546 = vrot.slane %v529, %v545
      %v551 = vadd.f32 %v525, %v534
      %v552 = vadd.f32 %v526, %v538
      %v553 = vadd.f32 %v527, %v542
      %v554 = vadd.f32 %v528, %v546
      %v555 = vpack.c.bf16 %v551, %v551
      %v556 = vpack.c.bf16 %v552, %v552
      %v557 = vpack.c.bf16 %v553, %v553
      %v558 = vpack.c.bf16 %v554, %v554
      %v563 = vunpack.c.l.b16 %v555
      %v564 = vunpack.c.l.b16 %v556
      %v565 = vunpack.c.l.b16 %v557
      %v566 = vunpack.c.l.b16 %v558
      %v567 = vpack.c.b16 %v564, %v563
      %v568 = vpack.c.b16 %v566, %v565
      %571 = vst [vmem:[%s3] sm:$0xff] %v567
      %572 = vst [vmem:[%s3 + $0x8] sm:$0xff] %v568
    $region25: #{resnet_server_forward.21} parent=1 // pred_fallthru
      _
    // Predicated region
    $region26: #{resnet_server_forward.21} parent=1 // pred_check
      _
    $region27: #{resnet_server_forward.21} parent=1 // pred_check_branch
      %574 = sbr.rel (0) target = $region29
    $region28: #{resnet_server_forward.21} parent=1 // pred_region
      _
    $region29: #{resnet_server_forward.21} parent=1 // pred_fallthru
      _
    // Predicated region
    $region30: #{resnet_server_forward.21} parent=1 // pred_check
      _
    $region31: #{resnet_server_forward.21} parent=1 // pred_check_branch
      %576 = sbr.rel (0) target = $region33
    $region32: #{resnet_server_forward.21} parent=1 // pred_region
      _
    $region33: #{resnet_server_forward.21} parent=1 // pred_fallthru
      _
    %577 = vsyncpa [#allocation4], 1

// kernel: resnet_server_forward.23
$region0: #{resnet_server_forward.23}
  #allocation0 [shape = 'u32[]', space=smem, size = 0x4, offset = 0x4, fixed_abs, tag = 'smem constant byte address 0x4 - core index']
  #allocation1 [shape = 'u32[144,128]{1,0:T(1,128)}', space=vmem, size = 0x12000, scoped, tag = 'internal scratch']
  #allocation2 [shape = 'f32[8,128]{1,0:T(8,128)}', space=vmem, size = 0x1000, scoped, tag = 'scratch operand']
  %s0 = inlined_call_operand.vmem [shape: bf16[1,8,512], index: 0, kind: input, shape index: {}]
  %s1 = inlined_call_operand.vmem [shape: bf16[1,512,128], index: 1, kind: input, shape index: {}]
  %s2 = inlined_call_operand.vmem [shape: f32[1,128], index: 2, kind: input, shape index: {}]
  %s3 = inlined_call_operand.vmem [shape: f32[8,128], index: 3, kind: output, shape index: {}]
  %s4 = sld [smem:[#allocation0]]
  $region30: #{resnet_server_forward.23} parent=0
    _
  %s6 = ssub.s32 1, %s4
  %s7 = scalar_select 0, %s6, %s4
  // Predicated region
  $region2: #{resnet_server_forward.23} parent=0 // pred_check
    _
  $region3: #{resnet_server_forward.23} parent=0 // pred_check_branch
    %9 = sbr.rel (0) target = $region5
  $region4: #{resnet_server_forward.23} parent=0 // pred_region
    _
  $region5: #{resnet_server_forward.23} parent=0 // pred_fallthru
    _
  // Predicated region
  $region6: #{resnet_server_forward.23} parent=0 // pred_check
    _
  $region7: #{resnet_server_forward.23} parent=0 // pred_check_branch
    %11 = sbr.rel (0) target = $region9
  $region8: #{resnet_server_forward.23} parent=0 // pred_region
    _
  $region9: #{resnet_server_forward.23} parent=0 // pred_fallthru
    _
  // Predicated region
  $region10: #{resnet_server_forward.23} parent=0 // pred_check
    _
  $region11: #{resnet_server_forward.23} parent=0 // pred_check_branch
    %13 = sbr.rel (0) target = $region13
  $region12: #{resnet_server_forward.23} parent=0 // pred_region
    _
  $region13: #{resnet_server_forward.23} parent=0 // pred_fallthru
    _
  %p15 = scmp.eq.s32.totalorder 0, 0
  // Predicated region
  $region14: #{resnet_server_forward.23} parent=0 // pred_check
    %p16 = pneg %p15
  $region15: #{resnet_server_forward.23} parent=0 // pred_check_branch
    %18 = sbr.rel (%p16) target = $region17
  $region16: #{resnet_server_forward.23} parent=0 // pred_region
    %19 = vst [vmem:[#allocation2] sm:$0xff] 0.0
  $region17: #{resnet_server_forward.23} parent=0 // pred_fallthru
    _
  %v20 = vld [vmem:[#allocation2] sm:$0xff]
  %v21 = vld [vmem:[%s0] sm:$0xff]
  %v22 = vld [vmem:[%s0 + $0x8] sm:$0xff]
  %v23 = vld [vmem:[%s1] sm:$0xf]
  %v24 = vld [vmem:[%s1 + $0x4] sm:$0xf]
  %v25 = vld [vmem:[%s1 + $0x8] sm:$0xf]
  %v26 = vld [vmem:[%s1 + $0xc] sm:$0xf]
  %v27 = vld [vmem:[%s1 + $0x10] sm:$0xf]
  %v28 = vld [vmem:[%s1 + $0x14] sm:$0xf]
  %v29 = vld [vmem:[%s1 + $0x18] sm:$0xf]
  %v30 = vld [vmem:[%s1 + $0x1c] sm:$0xf]
  %v31 = vld [vmem:[%s1 + $0x20] sm:$0xf]
  %v32 = vld [vmem:[%s1 + $0x24] sm:$0xf]
  %v33 = vld [vmem:[%s1 + $0x28] sm:$0xf]
  %v34 = vld [vmem:[%s1 + $0x2c] sm:$0xf]
  %v35 = vld [vmem:[%s1 + $0x30] sm:$0xf]
  %v36 = vld [vmem:[%s1 + $0x34] sm:$0xf]
  %v37 = vld [vmem:[%s1 + $0x38] sm:$0xf]
  %v38 = vld [vmem:[%s1 + $0x3c] sm:$0xf]
  %v39 = vld [vmem:[%s1 + $0x40] sm:$0xf]
  %v40 = vld [vmem:[%s1 + $0x44] sm:$0xf]
  %v41 = vld [vmem:[%s1 + $0x48] sm:$0xf]
  %v42 = vld [vmem:[%s1 + $0x4c] sm:$0xf]
  %v43 = vld [vmem:[%s1 + $0x50] sm:$0xf]
  %v44 = vld [vmem:[%s1 + $0x54] sm:$0xf]
  %v45 = vld [vmem:[%s1 + $0x58] sm:$0xf]
  %v46 = vld [vmem:[%s1 + $0x5c] sm:$0xf]
  %v47 = vld [vmem:[%s1 + $0x60] sm:$0xf]
  %v48 = vld [vmem:[%s1 + $0x64] sm:$0xf]
  %v49 = vld [vmem:[%s1 + $0x68] sm:$0xf]
  %v50 = vld [vmem:[%s1 + $0x6c] sm:$0xf]
  %v51 = vld [vmem:[%s1 + $0x70] sm:$0xf]
  %v52 = vld [vmem:[%s1 + $0x74] sm:$0xf]
  %v53 = vld [vmem:[%s1 + $0x78] sm:$0xf]
  %v54 = vld [vmem:[%s1 + $0x7c] sm:$0xf]
  %v55 = vld [vmem:[%s1 + $0x80] sm:$0xf]
  %v56 = vld [vmem:[%s1 + $0x84] sm:$0xf]
  %v57 = vld [vmem:[%s1 + $0x88] sm:$0xf]
  %v58 = vld [vmem:[%s1 + $0x8c] sm:$0xf]
  %v59 = vld [vmem:[%s1 + $0x90] sm:$0xf]
  %v60 = vld [vmem:[%s1 + $0x94] sm:$0xf]
  %v61 = vld [vmem:[%s1 + $0x98] sm:$0xf]
  %v62 = vld [vmem:[%s1 + $0x9c] sm:$0xf]
  %v63 = vld [vmem:[%s1 + $0xa0] sm:$0xf]
  %v64 = vld [vmem:[%s1 + $0xa4] sm:$0xf]
  %v65 = vld [vmem:[%s1 + $0xa8] sm:$0xf]
  %v66 = vld [vmem:[%s1 + $0xac] sm:$0xf]
  %v67 = vld [vmem:[%s1 + $0xb0] sm:$0xf]
  %v68 = vld [vmem:[%s1 + $0xb4] sm:$0xf]
  %v69 = vld [vmem:[%s1 + $0xb8] sm:$0xf]
  %v70 = vld [vmem:[%s1 + $0xbc] sm:$0xf]
  %v71 = vld [vmem:[%s1 + $0xc0] sm:$0xf]
  %v72 = vld [vmem:[%s1 + $0xc4] sm:$0xf]
  %v73 = vld [vmem:[%s1 + $0xc8] sm:$0xf]
  %v74 = vld [vmem:[%s1 + $0xcc] sm:$0xf]
  %v75 = vld [vmem:[%s1 + $0xd0] sm:$0xf]
  %v76 = vld [vmem:[%s1 + $0xd4] sm:$0xf]
  %v77 = vld [vmem:[%s1 + $0xd8] sm:$0xf]
  %v78 = vld [vmem:[%s1 + $0xdc] sm:$0xf]
  %v79 = vld [vmem:[%s1 + $0xe0] sm:$0xf]
  %v80 = vld [vmem:[%s1 + $0xe4] sm:$0xf]
  %v81 = vld [vmem:[%s1 + $0xe8] sm:$0xf]
  %v82 = vld [vmem:[%s1 + $0xec] sm:$0xf]
  %v83 = vld [vmem:[%s1 + $0xf0] sm:$0xf]
  %v84 = vld [vmem:[%s1 + $0xf4] sm:$0xf]
  %v85 = vld [vmem:[%s1 + $0xf8] sm:$0xf]
  %v86 = vld [vmem:[%s1 + $0xfc] sm:$0xf]
  %v89 = vunpack.c.l.b16 %v21
  %v90 = vunpack.c.h.b16 %v21
  %v91 = vunpack.c.l.b16 %v22
  %v92 = vunpack.c.h.b16 %v22
  %v93 = vpack.c.b16 %v89, %v89
  %v94 = vpack.c.b16 %v90, %v90
  %v95 = vpack.c.b16 %v91, %v91
  %v96 = vpack.c.b16 %v92, %v92
  %v165 = vunpack.c.l.b16 %v23
  %v166 = vunpack.c.l.b16 %v24
  %v167 = vunpack.c.l.b16 %v25
  %v168 = vunpack.c.l.b16 %v26
  %v169 = vunpack.c.l.b16 %v27
  %v170 = vunpack.c.l.b16 %v28
  %v171 = vunpack.c.l.b16 %v29
  %v172 = vunpack.c.l.b16 %v30
  %v173 = vunpack.c.l.b16 %v31
  %v174 = vunpack.c.l.b16 %v32
  %v175 = vunpack.c.l.b16 %v33
  %v176 = vunpack.c.l.b16 %v34
  %v177 = vunpack.c.l.b16 %v35
  %v178 = vunpack.c.l.b16 %v36
  %v179 = vunpack.c.l.b16 %v37
  %v180 = vunpack.c.l.b16 %v38
  %v181 = vunpack.c.l.b16 %v39
  %v182 = vunpack.c.l.b16 %v40
  %v183 = vunpack.c.l.b16 %v41
  %v184 = vunpack.c.l.b16 %v42
  %v185 = vunpack.c.l.b16 %v43
  %v186 = vunpack.c.l.b16 %v44
  %v187 = vunpack.c.l.b16 %v45
  %v188 = vunpack.c.l.b16 %v46
  %v189 = vunpack.c.l.b16 %v47
  %v190 = vunpack.c.l.b16 %v48
  %v191 = vunpack.c.l.b16 %v49
  %v192 = vunpack.c.l.b16 %v50
  %v193 = vunpack.c.l.b16 %v51
  %v194 = vunpack.c.l.b16 %v52
  %v195 = vunpack.c.l.b16 %v53
  %v196 = vunpack.c.l.b16 %v54
  %v197 = vunpack.c.l.b16 %v55
  %v198 = vunpack.c.l.b16 %v56
  %v199 = vunpack.c.l.b16 %v57
  %v200 = vunpack.c.l.b16 %v58
  %v201 = vunpack.c.l.b16 %v59
  %v202 = vunpack.c.l.b16 %v60
  %v203 = vunpack.c.l.b16 %v61
  %v204 = vunpack.c.l.b16 %v62
  %v205 = vunpack.c.l.b16 %v63
  %v206 = vunpack.c.l.b16 %v64
  %v207 = vunpack.c.l.b16 %v65
  %v208 = vunpack.c.l.b16 %v66
  %v209 = vunpack.c.l.b16 %v67
  %v210 = vunpack.c.l.b16 %v68
  %v211 = vunpack.c.l.b16 %v69
  %v212 = vunpack.c.l.b16 %v70
  %v213 = vunpack.c.l.b16 %v71
  %v214 = vunpack.c.l.b16 %v72
  %v215 = vunpack.c.l.b16 %v73
  %v216 = vunpack.c.l.b16 %v74
  %v217 = vunpack.c.l.b16 %v75
  %v218 = vunpack.c.l.b16 %v76
  %v219 = vunpack.c.l.b16 %v77
  %v220 = vunpack.c.l.b16 %v78
  %v221 = vunpack.c.l.b16 %v79
  %v222 = vunpack.c.l.b16 %v80
  %v223 = vunpack.c.l.b16 %v81
  %v224 = vunpack.c.l.b16 %v82
  %v225 = vunpack.c.l.b16 %v83
  %v226 = vunpack.c.l.b16 %v84
  %v227 = vunpack.c.l.b16 %v85
  %v228 = vunpack.c.l.b16 %v86
  %v229 = vpack.c.b16 %v166, %v165
  %v230 = vpack.c.b16 %v168, %v167
  %v231 = vpack.c.b16 %v170, %v169
  %v232 = vpack.c.b16 %v172, %v171
  %v233 = vpack.c.b16 %v174, %v173
  %v234 = vpack.c.b16 %v176, %v175
  %v235 = vpack.c.b16 %v178, %v177
  %v236 = vpack.c.b16 %v180, %v179
  %v237 = vpack.c.b16 %v182, %v181
  %v238 = vpack.c.b16 %v184, %v183
  %v239 = vpack.c.b16 %v186, %v185
  %v240 = vpack.c.b16 %v188, %v187
  %v241 = vpack.c.b16 %v190, %v189
  %v242 = vpack.c.b16 %v192, %v191
  %v243 = vpack.c.b16 %v194, %v193
  %v244 = vpack.c.b16 %v196, %v195
  %v245 = vpack.c.b16 %v198, %v197
  %v246 = vpack.c.b16 %v200, %v199
  %v247 = vpack.c.b16 %v202, %v201
  %v248 = vpack.c.b16 %v204, %v203
  %v249 = vpack.c.b16 %v206, %v205
  %v250 = vpack.c.b16 %v208, %v207
  %v251 = vpack.c.b16 %v210, %v209
  %v252 = vpack.c.b16 %v212, %v211
  %v253 = vpack.c.b16 %v214, %v213
  %v254 = vpack.c.b16 %v216, %v215
  %v255 = vpack.c.b16 %v218, %v217
  %v256 = vpack.c.b16 %v220, %v219
  %v257 = vpack.c.b16 %v222, %v221
  %v258 = vpack.c.b16 %v224, %v223
  %v259 = vpack.c.b16 %v226, %v225
  %v260 = vpack.c.b16 %v228, %v227
  %293 = vmatprep.subr.bf16.mxu0 0
  %294 = vmatpush1.bf16.msra.mxu0 %v236
  %295 = vmatprep.subr.bf16.mxu0 0
  %296 = vmatpush1.bf16.msra.mxu0 %v235
  %297 = vmatprep.subr.bf16.mxu0 0
  %298 = vmatpush1.bf16.msra.mxu0 %v234
  %299 = vmatprep.subr.bf16.mxu0 0
  %300 = vmatpush1.bf16.msra.mxu0 %v233
  %301 = vmatprep.subr.bf16.mxu0 0
  %302 = vmatpush1.bf16.msra.mxu0 %v232
  %303 = vmatprep.subr.bf16.mxu0 0
  %304 = vmatpush1.bf16.msra.mxu0 %v231
  %305 = vmatprep.subr.bf16.mxu0 0
  %306 = vmatpush1.bf16.msra.mxu0 %v230
  %307 = vmatprep.subr.bf16.mxu0 0
  %308 = vmatpush1.bf16.msra.mxu0 %v229
  %309 = vmatprep.subr.bf16.mxu0 0
  %310 = vmatpush2.bf16.msra.mxu0 %v244
  %311 = vmatprep.subr.bf16.mxu0 0
  %312 = vmatpush2.bf16.msra.mxu0 %v243
  %313 = vmatprep.subr.bf16.mxu0 0
  %314 = vmatpush2.bf16.msra.mxu0 %v242
  %315 = vmatprep.subr.bf16.mxu0 0
  %316 = vmatpush2.bf16.msra.mxu0 %v241
  %317 = vmatprep.subr.bf16.mxu0 0
  %318 = vmatpush2.bf16.msra.mxu0 %v240
  %319 = vmatprep.subr.bf16.mxu0 0
  %320 = vmatpush2.bf16.msra.mxu0 %v239
  %321 = vmatprep.subr.bf16.mxu0 0
  %322 = vmatpush2.bf16.msra.mxu0 %v238
  %323 = vmatprep.subr.bf16.mxu0 0
  %324 = vmatpush2.bf16.msra.mxu0 %v237
  %325 = vmatprep.mubr.bf16.mxu0 %v94
  %326 = vmatmul.mubr.bf16.gmra.mxu0 %v93
  %v327 = vpop.f32.mrf.mxu0
  %v328 = vadd.f32 0.0, %v327
  %v329 = vpop.f32.mrf.mxu0
  %v330 = vpop.f32.mrf.mxu0
  %v331 = vpop.f32.mrf.mxu0
  %332 = vdwg.mxu0
  %333 = vmatprep.subr.bf16.mxu0 0
  %334 = vmatpush1.bf16.msra.mxu0 %v252
  %335 = vmatprep.subr.bf16.mxu0 0
  %336 = vmatpush1.bf16.msra.mxu0 %v251
  %337 = vmatprep.subr.bf16.mxu0 0
  %338 = vmatpush1.bf16.msra.mxu0 %v250
  %339 = vmatprep.subr.bf16.mxu0 0
  %340 = vmatpush1.bf16.msra.mxu0 %v249
  %341 = vmatprep.subr.bf16.mxu0 0
  %342 = vmatpush1.bf16.msra.mxu0 %v248
  %343 = vmatprep.subr.bf16.mxu0 0
  %344 = vmatpush1.bf16.msra.mxu0 %v247
  %345 = vmatprep.subr.bf16.mxu0 0
  %346 = vmatpush1.bf16.msra.mxu0 %v246
  %347 = vmatprep.subr.bf16.mxu0 0
  %348 = vmatpush1.bf16.msra.mxu0 %v245
  %349 = vmatprep.subr.bf16.mxu0 0
  %350 = vmatpush2.bf16.msra.mxu0 %v260
  %351 = vmatprep.subr.bf16.mxu0 0
  %352 = vmatpush2.bf16.msra.mxu0 %v259
  %353 = vmatprep.subr.bf16.mxu0 0
  %354 = vmatpush2.bf16.msra.mxu0 %v258
  %355 = vmatprep.subr.bf16.mxu0 0
  %356 = vmatpush2.bf16.msra.mxu0 %v257
  %357 = vmatprep.subr.bf16.mxu0 0
  %358 = vmatpush2.bf16.msra.mxu0 %v256
  %359 = vmatprep.subr.bf16.mxu0 0
  %360 = vmatpush2.bf16.msra.mxu0 %v255
  %361 = vmatprep.subr.bf16.mxu0 0
  %362 = vmatpush2.bf16.msra.mxu0 %v254
  %363 = vmatprep.subr.bf16.mxu0 0
  %364 = vmatpush2.bf16.msra.mxu0 %v253
  %365 = vmatprep.mubr.bf16.mxu0 %v96
  %366 = vmatmul.mubr.bf16.gmra.mxu0 %v95
  %v367 = vpop.f32.mrf.mxu0
  %v368 = vadd.f32 %v328, %v367
  %v369 = vpop.f32.mrf.mxu0
  %v370 = vpop.f32.mrf.mxu0
  %v371 = vpop.f32.mrf.mxu0
  %372 = vdwg.mxu0
  %v373 = vadd.f32 %v20, %v368
  %374 = vst [vmem:[#allocation2] sm:$0xff] %v373
  // Predicated region
  $region18: #{resnet_server_forward.23} parent=0 // pred_check
    %p375 = pneg %p15
  $region19: #{resnet_server_forward.23} parent=0 // pred_check_branch
    %377 = sbr.rel (%p375) target = $region21
  $region20: #{resnet_server_forward.23} parent=0 // pred_region
    %v378 = vld [vmem:[#allocation2] sm:$0xff]
    %v379 = vld [vmem:[%s2] sm:$0x1]
    %v381 = vlaneseq
    %v382 = vshrl.u32 %v381, 7
    %v383 = vsub.s32 0, %v382
    %v384 = vrot.slane %v379, %v383
    %v386 = vadd.f32 %v378, %v384
    %387 = vst [vmem:[%s3] sm:$0xff] %v386
  $region21: #{resnet_server_forward.23} parent=0 // pred_fallthru
    _
  // Predicated region
  $region22: #{resnet_server_forward.23} parent=0 // pred_check
    _
  $region23: #{resnet_server_forward.23} parent=0 // pred_check_branch
    %389 = sbr.rel (0) target = $region25
  $region24: #{resnet_server_forward.23} parent=0 // pred_region
    _
  $region25: #{resnet_server_forward.23} parent=0 // pred_fallthru
    _
  // Predicated region
  $region26: #{resnet_server_forward.23} parent=0 // pred_check
    _
  $region27: #{resnet_server_forward.23} parent=0 // pred_check_branch
    %391 = sbr.rel (0) target = $region29
  $region28: #{resnet_server_forward.23} parent=0 // pred_region
    _
  $region29: #{resnet_server_forward.23} parent=0 // pred_fallthru
    _

// kernel: resnet_server_forward.22
$region0: #{resnet_server_forward.22}
  #allocation0 [shape = 'u32[]', space=smem, size = 0x4, offset = 0x4, fixed_abs, tag = 'smem constant byte address 0x4 - core index']
  #allocation1 [shape = 'u32[144,128]{1,0:T(1,128)}', space=vmem, size = 0x12000, scoped, tag = 'internal scratch']
  #allocation2 [shape = 'f32[8,512]{1,0:T(8,128)}', space=vmem, size = 0x4000, scoped, tag = 'scratch operand']
  %s0 = inlined_call_operand.vmem [shape: bf16[9,8,512], index: 0, kind: input, shape index: {}]
  %s1 = inlined_call_operand.vmem [shape: bf16[9,512,512], index: 1, kind: input, shape index: {}]
  %s2 = inlined_call_operand.vmem [shape: f32[1,512], index: 2, kind: input, shape index: {}]
  %s3 = inlined_call_operand.vmem [shape: bf16[8,512], index: 3, kind: input, shape index: {}]
  %s4 = inlined_call_operand.vmem [shape: bf16[8,512], index: 4, kind: output, shape index: {}]
  %s5 = sld [smem:[#allocation0]]
  $region57: #{resnet_server_forward.22} parent=0
    _
  %s7 = ssub.s32 1, %s5
  %s8 = scalar_select 0, %s7, %s5
  loop: start=0, step=1, limit=11
  $region2: #{resnet_server_forward.22} parent=0 // loop_pre_header
    _
  $region3: #{resnet_server_forward.22} parent=0 // loop_header
    %s10 = sphi 0, %s14
    %p11 = scmp.ge.s32.totalorder %s10, 11
    %s17 = sphi 0, %s29
    %s18 = sphi 0, %s25
    %s19 = sphi 0, %s17
    %s20 = sphi 0, %s18
    %s21 = sphi 0, %s19
    %s22 = sphi 0, %s20
    %s34 = sphi 0, %s36
    %s37 = sphi 0, %s34
    %s38 = sphi 0, %s37
    %s54 = sphi 0, %s38
    %s60 = sphi 0, %s62
    %s63 = sphi 0, %s60
    %s64 = sphi 0, %s63
    %s80 = sphi 0, %s64
    %s84 = sphi 0, %s84
    %s86 = sphi 0, %s84
    %s87 = sphi 0, %s86
    %s101 = sphi 0, %s87
    %s107 = sphi 0, %s109
    %s110 = sphi 0, %s107
    %s111 = sphi 0, %s110
    %s127 = sphi 0, %s111
    %s133 = sphi 0, %s135
    %s136 = sphi 0, %s133
    %s137 = sphi 0, %s136
    %s153 = sphi 0, %s137
  $region4: #{resnet_server_forward.22} parent=0 // loop_header_branch
    %13 = sbr.rel (%p11) target = $region8
  $region5: #{resnet_server_forward.22} parent=0 // loop_body
    %s15 = ssub.s32 %s10, 1
    %s16 = ssub.s32 %s10, 2
    %s23 = sadd.s32 1, %s18
    %p24 = scmp.ge.s32.totalorder %s23, 9
    %s25 = scalar_select %p24, 0, %s23
    %s26 = sadd.s32 1, %s17
    %s27 = scalar_select %p24, %s26, %s17
    %p28 = scmp.ge.s32.totalorder %s27, 1
    %s29 = scalar_select %p28, 0, %s27
    %s30 = ssub.s32 %s18, %s25
    %s31 = ssub.s32 %s17, %s29
    %s32 = sor.u32 %s30, %s31
    %p33 = scmp.eq.s32.totalorder %s32, 0
    %s35 = sadd.s32 %s34, 1
    %s36 = scalar_select %p33, %s34, %s35
    %p39 = pneg %p33
    %p40 = scmp.eq.s32.totalorder %s10, 8
    %p41 = por %p39, %p40
    %p42 = scmp.ne.s32.totalorder %s34, %s37
    %p43 = scmp.eq.s32.totalorder %s10, 0
    %p44 = por %p42, %p43
    %p45 = scmp.ne.s32.totalorder %s34, %s37
    %p46 = scmp.eq.s32.totalorder %s15, 8
    %p47 = por %p45, %p46
    %p48 = scmp.ne.s32.totalorder %s37, %s38
    %p49 = scmp.eq.s32.totalorder %s15, 0
    %p50 = por %p48, %p49
    %p51 = scmp.ne.s32.totalorder %s37, %s38
    %p52 = scmp.eq.s32.totalorder %s16, 8
    %p53 = por %p51, %p52
    %p55 = scmp.ne.s32.totalorder %s38, %s54
    %p56 = scmp.eq.s32.totalorder %s16, 0
    %p57 = por %p55, %p56
    %s58 = ssub.s32 %s18, %s25
    %p59 = scmp.eq.s32.totalorder %s58, 0
    %s61 = sadd.s32 %s60, 1
    %s62 = scalar_select %p59, %s60, %s61
    %p65 = pneg %p59
    %p66 = scmp.eq.s32.totalorder %s10, 8
    %p67 = por %p65, %p66
    %p68 = scmp.ne.s32.totalorder %s60, %s63
    %p69 = scmp.eq.s32.totalorder %s10, 0
    %p70 = por %p68, %p69
    %p71 = scmp.ne.s32.totalorder %s60, %s63
    %p72 = scmp.eq.s32.totalorder %s15, 8
    %p73 = por %p71, %p72
    %p74 = scmp.ne.s32.totalorder %s63, %s64
    %p75 = scmp.eq.s32.totalorder %s15, 0
    %p76 = por %p74, %p75
    %p77 = scmp.ne.s32.totalorder %s63, %s64
    %p78 = scmp.eq.s32.totalorder %s16, 8
    %p79 = por %p77, %p78
    %p81 = scmp.ne.s32.totalorder %s64, %s80
    %p82 = scmp.eq.s32.totalorder %s16, 0
    %p83 = por %p81, %p82
    %s85 = sadd.s32 %s84, 1
    %p88 = scmp.eq.s32.totalorder %s10, 8
    %p89 = scmp.ne.s32.totalorder %s84, %s86
    %p90 = scmp.eq.s32.totalorder %s10, 0
    %p91 = por %p89, %p90
    %p92 = scmp.ne.s32.totalorder %s84, %s86
    %p93 = scmp.eq.s32.totalorder %s15, 8
    %p94 = por %p92, %p93
    %p95 = scmp.ne.s32.totalorder %s86, %s87
    %p96 = scmp.eq.s32.totalorder %s15, 0
    %p97 = por %p95, %p96
    %p98 = scmp.ne.s32.totalorder %s86, %s87
    %p99 = scmp.eq.s32.totalorder %s16, 8
    %p100 = por %p98, %p99
    %p102 = scmp.ne.s32.totalorder %s87, %s101
    %p103 = scmp.eq.s32.totalorder %s16, 0
    %p104 = por %p102, %p103
    %s105 = ssub.s32 %s17, %s29
    %p106 = scmp.eq.s32.totalorder %s105, 0
    %s108 = sadd.s32 %s107, 1
    %s109 = scalar_select %p106, %s107, %s108
    %p112 = pneg %p106
    %p113 = scmp.eq.s32.totalorder %s10, 8
    %p114 = por %p112, %p113
    %p115 = scmp.ne.s32.totalorder %s107, %s110
    %p116 = scmp.eq.s32.totalorder %s10, 0
    %p117 = por %p115, %p116
    %p118 = scmp.ne.s32.totalorder %s107, %s110
    %p119 = scmp.eq.s32.totalorder %s15, 8
    %p120 = por %p118, %p119
    %p121 = scmp.ne.s32.totalorder %s110, %s111
    %p122 = scmp.eq.s32.totalorder %s15, 0
    %p123 = por %p121, %p122
    %p124 = scmp.ne.s32.totalorder %s110, %s111
    %p125 = scmp.eq.s32.totalorder %s16, 8
    %p126 = por %p124, %p125
    %p128 = scmp.ne.s32.totalorder %s111, %s127
    %p129 = scmp.eq.s32.totalorder %s16, 0
    %p130 = por %p128, %p129
    %s131 = ssub.s32 %s17, %s29
    %p132 = scmp.eq.s32.totalorder %s131, 0
    %s134 = sadd.s32 %s133, 1
    %s135 = scalar_select %p132, %s133, %s134
    %p138 = pneg %p132
    %p139 = scmp.eq.s32.totalorder %s10, 8
    %p140 = por %p138, %p139
    %p141 = scmp.ne.s32.totalorder %s133, %s136
    %p142 = scmp.eq.s32.totalorder %s10, 0
    %p143 = por %p141, %p142
    %p144 = scmp.ne.s32.totalorder %s133, %s136
    %p145 = scmp.eq.s32.totalorder %s15, 8
    %p146 = por %p144, %p145
    %p147 = scmp.ne.s32.totalorder %s136, %s137
    %p148 = scmp.eq.s32.totalorder %s15, 0
    %p149 = por %p147, %p148
    %p150 = scmp.ne.s32.totalorder %s136, %s137
    %p151 = scmp.eq.s32.totalorder %s16, 8
    %p152 = por %p150, %p151
    %p154 = scmp.ne.s32.totalorder %s137, %s153
    %p155 = scmp.eq.s32.totalorder %s16, 0
    %p156 = por %p154, %p155
    %p157 = scmp.le.s32.totalorder 1, %s10
    %p158 = scmp.lt.s32.totalorder %s10, 10
    %p159 = pnand %p157, %p158
    %p160 = pneg %p159
    // Predicated region
    $region9: #{resnet_server_forward.22} parent=5 // pred_check
      _
    $region10: #{resnet_server_forward.22} parent=5 // pred_check_branch
      %162 = sbr.rel (%p159) target = $region12
    $region11: #{resnet_server_forward.22} parent=5 // pred_region
      %s163 = ssub.s32 %s10, 1
      // Predicated region
      $region13: #{resnet_server_forward.22} parent=11 // pred_check
        %p164 = pneg %p97
      $region14: #{resnet_server_forward.22} parent=11 // pred_check_branch
        %166 = sbr.rel (%p164) target = $region16
      $region15: #{resnet_server_forward.22} parent=11 // pred_region
        _
      $region16: #{resnet_server_forward.22} parent=11 // pred_fallthru
        _
      // Predicated region
      $region17: #{resnet_server_forward.22} parent=11 // pred_check
        %p167 = pneg %p123
      $region18: #{resnet_server_forward.22} parent=11 // pred_check_branch
        %169 = sbr.rel (%p167) target = $region20
      $region19: #{resnet_server_forward.22} parent=11 // pred_region
        %p170 = scmp.lt.s32.totalorder %s19, 0
        %s171 = scalar_select %p170, %s19, 0
        %s172 = smul.addr %s171, 4
        %s173 = smul.addr %s172, 4
        %s174 = scalar_lea.vmem %s3, %s173
      $region20: #{resnet_server_forward.22} parent=11 // pred_fallthru
        _
    $region12: #{resnet_server_forward.22} parent=5 // pred_fallthru
      _
    %p175 = scmp.lt.s32.totalorder %s10, 9
    // Predicated region
    $region21: #{resnet_server_forward.22} parent=5 // pred_check
      %p176 = pneg %p175
    $region22: #{resnet_server_forward.22} parent=5 // pred_check_branch
      %178 = sbr.rel (%p176) target = $region24
    $region23: #{resnet_server_forward.22} parent=5 // pred_region
      // Predicated region
      $region25: #{resnet_server_forward.22} parent=23 // pred_check
        %p179 = pneg %p44
      $region26: #{resnet_server_forward.22} parent=23 // pred_check_branch
        %181 = sbr.rel (%p179) target = $region28
      $region27: #{resnet_server_forward.22} parent=23 // pred_region
        %p182 = scmp.lt.s32.totalorder %s18, 8
        %s183 = scalar_select %p182, %s18, 8
        %p184 = scmp.lt.s32.totalorder %s17, 0
        %s185 = scalar_select %p184, %s17, 0
        %s186 = smul.addr %s185, 4
        %s187 = smul.addr %s183, 4
        %s188 = sadd.s32 %s186, %s187
        %s189 = smul.addr %s188, 4
        %s190 = scalar_lea.vmem %s0, %s189
      $region28: #{resnet_server_forward.22} parent=23 // pred_fallthru
        _
      // Predicated region
      $region29: #{resnet_server_forward.22} parent=23 // pred_check
        %p191 = pneg %p70
      $region30: #{resnet_server_forward.22} parent=23 // pred_check_branch
        %193 = sbr.rel (%p191) target = $region32
      $region31: #{resnet_server_forward.22} parent=23 // pred_region
        %p194 = scmp.lt.s32.totalorder %s18, 8
        %s195 = scalar_select %p194, %s18, 8
        %s196 = smul.addr %s195, 256
        %s197 = smul.addr %s196, 4
        %s198 = scalar_lea.vmem %s1, %s197
      $region32: #{resnet_server_forward.22} parent=23 // pred_fallthru
        _
    $region24: #{resnet_server_forward.22} parent=5 // pred_fallthru
      _
    %p199 = scmp.le.s32.totalorder 1, %s10
    %p200 = scmp.lt.s32.totalorder %s10, 10
    %p201 = pnand %p199, %p200
    %p202 = pneg %p201
    // Predicated region
    $region33: #{resnet_server_forward.22} parent=5 // pred_check
      _
    $region34: #{resnet_server_forward.22} parent=5 // pred_check_branch
      %204 = sbr.rel (%p201) target = $region36
    $region35: #{resnet_server_forward.22} parent=5 // pred_region
      %s205 = ssub.s32 %s10, 1
      %p206 = scmp.lt.s32.totalorder %s20, 8
      %s207 = scalar_select %p206, %s20, 8
      %p208 = scmp.lt.s32.totalorder %s19, 0
      %s209 = scalar_select %p208, %s19, 0
      %s210 = smul.addr %s209, 4
      %s211 = smul.addr %s207, 4
      %s212 = sadd.s32 %s210, %s211
      %s213 = smul.addr %s212, 4
      %s214 = scalar_lea.vmem %s0, %s213
      %p215 = pneg %p50
      %p216 = pneg %p47
      %p217 = scmp.lt.s32.totalorder %s20, 8
      %s218 = scalar_select %p217, %s20, 8
      %s219 = smul.addr %s218, 256
      %s220 = smul.addr %s219, 4
      %s221 = scalar_lea.vmem %s1, %s220
      %p222 = pneg %p76
      %p223 = pneg %p73
      %p224 = pneg %p97
      %p225 = pneg %p94
      %p226 = scmp.lt.s32.totalorder %s19, 0
      %s227 = scalar_select %p226, %s19, 0
      %s228 = smul.addr %s227, 4
      %s229 = smul.addr %s228, 4
      %s230 = scalar_lea.vmem %s3, %s229
      %p231 = pneg %p123
      %p232 = pneg %p120
      %p233 = pneg %p149
      %p234 = pneg %p146
      %p235 = scmp.lt.s32.totalorder %s19, 0
      %s236 = scalar_select %p235, %s19, 0
      %s237 = smul.addr %s236, 4
      %s238 = smul.addr %s237, 4
      %s239 = scalar_lea.vmem %s4, %s238
      %p240 = scmp.lt.s32.totalorder %s20, 8
      %s241 = scalar_select %p240, %s20, 8
      %p242 = scmp.lt.s32.totalorder %s19, 0
      %s243 = scalar_select %p242, %s19, 0
      %s244 = smul.addr %s243, 4
      %s245 = smul.addr %s241, 4
      %s246 = sadd.s32 %s244, %s245
      %s247 = smul.addr %s246, 4
      %s248 = scalar_lea.vmem %s0, %s247
      %p249 = scmp.lt.s32.totalorder %s20, 8
      %s250 = scalar_select %p249, %s20, 8
      %s251 = smul.addr %s250, 256
      %s252 = smul.addr %s251, 4
      %s253 = scalar_lea.vmem %s1, %s252
      %p254 = scmp.lt.s32.totalorder %s19, 0
      %s255 = scalar_select %p254, %s19, 0
      %s256 = smul.addr %s255, 4
      %s257 = smul.addr %s256, 4
      %s258 = scalar_lea.vmem %s3, %s257
      %p259 = scmp.lt.s32.totalorder %s19, 0
      %s260 = scalar_select %p259, %s19, 0
      %s261 = smul.addr %s260, 4
      %s262 = smul.addr %s261, 4
      %s263 = scalar_lea.vmem %s4, %s262
      %p264 = scmp.eq.s32.totalorder %s20, 0
      // Predicated region
      $region37: #{resnet_server_forward.22} parent=35 // pred_check
        %p265 = pneg %p264
      $region38: #{resnet_server_forward.22} parent=35 // pred_check_branch
        %267 = sbr.rel (%p265) target = $region40
      $region39: #{resnet_server_forward.22} parent=35 // pred_region
        %268 = vst [vmem:[#allocation2] sm:$0xff] 0.0
        %269 = vst [vmem:[#allocation2 + $0x8] sm:$0xff] 0.0
        %270 = vst [vmem:[#allocation2 + $0x10] sm:$0xff] 0.0
        %271 = vst [vmem:[#allocation2 + $0x18] sm:$0xff] 0.0
      $region40: #{resnet_server_forward.22} parent=35 // pred_fallthru
        _
      %v272 = vld [vmem:[#allocation2] sm:$0xff]
      %v273 = vld [vmem:[#allocation2 + $0x8] sm:$0xff]
      %v274 = vld [vmem:[#allocation2 + $0x10] sm:$0xff]
      %v275 = vld [vmem:[#allocation2 + $0x18] sm:$0xff]
      %v276 = vld [vmem:[%s248] sm:$0xff]
      %v277 = vld [vmem:[%s248 + $0x8] sm:$0xff]
      %v278 = vld [vmem:[%s253] sm:$0xff]
      %v279 = vld [vmem:[%s253 + $0x8] sm:$0xff]
      %v280 = vld [vmem:[%s253 + $0x10] sm:$0xff]
      %v281 = vld [vmem:[%s253 + $0x18] sm:$0xff]
      %v282 = vld [vmem:[%s253 + $0x20] sm:$0xff]
      %v283 = vld [vmem:[%s253 + $0x28] sm:$0xff]
      %v284 = vld [vmem:[%s253 + $0x30] sm:$0xff]
      %v285 = vld [vmem:[%s253 + $0x38] sm:$0xff]
      %v286 = vld [vmem:[%s253 + $0x40] sm:$0xff]
      %v287 = vld [vmem:[%s253 + $0x48] sm:$0xff]
      %v288 = vld [vmem:[%s253 + $0x50] sm:$0xff]
      %v289 = vld [vmem:[%s253 + $0x58] sm:$0xff]
      %v290 = vld [vmem:[%s253 + $0x60] sm:$0xff]
      %v291 = vld [vmem:[%s253 + $0x68] sm:$0xff]
      %v292 = vld [vmem:[%s253 + $0x70] sm:$0xff]
      %v293 = vld [vmem:[%s253 + $0x78] sm:$0xff]
      %v294 = vld [vmem:[%s253 + $0x80] sm:$0xff]
      %v295 = vld [vmem:[%s253 + $0x88] sm:$0xff]
      %v296 = vld [vmem:[%s253 + $0x90] sm:$0xff]
      %v297 = vld [vmem:[%s253 + $0x98] sm:$0xff]
      %v298 = vld [vmem:[%s253 + $0xa0] sm:$0xff]
      %v299 = vld [vmem:[%s253 + $0xa8] sm:$0xff]
      %v300 = vld [vmem:[%s253 + $0xb0] sm:$0xff]
      %v301 = vld [vmem:[%s253 + $0xb8] sm:$0xff]
      %v302 = vld [vmem:[%s253 + $0xc0] sm:$0xff]
      %v303 = vld [vmem:[%s253 + $0xc8] sm:$0xff]
      %v304 = vld [vmem:[%s253 + $0xd0] sm:$0xff]
      %v305 = vld [vmem:[%s253 + $0xd8] sm:$0xff]
      %v306 = vld [vmem:[%s253 + $0xe0] sm:$0xff]
      %v307 = vld [vmem:[%s253 + $0xe8] sm:$0xff]
      %v308 = vld [vmem:[%s253 + $0xf0] sm:$0xff]
      %v309 = vld [vmem:[%s253 + $0xf8] sm:$0xff]
      %v310 = vld [vmem:[%s253 + $0x100] sm:$0xff]
      %v311 = vld [vmem:[%s253 + $0x108] sm:$0xff]
      %v312 = vld [vmem:[%s253 + $0x110] sm:$0xff]
      %v313 = vld [vmem:[%s253 + $0x118] sm:$0xff]
      %v314 = vld [vmem:[%s253 + $0x120] sm:$0xff]
      %v315 = vld [vmem:[%s253 + $0x128] sm:$0xff]
      %v316 = vld [vmem:[%s253 + $0x130] sm:$0xff]
      %v317 = vld [vmem:[%s253 + $0x138] sm:$0xff]
      %v318 = vld [vmem:[%s253 + $0x140] sm:$0xff]
      %v319 = vld [vmem:[%s253 + $0x148] sm:$0xff]
      %v320 = vld [vmem:[%s253 + $0x150] sm:$0xff]
      %v321 = vld [vmem:[%s253 + $0x158] sm:$0xff]
      %v322 = vld [vmem:[%s253 + $0x160] sm:$0xff]
      %v323 = vld [vmem:[%s253 + $0x168] sm:$0xff]
      %v324 = vld [vmem:[%s253 + $0x170] sm:$0xff]
      %v325 = vld [vmem:[%s253 + $0x178] sm:$0xff]
      %v326 = vld [vmem:[%s253 + $0x180] sm:$0xff]
      %v327 = vld [vmem:[%s253 + $0x188] sm:$0xff]
      %v328 = vld [vmem:[%s253 + $0x190] sm:$0xff]
      %v329 = vld [vmem:[%s253 + $0x198] sm:$0xff]
      %v330 = vld [vmem:[%s253 + $0x1a0] sm:$0xff]
      %v331 = vld [vmem:[%s253 + $0x1a8] sm:$0xff]
      %v332 = vld [vmem:[%s253 + $0x1b0] sm:$0xff]
      %v333 = vld [vmem:[%s253 + $0x1b8] sm:$0xff]
      %v334 = vld [vmem:[%s253 + $0x1c0] sm:$0xff]
      %v335 = vld [vmem:[%s253 + $0x1c8] sm:$0xff]
      %v336 = vld [vmem:[%s253 + $0x1d0] sm:$0xff]
      %v337 = vld [vmem:[%s253 + $0x1d8] sm:$0xff]
      %v338 = vld [vmem:[%s253 + $0x1e0] sm:$0xff]
      %v339 = vld [vmem:[%s253 + $0x1e8] sm:$0xff]
      %v340 = vld [vmem:[%s253 + $0x1f0] sm:$0xff]
      %v341 = vld [vmem:[%s253 + $0x1f8] sm:$0xff]
      %v342 = vld [vmem:[%s253 + $0x200] sm:$0xff]
      %v343 = vld [vmem:[%s253 + $0x208] sm:$0xff]
      %v344 = vld [vmem:[%s253 + $0x210] sm:$0xff]
      %v345 = vld [vmem:[%s253 + $0x218] sm:$0xff]
      %v346 = vld [vmem:[%s253 + $0x220] sm:$0xff]
      %v347 = vld [vmem:[%s253 + $0x228] sm:$0xff]
      %v348 = vld [vmem:[%s253 + $0x230] sm:$0xff]
      %v349 = vld [vmem:[%s253 + $0x238] sm:$0xff]
      %v350 = vld [vmem:[%s253 + $0x240] sm:$0xff]
      %v351 = vld [vmem:[%s253 + $0x248] sm:$0xff]
      %v352 = vld [vmem:[%s253 + $0x250] sm:$0xff]
      %v353 = vld [vmem:[%s253 + $0x258] sm:$0xff]
      %v354 = vld [vmem:[%s253 + $0x260] sm:$0xff]
      %v355 = vld [vmem:[%s253 + $0x268] sm:$0xff]
      %v356 = vld [vmem:[%s253 + $0x270] sm:$0xff]
      %v357 = vld [vmem:[%s253 + $0x278] sm:$0xff]
      %v358 = vld [vmem:[%s253 + $0x280] sm:$0xff]
      %v359 = vld [vmem:[%s253 + $0x288] sm:$0xff]
      %v360 = vld [vmem:[%s253 + $0x290] sm:$0xff]
      %v361 = vld [vmem:[%s253 + $0x298] sm:$0xff]
      %v362 = vld [vmem:[%s253 + $0x2a0] sm:$0xff]
      %v363 = vld [vmem:[%s253 + $0x2a8] sm:$0xff]
      %v364 = vld [vmem:[%s253 + $0x2b0] sm:$0xff]
      %v365 = vld [vmem:[%s253 + $0x2b8] sm:$0xff]
      %v366 = vld [vmem:[%s253 + $0x2c0] sm:$0xff]
      %v367 = vld [vmem:[%s253 + $0x2c8] sm:$0xff]
      %v368 = vld [vmem:[%s253 + $0x2d0] sm:$0xff]
      %v369 = vld [vmem:[%s253 + $0x2d8] sm:$0xff]
      %v370 = vld [vmem:[%s253 + $0x2e0] sm:$0xff]
      %v371 = vld [vmem:[%s253 + $0x2e8] sm:$0xff]
      %v372 = vld [vmem:[%s253 + $0x2f0] sm:$0xff]
      %v373 = vld [vmem:[%s253 + $0x2f8] sm:$0xff]
      %v374 = vld [vmem:[%s253 + $0x300] sm:$0xff]
      %v375 = vld [vmem:[%s253 + $0x308] sm:$0xff]
      %v376 = vld [vmem:[%s253 + $0x310] sm:$0xff]
      %v377 = vld [vmem:[%s253 + $0x318] sm:$0xff]
      %v378 = vld [vmem:[%s253 + $0x320] sm:$0xff]
      %v379 = vld [vmem:[%s253 + $0x328] sm:$0xff]
      %v380 = vld [vmem:[%s253 + $0x330] sm:$0xff]
      %v381 = vld [vmem:[%s253 + $0x338] sm:$0xff]
      %v382 = vld [vmem:[%s253 + $0x340] sm:$0xff]
      %v383 = vld [vmem:[%s253 + $0x348] sm:$0xff]
      %v384 = vld [vmem:[%s253 + $0x350] sm:$0xff]
      %v385 = vld [vmem:[%s253 + $0x358] sm:$0xff]
      %v386 = vld [vmem:[%s253 + $0x360] sm:$0xff]
      %v387 = vld [vmem:[%s253 + $0x368] sm:$0xff]
      %v388 = vld [vmem:[%s253 + $0x370] sm:$0xff]
      %v389 = vld [vmem:[%s253 + $0x378] sm:$0xff]
      %v390 = vld [vmem:[%s253 + $0x380] sm:$0xff]
      %v391 = vld [vmem:[%s253 + $0x388] sm:$0xff]
      %v392 = vld [vmem:[%s253 + $0x390] sm:$0xff]
      %v393 = vld [vmem:[%s253 + $0x398] sm:$0xff]
      %v394 = vld [vmem:[%s253 + $0x3a0] sm:$0xff]
      %v395 = vld [vmem:[%s253 + $0x3a8] sm:$0xff]
      %v396 = vld [vmem:[%s253 + $0x3b0] sm:$0xff]
      %v397 = vld [vmem:[%s253 + $0x3b8] sm:$0xff]
      %v398 = vld [vmem:[%s253 + $0x3c0] sm:$0xff]
      %v399 = vld [vmem:[%s253 + $0x3c8] sm:$0xff]
      %v400 = vld [vmem:[%s253 + $0x3d0] sm:$0xff]
      %v401 = vld [vmem:[%s253 + $0x3d8] sm:$0xff]
      %v402 = vld [vmem:[%s253 + $0x3e0] sm:$0xff]
      %v403 = vld [vmem:[%s253 + $0x3e8] sm:$0xff]
      %v404 = vld [vmem:[%s253 + $0x3f0] sm:$0xff]
      %v405 = vld [vmem:[%s253 + $0x3f8] sm:$0xff]
      %v408 = vunpack.c.l.b16 %v276
      %v409 = vunpack.c.h.b16 %v276
      %v410 = vunpack.c.l.b16 %v277
      %v411 = vunpack.c.h.b16 %v277
      %v412 = vpack.c.b16 %v408, %v408
      %v413 = vpack.c.b16 %v409, %v409
      %v414 = vpack.c.b16 %v410, %v410
      %v415 = vpack.c.b16 %v411, %v411
      %v548 = vunpack.c.l.b16 %v278
      %v549 = vunpack.c.h.b16 %v278
      %v550 = vunpack.c.l.b16 %v279
      %v551 = vunpack.c.h.b16 %v279
      %v552 = vunpack.c.l.b16 %v280
      %v553 = vunpack.c.h.b16 %v280
      %v554 = vunpack.c.l.b16 %v281
      %v555 = vunpack.c.h.b16 %v281
      %v556 = vunpack.c.l.b16 %v282
      %v557 = vunpack.c.h.b16 %v282
      %v558 = vunpack.c.l.b16 %v283
      %v559 = vunpack.c.h.b16 %v283
      %v560 = vunpack.c.l.b16 %v284
      %v561 = vunpack.c.h.b16 %v284
      %v562 = vunpack.c.l.b16 %v285
      %v563 = vunpack.c.h.b16 %v285
      %v564 = vunpack.c.l.b16 %v286
      %v565 = vunpack.c.h.b16 %v286
      %v566 = vunpack.c.l.b16 %v287
      %v567 = vunpack.c.h.b16 %v287
      %v568 = vunpack.c.l.b16 %v288
      %v569 = vunpack.c.h.b16 %v288
      %v570 = vunpack.c.l.b16 %v289
      %v571 = vunpack.c.h.b16 %v289
      %v572 = vunpack.c.l.b16 %v290
      %v573 = vunpack.c.h.b16 %v290
      %v574 = vunpack.c.l.b16 %v291
      %v575 = vunpack.c.h.b16 %v291
      %v576 = vunpack.c.l.b16 %v292
      %v577 = vunpack.c.h.b16 %v292
      %v578 = vunpack.c.l.b16 %v293
      %v579 = vunpack.c.h.b16 %v293
      %v580 = vunpack.c.l.b16 %v294
      %v581 = vunpack.c.h.b16 %v294
      %v582 = vunpack.c.l.b16 %v295
      %v583 = vunpack.c.h.b16 %v295
      %v584 = vunpack.c.l.b16 %v296
      %v585 = vunpack.c.h.b16 %v296
      %v586 = vunpack.c.l.b16 %v297
      %v587 = vunpack.c.h.b16 %v297
      %v588 = vunpack.c.l.b16 %v298
      %v589 = vunpack.c.h.b16 %v298
      %v590 = vunpack.c.l.b16 %v299
      %v591 = vunpack.c.h.b16 %v299
      %v592 = vunpack.c.l.b16 %v300
      %v593 = vunpack.c.h.b16 %v300
      %v594 = vunpack.c.l.b16 %v301
      %v595 = vunpack.c.h.b16 %v301
      %v596 = vunpack.c.l.b16 %v302
      %v597 = vunpack.c.h.b16 %v302
      %v598 = vunpack.c.l.b16 %v303
      %v599 = vunpack.c.h.b16 %v303
      %v600 = vunpack.c.l.b16 %v304
      %v601 = vunpack.c.h.b16 %v304
      %v602 = vunpack.c.l.b16 %v305
      %v603 = vunpack.c.h.b16 %v305
      %v604 = vunpack.c.l.b16 %v306
      %v605 = vunpack.c.h.b16 %v306
      %v606 = vunpack.c.l.b16 %v307
      %v607 = vunpack.c.h.b16 %v307
      %v608 = vunpack.c.l.b16 %v308
      %v609 = vunpack.c.h.b16 %v308
      %v610 = vunpack.c.l.b16 %v309
      %v611 = vunpack.c.h.b16 %v309
      %v612 = vunpack.c.l.b16 %v310
      %v613 = vunpack.c.h.b16 %v310
      %v614 = vunpack.c.l.b16 %v311
      %v615 = vunpack.c.h.b16 %v311
      %v616 = vunpack.c.l.b16 %v312
      %v617 = vunpack.c.h.b16 %v312
      %v618 = vunpack.c.l.b16 %v313
      %v619 = vunpack.c.h.b16 %v313
      %v620 = vunpack.c.l.b16 %v314
      %v621 = vunpack.c.h.b16 %v314
      %v622 = vunpack.c.l.b16 %v315
      %v623 = vunpack.c.h.b16 %v315
      %v624 = vunpack.c.l.b16 %v316
      %v625 = vunpack.c.h.b16 %v316
      %v626 = vunpack.c.l.b16 %v317
      %v627 = vunpack.c.h.b16 %v317
      %v628 = vunpack.c.l.b16 %v318
      %v629 = vunpack.c.h.b16 %v318
      %v630 = vunpack.c.l.b16 %v319
      %v631 = vunpack.c.h.b16 %v319
      %v632 = vunpack.c.l.b16 %v320
      %v633 = vunpack.c.h.b16 %v320
      %v634 = vunpack.c.l.b16 %v321
      %v635 = vunpack.c.h.b16 %v321
      %v636 = vunpack.c.l.b16 %v322
      %v637 = vunpack.c.h.b16 %v322
      %v638 = vunpack.c.l.b16 %v323
      %v639 = vunpack.c.h.b16 %v323
      %v640 = vunpack.c.l.b16 %v324
      %v641 = vunpack.c.h.b16 %v324
      %v642 = vunpack.c.l.b16 %v325
      %v643 = vunpack.c.h.b16 %v325
      %v644 = vunpack.c.l.b16 %v326
      %v645 = vunpack.c.h.b16 %v326
      %v646 = vunpack.c.l.b16 %v327
      %v647 = vunpack.c.h.b16 %v327
      %v648 = vunpack.c.l.b16 %v328
      %v649 = vunpack.c.h.b16 %v328
      %v650 = vunpack.c.l.b16 %v329
      %v651 = vunpack.c.h.b16 %v329
      %v652 = vunpack.c.l.b16 %v330
      %v653 = vunpack.c.h.b16 %v330
      %v654 = vunpack.c.l.b16 %v331
      %v655 = vunpack.c.h.b16 %v331
      %v656 = vunpack.c.l.b16 %v332
      %v657 = vunpack.c.h.b16 %v332
      %v658 = vunpack.c.l.b16 %v333
      %v659 = vunpack.c.h.b16 %v333
      %v660 = vunpack.c.l.b16 %v334
      %v661 = vunpack.c.h.b16 %v334
      %v662 = vunpack.c.l.b16 %v335
      %v663 = vunpack.c.h.b16 %v335
      %v664 = vunpack.c.l.b16 %v336
      %v665 = vunpack.c.h.b16 %v336
      %v666 = vunpack.c.l.b16 %v337
      %v667 = vunpack.c.h.b16 %v337
      %v668 = vunpack.c.l.b16 %v338
      %v669 = vunpack.c.h.b16 %v338
      %v670 = vunpack.c.l.b16 %v339
      %v671 = vunpack.c.h.b16 %v339
      %v672 = vunpack.c.l.b16 %v340
      %v673 = vunpack.c.h.b16 %v340
      %v674 = vunpack.c.l.b16 %v341
      %v675 = vunpack.c.h.b16 %v341
      %v676 = vunpack.c.l.b16 %v342
      %v677 = vunpack.c.h.b16 %v342
      %v678 = vunpack.c.l.b16 %v343
      %v679 = vunpack.c.h.b16 %v343
      %v680 = vunpack.c.l.b16 %v344
      %v681 = vunpack.c.h.b16 %v344
      %v682 = vunpack.c.l.b16 %v345
      %v683 = vunpack.c.h.b16 %v345
      %v684 = vunpack.c.l.b16 %v346
      %v685 = vunpack.c.h.b16 %v346
      %v686 = vunpack.c.l.b16 %v347
      %v687 = vunpack.c.h.b16 %v347
      %v688 = vunpack.c.l.b16 %v348
      %v689 = vunpack.c.h.b16 %v348
      %v690 = vunpack.c.l.b16 %v349
      %v691 = vunpack.c.h.b16 %v349
      %v692 = vunpack.c.l.b16 %v350
      %v693 = vunpack.c.h.b16 %v350
      %v694 = vunpack.c.l.b16 %v351
      %v695 = vunpack.c.h.b16 %v351
      %v696 = vunpack.c.l.b16 %v352
      %v697 = vunpack.c.h.b16 %v352
      %v698 = vunpack.c.l.b16 %v353
      %v699 = vunpack.c.h.b16 %v353
      %v700 = vunpack.c.l.b16 %v354
      %v701 = vunpack.c.h.b16 %v354
      %v702 = vunpack.c.l.b16 %v355
      %v703 = vunpack.c.h.b16 %v355
      %v704 = vunpack.c.l.b16 %v356
      %v705 = vunpack.c.h.b16 %v356
      %v706 = vunpack.c.l.b16 %v357
      %v707 = vunpack.c.h.b16 %v357
      %v708 = vunpack.c.l.b16 %v358
      %v709 = vunpack.c.h.b16 %v358
      %v710 = vunpack.c.l.b16 %v359
      %v711 = vunpack.c.h.b16 %v359
      %v712 = vunpack.c.l.b16 %v360
      %v713 = vunpack.c.h.b16 %v360
      %v714 = vunpack.c.l.b16 %v361
      %v715 = vunpack.c.h.b16 %v361
      %v716 = vunpack.c.l.b16 %v362
      %v717 = vunpack.c.h.b16 %v362
      %v718 = vunpack.c.l.b16 %v363
      %v719 = vunpack.c.h.b16 %v363
      %v720 = vunpack.c.l.b16 %v364
      %v721 = vunpack.c.h.b16 %v364
      %v722 = vunpack.c.l.b16 %v365
      %v723 = vunpack.c.h.b16 %v365
      %v724 = vunpack.c.l.b16 %v366
      %v725 = vunpack.c.h.b16 %v366
      %v726 = vunpack.c.l.b16 %v367
      %v727 = vunpack.c.h.b16 %v367
      %v728 = vunpack.c.l.b16 %v368
      %v729 = vunpack.c.h.b16 %v368
      %v730 = vunpack.c.l.b16 %v369
      %v731 = vunpack.c.h.b16 %v369
      %v732 = vunpack.c.l.b16 %v370
      %v733 = vunpack.c.h.b16 %v370
      %v734 = vunpack.c.l.b16 %v371
      %v735 = vunpack.c.h.b16 %v371
      %v736 = vunpack.c.l.b16 %v372
      %v737 = vunpack.c.h.b16 %v372
      %v738 = vunpack.c.l.b16 %v373
      %v739 = vunpack.c.h.b16 %v373
      %v740 = vunpack.c.l.b16 %v374
      %v741 = vunpack.c.h.b16 %v374
      %v742 = vunpack.c.l.b16 %v375
      %v743 = vunpack.c.h.b16 %v375
      %v744 = vunpack.c.l.b16 %v376
      %v745 = vunpack.c.h.b16 %v376
      %v746 = vunpack.c.l.b16 %v377
      %v747 = vunpack.c.h.b16 %v377
      %v748 = vunpack.c.l.b16 %v378
      %v749 = vunpack.c.h.b16 %v378
      %v750 = vunpack.c.l.b16 %v379
      %v751 = vunpack.c.h.b16 %v379
      %v752 = vunpack.c.l.b16 %v380
      %v753 = vunpack.c.h.b16 %v380
      %v754 = vunpack.c.l.b16 %v381
      %v755 = vunpack.c.h.b16 %v381
      %v756 = vunpack.c.l.b16 %v382
      %v757 = vunpack.c.h.b16 %v382
      %v758 = vunpack.c.l.b16 %v383
      %v759 = vunpack.c.h.b16 %v383
      %v760 = vunpack.c.l.b16 %v384
      %v761 = vunpack.c.h.b16 %v384
      %v762 = vunpack.c.l.b16 %v385
      %v763 = vunpack.c.h.b16 %v385
      %v764 = vunpack.c.l.b16 %v386
      %v765 = vunpack.c.h.b16 %v386
      %v766 = vunpack.c.l.b16 %v387
      %v767 = vunpack.c.h.b16 %v387
      %v768 = vunpack.c.l.b16 %v388
      %v769 = vunpack.c.h.b16 %v388
      %v770 = vunpack.c.l.b16 %v389
      %v771 = vunpack.c.h.b16 %v389
      %v772 = vunpack.c.l.b16 %v390
      %v773 = vunpack.c.h.b16 %v390
      %v774 = vunpack.c.l.b16 %v391
      %v775 = vunpack.c.h.b16 %v391
      %v776 = vunpack.c.l.b16 %v392
      %v777 = vunpack.c.h.b16 %v392
      %v778 = vunpack.c.l.b16 %v393
      %v779 = vunpack.c.h.b16 %v393
      %v780 = vunpack.c.l.b16 %v394
      %v781 = vunpack.c.h.b16 %v394
      %v782 = vunpack.c.l.b16 %v395
      %v783 = vunpack.c.h.b16 %v395
      %v784 = vunpack.c.l.b16 %v396
      %v785 = vunpack.c.h.b16 %v396
      %v786 = vunpack.c.l.b16 %v397
      %v787 = vunpack.c.h.b16 %v397
      %v788 = vunpack.c.l.b16 %v398
      %v789 = vunpack.c.h.b16 %v398
      %v790 = vunpack.c.l.b16 %v399
      %v791 = vunpack.c.h.b16 %v399
      %v792 = vunpack.c.l.b16 %v400
      %v793 = vunpack.c.h.b16 %v400
      %v794 = vunpack.c.l.b16 %v401
      %v795 = vunpack.c.h.b16 %v401
      %v796 = vunpack.c.l.b16 %v402
      %v797 = vunpack.c.h.b16 %v402
      %v798 = vunpack.c.l.b16 %v403
      %v799 = vunpack.c.h.b16 %v403
      %v800 = vunpack.c.l.b16 %v404
      %v801 = vunpack.c.h.b16 %v404
      %v802 = vunpack.c.l.b16 %v405
      %v803 = vunpack.c.h.b16 %v405
      %v804 = vpack.c.b16 %v552, %v548
      %v805 = vpack.c.b16 %v553, %v549
      %v806 = vpack.c.b16 %v554, %v550
      %v807 = vpack.c.b16 %v555, %v551
      %v808 = vpack.c.b16 %v560, %v556
      %v809 = vpack.c.b16 %v561, %v557
      %v810 = vpack.c.b16 %v562, %v558
      %v811 = vpack.c.b16 %v563, %v559
      %v812 = vpack.c.b16 %v568, %v564
      %v813 = vpack.c.b16 %v569, %v565
      %v814 = vpack.c.b16 %v570, %v566
      %v815 = vpack.c.b16 %v571, %v567
      %v816 = vpack.c.b16 %v576, %v572
      %v817 = vpack.c.b16 %v577, %v573
      %v818 = vpack.c.b16 %v578, %v574
      %v819 = vpack.c.b16 %v579, %v575
      %v820 = vpack.c.b16 %v584, %v580
      %v821 = vpack.c.b16 %v585, %v581
      %v822 = vpack.c.b16 %v586, %v582
      %v823 = vpack.c.b16 %v587, %v583
      %v824 = vpack.c.b16 %v592, %v588
      %v825 = vpack.c.b16 %v593, %v589
      %v826 = vpack.c.b16 %v594, %v590
      %v827 = vpack.c.b16 %v595, %v591
      %v828 = vpack.c.b16 %v600, %v596
      %v829 = vpack.c.b16 %v601, %v597
      %v830 = vpack.c.b16 %v602, %v598
      %v831 = vpack.c.b16 %v603, %v599
      %v832 = vpack.c.b16 %v608, %v604
      %v833 = vpack.c.b16 %v609, %v605
      %v834 = vpack.c.b16 %v610, %v606
      %v835 = vpack.c.b16 %v611, %v607
      %v836 = vpack.c.b16 %v616, %v612
      %v837 = vpack.c.b16 %v617, %v613
      %v838 = vpack.c.b16 %v618, %v614
      %v839 = vpack.c.b16 %v619, %v615
      %v840 = vpack.c.b16 %v624, %v620
      %v841 = vpack.c.b16 %v625, %v621
      %v842 = vpack.c.b16 %v626, %v622
      %v843 = vpack.c.b16 %v627, %v623
      %v844 = vpack.c.b16 %v632, %v628
      %v845 = vpack.c.b16 %v633, %v629
      %v846 = vpack.c.b16 %v634, %v630
      %v847 = vpack.c.b16 %v635, %v631
      %v848 = vpack.c.b16 %v640, %v636
      %v849 = vpack.c.b16 %v641, %v637
      %v850 = vpack.c.b16 %v642, %v638
      %v851 = vpack.c.b16 %v643, %v639
      %v852 = vpack.c.b16 %v648, %v644
      %v853 = vpack.c.b16 %v649, %v645
      %v854 = vpack.c.b16 %v650, %v646
      %v855 = vpack.c.b16 %v651, %v647
      %v856 = vpack.c.b16 %v656, %v652
      %v857 = vpack.c.b16 %v657, %v653
      %v858 = vpack.c.b16 %v658, %v654
      %v859 = vpack.c.b16 %v659, %v655
      %v860 = vpack.c.b16 %v664, %v660
      %v861 = vpack.c.b16 %v665, %v661
      %v862 = vpack.c.b16 %v666, %v662
      %v863 = vpack.c.b16 %v667, %v663
      %v864 = vpack.c.b16 %v672, %v668
      %v865 = vpack.c.b16 %v673, %v669
      %v866 = vpack.c.b16 %v674, %v670
      %v867 = vpack.c.b16 %v675, %v671
      %v868 = vpack.c.b16 %v680, %v676
      %v869 = vpack.c.b16 %v681, %v677
      %v870 = vpack.c.b16 %v682, %v678
      %v871 = vpack.c.b16 %v683, %v679
      %v872 = vpack.c.b16 %v688, %v684
      %v873 = vpack.c.b16 %v689, %v685
      %v874 = vpack.c.b16 %v690, %v686
      %v875 = vpack.c.b16 %v691, %v687
      %v876 = vpack.c.b16 %v696, %v692
      %v877 = vpack.c.b16 %v697, %v693
      %v878 = vpack.c.b16 %v698, %v694
      %v879 = vpack.c.b16 %v699, %v695
      %v880 = vpack.c.b16 %v704, %v700
      %v881 = vpack.c.b16 %v705, %v701
      %v882 = vpack.c.b16 %v706, %v702
      %v883 = vpack.c.b16 %v707, %v703
      %v884 = vpack.c.b16 %v712, %v708
      %v885 = vpack.c.b16 %v713, %v709
      %v886 = vpack.c.b16 %v714, %v710
      %v887 = vpack.c.b16 %v715, %v711
      %v888 = vpack.c.b16 %v720, %v716
      %v889 = vpack.c.b16 %v721, %v717
      %v890 = vpack.c.b16 %v722, %v718
      %v891 = vpack.c.b16 %v723, %v719
      %v892 = vpack.c.b16 %v728, %v724
      %v893 = vpack.c.b16 %v729, %v725
      %v894 = vpack.c.b16 %v730, %v726
      %v895 = vpack.c.b16 %v731, %v727
      %v896 = vpack.c.b16 %v736, %v732
      %v897 = vpack.c.b16 %v737, %v733
      %v898 = vpack.c.b16 %v738, %v734
      %v899 = vpack.c.b16 %v739, %v735
      %v900 = vpack.c.b16 %v744, %v740
      %v901 = vpack.c.b16 %v745, %v741
      %v902 = vpack.c.b16 %v746, %v742
      %v903 = vpack.c.b16 %v747, %v743
      %v904 = vpack.c.b16 %v752, %v748
      %v905 = vpack.c.b16 %v753, %v749
      %v906 = vpack.c.b16 %v754, %v750
      %v907 = vpack.c.b16 %v755, %v751
      %v908 = vpack.c.b16 %v760, %v756
      %v909 = vpack.c.b16 %v761, %v757
      %v910 = vpack.c.b16 %v762, %v758
      %v911 = vpack.c.b16 %v763, %v759
      %v912 = vpack.c.b16 %v768, %v764
      %v913 = vpack.c.b16 %v769, %v765
      %v914 = vpack.c.b16 %v770, %v766
      %v915 = vpack.c.b16 %v771, %v767
      %v916 = vpack.c.b16 %v776, %v772
      %v917 = vpack.c.b16 %v777, %v773
      %v918 = vpack.c.b16 %v778, %v774
      %v919 = vpack.c.b16 %v779, %v775
      %v920 = vpack.c.b16 %v784, %v780
      %v921 = vpack.c.b16 %v785, %v781
      %v922 = vpack.c.b16 %v786, %v782
      %v923 = vpack.c.b16 %v787, %v783
      %v924 = vpack.c.b16 %v792, %v788
      %v925 = vpack.c.b16 %v793, %v789
      %v926 = vpack.c.b16 %v794, %v790
      %v927 = vpack.c.b16 %v795, %v791
      %v928 = vpack.c.b16 %v800, %v796
      %v929 = vpack.c.b16 %v801, %v797
      %v930 = vpack.c.b16 %v802, %v798
      %v931 = vpack.c.b16 %v803, %v799
      %1060 = vmatprep.subr.bf16.mxu0 %v833
      %1061 = vmatpush1.bf16.msra.mxu0 %v832
      %1062 = vmatprep.subr.bf16.mxu0 %v829
      %1063 = vmatpush1.bf16.msra.mxu0 %v828
      %1064 = vmatprep.subr.bf16.mxu0 %v825
      %1065 = vmatpush1.bf16.msra.mxu0 %v824
      %1066 = vmatprep.subr.bf16.mxu0 %v821
      %1067 = vmatpush1.bf16.msra.mxu0 %v820
      %1068 = vmatprep.subr.bf16.mxu0 %v817
      %1069 = vmatpush1.bf16.msra.mxu0 %v816
      %1070 = vmatprep.subr.bf16.mxu0 %v813
      %1071 = vmatpush1.bf16.msra.mxu0 %v812
      %1072 = vmatprep.subr.bf16.mxu0 %v809
      %1073 = vmatpush1.bf16.msra.mxu0 %v808
      %1074 = vmatprep.subr.bf16.mxu0 %v805
      %1075 = vmatpush1.bf16.msra.mxu0 %v804
      %1076 = vmatprep.subr.bf16.mxu0 %v865
      %1077 = vmatpush2.bf16.msra.mxu0 %v864
      %1078 = vmatprep.subr.bf16.mxu0 %v861
      %1079 = vmatpush2.bf16.msra.mxu0 %v860
      %1080 = vmatprep.subr.bf16.mxu0 %v857
      %1081 = vmatpush2.bf16.msra.mxu0 %v856
      %1082 = vmatprep.subr.bf16.mxu0 %v853
      %1083 = vmatpush2.bf16.msra.mxu0 %v852
      %1084 = vmatprep.subr.bf16.mxu0 %v849
      %1085 = vmatpush2.bf16.msra.mxu0 %v848
      %1086 = vmatprep.subr.bf16.mxu0 %v845
      %1087 = vmatpush2.bf16.msra.mxu0 %v844
      %1088 = vmatprep.subr.bf16.mxu0 %v841
      %1089 = vmatpush2.bf16.msra.mxu0 %v840
      %1090 = vmatprep.subr.bf16.mxu0 %v837
      %1091 = vmatpush2.bf16.msra.mxu0 %v836
      %1092 = vmatprep.mubr.bf16.mxu0 %v413
      %1093 = vmatmul.mubr.bf16.gmra.mxu0 %v412
      %v1094 = vpop.f32.mrf.mxu0
      %v1095 = vadd.f32 0.0, %v1094
      %v1096 = vpop.f32.mrf.mxu0
      %v1097 = vadd.f32 0.0, %v1096
      %v1098 = vpop.f32.mrf.mxu0
      %v1099 = vpop.f32.mrf.mxu0
      %1100 = vdwg.mxu0
      %1101 = vmatprep.subr.bf16.mxu0 %v897
      %1102 = vmatpush1.bf16.msra.mxu0 %v896
      %1103 = vmatprep.subr.bf16.mxu0 %v893
      %1104 = vmatpush1.bf16.msra.mxu0 %v892
      %1105 = vmatprep.subr.bf16.mxu0 %v889
      %1106 = vmatpush1.bf16.msra.mxu0 %v888
      %1107 = vmatprep.subr.bf16.mxu0 %v885
      %1108 = vmatpush1.bf16.msra.mxu0 %v884
      %1109 = vmatprep.subr.bf16.mxu0 %v881
      %1110 = vmatpush1.bf16.msra.mxu0 %v880
      %1111 = vmatprep.subr.bf16.mxu0 %v877
      %1112 = vmatpush1.bf16.msra.mxu0 %v876
      %1113 = vmatprep.subr.bf16.mxu0 %v873
      %1114 = vmatpush1.bf16.msra.mxu0 %v872
      %1115 = vmatprep.subr.bf16.mxu0 %v869
      %1116 = vmatpush1.bf16.msra.mxu0 %v868
      %1117 = vmatprep.subr.bf16.mxu0 %v929
      %1118 = vmatpush2.bf16.msra.mxu0 %v928
      %1119 = vmatprep.subr.bf16.mxu0 %v925
      %1120 = vmatpush2.bf16.msra.mxu0 %v924
      %1121 = vmatprep.subr.bf16.mxu0 %v921
      %1122 = vmatpush2.bf16.msra.mxu0 %v920
      %1123 = vmatprep.subr.bf16.mxu0 %v917
      %1124 = vmatpush2.bf16.msra.mxu0 %v916
      %1125 = vmatprep.subr.bf16.mxu0 %v913
      %1126 = vmatpush2.bf16.msra.mxu0 %v912
      %1127 = vmatprep.subr.bf16.mxu0 %v909
      %1128 = vmatpush2.bf16.msra.mxu0 %v908
      %1129 = vmatprep.subr.bf16.mxu0 %v905
      %1130 = vmatpush2.bf16.msra.mxu0 %v904
      %1131 = vmatprep.subr.bf16.mxu0 %v901
      %1132 = vmatpush2.bf16.msra.mxu0 %v900
      %1133 = vmatprep.mubr.bf16.mxu0 %v415
      %1134 = vmatmul.mubr.bf16.gmra.mxu0 %v414
      %v1135 = vpop.f32.mrf.mxu0
      %v1136 = vadd.f32 %v1095, %v1135
      %v1137 = vpop.f32.mrf.mxu0
      %v1138 = vadd.f32 %v1097, %v1137
      %v1139 = vpop.f32.mrf.mxu0
      %v1140 = vpop.f32.mrf.mxu0
      %1141 = vdwg.mxu0
      %1142 = vmatprep.subr.bf16.mxu0 %v835
      %1143 = vmatpush1.bf16.msra.mxu0 %v834
      %1144 = vmatprep.subr.bf16.mxu0 %v831
      %1145 = vmatpush1.bf16.msra.mxu0 %v830
      %1146 = vmatprep.subr.bf16.mxu0 %v827
      %1147 = vmatpush1.bf16.msra.mxu0 %v826
      %1148 = vmatprep.subr.bf16.mxu0 %v823
      %1149 = vmatpush1.bf16.msra.mxu0 %v822
      %1150 = vmatprep.subr.bf16.mxu0 %v819
      %1151 = vmatpush1.bf16.msra.mxu0 %v818
      %1152 = vmatprep.subr.bf16.mxu0 %v815
      %1153 = vmatpush1.bf16.msra.mxu0 %v814
      %1154 = vmatprep.subr.bf16.mxu0 %v811
      %1155 = vmatpush1.bf16.msra.mxu0 %v810
      %1156 = vmatprep.subr.bf16.mxu0 %v807
      %1157 = vmatpush1.bf16.msra.mxu0 %v806
      %1158 = vmatprep.subr.bf16.mxu0 %v867
      %1159 = vmatpush2.bf16.msra.mxu0 %v866
      %1160 = vmatprep.subr.bf16.mxu0 %v863
      %1161 = vmatpush2.bf16.msra.mxu0 %v862
      %1162 = vmatprep.subr.bf16.mxu0 %v859
      %1163 = vmatpush2.bf16.msra.mxu0 %v858
      %1164 = vmatprep.subr.bf16.mxu0 %v855
      %1165 = vmatpush2.bf16.msra.mxu0 %v854
      %1166 = vmatprep.subr.bf16.mxu0 %v851
      %1167 = vmatpush2.bf16.msra.mxu0 %v850
      %1168 = vmatprep.subr.bf16.mxu0 %v847
      %1169 = vmatpush2.bf16.msra.mxu0 %v846
      %1170 = vmatprep.subr.bf16.mxu0 %v843
      %1171 = vmatpush2.bf16.msra.mxu0 %v842
      %1172 = vmatprep.subr.bf16.mxu0 %v839
      %1173 = vmatpush2.bf16.msra.mxu0 %v838
      %1174 = vmatprep.mubr.bf16.mxu0 %v413
      %1175 = vmatmul.mubr.bf16.gmra.mxu0 %v412
      %v1176 = vpop.f32.mrf.mxu0
      %v1177 = vadd.f32 0.0, %v1176
      %v1178 = vpop.f32.mrf.mxu0
      %v1179 = vadd.f32 0.0, %v1178
      %v1180 = vpop.f32.mrf.mxu0
      %v1181 = vpop.f32.mrf.mxu0
      %1182 = vdwg.mxu0
      %1183 = vmatprep.subr.bf16.mxu0 %v899
      %1184 = vmatpush1.bf16.msra.mxu0 %v898
      %1185 = vmatprep.subr.bf16.mxu0 %v895
      %1186 = vmatpush1.bf16.msra.mxu0 %v894
      %1187 = vmatprep.subr.bf16.mxu0 %v891
      %1188 = vmatpush1.bf16.msra.mxu0 %v890
      %1189 = vmatprep.subr.bf16.mxu0 %v887
      %1190 = vmatpush1.bf16.msra.mxu0 %v886
      %1191 = vmatprep.subr.bf16.mxu0 %v883
      %1192 = vmatpush1.bf16.msra.mxu0 %v882
      %1193 = vmatprep.subr.bf16.mxu0 %v879
      %1194 = vmatpush1.bf16.msra.mxu0 %v878
      %1195 = vmatprep.subr.bf16.mxu0 %v875
      %1196 = vmatpush1.bf16.msra.mxu0 %v874
      %1197 = vmatprep.subr.bf16.mxu0 %v871
      %1198 = vmatpush1.bf16.msra.mxu0 %v870
      %1199 = vmatprep.subr.bf16.mxu0 %v931
      %1200 = vmatpush2.bf16.msra.mxu0 %v930
      %1201 = vmatprep.subr.bf16.mxu0 %v927
      %1202 = vmatpush2.bf16.msra.mxu0 %v926
      %1203 = vmatprep.subr.bf16.mxu0 %v923
      %1204 = vmatpush2.bf16.msra.mxu0 %v922
      %1205 = vmatprep.subr.bf16.mxu0 %v919
      %1206 = vmatpush2.bf16.msra.mxu0 %v918
      %1207 = vmatprep.subr.bf16.mxu0 %v915
      %1208 = vmatpush2.bf16.msra.mxu0 %v914
      %1209 = vmatprep.subr.bf16.mxu0 %v911
      %1210 = vmatpush2.bf16.msra.mxu0 %v910
      %1211 = vmatprep.subr.bf16.mxu0 %v907
      %1212 = vmatpush2.bf16.msra.mxu0 %v906
      %1213 = vmatprep.subr.bf16.mxu0 %v903
      %1214 = vmatpush2.bf16.msra.mxu0 %v902
      %1215 = vmatprep.mubr.bf16.mxu0 %v415
      %1216 = vmatmul.mubr.bf16.gmra.mxu0 %v414
      %v1217 = vpop.f32.mrf.mxu0
      %v1218 = vadd.f32 %v1177, %v1217
      %v1219 = vpop.f32.mrf.mxu0
      %v1220 = vadd.f32 %v1179, %v1219
      %v1221 = vpop.f32.mrf.mxu0
      %v1222 = vpop.f32.mrf.mxu0
      %1223 = vdwg.mxu0
      %v1224 = vadd.f32 %v272, %v1136
      %v1225 = vadd.f32 %v273, %v1138
      %v1226 = vadd.f32 %v274, %v1218
      %v1227 = vadd.f32 %v275, %v1220
      %1228 = vst [vmem:[#allocation2] sm:$0xff] %v1224
      %1229 = vst [vmem:[#allocation2 + $0x8] sm:$0xff] %v1225
      %1230 = vst [vmem:[#allocation2 + $0x10] sm:$0xff] %v1226
      %1231 = vst [vmem:[#allocation2 + $0x18] sm:$0xff] %v1227
      %p1232 = scmp.eq.s32.totalorder %s20, 8
      // Predicated region
      $region41: #{resnet_server_forward.22} parent=35 // pred_check
        %p1233 = pneg %p1232
      $region42: #{resnet_server_forward.22} parent=35 // pred_check_branch
        %1235 = sbr.rel (%p1233) target = $region44
      $region43: #{resnet_server_forward.22} parent=35 // pred_region
        %v1236 = vld [vmem:[#allocation2] sm:$0xff]
        %v1237 = vld [vmem:[#allocation2 + $0x8] sm:$0xff]
        %v1238 = vld [vmem:[#allocation2 + $0x10] sm:$0xff]
        %v1239 = vld [vmem:[#allocation2 + $0x18] sm:$0xff]
        %v1240 = vld [vmem:[%s2] sm:$0xf]
        %v1242 = vlaneseq
        %v1243 = vshrl.u32 %v1242, 7
        %v1244 = vsub.s32 0, %v1243
        %v1245 = vrot.slane %v1240, %v1244
        %v1246 = vlaneseq
        %v1247 = vshrl.u32 %v1246, 7
        %v1248 = vsub.s32 1, %v1247
        %v1249 = vrot.slane %v1240, %v1248
        %v1250 = vlaneseq
        %v1251 = vshrl.u32 %v1250, 7
        %v1252 = vsub.s32 2, %v1251
        %v1253 = vrot.slane %v1240, %v1252
        %v1254 = vlaneseq
        %v1255 = vshrl.u32 %v1254, 7
        %v1256 = vsub.s32 3, %v1255
        %v1257 = vrot.slane %v1240, %v1256
        %v1262 = vadd.f32 %v1236, %v1245
        %v1263 = vadd.f32 %v1237, %v1249
        %v1264 = vadd.f32 %v1238, %v1253
        %v1265 = vadd.f32 %v1239, %v1257
        %v1266 = vld [vmem:[%s258] sm:$0xff]
        %v1267 = vld [vmem:[%s258 + $0x8] sm:$0xff]
        %v1268 = vunpack.c.l.bf16 %v1266
        %v1269 = vunpack.c.h.bf16 %v1266
        %v1270 = vunpack.c.l.bf16 %v1267
        %v1271 = vunpack.c.h.bf16 %v1267
        %v1272 = vadd.f32 %v1262, %v1268
        %v1273 = vadd.f32 %v1263, %v1269
        %v1274 = vadd.f32 %v1264, %v1270
        %v1275 = vadd.f32 %v1265, %v1271
        %v1276 = vmax.f32 %v1272, 0.0
        %v1277 = vmax.f32 %v1273, 0.0
        %v1278 = vmax.f32 %v1274, 0.0
        %v1279 = vmax.f32 %v1275, 0.0
        %v1280 = vpack.c.bf16 %v1276, %v1276
        %v1281 = vpack.c.bf16 %v1277, %v1277
        %v1282 = vpack.c.bf16 %v1278, %v1278
        %v1283 = vpack.c.bf16 %v1279, %v1279
        %v1288 = vunpack.c.l.b16 %v1280
        %v1289 = vunpack.c.l.b16 %v1281
        %v1290 = vunpack.c.l.b16 %v1282
        %v1291 = vunpack.c.l.b16 %v1283
        %v1292 = vpack.c.b16 %v1289, %v1288
        %v1293 = vpack.c.b16 %v1291, %v1290
        %1296 = vst [vmem:[%s263] sm:$0xff] %v1292
        %1297 = vst [vmem:[%s263 + $0x8] sm:$0xff] %v1293
      $region44: #{resnet_server_forward.22} parent=35 // pred_fallthru
        _
      %p1298 = scmp.lt.s32.totalorder %s19, 0
      %s1299 = scalar_select %p1298, %s19, 0
      %s1300 = smul.addr %s1299, 4
      %s1301 = smul.addr %s1300, 4
      %s1302 = scalar_lea.vmem %s4, %s1301
      // Predicated region
      $region45: #{resnet_server_forward.22} parent=35 // pred_check
        %p1303 = pneg %p146
      $region46: #{resnet_server_forward.22} parent=35 // pred_check_branch
        %1305 = sbr.rel (%p1303) target = $region48
      $region47: #{resnet_server_forward.22} parent=35 // pred_region
        _
      $region48: #{resnet_server_forward.22} parent=35 // pred_fallthru
        _
      // Predicated region
      $region49: #{resnet_server_forward.22} parent=35 // pred_check
        %p1306 = pneg %p146
      $region50: #{resnet_server_forward.22} parent=35 // pred_check_branch
        %1308 = sbr.rel (%p1306) target = $region52
      $region51: #{resnet_server_forward.22} parent=35 // pred_region
        %p1309 = scmp.lt.s32.totalorder %s19, 0
        %s1310 = scalar_select %p1309, %s19, 0
        %s1311 = smul.addr %s1310, 4
        %s1312 = smul.addr %s1311, 4
        %s1313 = scalar_lea.vmem %s4, %s1312
      $region52: #{resnet_server_forward.22} parent=35 // pred_fallthru
        _
    $region36: #{resnet_server_forward.22} parent=5 // pred_fallthru
      _
    %p1314 = scmp.le.s32.totalorder 2, %s10
    // Predicated region
    $region53: #{resnet_server_forward.22} parent=5 // pred_check
      %p1315 = pneg %p1314
    $region54: #{resnet_server_forward.22} parent=5 // pred_check_branch
      %1317 = sbr.rel (%p1315) target = $region56
    $region55: #{resnet_server_forward.22} parent=5 // pred_region
      %s1318 = ssub.s32 %s10, 2
    $region56: #{resnet_server_forward.22} parent=5 // pred_fallthru
      _
  $region6: #{resnet_server_forward.22} parent=0 // loop_footer
    %s14 = sadd.s32 1, %s10
  $region7: #{resnet_server_forward.22} parent=0 // loop_footer_branch
    %9 = sbr.rel target = $region3
  $region8: #{resnet_server_forward.22} parent=0 // loop_exit
    _

</llo_original>
